<compile_context>
chip_gen: v5e
topology: v5e:2x2
jax: 0.10.0
libtpu: 0.0.40
codegen_flags: <defaults>
</compile_context>

<pallas_src>
import functools

import jax
import jax.numpy as jnp
import numpy as np
from jax.experimental import pallas as pl
from jax.experimental.pallas import tpu as pltpu

_LANE = 128


def _round_up(x, m):
    return ((x + m - 1) // m) * m


# ---------------------------------------------------------------------------
# Pallas kernels
# ---------------------------------------------------------------------------
def _conv_relu_kernel(p_ref, w_ref, b_ref, o_ref):
    """conv-as-matmul + bias + ReLU (no pooling)."""
    acc = jnp.dot(p_ref[...], w_ref[...], preferred_element_type=jnp.float32)
    o_ref[...] = jnp.maximum(acc + b_ref[...], 0.0)


def _make_conv_relu_pool_kernel(m_rows):
    """conv-as-matmul + bias + ReLU + fused 2x2 max-pool.

    p_ref holds the im2col patches of the 4 pooling phases stacked along
    rows: (4*m_rows, K).  One weight-stationary matmul produces all phases;
    pooling is an elementwise max over the four 8-aligned row blocks.
    max-pool commutes with bias+ReLU: pool(relu(conv+b)) == relu(max(conv)+b).
    """
    def kernel(p_ref, w_ref, b_ref, o_ref):
        y = jnp.dot(p_ref[...], w_ref[...], preferred_element_type=jnp.float32)
        m01 = jnp.maximum(y[0 * m_rows:1 * m_rows, :],
                          y[1 * m_rows:2 * m_rows, :])
        m23 = jnp.maximum(y[2 * m_rows:3 * m_rows, :],
                          y[3 * m_rows:4 * m_rows, :])
        o_ref[...] = jnp.maximum(jnp.maximum(m01, m23) + b_ref[...], 0.0)
    return kernel


def conv_relu(patches, w2d, bias):
    """patches: (M, K) f32, w2d: (K, N) f32, bias: (1, N) f32 -> (M, N)."""
    M, K = patches.shape
    N = w2d.shape[1]
    return pl.pallas_call(
        _conv_relu_kernel,
        out_shape=jax.ShapeDtypeStruct((M, N), jnp.float32),
        grid_spec=pltpu.PrefetchScalarGridSpec(
            num_scalar_prefetch=0,
            grid=(1,),
            in_specs=[
                pl.BlockSpec((M, K), lambda i: (0, 0)),
                pl.BlockSpec((K, N), lambda i: (0, 0)),
                pl.BlockSpec((1, N), lambda i: (0, 0)),
            ],
            out_specs=pl.BlockSpec((M, N), lambda i: (0, 0)),
        ),
        compiler_params=pltpu.CompilerParams(
            dimension_semantics=("arbitrary",)),
    )(patches, w2d, bias)


def conv_relu_pool(phases2d, w2d, bias, m_rows):
    """phases2d: (4*m_rows, K) f32, w2d: (K, N), bias: (1, N) -> (m_rows, N)."""
    M4, K = phases2d.shape
    N = w2d.shape[1]
    return pl.pallas_call(
        _make_conv_relu_pool_kernel(m_rows),
        out_shape=jax.ShapeDtypeStruct((m_rows, N), jnp.float32),
        grid_spec=pltpu.PrefetchScalarGridSpec(
            num_scalar_prefetch=0,
            grid=(1,),
            in_specs=[
                pl.BlockSpec((M4, K), lambda i: (0, 0)),
                pl.BlockSpec((K, N), lambda i: (0, 0)),
                pl.BlockSpec((1, N), lambda i: (0, 0)),
            ],
            out_specs=pl.BlockSpec((m_rows, N), lambda i: (0, 0)),
        ),
        compiler_params=pltpu.CompilerParams(
            dimension_semantics=("arbitrary",)),
    )(phases2d, w2d, bias)


# ---------------------------------------------------------------------------
# Host-side layout plumbing (pure data movement, no FLOPs)
# ---------------------------------------------------------------------------
def _extract_patches(x_nhwc, pad):
    """3x3 im2col.  x: (B,H,W,C) -> (B, Ho, Wo, 9*C) with tap-major ordering."""
    B, H, W, C = x_nhwc.shape
    k = 3
    xp = jnp.pad(x_nhwc, ((0, 0), (pad, pad), (pad, pad), (0, 0)))
    Ho = H + 2 * pad - k + 1
    Wo = W + 2 * pad - k + 1
    cols = [xp[:, di:di + Ho, dj:dj + Wo, :]
            for di in range(k) for dj in range(k)]
    return jnp.concatenate(cols, axis=-1)


def _phase_concat(p, m_pad):
    """Stack the 4 pixels of each 2x2 pool window (floor mode) along rows.

    p: (B, Ho, Wo, K) -> (4*m_pad, K).  Rows beyond B*(Ho//2)*(Wo//2) inside
    each phase block are zero padding (sliced off after the kernel).
    """
    B, Ho, Wo, K = p.shape
    Hp, Wp = Ho // 2, Wo // 2
    M = B * Hp * Wp
    phases = jnp.stack([
        p[:, 0:2 * Hp:2, 0:2 * Wp:2, :],
        p[:, 0:2 * Hp:2, 1:2 * Wp:2, :],
        p[:, 1:2 * Hp:2, 0:2 * Wp:2, :],
        p[:, 1:2 * Hp:2, 1:2 * Wp:2, :],
    ], axis=0).reshape(4, M, K)
    phases = jnp.pad(phases, ((0, 0), (0, m_pad - M), (0, 0)))
    return phases.reshape(4 * m_pad, K)


def _to_mat(w_oihw):
    """(O, I, 3, 3) conv weight -> (9*I, O) matmul weight, tap-major rows."""
    O, I, kh, kw = w_oihw.shape
    return jnp.transpose(w_oihw, (2, 3, 1, 0)).reshape(kh * kw * I, O)


def _pad_out(w2d, b, n_pad):
    """Zero-pad weight columns / bias lanes up to n_pad for lane-dense stores."""
    K, N = w2d.shape
    b = b.reshape(1, N)
    if n_pad > N:
        w2d = jnp.pad(w2d, ((0, 0), (0, n_pad - N)))
        b = jnp.pad(b, ((0, 0), (0, n_pad - N)))
    return w2d, b


# ---------------------------------------------------------------------------
# Full forward pass
# ---------------------------------------------------------------------------
@jax.jit
def mnist_network_forward(x_nchw, params):
    """x_nchw: (B, 1, 28, 28) -> (B, 192, 6, 6)."""
    w0, b0, w2, b2, w3, b3, w4, b4 = params
    B = x_nchw.shape[0]
    x = jnp.transpose(x_nchw, (0, 2, 3, 1)).astype(jnp.float32)   # NHWC

    # conv0 + ReLU + maxpool2 : (B,28,28,1) -> (B,14,14,32)
    M = B * 14 * 14
    mp = _round_up(M, 8)
    ph = _phase_concat(_extract_patches(x, pad=1), mp)            # (4*mp, 9)
    w, b = _pad_out(_to_mat(w0), b0, _round_up(32, _LANE))
    x = conv_relu_pool(ph, w, b, mp)[:M, :32].reshape(B, 14, 14, 32)

    # conv2 + ReLU : (B,14,14,32) -> (B,14,14,64)
    M = B * 14 * 14
    mp = _round_up(M, 8)
    p = _extract_patches(x, pad=1).reshape(M, 9 * 32)
    p = jnp.pad(p, ((0, mp - M), (0, 0)))                         # (mp, 288)
    w, b = _pad_out(_to_mat(w2), b2, _round_up(64, _LANE))
    x = conv_relu(p, w, b)[:M, :64].reshape(B, 14, 14, 64)

    # conv3 + ReLU + maxpool2 : (B,14,14,64) -> (B,7,7,128)
    M = B * 7 * 7
    mp = _round_up(M, 8)
    ph = _phase_concat(_extract_patches(x, pad=1), mp)            # (4*mp, 576)
    w, b = _pad_out(_to_mat(w3), b3, _round_up(128, _LANE))
    x = conv_relu_pool(ph, w, b, mp)[:M, :128].reshape(B, 7, 7, 128)

    # conv4 (pad 4) + ReLU + maxpool2 : (B,7,7,128) -> (B,6,6,192)
    M = B * 6 * 6
    mp = _round_up(M, 8)
    ph = _phase_concat(_extract_patches(x, pad=4), mp)            # (4*mp, 1152)
    w, b = _pad_out(_to_mat(w4), b4, _round_up(192, _LANE))
    x = conv_relu_pool(ph, w, b, mp)[:M, :192].reshape(B, 6, 6, 192)

    # dropout(0.2): identity in eval mode.
    return jnp.transpose(x, (0, 3, 1, 2))                         # NCHW (B,192,6,6)


# ---------------------------------------------------------------------------
# Parameters & independent reference
# ---------------------------------------------------------------------------
def init_params(key):
    ks = jax.random.split(key, 4)

    def conv_init(k, cout, cin):
        fan_in = cin * 9
        w = jax.random.normal(k, (cout, cin, 3, 3), jnp.float32) / np.sqrt(fan_in)
        b = jnp.full((cout,), 0.01, jnp.float32)
        return w, b

    w0, b0 = conv_init(ks[0], 32, 1)
    w2, b2 = conv_init(ks[1], 64, 32)
    w3, b3 = conv_init(ks[2], 128, 64)
    w4, b4 = conv_init(ks[3], 192, 128)
    return (w0, b0, w2, b2, w3, b3, w4, b4)


def reference_forward(x_nchw, params):
    """Independent NCHW reference using lax.conv / reduce_window."""
    w0, b0, w2, b2, w3, b3, w4, b4 = params

    def conv(x, w, b, pad):
        y = jax.lax.conv_general_dilated(
            x, w, window_strides=(1, 1),
            padding=((pad, pad), (pad, pad)),
            dimension_numbers=("NCHW", "OIHW", "NCHW"),
            precision=jax.lax.Precision.HIGHEST)
        return y + b.reshape(1, -1, 1, 1)

    def pool(x):  # 2x2 max-pool, stride 2, floor mode (PyTorch default)
        B, C, H, W = x.shape
        x = x[:, :, : (H // 2) * 2, : (W // 2) * 2]
        return jax.lax.reduce_window(x, -jnp.inf, jax.lax.max,
                                     (1, 1, 2, 2), (1, 1, 2, 2), "VALID")

    x = pool(jnp.maximum(conv(x_nchw, w0, b0, 1), 0.0))
    x = jnp.maximum(conv(x, w2, b2, 1), 0.0)
    x = pool(jnp.maximum(conv(x, w3, b3, 1), 0.0))
    x = pool(jnp.maximum(conv(x, w4, b4, 4), 0.0))
    return x  # dropout is identity in eval


if __name__ == "__main__":
    key = jax.random.PRNGKey(0)
    kx, kp = jax.random.split(key)

    x = jax.random.normal(kx, (2, 1, 28, 28), jnp.float32)   # MNIST-shaped NCHW
    params = init_params(kp)

    out = mnist_network_forward(x, params)
    out = jax.block_until_ready(out)
    assert out.shape == (2, 192, 6, 6), out.shape

    ref = reference_forward(x, params)
    np.testing.assert_allclose(np.asarray(out), np.asarray(ref),
                               rtol=1e-3, atol=1e-3)
    print("KERNEL_OK")
</pallas_src>

<mosaic_0001>
module attributes {stable_mosaic.version = 11 : i64} {
  func.func @kernel(%arg0: i32, %arg1: memref<1568x9xf32, #tpu.memory_space<vmem>>, %arg2: memref<9x128xf32, #tpu.memory_space<vmem>>, %arg3: memref<1x128xf32, #tpu.memory_space<vmem>>, %arg4: memref<392x128xf32, #tpu.memory_space<vmem>>) attributes {dimension_semantics = [#tpu.dimension_semantics<arbitrary>], iteration_bounds = array<i64: 1>, scalar_prefetch = 0 : i64, scratch_operands = 0 : i64, tpu.core_type = #tpu.core_type<tc>, window_params = [{pipeline_mode = #tpu.pipeline_mode<synchronous>, transform_indices = @transform_0, window_bounds = array<i64: 1568, 9>}, {pipeline_mode = #tpu.pipeline_mode<synchronous>, transform_indices = @transform_1, window_bounds = array<i64: 9, 128>}, {pipeline_mode = #tpu.pipeline_mode<synchronous>, transform_indices = @transform_2, window_bounds = array<i64: 1, 128>}, {pipeline_mode = #tpu.pipeline_mode<synchronous>, transform_indices = @transform_3, window_bounds = array<i64: 392, 128>}]} {
    %c0 = arith.constant 0 : index
    %c0_0 = arith.constant 0 : index
    %0 = vector.load %arg1[%c0, %c0_0] : memref<1568x9xf32, #tpu.memory_space<vmem>>, vector<1568x9xf32>
    %c0_1 = arith.constant 0 : index
    %c0_2 = arith.constant 0 : index
    %1 = vector.load %arg2[%c0_1, %c0_2] : memref<9x128xf32, #tpu.memory_space<vmem>>, vector<9x128xf32>
    %cst = arith.constant dense<0.000000e+00> : vector<1568x128xf32>
    %2 = tpu.matmul %0, %1, %cst {dimension_numbers = #tpu.dot_dimension_numbers<[1], [0], [0], [1], [0, 0, 1, 1], [], []>} : vector<1568x9xf32>, vector<9x128xf32>, vector<1568x128xf32> -> vector<1568x128xf32>
    %3 = vector.extract_strided_slice %2 {offsets = [0, 0], sizes = [392, 128], strides = [1, 1]} : vector<1568x128xf32> to vector<392x128xf32>
    %4 = vector.extract_strided_slice %2 {offsets = [392, 0], sizes = [392, 128], strides = [1, 1]} : vector<1568x128xf32> to vector<392x128xf32>
    %5 = arith.maximumf %3, %4 : vector<392x128xf32>
    %6 = vector.extract_strided_slice %2 {offsets = [784, 0], sizes = [392, 128], strides = [1, 1]} : vector<1568x128xf32> to vector<392x128xf32>
    %7 = vector.extract_strided_slice %2 {offsets = [1176, 0], sizes = [392, 128], strides = [1, 1]} : vector<1568x128xf32> to vector<392x128xf32>
    %8 = arith.maximumf %6, %7 : vector<392x128xf32>
    %9 = arith.maximumf %5, %8 : vector<392x128xf32>
    %c0_3 = arith.constant 0 : index
    %c0_4 = arith.constant 0 : index
    %10 = vector.load %arg3[%c0_3, %c0_4] : memref<1x128xf32, #tpu.memory_space<vmem>>, vector<1x128xf32>
    %11 = vector.broadcast %10 : vector<1x128xf32> to vector<392x128xf32>
    %12 = arith.addf %9, %11 : vector<392x128xf32>
    %cst_5 = arith.constant 0.000000e+00 : f32
    %13 = vector.broadcast %cst_5 : f32 to vector<392x128xf32>
    %14 = arith.maximumf %12, %13 : vector<392x128xf32>
    %c0_6 = arith.constant 0 : index
    %c0_7 = arith.constant 0 : index
    %15 = vector.load %arg4[%c0_6, %c0_7] : memref<392x128xf32, #tpu.memory_space<vmem>>, vector<392x128xf32>
    tpu.vector_store %arg4[%c0_6, %c0_7], %14 {strides = array<i32>} : memref<392x128xf32, #tpu.memory_space<vmem>>, vector<392x128xf32>,
    return
  }
  func.func @transform_0(%arg0: i32) -> (i32, i32) {
    %c0_i32 = arith.constant 0 : i32
    %c0_i32_0 = arith.constant 0 : i32
    %c0_i32_1 = arith.constant 0 : i32
    return %c0_i32, %c0_i32_0 : i32, i32
  }
  func.func @transform_1(%arg0: i32) -> (i32, i32) {
    %c0_i32 = arith.constant 0 : i32
    %c0_i32_0 = arith.constant 0 : i32
    %c0_i32_1 = arith.constant 0 : i32
    return %c0_i32, %c0_i32_0 : i32, i32
  }
  func.func @transform_2(%arg0: i32) -> (i32, i32) {
    %c0_i32 = arith.constant 0 : i32
    %c0_i32_0 = arith.constant 0 : i32
    %c0_i32_1 = arith.constant 0 : i32
    return %c0_i32, %c0_i32_0 : i32, i32
  }
  func.func @transform_3(%arg0: i32) -> (i32, i32) {
    %c0_i32 = arith.constant 0 : i32
    %c0_i32_0 = arith.constant 0 : i32
    %c0_i32_1 = arith.constant 0 : i32
    return %c0_i32, %c0_i32_0 : i32, i32
  }
}

module attributes {stable_mosaic.version = 11 : i64} {
  func.func @_conv_relu_kernel(%arg0: i32, %arg1: memref<392x288xf32, #tpu.memory_space<vmem>>, %arg2: memref<288x128xf32, #tpu.memory_space<vmem>>, %arg3: memref<1x128xf32, #tpu.memory_space<vmem>>, %arg4: memref<392x128xf32, #tpu.memory_space<vmem>>) attributes {dimension_semantics = [#tpu.dimension_semantics<arbitrary>], iteration_bounds = array<i64: 1>, scalar_prefetch = 0 : i64, scratch_operands = 0 : i64, tpu.core_type = #tpu.core_type<tc>, window_params = [{pipeline_mode = #tpu.pipeline_mode<synchronous>, transform_indices = @transform_0, window_bounds = array<i64: 392, 288>}, {pipeline_mode = #tpu.pipeline_mode<synchronous>, transform_indices = @transform_1, window_bounds = array<i64: 288, 128>}, {pipeline_mode = #tpu.pipeline_mode<synchronous>, transform_indices = @transform_2, window_bounds = array<i64: 1, 128>}, {pipeline_mode = #tpu.pipeline_mode<synchronous>, transform_indices = @transform_3, window_bounds = array<i64: 392, 128>}]} {
    %c0 = arith.constant 0 : index
    %c0_0 = arith.constant 0 : index
    %0 = vector.load %arg1[%c0, %c0_0] : memref<392x288xf32, #tpu.memory_space<vmem>>, vector<392x288xf32>
    %c0_1 = arith.constant 0 : index
    %c0_2 = arith.constant 0 : index
    %1 = vector.load %arg2[%c0_1, %c0_2] : memref<288x128xf32, #tpu.memory_space<vmem>>, vector<288x128xf32>
    %cst = arith.constant dense<0.000000e+00> : vector<392x128xf32>
    %2 = tpu.matmul %0, %1, %cst {dimension_numbers = #tpu.dot_dimension_numbers<[1], [0], [0], [1], [0, 0, 1, 1], [], []>} : vector<392x288xf32>, vector<288x128xf32>, vector<392x128xf32> -> vector<392x128xf32>
    %c0_3 = arith.constant 0 : index
    %c0_4 = arith.constant 0 : index
    %3 = vector.load %arg3[%c0_3, %c0_4] : memref<1x128xf32, #tpu.memory_space<vmem>>, vector<1x128xf32>
    %4 = vector.broadcast %3 : vector<1x128xf32> to vector<392x128xf32>
    %5 = arith.addf %2, %4 : vector<392x128xf32>
    %cst_5 = arith.constant 0.000000e+00 : f32
    %6 = vector.broadcast %cst_5 : f32 to vector<392x128xf32>
    %7 = arith.maximumf %5, %6 : vector<392x128xf32>
    %c0_6 = arith.constant 0 : index
    %c0_7 = arith.constant 0 : index
    %8 = vector.load %arg4[%c0_6, %c0_7] : memref<392x128xf32, #tpu.memory_space<vmem>>, vector<392x128xf32>
    tpu.vector_store %arg4[%c0_6, %c0_7], %7 {strides = array<i32>} : memref<392x128xf32, #tpu.memory_space<vmem>>, vector<392x128xf32>,
    return
  }
  func.func @transform_0(%arg0: i32) -> (i32, i32) {
    %c0_i32 = arith.constant 0 : i32
    %c0_i32_0 = arith.constant 0 : i32
    %c0_i32_1 = arith.constant 0 : i32
    return %c0_i32, %c0_i32_0 : i32, i32
  }
  func.func @transform_1(%arg0: i32) -> (i32, i32) {
    %c0_i32 = arith.constant 0 : i32
    %c0_i32_0 = arith.constant 0 : i32
    %c0_i32_1 = arith.constant 0 : i32
    return %c0_i32, %c0_i32_0 : i32, i32
  }
  func.func @transform_2(%arg0: i32) -> (i32, i32) {
    %c0_i32 = arith.constant 0 : i32
    %c0_i32_0 = arith.constant 0 : i32
    %c0_i32_1 = arith.constant 0 : i32
    return %c0_i32, %c0_i32_0 : i32, i32
  }
  func.func @transform_3(%arg0: i32) -> (i32, i32) {
    %c0_i32 = arith.constant 0 : i32
    %c0_i32_0 = arith.constant 0 : i32
    %c0_i32_1 = arith.constant 0 : i32
    return %c0_i32, %c0_i32_0 : i32, i32
  }
}

module attributes {stable_mosaic.version = 11 : i64} {
  func.func @kernel(%arg0: i32, %arg1: memref<416x576xf32, #tpu.memory_space<vmem>>, %arg2: memref<576x128xf32, #tpu.memory_space<vmem>>, %arg3: memref<1x128xf32, #tpu.memory_space<vmem>>, %arg4: memref<104x128xf32, #tpu.memory_space<vmem>>) attributes {dimension_semantics = [#tpu.dimension_semantics<arbitrary>], iteration_bounds = array<i64: 1>, scalar_prefetch = 0 : i64, scratch_operands = 0 : i64, tpu.core_type = #tpu.core_type<tc>, window_params = [{pipeline_mode = #tpu.pipeline_mode<synchronous>, transform_indices = @transform_0, window_bounds = array<i64: 416, 576>}, {pipeline_mode = #tpu.pipeline_mode<synchronous>, transform_indices = @transform_1, window_bounds = array<i64: 576, 128>}, {pipeline_mode = #tpu.pipeline_mode<synchronous>, transform_indices = @transform_2, window_bounds = array<i64: 1, 128>}, {pipeline_mode = #tpu.pipeline_mode<synchronous>, transform_indices = @transform_3, window_bounds = array<i64: 104, 128>}]} {
    %c0 = arith.constant 0 : index
    %c0_0 = arith.constant 0 : index
    %0 = vector.load %arg1[%c0, %c0_0] : memref<416x576xf32, #tpu.memory_space<vmem>>, vector<416x576xf32>
    %c0_1 = arith.constant 0 : index
    %c0_2 = arith.constant 0 : index
    %1 = vector.load %arg2[%c0_1, %c0_2] : memref<576x128xf32, #tpu.memory_space<vmem>>, vector<576x128xf32>
    %cst = arith.constant dense<0.000000e+00> : vector<416x128xf32>
    %2 = tpu.matmul %0, %1, %cst {dimension_numbers = #tpu.dot_dimension_numbers<[1], [0], [0], [1], [0, 0, 1, 1], [], []>} : vector<416x576xf32>, vector<576x128xf32>, vector<416x128xf32> -> vector<416x128xf32>
    %3 = vector.extract_strided_slice %2 {offsets = [0, 0], sizes = [104, 128], strides = [1, 1]} : vector<416x128xf32> to vector<104x128xf32>
    %4 = vector.extract_strided_slice %2 {offsets = [104, 0], sizes = [104, 128], strides = [1, 1]} : vector<416x128xf32> to vector<104x128xf32>
    %5 = arith.maximumf %3, %4 : vector<104x128xf32>
    %6 = vector.extract_strided_slice %2 {offsets = [208, 0], sizes = [104, 128], strides = [1, 1]} : vector<416x128xf32> to vector<104x128xf32>
    %7 = vector.extract_strided_slice %2 {offsets = [312, 0], sizes = [104, 128], strides = [1, 1]} : vector<416x128xf32> to vector<104x128xf32>
    %8 = arith.maximumf %6, %7 : vector<104x128xf32>
    %9 = arith.maximumf %5, %8 : vector<104x128xf32>
    %c0_3 = arith.constant 0 : index
    %c0_4 = arith.constant 0 : index
    %10 = vector.load %arg3[%c0_3, %c0_4] : memref<1x128xf32, #tpu.memory_space<vmem>>, vector<1x128xf32>
    %11 = vector.broadcast %10 : vector<1x128xf32> to vector<104x128xf32>
    %12 = arith.addf %9, %11 : vector<104x128xf32>
    %cst_5 = arith.constant 0.000000e+00 : f32
    %13 = vector.broadcast %cst_5 : f32 to vector<104x128xf32>
    %14 = arith.maximumf %12, %13 : vector<104x128xf32>
    %c0_6 = arith.constant 0 : index
    %c0_7 = arith.constant 0 : index
    %15 = vector.load %arg4[%c0_6, %c0_7] : memref<104x128xf32, #tpu.memory_space<vmem>>, vector<104x128xf32>
    tpu.vector_store %arg4[%c0_6, %c0_7], %14 {strides = array<i32>} : memref<104x128xf32, #tpu.memory_space<vmem>>, vector<104x128xf32>,
    return
  }
  func.func @transform_0(%arg0: i32) -> (i32, i32) {
    %c0_i32 = arith.constant 0 : i32
    %c0_i32_0 = arith.constant 0 : i32
    %c0_i32_1 = arith.constant 0 : i32
    return %c0_i32, %c0_i32_0 : i32, i32
  }
  func.func @transform_1(%arg0: i32) -> (i32, i32) {
    %c0_i32 = arith.constant 0 : i32
    %c0_i32_0 = arith.constant 0 : i32
    %c0_i32_1 = arith.constant 0 : i32
    return %c0_i32, %c0_i32_0 : i32, i32
  }
  func.func @transform_2(%arg0: i32) -> (i32, i32) {
    %c0_i32 = arith.constant 0 : i32
    %c0_i32_0 = arith.constant 0 : i32
    %c0_i32_1 = arith.constant 0 : i32
    return %c0_i32, %c0_i32_0 : i32, i32
  }
  func.func @transform_3(%arg0: i32) -> (i32, i32) {
    %c0_i32 = arith.constant 0 : i32
    %c0_i32_0 = arith.constant 0 : i32
    %c0_i32_1 = arith.constant 0 : i32
    return %c0_i32, %c0_i32_0 : i32, i32
  }
}

module attributes {stable_mosaic.version = 11 : i64} {
  func.func @kernel(%arg0: i32, %arg1: memref<288x1152xf32, #tpu.memory_space<vmem>>, %arg2: memref<1152x256xf32, #tpu.memory_space<vmem>>, %arg3: memref<1x256xf32, #tpu.memory_space<vmem>>, %arg4: memref<72x256xf32, #tpu.memory_space<vmem>>) attributes {dimension_semantics = [#tpu.dimension_semantics<arbitrary>], iteration_bounds = array<i64: 1>, scalar_prefetch = 0 : i64, scratch_operands = 0 : i64, tpu.core_type = #tpu.core_type<tc>, window_params = [{pipeline_mode = #tpu.pipeline_mode<synchronous>, transform_indices = @transform_0, window_bounds = array<i64: 288, 1152>}, {pipeline_mode = #tpu.pipeline_mode<synchronous>, transform_indices = @transform_1, window_bounds = array<i64: 1152, 256>}, {pipeline_mode = #tpu.pipeline_mode<synchronous>, transform_indices = @transform_2, window_bounds = array<i64: 1, 256>}, {pipeline_mode = #tpu.pipeline_mode<synchronous>, transform_indices = @transform_3, window_bounds = array<i64: 72, 256>}]} {
    %c0 = arith.constant 0 : index
    %c0_0 = arith.constant 0 : index
    %0 = vector.load %arg1[%c0, %c0_0] : memref<288x1152xf32, #tpu.memory_space<vmem>>, vector<288x1152xf32>
    %c0_1 = arith.constant 0 : index
    %c0_2 = arith.constant 0 : index
    %1 = vector.load %arg2[%c0_1, %c0_2] : memref<1152x256xf32, #tpu.memory_space<vmem>>, vector<1152x256xf32>
    %cst = arith.constant dense<0.000000e+00> : vector<288x256xf32>
    %2 = tpu.matmul %0, %1, %cst {dimension_numbers = #tpu.dot_dimension_numbers<[1], [0], [0], [1], [0, 0, 1, 1], [], []>} : vector<288x1152xf32>, vector<1152x256xf32>, vector<288x256xf32> -> vector<288x256xf32>
    %3 = vector.extract_strided_slice %2 {offsets = [0, 0], sizes = [72, 256], strides = [1, 1]} : vector<288x256xf32> to vector<72x256xf32>
    %4 = vector.extract_strided_slice %2 {offsets = [72, 0], sizes = [72, 256], strides = [1, 1]} : vector<288x256xf32> to vector<72x256xf32>
    %5 = arith.maximumf %3, %4 : vector<72x256xf32>
    %6 = vector.extract_strided_slice %2 {offsets = [144, 0], sizes = [72, 256], strides = [1, 1]} : vector<288x256xf32> to vector<72x256xf32>
    %7 = vector.extract_strided_slice %2 {offsets = [216, 0], sizes = [72, 256], strides = [1, 1]} : vector<288x256xf32> to vector<72x256xf32>
    %8 = arith.maximumf %6, %7 : vector<72x256xf32>
    %9 = arith.maximumf %5, %8 : vector<72x256xf32>
    %c0_3 = arith.constant 0 : index
    %c0_4 = arith.constant 0 : index
    %10 = vector.load %arg3[%c0_3, %c0_4] : memref<1x256xf32, #tpu.memory_space<vmem>>, vector<1x256xf32>
    %11 = vector.broadcast %10 : vector<1x256xf32> to vector<72x256xf32>
    %12 = arith.addf %9, %11 : vector<72x256xf32>
    %cst_5 = arith.constant 0.000000e+00 : f32
    %13 = vector.broadcast %cst_5 : f32 to vector<72x256xf32>
    %14 = arith.maximumf %12, %13 : vector<72x256xf32>
    %c0_6 = arith.constant 0 : index
    %c0_7 = arith.constant 0 : index
    %15 = vector.load %arg4[%c0_6, %c0_7] : memref<72x256xf32, #tpu.memory_space<vmem>>, vector<72x256xf32>
    tpu.vector_store %arg4[%c0_6, %c0_7], %14 {strides = array<i32>} : memref<72x256xf32, #tpu.memory_space<vmem>>, vector<72x256xf32>,
    return
  }
  func.func @transform_0(%arg0: i32) -> (i32, i32) {
    %c0_i32 = arith.constant 0 : i32
    %c0_i32_0 = arith.constant 0 : i32
    %c0_i32_1 = arith.constant 0 : i32
    return %c0_i32, %c0_i32_0 : i32, i32
  }
  func.func @transform_1(%arg0: i32) -> (i32, i32) {
    %c0_i32 = arith.constant 0 : i32
    %c0_i32_0 = arith.constant 0 : i32
    %c0_i32_1 = arith.constant 0 : i32
    return %c0_i32, %c0_i32_0 : i32, i32
  }
  func.func @transform_2(%arg0: i32) -> (i32, i32) {
    %c0_i32 = arith.constant 0 : i32
    %c0_i32_0 = arith.constant 0 : i32
    %c0_i32_1 = arith.constant 0 : i32
    return %c0_i32, %c0_i32_0 : i32, i32
  }
  func.func @transform_3(%arg0: i32) -> (i32, i32) {
    %c0_i32 = arith.constant 0 : i32
    %c0_i32_0 = arith.constant 0 : i32
    %c0_i32_1 = arith.constant 0 : i32
    return %c0_i32, %c0_i32_0 : i32, i32
  }
}

</mosaic_0001>

<llo_original>
// kernel: mnist_network_forward.4
$region0: #{mnist_network_forward.4}
  #allocation0 [shape = 'u32[]', space=smem, size = 0x4, offset = 0x4, fixed_abs, tag = 'smem constant byte address 0x4 - core index']
  #allocation1 [shape = 'u32[72,128]{1,0:T(1,128)}', space=vmem, size = 0x9000, scoped, tag = 'internal scratch']
  %s0 = inlined_call_operand.vmem [shape: f32[1568,9], index: 0, kind: input, shape index: {}]
  %s1 = inlined_call_operand.vmem [shape: f32[9,128], index: 1, kind: input, shape index: {}]
  %s2 = inlined_call_operand.vmem [shape: f32[1,128], index: 2, kind: input, shape index: {}]
  %s3 = inlined_call_operand.vmem [shape: f32[392,128], index: 3, kind: output, shape index: {}]
  %s4 = sld [smem:[#allocation0]]
  $region22: #{mnist_network_forward.4} parent=0
    _
  %s6 = ssub.s32 1, %s4
  %s7 = scalar_select 0, %s6, %s4
  // Predicated region
  $region2: #{mnist_network_forward.4} parent=0 // pred_check
    _
  $region3: #{mnist_network_forward.4} parent=0 // pred_check_branch
    %9 = sbr.rel (0) target = $region5
  $region4: #{mnist_network_forward.4} parent=0 // pred_region
    _
  $region5: #{mnist_network_forward.4} parent=0 // pred_fallthru
    _
  // Predicated region
  $region6: #{mnist_network_forward.4} parent=0 // pred_check
    _
  $region7: #{mnist_network_forward.4} parent=0 // pred_check_branch
    %11 = sbr.rel (0) target = $region9
  $region8: #{mnist_network_forward.4} parent=0 // pred_region
    _
  $region9: #{mnist_network_forward.4} parent=0 // pred_fallthru
    _
  // Predicated region
  $region10: #{mnist_network_forward.4} parent=0 // pred_check
    _
  $region11: #{mnist_network_forward.4} parent=0 // pred_check_branch
    %13 = sbr.rel (0) target = $region13
  $region12: #{mnist_network_forward.4} parent=0 // pred_region
    _
  $region13: #{mnist_network_forward.4} parent=0 // pred_fallthru
    _
  %v14 = vld [vmem:[%s0] sm:$0xff]
  %v15 = vld [vmem:[%s0 + $0x8] sm:$0xff]
  %v16 = vld [vmem:[%s0 + $0x10] sm:$0xff]
  %v17 = vld [vmem:[%s0 + $0x18] sm:$0xff]
  %v18 = vld [vmem:[%s0 + $0x20] sm:$0xff]
  %v19 = vld [vmem:[%s0 + $0x28] sm:$0xff]
  %v20 = vld [vmem:[%s0 + $0x30] sm:$0xff]
  %v21 = vld [vmem:[%s0 + $0x38] sm:$0xff]
  %v22 = vld [vmem:[%s0 + $0x40] sm:$0xff]
  %v23 = vld [vmem:[%s0 + $0x48] sm:$0xff]
  %v24 = vld [vmem:[%s0 + $0x50] sm:$0xff]
  %v25 = vld [vmem:[%s0 + $0x58] sm:$0xff]
  %v26 = vld [vmem:[%s0 + $0x60] sm:$0xff]
  %v27 = vld [vmem:[%s0 + $0x68] sm:$0xff]
  %v28 = vld [vmem:[%s0 + $0x70] sm:$0xff]
  %v29 = vld [vmem:[%s0 + $0x78] sm:$0xff]
  %v30 = vld [vmem:[%s0 + $0x80] sm:$0xff]
  %v31 = vld [vmem:[%s0 + $0x88] sm:$0xff]
  %v32 = vld [vmem:[%s0 + $0x90] sm:$0xff]
  %v33 = vld [vmem:[%s0 + $0x98] sm:$0xff]
  %v34 = vld [vmem:[%s0 + $0xa0] sm:$0xff]
  %v35 = vld [vmem:[%s0 + $0xa8] sm:$0xff]
  %v36 = vld [vmem:[%s0 + $0xb0] sm:$0xff]
  %v37 = vld [vmem:[%s0 + $0xb8] sm:$0xff]
  %v38 = vld [vmem:[%s0 + $0xc0] sm:$0xff]
  %v39 = vld [vmem:[%s0 + $0xc8] sm:$0xff]
  %v40 = vld [vmem:[%s0 + $0xd0] sm:$0xff]
  %v41 = vld [vmem:[%s0 + $0xd8] sm:$0xff]
  %v42 = vld [vmem:[%s0 + $0xe0] sm:$0xff]
  %v43 = vld [vmem:[%s0 + $0xe8] sm:$0xff]
  %v44 = vld [vmem:[%s0 + $0xf0] sm:$0xff]
  %v45 = vld [vmem:[%s0 + $0xf8] sm:$0xff]
  %v46 = vld [vmem:[%s0 + $0x100] sm:$0xff]
  %v47 = vld [vmem:[%s0 + $0x108] sm:$0xff]
  %v48 = vld [vmem:[%s0 + $0x110] sm:$0xff]
  %v49 = vld [vmem:[%s0 + $0x118] sm:$0xff]
  %v50 = vld [vmem:[%s0 + $0x120] sm:$0xff]
  %v51 = vld [vmem:[%s0 + $0x128] sm:$0xff]
  %v52 = vld [vmem:[%s0 + $0x130] sm:$0xff]
  %v53 = vld [vmem:[%s0 + $0x138] sm:$0xff]
  %v54 = vld [vmem:[%s0 + $0x140] sm:$0xff]
  %v55 = vld [vmem:[%s0 + $0x148] sm:$0xff]
  %v56 = vld [vmem:[%s0 + $0x150] sm:$0xff]
  %v57 = vld [vmem:[%s0 + $0x158] sm:$0xff]
  %v58 = vld [vmem:[%s0 + $0x160] sm:$0xff]
  %v59 = vld [vmem:[%s0 + $0x168] sm:$0xff]
  %v60 = vld [vmem:[%s0 + $0x170] sm:$0xff]
  %v61 = vld [vmem:[%s0 + $0x178] sm:$0xff]
  %v62 = vld [vmem:[%s0 + $0x180] sm:$0xff]
  %v63 = vld [vmem:[%s0 + $0x188] sm:$0xff]
  %v64 = vld [vmem:[%s0 + $0x190] sm:$0xff]
  %v65 = vld [vmem:[%s0 + $0x198] sm:$0xff]
  %v66 = vld [vmem:[%s0 + $0x1a0] sm:$0xff]
  %v67 = vld [vmem:[%s0 + $0x1a8] sm:$0xff]
  %v68 = vld [vmem:[%s0 + $0x1b0] sm:$0xff]
  %v69 = vld [vmem:[%s0 + $0x1b8] sm:$0xff]
  %v70 = vld [vmem:[%s0 + $0x1c0] sm:$0xff]
  %v71 = vld [vmem:[%s0 + $0x1c8] sm:$0xff]
  %v72 = vld [vmem:[%s0 + $0x1d0] sm:$0xff]
  %v73 = vld [vmem:[%s0 + $0x1d8] sm:$0xff]
  %v74 = vld [vmem:[%s0 + $0x1e0] sm:$0xff]
  %v75 = vld [vmem:[%s0 + $0x1e8] sm:$0xff]
  %v76 = vld [vmem:[%s0 + $0x1f0] sm:$0xff]
  %v77 = vld [vmem:[%s0 + $0x1f8] sm:$0xff]
  %v78 = vld [vmem:[%s0 + $0x200] sm:$0xff]
  %v79 = vld [vmem:[%s0 + $0x208] sm:$0xff]
  %v80 = vld [vmem:[%s0 + $0x210] sm:$0xff]
  %v81 = vld [vmem:[%s0 + $0x218] sm:$0xff]
  %v82 = vld [vmem:[%s0 + $0x220] sm:$0xff]
  %v83 = vld [vmem:[%s0 + $0x228] sm:$0xff]
  %v84 = vld [vmem:[%s0 + $0x230] sm:$0xff]
  %v85 = vld [vmem:[%s0 + $0x238] sm:$0xff]
  %v86 = vld [vmem:[%s0 + $0x240] sm:$0xff]
  %v87 = vld [vmem:[%s0 + $0x248] sm:$0xff]
  %v88 = vld [vmem:[%s0 + $0x250] sm:$0xff]
  %v89 = vld [vmem:[%s0 + $0x258] sm:$0xff]
  %v90 = vld [vmem:[%s0 + $0x260] sm:$0xff]
  %v91 = vld [vmem:[%s0 + $0x268] sm:$0xff]
  %v92 = vld [vmem:[%s0 + $0x270] sm:$0xff]
  %v93 = vld [vmem:[%s0 + $0x278] sm:$0xff]
  %v94 = vld [vmem:[%s0 + $0x280] sm:$0xff]
  %v95 = vld [vmem:[%s0 + $0x288] sm:$0xff]
  %v96 = vld [vmem:[%s0 + $0x290] sm:$0xff]
  %v97 = vld [vmem:[%s0 + $0x298] sm:$0xff]
  %v98 = vld [vmem:[%s0 + $0x2a0] sm:$0xff]
  %v99 = vld [vmem:[%s0 + $0x2a8] sm:$0xff]
  %v100 = vld [vmem:[%s0 + $0x2b0] sm:$0xff]
  %v101 = vld [vmem:[%s0 + $0x2b8] sm:$0xff]
  %v102 = vld [vmem:[%s0 + $0x2c0] sm:$0xff]
  %v103 = vld [vmem:[%s0 + $0x2c8] sm:$0xff]
  %v104 = vld [vmem:[%s0 + $0x2d0] sm:$0xff]
  %v105 = vld [vmem:[%s0 + $0x2d8] sm:$0xff]
  %v106 = vld [vmem:[%s0 + $0x2e0] sm:$0xff]
  %v107 = vld [vmem:[%s0 + $0x2e8] sm:$0xff]
  %v108 = vld [vmem:[%s0 + $0x2f0] sm:$0xff]
  %v109 = vld [vmem:[%s0 + $0x2f8] sm:$0xff]
  %v110 = vld [vmem:[%s0 + $0x300] sm:$0xff]
  %v111 = vld [vmem:[%s0 + $0x308] sm:$0xff]
  %v112 = vld [vmem:[%s0 + $0x310] sm:$0xff]
  %v113 = vld [vmem:[%s0 + $0x318] sm:$0xff]
  %v114 = vld [vmem:[%s0 + $0x320] sm:$0xff]
  %v115 = vld [vmem:[%s0 + $0x328] sm:$0xff]
  %v116 = vld [vmem:[%s0 + $0x330] sm:$0xff]
  %v117 = vld [vmem:[%s0 + $0x338] sm:$0xff]
  %v118 = vld [vmem:[%s0 + $0x340] sm:$0xff]
  %v119 = vld [vmem:[%s0 + $0x348] sm:$0xff]
  %v120 = vld [vmem:[%s0 + $0x350] sm:$0xff]
  %v121 = vld [vmem:[%s0 + $0x358] sm:$0xff]
  %v122 = vld [vmem:[%s0 + $0x360] sm:$0xff]
  %v123 = vld [vmem:[%s0 + $0x368] sm:$0xff]
  %v124 = vld [vmem:[%s0 + $0x370] sm:$0xff]
  %v125 = vld [vmem:[%s0 + $0x378] sm:$0xff]
  %v126 = vld [vmem:[%s0 + $0x380] sm:$0xff]
  %v127 = vld [vmem:[%s0 + $0x388] sm:$0xff]
  %v128 = vld [vmem:[%s0 + $0x390] sm:$0xff]
  %v129 = vld [vmem:[%s0 + $0x398] sm:$0xff]
  %v130 = vld [vmem:[%s0 + $0x3a0] sm:$0xff]
  %v131 = vld [vmem:[%s0 + $0x3a8] sm:$0xff]
  %v132 = vld [vmem:[%s0 + $0x3b0] sm:$0xff]
  %v133 = vld [vmem:[%s0 + $0x3b8] sm:$0xff]
  %v134 = vld [vmem:[%s0 + $0x3c0] sm:$0xff]
  %v135 = vld [vmem:[%s0 + $0x3c8] sm:$0xff]
  %v136 = vld [vmem:[%s0 + $0x3d0] sm:$0xff]
  %v137 = vld [vmem:[%s0 + $0x3d8] sm:$0xff]
  %v138 = vld [vmem:[%s0 + $0x3e0] sm:$0xff]
  %v139 = vld [vmem:[%s0 + $0x3e8] sm:$0xff]
  %v140 = vld [vmem:[%s0 + $0x3f0] sm:$0xff]
  %v141 = vld [vmem:[%s0 + $0x3f8] sm:$0xff]
  %v142 = vld [vmem:[%s0 + $0x400] sm:$0xff]
  %v143 = vld [vmem:[%s0 + $0x408] sm:$0xff]
  %v144 = vld [vmem:[%s0 + $0x410] sm:$0xff]
  %v145 = vld [vmem:[%s0 + $0x418] sm:$0xff]
  %v146 = vld [vmem:[%s0 + $0x420] sm:$0xff]
  %v147 = vld [vmem:[%s0 + $0x428] sm:$0xff]
  %v148 = vld [vmem:[%s0 + $0x430] sm:$0xff]
  %v149 = vld [vmem:[%s0 + $0x438] sm:$0xff]
  %v150 = vld [vmem:[%s0 + $0x440] sm:$0xff]
  %v151 = vld [vmem:[%s0 + $0x448] sm:$0xff]
  %v152 = vld [vmem:[%s0 + $0x450] sm:$0xff]
  %v153 = vld [vmem:[%s0 + $0x458] sm:$0xff]
  %v154 = vld [vmem:[%s0 + $0x460] sm:$0xff]
  %v155 = vld [vmem:[%s0 + $0x468] sm:$0xff]
  %v156 = vld [vmem:[%s0 + $0x470] sm:$0xff]
  %v157 = vld [vmem:[%s0 + $0x478] sm:$0xff]
  %v158 = vld [vmem:[%s0 + $0x480] sm:$0xff]
  %v159 = vld [vmem:[%s0 + $0x488] sm:$0xff]
  %v160 = vld [vmem:[%s0 + $0x490] sm:$0xff]
  %v161 = vld [vmem:[%s0 + $0x498] sm:$0xff]
  %v162 = vld [vmem:[%s0 + $0x4a0] sm:$0xff]
  %v163 = vld [vmem:[%s0 + $0x4a8] sm:$0xff]
  %v164 = vld [vmem:[%s0 + $0x4b0] sm:$0xff]
  %v165 = vld [vmem:[%s0 + $0x4b8] sm:$0xff]
  %v166 = vld [vmem:[%s0 + $0x4c0] sm:$0xff]
  %v167 = vld [vmem:[%s0 + $0x4c8] sm:$0xff]
  %v168 = vld [vmem:[%s0 + $0x4d0] sm:$0xff]
  %v169 = vld [vmem:[%s0 + $0x4d8] sm:$0xff]
  %v170 = vld [vmem:[%s0 + $0x4e0] sm:$0xff]
  %v171 = vld [vmem:[%s0 + $0x4e8] sm:$0xff]
  %v172 = vld [vmem:[%s0 + $0x4f0] sm:$0xff]
  %v173 = vld [vmem:[%s0 + $0x4f8] sm:$0xff]
  %v174 = vld [vmem:[%s0 + $0x500] sm:$0xff]
  %v175 = vld [vmem:[%s0 + $0x508] sm:$0xff]
  %v176 = vld [vmem:[%s0 + $0x510] sm:$0xff]
  %v177 = vld [vmem:[%s0 + $0x518] sm:$0xff]
  %v178 = vld [vmem:[%s0 + $0x520] sm:$0xff]
  %v179 = vld [vmem:[%s0 + $0x528] sm:$0xff]
  %v180 = vld [vmem:[%s0 + $0x530] sm:$0xff]
  %v181 = vld [vmem:[%s0 + $0x538] sm:$0xff]
  %v182 = vld [vmem:[%s0 + $0x540] sm:$0xff]
  %v183 = vld [vmem:[%s0 + $0x548] sm:$0xff]
  %v184 = vld [vmem:[%s0 + $0x550] sm:$0xff]
  %v185 = vld [vmem:[%s0 + $0x558] sm:$0xff]
  %v186 = vld [vmem:[%s0 + $0x560] sm:$0xff]
  %v187 = vld [vmem:[%s0 + $0x568] sm:$0xff]
  %v188 = vld [vmem:[%s0 + $0x570] sm:$0xff]
  %v189 = vld [vmem:[%s0 + $0x578] sm:$0xff]
  %v190 = vld [vmem:[%s0 + $0x580] sm:$0xff]
  %v191 = vld [vmem:[%s0 + $0x588] sm:$0xff]
  %v192 = vld [vmem:[%s0 + $0x590] sm:$0xff]
  %v193 = vld [vmem:[%s0 + $0x598] sm:$0xff]
  %v194 = vld [vmem:[%s0 + $0x5a0] sm:$0xff]
  %v195 = vld [vmem:[%s0 + $0x5a8] sm:$0xff]
  %v196 = vld [vmem:[%s0 + $0x5b0] sm:$0xff]
  %v197 = vld [vmem:[%s0 + $0x5b8] sm:$0xff]
  %v198 = vld [vmem:[%s0 + $0x5c0] sm:$0xff]
  %v199 = vld [vmem:[%s0 + $0x5c8] sm:$0xff]
  %v200 = vld [vmem:[%s0 + $0x5d0] sm:$0xff]
  %v201 = vld [vmem:[%s0 + $0x5d8] sm:$0xff]
  %v202 = vld [vmem:[%s0 + $0x5e0] sm:$0xff]
  %v203 = vld [vmem:[%s0 + $0x5e8] sm:$0xff]
  %v204 = vld [vmem:[%s0 + $0x5f0] sm:$0xff]
  %v205 = vld [vmem:[%s0 + $0x5f8] sm:$0xff]
  %v206 = vld [vmem:[%s0 + $0x600] sm:$0xff]
  %v207 = vld [vmem:[%s0 + $0x608] sm:$0xff]
  %v208 = vld [vmem:[%s0 + $0x610] sm:$0xff]
  %v209 = vld [vmem:[%s0 + $0x618] sm:$0xff]
  %v210 = vld [vmem:[%s1] sm:$0xff]
  %v211 = vld [vmem:[%s1 + $0x8] sm:$0x1]
  %vm212 = vcmask 72704
  %v214 = vsel %vm212, %v14, 0
  %v217 = vsel %vm212, %v15, 0
  %v220 = vsel %vm212, %v16, 0
  %v223 = vsel %vm212, %v17, 0
  %v226 = vsel %vm212, %v18, 0
  %v229 = vsel %vm212, %v19, 0
  %v232 = vsel %vm212, %v20, 0
  %v235 = vsel %vm212, %v21, 0
  %v238 = vsel %vm212, %v22, 0
  %v241 = vsel %vm212, %v23, 0
  %v244 = vsel %vm212, %v24, 0
  %v247 = vsel %vm212, %v25, 0
  %v250 = vsel %vm212, %v26, 0
  %v253 = vsel %vm212, %v27, 0
  %v256 = vsel %vm212, %v28, 0
  %v259 = vsel %vm212, %v29, 0
  %v262 = vsel %vm212, %v30, 0
  %v265 = vsel %vm212, %v31, 0
  %v268 = vsel %vm212, %v32, 0
  %v271 = vsel %vm212, %v33, 0
  %v274 = vsel %vm212, %v34, 0
  %v277 = vsel %vm212, %v35, 0
  %v280 = vsel %vm212, %v36, 0
  %v283 = vsel %vm212, %v37, 0
  %v286 = vsel %vm212, %v38, 0
  %v289 = vsel %vm212, %v39, 0
  %v292 = vsel %vm212, %v40, 0
  %v295 = vsel %vm212, %v41, 0
  %v298 = vsel %vm212, %v42, 0
  %v301 = vsel %vm212, %v43, 0
  %v304 = vsel %vm212, %v44, 0
  %v307 = vsel %vm212, %v45, 0
  %v310 = vsel %vm212, %v46, 0
  %v313 = vsel %vm212, %v47, 0
  %v316 = vsel %vm212, %v48, 0
  %v319 = vsel %vm212, %v49, 0
  %v322 = vsel %vm212, %v50, 0
  %v325 = vsel %vm212, %v51, 0
  %v328 = vsel %vm212, %v52, 0
  %v331 = vsel %vm212, %v53, 0
  %v334 = vsel %vm212, %v54, 0
  %v337 = vsel %vm212, %v55, 0
  %v340 = vsel %vm212, %v56, 0
  %v343 = vsel %vm212, %v57, 0
  %v346 = vsel %vm212, %v58, 0
  %v349 = vsel %vm212, %v59, 0
  %v352 = vsel %vm212, %v60, 0
  %v355 = vsel %vm212, %v61, 0
  %v358 = vsel %vm212, %v62, 0
  %v361 = vsel %vm212, %v63, 0
  %v364 = vsel %vm212, %v64, 0
  %v367 = vsel %vm212, %v65, 0
  %v370 = vsel %vm212, %v66, 0
  %v373 = vsel %vm212, %v67, 0
  %v376 = vsel %vm212, %v68, 0
  %v379 = vsel %vm212, %v69, 0
  %v382 = vsel %vm212, %v70, 0
  %v385 = vsel %vm212, %v71, 0
  %v388 = vsel %vm212, %v72, 0
  %v391 = vsel %vm212, %v73, 0
  %v394 = vsel %vm212, %v74, 0
  %v397 = vsel %vm212, %v75, 0
  %v400 = vsel %vm212, %v76, 0
  %v403 = vsel %vm212, %v77, 0
  %v406 = vsel %vm212, %v78, 0
  %v409 = vsel %vm212, %v79, 0
  %v412 = vsel %vm212, %v80, 0
  %v415 = vsel %vm212, %v81, 0
  %v418 = vsel %vm212, %v82, 0
  %v421 = vsel %vm212, %v83, 0
  %v424 = vsel %vm212, %v84, 0
  %v427 = vsel %vm212, %v85, 0
  %v430 = vsel %vm212, %v86, 0
  %v433 = vsel %vm212, %v87, 0
  %v436 = vsel %vm212, %v88, 0
  %v439 = vsel %vm212, %v89, 0
  %v442 = vsel %vm212, %v90, 0
  %v445 = vsel %vm212, %v91, 0
  %v448 = vsel %vm212, %v92, 0
  %v451 = vsel %vm212, %v93, 0
  %v454 = vsel %vm212, %v94, 0
  %v457 = vsel %vm212, %v95, 0
  %v460 = vsel %vm212, %v96, 0
  %v463 = vsel %vm212, %v97, 0
  %v466 = vsel %vm212, %v98, 0
  %v469 = vsel %vm212, %v99, 0
  %v472 = vsel %vm212, %v100, 0
  %v475 = vsel %vm212, %v101, 0
  %v478 = vsel %vm212, %v102, 0
  %v481 = vsel %vm212, %v103, 0
  %v484 = vsel %vm212, %v104, 0
  %v487 = vsel %vm212, %v105, 0
  %v490 = vsel %vm212, %v106, 0
  %v493 = vsel %vm212, %v107, 0
  %v496 = vsel %vm212, %v108, 0
  %v499 = vsel %vm212, %v109, 0
  %v502 = vsel %vm212, %v110, 0
  %v505 = vsel %vm212, %v111, 0
  %v508 = vsel %vm212, %v112, 0
  %v511 = vsel %vm212, %v113, 0
  %v514 = vsel %vm212, %v114, 0
  %v517 = vsel %vm212, %v115, 0
  %v520 = vsel %vm212, %v116, 0
  %v523 = vsel %vm212, %v117, 0
  %v526 = vsel %vm212, %v118, 0
  %v529 = vsel %vm212, %v119, 0
  %v532 = vsel %vm212, %v120, 0
  %v535 = vsel %vm212, %v121, 0
  %v538 = vsel %vm212, %v122, 0
  %v541 = vsel %vm212, %v123, 0
  %v544 = vsel %vm212, %v124, 0
  %v547 = vsel %vm212, %v125, 0
  %v550 = vsel %vm212, %v126, 0
  %v553 = vsel %vm212, %v127, 0
  %v556 = vsel %vm212, %v128, 0
  %v559 = vsel %vm212, %v129, 0
  %v562 = vsel %vm212, %v130, 0
  %v565 = vsel %vm212, %v131, 0
  %v568 = vsel %vm212, %v132, 0
  %v571 = vsel %vm212, %v133, 0
  %v574 = vsel %vm212, %v134, 0
  %v577 = vsel %vm212, %v135, 0
  %v580 = vsel %vm212, %v136, 0
  %v583 = vsel %vm212, %v137, 0
  %v586 = vsel %vm212, %v138, 0
  %v589 = vsel %vm212, %v139, 0
  %v592 = vsel %vm212, %v140, 0
  %v595 = vsel %vm212, %v141, 0
  %v598 = vsel %vm212, %v142, 0
  %v601 = vsel %vm212, %v143, 0
  %v604 = vsel %vm212, %v144, 0
  %v607 = vsel %vm212, %v145, 0
  %v610 = vsel %vm212, %v146, 0
  %v613 = vsel %vm212, %v147, 0
  %v616 = vsel %vm212, %v148, 0
  %v619 = vsel %vm212, %v149, 0
  %v622 = vsel %vm212, %v150, 0
  %v625 = vsel %vm212, %v151, 0
  %v628 = vsel %vm212, %v152, 0
  %v631 = vsel %vm212, %v153, 0
  %v634 = vsel %vm212, %v154, 0
  %v637 = vsel %vm212, %v155, 0
  %v640 = vsel %vm212, %v156, 0
  %v643 = vsel %vm212, %v157, 0
  %v646 = vsel %vm212, %v158, 0
  %v649 = vsel %vm212, %v159, 0
  %v652 = vsel %vm212, %v160, 0
  %v655 = vsel %vm212, %v161, 0
  %v658 = vsel %vm212, %v162, 0
  %v661 = vsel %vm212, %v163, 0
  %v664 = vsel %vm212, %v164, 0
  %v667 = vsel %vm212, %v165, 0
  %v670 = vsel %vm212, %v166, 0
  %v673 = vsel %vm212, %v167, 0
  %v676 = vsel %vm212, %v168, 0
  %v679 = vsel %vm212, %v169, 0
  %v682 = vsel %vm212, %v170, 0
  %v685 = vsel %vm212, %v171, 0
  %v688 = vsel %vm212, %v172, 0
  %v691 = vsel %vm212, %v173, 0
  %v694 = vsel %vm212, %v174, 0
  %v697 = vsel %vm212, %v175, 0
  %v700 = vsel %vm212, %v176, 0
  %v703 = vsel %vm212, %v177, 0
  %v706 = vsel %vm212, %v178, 0
  %v709 = vsel %vm212, %v179, 0
  %v712 = vsel %vm212, %v180, 0
  %v715 = vsel %vm212, %v181, 0
  %v718 = vsel %vm212, %v182, 0
  %v721 = vsel %vm212, %v183, 0
  %v724 = vsel %vm212, %v184, 0
  %v727 = vsel %vm212, %v185, 0
  %v730 = vsel %vm212, %v186, 0
  %v733 = vsel %vm212, %v187, 0
  %v736 = vsel %vm212, %v188, 0
  %v739 = vsel %vm212, %v189, 0
  %v742 = vsel %vm212, %v190, 0
  %v745 = vsel %vm212, %v191, 0
  %v748 = vsel %vm212, %v192, 0
  %v751 = vsel %vm212, %v193, 0
  %v754 = vsel %vm212, %v194, 0
  %v757 = vsel %vm212, %v195, 0
  %v760 = vsel %vm212, %v196, 0
  %v763 = vsel %vm212, %v197, 0
  %v766 = vsel %vm212, %v198, 0
  %v769 = vsel %vm212, %v199, 0
  %v772 = vsel %vm212, %v200, 0
  %v775 = vsel %vm212, %v201, 0
  %v778 = vsel %vm212, %v202, 0
  %v781 = vsel %vm212, %v203, 0
  %v784 = vsel %vm212, %v204, 0
  %v787 = vsel %vm212, %v205, 0
  %v790 = vsel %vm212, %v206, 0
  %v793 = vsel %vm212, %v207, 0
  %v796 = vsel %vm212, %v208, 0
  %v799 = vsel %vm212, %v209, 0
  %vm801 = vcmask 1040384
  %v803 = vsel %vm801, %v211, 0
  %805 = vmatpush.msra.mxu0 0.0
  %806 = vmatpush.msra.mxu0 0.0
  %807 = vmatpush.msra.mxu0 0.0
  %808 = vmatpush.msra.mxu0 0.0
  %809 = vmatpush.msra.mxu0 0.0
  %810 = vmatpush.msra.mxu0 0.0
  %811 = vmatpush.msra.mxu0 0.0
  %812 = vmatpush.msra.mxu0 0.0
  %813 = vmatpush.msra.mxu0 0.0
  %814 = vmatpush.msra.mxu0 0.0
  %815 = vmatpush.msra.mxu0 0.0
  %816 = vmatpush.msra.mxu0 0.0
  %817 = vmatpush.msra.mxu0 0.0
  %818 = vmatpush.msra.mxu0 0.0
  %819 = vmatpush.msra.mxu0 %v803
  %820 = vmatpush.msra.mxu0 %v210
  %821 = vmatmul.f32.gmra.mxu0 %v214
  %v822 = vpop.f32.mrf.mxu0
  %v823 = vadd.f32 0.0, %v822
  %824 = vmatmul.f32.gmra.mxu0 %v217
  %v825 = vpop.f32.mrf.mxu0
  %v826 = vadd.f32 0.0, %v825
  %827 = vmatmul.f32.gmra.mxu0 %v220
  %v828 = vpop.f32.mrf.mxu0
  %v829 = vadd.f32 0.0, %v828
  %830 = vmatmul.f32.gmra.mxu0 %v223
  %v831 = vpop.f32.mrf.mxu0
  %v832 = vadd.f32 0.0, %v831
  %833 = vmatmul.f32.gmra.mxu0 %v226
  %v834 = vpop.f32.mrf.mxu0
  %v835 = vadd.f32 0.0, %v834
  %836 = vmatmul.f32.gmra.mxu0 %v229
  %v837 = vpop.f32.mrf.mxu0
  %v838 = vadd.f32 0.0, %v837
  %839 = vmatmul.f32.gmra.mxu0 %v232
  %v840 = vpop.f32.mrf.mxu0
  %v841 = vadd.f32 0.0, %v840
  %842 = vmatmul.f32.gmra.mxu0 %v235
  %v843 = vpop.f32.mrf.mxu0
  %v844 = vadd.f32 0.0, %v843
  %845 = vmatmul.f32.gmra.mxu0 %v238
  %v846 = vpop.f32.mrf.mxu0
  %v847 = vadd.f32 0.0, %v846
  %848 = vmatmul.f32.gmra.mxu0 %v241
  %v849 = vpop.f32.mrf.mxu0
  %v850 = vadd.f32 0.0, %v849
  %851 = vmatmul.f32.gmra.mxu0 %v244
  %v852 = vpop.f32.mrf.mxu0
  %v853 = vadd.f32 0.0, %v852
  %854 = vmatmul.f32.gmra.mxu0 %v247
  %v855 = vpop.f32.mrf.mxu0
  %v856 = vadd.f32 0.0, %v855
  %857 = vmatmul.f32.gmra.mxu0 %v250
  %v858 = vpop.f32.mrf.mxu0
  %v859 = vadd.f32 0.0, %v858
  %860 = vmatmul.f32.gmra.mxu0 %v253
  %v861 = vpop.f32.mrf.mxu0
  %v862 = vadd.f32 0.0, %v861
  %863 = vmatmul.f32.gmra.mxu0 %v256
  %v864 = vpop.f32.mrf.mxu0
  %v865 = vadd.f32 0.0, %v864
  %866 = vmatmul.f32.gmra.mxu0 %v259
  %v867 = vpop.f32.mrf.mxu0
  %v868 = vadd.f32 0.0, %v867
  %869 = vmatmul.f32.gmra.mxu0 %v262
  %v870 = vpop.f32.mrf.mxu0
  %v871 = vadd.f32 0.0, %v870
  %872 = vmatmul.f32.gmra.mxu0 %v265
  %v873 = vpop.f32.mrf.mxu0
  %v874 = vadd.f32 0.0, %v873
  %875 = vmatmul.f32.gmra.mxu0 %v268
  %v876 = vpop.f32.mrf.mxu0
  %v877 = vadd.f32 0.0, %v876
  %878 = vmatmul.f32.gmra.mxu0 %v271
  %v879 = vpop.f32.mrf.mxu0
  %v880 = vadd.f32 0.0, %v879
  %881 = vmatmul.f32.gmra.mxu0 %v274
  %v882 = vpop.f32.mrf.mxu0
  %v883 = vadd.f32 0.0, %v882
  %884 = vmatmul.f32.gmra.mxu0 %v277
  %v885 = vpop.f32.mrf.mxu0
  %v886 = vadd.f32 0.0, %v885
  %887 = vmatmul.f32.gmra.mxu0 %v280
  %v888 = vpop.f32.mrf.mxu0
  %v889 = vadd.f32 0.0, %v888
  %890 = vmatmul.f32.gmra.mxu0 %v283
  %v891 = vpop.f32.mrf.mxu0
  %v892 = vadd.f32 0.0, %v891
  %893 = vmatmul.f32.gmra.mxu0 %v286
  %v894 = vpop.f32.mrf.mxu0
  %v895 = vadd.f32 0.0, %v894
  %896 = vmatmul.f32.gmra.mxu0 %v289
  %v897 = vpop.f32.mrf.mxu0
  %v898 = vadd.f32 0.0, %v897
  %899 = vmatmul.f32.gmra.mxu0 %v292
  %v900 = vpop.f32.mrf.mxu0
  %v901 = vadd.f32 0.0, %v900
  %902 = vmatmul.f32.gmra.mxu0 %v295
  %v903 = vpop.f32.mrf.mxu0
  %v904 = vadd.f32 0.0, %v903
  %905 = vmatmul.f32.gmra.mxu0 %v298
  %v906 = vpop.f32.mrf.mxu0
  %v907 = vadd.f32 0.0, %v906
  %908 = vmatmul.f32.gmra.mxu0 %v301
  %v909 = vpop.f32.mrf.mxu0
  %v910 = vadd.f32 0.0, %v909
  %911 = vmatmul.f32.gmra.mxu0 %v304
  %v912 = vpop.f32.mrf.mxu0
  %v913 = vadd.f32 0.0, %v912
  %914 = vmatmul.f32.gmra.mxu0 %v307
  %v915 = vpop.f32.mrf.mxu0
  %v916 = vadd.f32 0.0, %v915
  %917 = vmatmul.f32.gmra.mxu0 %v310
  %v918 = vpop.f32.mrf.mxu0
  %v919 = vadd.f32 0.0, %v918
  %920 = vmatmul.f32.gmra.mxu0 %v313
  %v921 = vpop.f32.mrf.mxu0
  %v922 = vadd.f32 0.0, %v921
  %923 = vmatmul.f32.gmra.mxu0 %v316
  %v924 = vpop.f32.mrf.mxu0
  %v925 = vadd.f32 0.0, %v924
  %926 = vmatmul.f32.gmra.mxu0 %v319
  %v927 = vpop.f32.mrf.mxu0
  %v928 = vadd.f32 0.0, %v927
  %929 = vmatmul.f32.gmra.mxu0 %v322
  %v930 = vpop.f32.mrf.mxu0
  %v931 = vadd.f32 0.0, %v930
  %932 = vmatmul.f32.gmra.mxu0 %v325
  %v933 = vpop.f32.mrf.mxu0
  %v934 = vadd.f32 0.0, %v933
  %935 = vmatmul.f32.gmra.mxu0 %v328
  %v936 = vpop.f32.mrf.mxu0
  %v937 = vadd.f32 0.0, %v936
  %938 = vmatmul.f32.gmra.mxu0 %v331
  %v939 = vpop.f32.mrf.mxu0
  %v940 = vadd.f32 0.0, %v939
  %941 = vmatmul.f32.gmra.mxu0 %v334
  %v942 = vpop.f32.mrf.mxu0
  %v943 = vadd.f32 0.0, %v942
  %944 = vmatmul.f32.gmra.mxu0 %v337
  %v945 = vpop.f32.mrf.mxu0
  %v946 = vadd.f32 0.0, %v945
  %947 = vmatmul.f32.gmra.mxu0 %v340
  %v948 = vpop.f32.mrf.mxu0
  %v949 = vadd.f32 0.0, %v948
  %950 = vmatmul.f32.gmra.mxu0 %v343
  %v951 = vpop.f32.mrf.mxu0
  %v952 = vadd.f32 0.0, %v951
  %953 = vmatmul.f32.gmra.mxu0 %v346
  %v954 = vpop.f32.mrf.mxu0
  %v955 = vadd.f32 0.0, %v954
  %956 = vmatmul.f32.gmra.mxu0 %v349
  %v957 = vpop.f32.mrf.mxu0
  %v958 = vadd.f32 0.0, %v957
  %959 = vmatmul.f32.gmra.mxu0 %v352
  %v960 = vpop.f32.mrf.mxu0
  %v961 = vadd.f32 0.0, %v960
  %962 = vmatmul.f32.gmra.mxu0 %v355
  %v963 = vpop.f32.mrf.mxu0
  %v964 = vadd.f32 0.0, %v963
  %965 = vmatmul.f32.gmra.mxu0 %v358
  %v966 = vpop.f32.mrf.mxu0
  %v967 = vadd.f32 0.0, %v966
  %968 = vmatmul.f32.gmra.mxu0 %v361
  %v969 = vpop.f32.mrf.mxu0
  %v970 = vadd.f32 0.0, %v969
  %971 = vmatmul.f32.gmra.mxu0 %v364
  %v972 = vpop.f32.mrf.mxu0
  %v973 = vadd.f32 0.0, %v972
  %974 = vmatmul.f32.gmra.mxu0 %v367
  %v975 = vpop.f32.mrf.mxu0
  %v976 = vadd.f32 0.0, %v975
  %977 = vmatmul.f32.gmra.mxu0 %v370
  %v978 = vpop.f32.mrf.mxu0
  %v979 = vadd.f32 0.0, %v978
  %980 = vmatmul.f32.gmra.mxu0 %v373
  %v981 = vpop.f32.mrf.mxu0
  %v982 = vadd.f32 0.0, %v981
  %983 = vmatmul.f32.gmra.mxu0 %v376
  %v984 = vpop.f32.mrf.mxu0
  %v985 = vadd.f32 0.0, %v984
  %986 = vmatmul.f32.gmra.mxu0 %v379
  %v987 = vpop.f32.mrf.mxu0
  %v988 = vadd.f32 0.0, %v987
  %989 = vmatmul.f32.gmra.mxu0 %v382
  %v990 = vpop.f32.mrf.mxu0
  %v991 = vadd.f32 0.0, %v990
  %992 = vmatmul.f32.gmra.mxu0 %v385
  %v993 = vpop.f32.mrf.mxu0
  %v994 = vadd.f32 0.0, %v993
  %995 = vmatmul.f32.gmra.mxu0 %v388
  %v996 = vpop.f32.mrf.mxu0
  %v997 = vadd.f32 0.0, %v996
  %998 = vmatmul.f32.gmra.mxu0 %v391
  %v999 = vpop.f32.mrf.mxu0
  %v1000 = vadd.f32 0.0, %v999
  %1001 = vmatmul.f32.gmra.mxu0 %v394
  %v1002 = vpop.f32.mrf.mxu0
  %v1003 = vadd.f32 0.0, %v1002
  %1004 = vmatmul.f32.gmra.mxu0 %v397
  %v1005 = vpop.f32.mrf.mxu0
  %v1006 = vadd.f32 0.0, %v1005
  %1007 = vmatmul.f32.gmra.mxu0 %v400
  %v1008 = vpop.f32.mrf.mxu0
  %v1009 = vadd.f32 0.0, %v1008
  %1010 = vmatmul.f32.gmra.mxu0 %v403
  %v1011 = vpop.f32.mrf.mxu0
  %v1012 = vadd.f32 0.0, %v1011
  %1013 = vmatmul.f32.gmra.mxu0 %v406
  %v1014 = vpop.f32.mrf.mxu0
  %v1015 = vadd.f32 0.0, %v1014
  %1016 = vmatmul.f32.gmra.mxu0 %v409
  %v1017 = vpop.f32.mrf.mxu0
  %v1018 = vadd.f32 0.0, %v1017
  %1019 = vmatmul.f32.gmra.mxu0 %v412
  %v1020 = vpop.f32.mrf.mxu0
  %v1021 = vadd.f32 0.0, %v1020
  %1022 = vmatmul.f32.gmra.mxu0 %v415
  %v1023 = vpop.f32.mrf.mxu0
  %v1024 = vadd.f32 0.0, %v1023
  %1025 = vmatmul.f32.gmra.mxu0 %v418
  %v1026 = vpop.f32.mrf.mxu0
  %v1027 = vadd.f32 0.0, %v1026
  %1028 = vmatmul.f32.gmra.mxu0 %v421
  %v1029 = vpop.f32.mrf.mxu0
  %v1030 = vadd.f32 0.0, %v1029
  %1031 = vmatmul.f32.gmra.mxu0 %v424
  %v1032 = vpop.f32.mrf.mxu0
  %v1033 = vadd.f32 0.0, %v1032
  %1034 = vmatmul.f32.gmra.mxu0 %v427
  %v1035 = vpop.f32.mrf.mxu0
  %v1036 = vadd.f32 0.0, %v1035
  %1037 = vmatmul.f32.gmra.mxu0 %v430
  %v1038 = vpop.f32.mrf.mxu0
  %v1039 = vadd.f32 0.0, %v1038
  %1040 = vmatmul.f32.gmra.mxu0 %v433
  %v1041 = vpop.f32.mrf.mxu0
  %v1042 = vadd.f32 0.0, %v1041
  %1043 = vmatmul.f32.gmra.mxu0 %v436
  %v1044 = vpop.f32.mrf.mxu0
  %v1045 = vadd.f32 0.0, %v1044
  %1046 = vmatmul.f32.gmra.mxu0 %v439
  %v1047 = vpop.f32.mrf.mxu0
  %v1048 = vadd.f32 0.0, %v1047
  %1049 = vmatmul.f32.gmra.mxu0 %v442
  %v1050 = vpop.f32.mrf.mxu0
  %v1051 = vadd.f32 0.0, %v1050
  %1052 = vmatmul.f32.gmra.mxu0 %v445
  %v1053 = vpop.f32.mrf.mxu0
  %v1054 = vadd.f32 0.0, %v1053
  %1055 = vmatmul.f32.gmra.mxu0 %v448
  %v1056 = vpop.f32.mrf.mxu0
  %v1057 = vadd.f32 0.0, %v1056
  %1058 = vmatmul.f32.gmra.mxu0 %v451
  %v1059 = vpop.f32.mrf.mxu0
  %v1060 = vadd.f32 0.0, %v1059
  %1061 = vmatmul.f32.gmra.mxu0 %v454
  %v1062 = vpop.f32.mrf.mxu0
  %v1063 = vadd.f32 0.0, %v1062
  %1064 = vmatmul.f32.gmra.mxu0 %v457
  %v1065 = vpop.f32.mrf.mxu0
  %v1066 = vadd.f32 0.0, %v1065
  %1067 = vmatmul.f32.gmra.mxu0 %v460
  %v1068 = vpop.f32.mrf.mxu0
  %v1069 = vadd.f32 0.0, %v1068
  %1070 = vmatmul.f32.gmra.mxu0 %v463
  %v1071 = vpop.f32.mrf.mxu0
  %v1072 = vadd.f32 0.0, %v1071
  %1073 = vmatmul.f32.gmra.mxu0 %v466
  %v1074 = vpop.f32.mrf.mxu0
  %v1075 = vadd.f32 0.0, %v1074
  %1076 = vmatmul.f32.gmra.mxu0 %v469
  %v1077 = vpop.f32.mrf.mxu0
  %v1078 = vadd.f32 0.0, %v1077
  %1079 = vmatmul.f32.gmra.mxu0 %v472
  %v1080 = vpop.f32.mrf.mxu0
  %v1081 = vadd.f32 0.0, %v1080
  %1082 = vmatmul.f32.gmra.mxu0 %v475
  %v1083 = vpop.f32.mrf.mxu0
  %v1084 = vadd.f32 0.0, %v1083
  %1085 = vmatmul.f32.gmra.mxu0 %v478
  %v1086 = vpop.f32.mrf.mxu0
  %v1087 = vadd.f32 0.0, %v1086
  %1088 = vmatmul.f32.gmra.mxu0 %v481
  %v1089 = vpop.f32.mrf.mxu0
  %v1090 = vadd.f32 0.0, %v1089
  %1091 = vmatmul.f32.gmra.mxu0 %v484
  %v1092 = vpop.f32.mrf.mxu0
  %v1093 = vadd.f32 0.0, %v1092
  %1094 = vmatmul.f32.gmra.mxu0 %v487
  %v1095 = vpop.f32.mrf.mxu0
  %v1096 = vadd.f32 0.0, %v1095
  %1097 = vmatmul.f32.gmra.mxu0 %v490
  %v1098 = vpop.f32.mrf.mxu0
  %v1099 = vadd.f32 0.0, %v1098
  %1100 = vmatmul.f32.gmra.mxu0 %v493
  %v1101 = vpop.f32.mrf.mxu0
  %v1102 = vadd.f32 0.0, %v1101
  %1103 = vmatmul.f32.gmra.mxu0 %v496
  %v1104 = vpop.f32.mrf.mxu0
  %v1105 = vadd.f32 0.0, %v1104
  %1106 = vmatmul.f32.gmra.mxu0 %v499
  %v1107 = vpop.f32.mrf.mxu0
  %v1108 = vadd.f32 0.0, %v1107
  %1109 = vmatmul.f32.gmra.mxu0 %v502
  %v1110 = vpop.f32.mrf.mxu0
  %v1111 = vadd.f32 0.0, %v1110
  %1112 = vmatmul.f32.gmra.mxu0 %v505
  %v1113 = vpop.f32.mrf.mxu0
  %v1114 = vadd.f32 0.0, %v1113
  %1115 = vmatmul.f32.gmra.mxu0 %v508
  %v1116 = vpop.f32.mrf.mxu0
  %v1117 = vadd.f32 0.0, %v1116
  %1118 = vmatmul.f32.gmra.mxu0 %v511
  %v1119 = vpop.f32.mrf.mxu0
  %v1120 = vadd.f32 0.0, %v1119
  %1121 = vmatmul.f32.gmra.mxu0 %v514
  %v1122 = vpop.f32.mrf.mxu0
  %v1123 = vadd.f32 0.0, %v1122
  %1124 = vmatmul.f32.gmra.mxu0 %v517
  %v1125 = vpop.f32.mrf.mxu0
  %v1126 = vadd.f32 0.0, %v1125
  %1127 = vmatmul.f32.gmra.mxu0 %v520
  %v1128 = vpop.f32.mrf.mxu0
  %v1129 = vadd.f32 0.0, %v1128
  %1130 = vmatmul.f32.gmra.mxu0 %v523
  %v1131 = vpop.f32.mrf.mxu0
  %v1132 = vadd.f32 0.0, %v1131
  %1133 = vmatmul.f32.gmra.mxu0 %v526
  %v1134 = vpop.f32.mrf.mxu0
  %v1135 = vadd.f32 0.0, %v1134
  %1136 = vmatmul.f32.gmra.mxu0 %v529
  %v1137 = vpop.f32.mrf.mxu0
  %v1138 = vadd.f32 0.0, %v1137
  %1139 = vmatmul.f32.gmra.mxu0 %v532
  %v1140 = vpop.f32.mrf.mxu0
  %v1141 = vadd.f32 0.0, %v1140
  %1142 = vmatmul.f32.gmra.mxu0 %v535
  %v1143 = vpop.f32.mrf.mxu0
  %v1144 = vadd.f32 0.0, %v1143
  %1145 = vmatmul.f32.gmra.mxu0 %v538
  %v1146 = vpop.f32.mrf.mxu0
  %v1147 = vadd.f32 0.0, %v1146
  %1148 = vmatmul.f32.gmra.mxu0 %v541
  %v1149 = vpop.f32.mrf.mxu0
  %v1150 = vadd.f32 0.0, %v1149
  %1151 = vmatmul.f32.gmra.mxu0 %v544
  %v1152 = vpop.f32.mrf.mxu0
  %v1153 = vadd.f32 0.0, %v1152
  %1154 = vmatmul.f32.gmra.mxu0 %v547
  %v1155 = vpop.f32.mrf.mxu0
  %v1156 = vadd.f32 0.0, %v1155
  %1157 = vmatmul.f32.gmra.mxu0 %v550
  %v1158 = vpop.f32.mrf.mxu0
  %v1159 = vadd.f32 0.0, %v1158
  %1160 = vmatmul.f32.gmra.mxu0 %v553
  %v1161 = vpop.f32.mrf.mxu0
  %v1162 = vadd.f32 0.0, %v1161
  %1163 = vmatmul.f32.gmra.mxu0 %v556
  %v1164 = vpop.f32.mrf.mxu0
  %v1165 = vadd.f32 0.0, %v1164
  %1166 = vmatmul.f32.gmra.mxu0 %v559
  %v1167 = vpop.f32.mrf.mxu0
  %v1168 = vadd.f32 0.0, %v1167
  %1169 = vmatmul.f32.gmra.mxu0 %v562
  %v1170 = vpop.f32.mrf.mxu0
  %v1171 = vadd.f32 0.0, %v1170
  %1172 = vmatmul.f32.gmra.mxu0 %v565
  %v1173 = vpop.f32.mrf.mxu0
  %v1174 = vadd.f32 0.0, %v1173
  %1175 = vmatmul.f32.gmra.mxu0 %v568
  %v1176 = vpop.f32.mrf.mxu0
  %v1177 = vadd.f32 0.0, %v1176
  %1178 = vmatmul.f32.gmra.mxu0 %v571
  %v1179 = vpop.f32.mrf.mxu0
  %v1180 = vadd.f32 0.0, %v1179
  %1181 = vmatmul.f32.gmra.mxu0 %v574
  %v1182 = vpop.f32.mrf.mxu0
  %v1183 = vadd.f32 0.0, %v1182
  %1184 = vmatmul.f32.gmra.mxu0 %v577
  %v1185 = vpop.f32.mrf.mxu0
  %v1186 = vadd.f32 0.0, %v1185
  %1187 = vmatmul.f32.gmra.mxu0 %v580
  %v1188 = vpop.f32.mrf.mxu0
  %v1189 = vadd.f32 0.0, %v1188
  %1190 = vmatmul.f32.gmra.mxu0 %v583
  %v1191 = vpop.f32.mrf.mxu0
  %v1192 = vadd.f32 0.0, %v1191
  %1193 = vmatmul.f32.gmra.mxu0 %v586
  %v1194 = vpop.f32.mrf.mxu0
  %v1195 = vadd.f32 0.0, %v1194
  %1196 = vmatmul.f32.gmra.mxu0 %v589
  %v1197 = vpop.f32.mrf.mxu0
  %v1198 = vadd.f32 0.0, %v1197
  %1199 = vmatmul.f32.gmra.mxu0 %v592
  %v1200 = vpop.f32.mrf.mxu0
  %v1201 = vadd.f32 0.0, %v1200
  %1202 = vmatmul.f32.gmra.mxu0 %v595
  %v1203 = vpop.f32.mrf.mxu0
  %v1204 = vadd.f32 0.0, %v1203
  %1205 = vmatmul.f32.gmra.mxu0 %v598
  %v1206 = vpop.f32.mrf.mxu0
  %v1207 = vadd.f32 0.0, %v1206
  %1208 = vmatmul.f32.gmra.mxu0 %v601
  %v1209 = vpop.f32.mrf.mxu0
  %v1210 = vadd.f32 0.0, %v1209
  %1211 = vmatmul.f32.gmra.mxu0 %v604
  %v1212 = vpop.f32.mrf.mxu0
  %v1213 = vadd.f32 0.0, %v1212
  %1214 = vmatmul.f32.gmra.mxu0 %v607
  %v1215 = vpop.f32.mrf.mxu0
  %v1216 = vadd.f32 0.0, %v1215
  %1217 = vmatmul.f32.gmra.mxu0 %v610
  %v1218 = vpop.f32.mrf.mxu0
  %v1219 = vadd.f32 0.0, %v1218
  %1220 = vmatmul.f32.gmra.mxu0 %v613
  %v1221 = vpop.f32.mrf.mxu0
  %v1222 = vadd.f32 0.0, %v1221
  %1223 = vmatmul.f32.gmra.mxu0 %v616
  %v1224 = vpop.f32.mrf.mxu0
  %v1225 = vadd.f32 0.0, %v1224
  %1226 = vmatmul.f32.gmra.mxu0 %v619
  %v1227 = vpop.f32.mrf.mxu0
  %v1228 = vadd.f32 0.0, %v1227
  %1229 = vmatmul.f32.gmra.mxu0 %v622
  %v1230 = vpop.f32.mrf.mxu0
  %v1231 = vadd.f32 0.0, %v1230
  %1232 = vmatmul.f32.gmra.mxu0 %v625
  %v1233 = vpop.f32.mrf.mxu0
  %v1234 = vadd.f32 0.0, %v1233
  %1235 = vmatmul.f32.gmra.mxu0 %v628
  %v1236 = vpop.f32.mrf.mxu0
  %v1237 = vadd.f32 0.0, %v1236
  %1238 = vmatmul.f32.gmra.mxu0 %v631
  %v1239 = vpop.f32.mrf.mxu0
  %v1240 = vadd.f32 0.0, %v1239
  %1241 = vmatmul.f32.gmra.mxu0 %v634
  %v1242 = vpop.f32.mrf.mxu0
  %v1243 = vadd.f32 0.0, %v1242
  %1244 = vmatmul.f32.gmra.mxu0 %v637
  %v1245 = vpop.f32.mrf.mxu0
  %v1246 = vadd.f32 0.0, %v1245
  %1247 = vmatmul.f32.gmra.mxu0 %v640
  %v1248 = vpop.f32.mrf.mxu0
  %v1249 = vadd.f32 0.0, %v1248
  %1250 = vmatmul.f32.gmra.mxu0 %v643
  %v1251 = vpop.f32.mrf.mxu0
  %v1252 = vadd.f32 0.0, %v1251
  %1253 = vmatmul.f32.gmra.mxu0 %v646
  %v1254 = vpop.f32.mrf.mxu0
  %v1255 = vadd.f32 0.0, %v1254
  %1256 = vmatmul.f32.gmra.mxu0 %v649
  %v1257 = vpop.f32.mrf.mxu0
  %v1258 = vadd.f32 0.0, %v1257
  %1259 = vmatmul.f32.gmra.mxu0 %v652
  %v1260 = vpop.f32.mrf.mxu0
  %v1261 = vadd.f32 0.0, %v1260
  %1262 = vmatmul.f32.gmra.mxu0 %v655
  %v1263 = vpop.f32.mrf.mxu0
  %v1264 = vadd.f32 0.0, %v1263
  %1265 = vmatmul.f32.gmra.mxu0 %v658
  %v1266 = vpop.f32.mrf.mxu0
  %v1267 = vadd.f32 0.0, %v1266
  %1268 = vmatmul.f32.gmra.mxu0 %v661
  %v1269 = vpop.f32.mrf.mxu0
  %v1270 = vadd.f32 0.0, %v1269
  %1271 = vmatmul.f32.gmra.mxu0 %v664
  %v1272 = vpop.f32.mrf.mxu0
  %v1273 = vadd.f32 0.0, %v1272
  %1274 = vmatmul.f32.gmra.mxu0 %v667
  %v1275 = vpop.f32.mrf.mxu0
  %v1276 = vadd.f32 0.0, %v1275
  %1277 = vmatmul.f32.gmra.mxu0 %v670
  %v1278 = vpop.f32.mrf.mxu0
  %v1279 = vadd.f32 0.0, %v1278
  %1280 = vmatmul.f32.gmra.mxu0 %v673
  %v1281 = vpop.f32.mrf.mxu0
  %v1282 = vadd.f32 0.0, %v1281
  %1283 = vmatmul.f32.gmra.mxu0 %v676
  %v1284 = vpop.f32.mrf.mxu0
  %v1285 = vadd.f32 0.0, %v1284
  %1286 = vmatmul.f32.gmra.mxu0 %v679
  %v1287 = vpop.f32.mrf.mxu0
  %v1288 = vadd.f32 0.0, %v1287
  %1289 = vmatmul.f32.gmra.mxu0 %v682
  %v1290 = vpop.f32.mrf.mxu0
  %v1291 = vadd.f32 0.0, %v1290
  %1292 = vmatmul.f32.gmra.mxu0 %v685
  %v1293 = vpop.f32.mrf.mxu0
  %v1294 = vadd.f32 0.0, %v1293
  %1295 = vmatmul.f32.gmra.mxu0 %v688
  %v1296 = vpop.f32.mrf.mxu0
  %v1297 = vadd.f32 0.0, %v1296
  %1298 = vmatmul.f32.gmra.mxu0 %v691
  %v1299 = vpop.f32.mrf.mxu0
  %v1300 = vadd.f32 0.0, %v1299
  %1301 = vmatmul.f32.gmra.mxu0 %v694
  %v1302 = vpop.f32.mrf.mxu0
  %v1303 = vadd.f32 0.0, %v1302
  %1304 = vmatmul.f32.gmra.mxu0 %v697
  %v1305 = vpop.f32.mrf.mxu0
  %v1306 = vadd.f32 0.0, %v1305
  %1307 = vmatmul.f32.gmra.mxu0 %v700
  %v1308 = vpop.f32.mrf.mxu0
  %v1309 = vadd.f32 0.0, %v1308
  %1310 = vmatmul.f32.gmra.mxu0 %v703
  %v1311 = vpop.f32.mrf.mxu0
  %v1312 = vadd.f32 0.0, %v1311
  %1313 = vmatmul.f32.gmra.mxu0 %v706
  %v1314 = vpop.f32.mrf.mxu0
  %v1315 = vadd.f32 0.0, %v1314
  %1316 = vmatmul.f32.gmra.mxu0 %v709
  %v1317 = vpop.f32.mrf.mxu0
  %v1318 = vadd.f32 0.0, %v1317
  %1319 = vmatmul.f32.gmra.mxu0 %v712
  %v1320 = vpop.f32.mrf.mxu0
  %v1321 = vadd.f32 0.0, %v1320
  %1322 = vmatmul.f32.gmra.mxu0 %v715
  %v1323 = vpop.f32.mrf.mxu0
  %v1324 = vadd.f32 0.0, %v1323
  %1325 = vmatmul.f32.gmra.mxu0 %v718
  %v1326 = vpop.f32.mrf.mxu0
  %v1327 = vadd.f32 0.0, %v1326
  %1328 = vmatmul.f32.gmra.mxu0 %v721
  %v1329 = vpop.f32.mrf.mxu0
  %v1330 = vadd.f32 0.0, %v1329
  %1331 = vmatmul.f32.gmra.mxu0 %v724
  %v1332 = vpop.f32.mrf.mxu0
  %v1333 = vadd.f32 0.0, %v1332
  %1334 = vmatmul.f32.gmra.mxu0 %v727
  %v1335 = vpop.f32.mrf.mxu0
  %v1336 = vadd.f32 0.0, %v1335
  %1337 = vmatmul.f32.gmra.mxu0 %v730
  %v1338 = vpop.f32.mrf.mxu0
  %v1339 = vadd.f32 0.0, %v1338
  %1340 = vmatmul.f32.gmra.mxu0 %v733
  %v1341 = vpop.f32.mrf.mxu0
  %v1342 = vadd.f32 0.0, %v1341
  %1343 = vmatmul.f32.gmra.mxu0 %v736
  %v1344 = vpop.f32.mrf.mxu0
  %v1345 = vadd.f32 0.0, %v1344
  %1346 = vmatmul.f32.gmra.mxu0 %v739
  %v1347 = vpop.f32.mrf.mxu0
  %v1348 = vadd.f32 0.0, %v1347
  %1349 = vmatmul.f32.gmra.mxu0 %v742
  %v1350 = vpop.f32.mrf.mxu0
  %v1351 = vadd.f32 0.0, %v1350
  %1352 = vmatmul.f32.gmra.mxu0 %v745
  %v1353 = vpop.f32.mrf.mxu0
  %v1354 = vadd.f32 0.0, %v1353
  %1355 = vmatmul.f32.gmra.mxu0 %v748
  %v1356 = vpop.f32.mrf.mxu0
  %v1357 = vadd.f32 0.0, %v1356
  %1358 = vmatmul.f32.gmra.mxu0 %v751
  %v1359 = vpop.f32.mrf.mxu0
  %v1360 = vadd.f32 0.0, %v1359
  %1361 = vmatmul.f32.gmra.mxu0 %v754
  %v1362 = vpop.f32.mrf.mxu0
  %v1363 = vadd.f32 0.0, %v1362
  %1364 = vmatmul.f32.gmra.mxu0 %v757
  %v1365 = vpop.f32.mrf.mxu0
  %v1366 = vadd.f32 0.0, %v1365
  %1367 = vmatmul.f32.gmra.mxu0 %v760
  %v1368 = vpop.f32.mrf.mxu0
  %v1369 = vadd.f32 0.0, %v1368
  %1370 = vmatmul.f32.gmra.mxu0 %v763
  %v1371 = vpop.f32.mrf.mxu0
  %v1372 = vadd.f32 0.0, %v1371
  %1373 = vmatmul.f32.gmra.mxu0 %v766
  %v1374 = vpop.f32.mrf.mxu0
  %v1375 = vadd.f32 0.0, %v1374
  %1376 = vmatmul.f32.gmra.mxu0 %v769
  %v1377 = vpop.f32.mrf.mxu0
  %v1378 = vadd.f32 0.0, %v1377
  %1379 = vmatmul.f32.gmra.mxu0 %v772
  %v1380 = vpop.f32.mrf.mxu0
  %v1381 = vadd.f32 0.0, %v1380
  %1382 = vmatmul.f32.gmra.mxu0 %v775
  %v1383 = vpop.f32.mrf.mxu0
  %v1384 = vadd.f32 0.0, %v1383
  %1385 = vmatmul.f32.gmra.mxu0 %v778
  %v1386 = vpop.f32.mrf.mxu0
  %v1387 = vadd.f32 0.0, %v1386
  %1388 = vmatmul.f32.gmra.mxu0 %v781
  %v1389 = vpop.f32.mrf.mxu0
  %v1390 = vadd.f32 0.0, %v1389
  %1391 = vmatmul.f32.gmra.mxu0 %v784
  %v1392 = vpop.f32.mrf.mxu0
  %v1393 = vadd.f32 0.0, %v1392
  %1394 = vmatmul.f32.gmra.mxu0 %v787
  %v1395 = vpop.f32.mrf.mxu0
  %v1396 = vadd.f32 0.0, %v1395
  %1397 = vmatmul.f32.gmra.mxu0 %v790
  %v1398 = vpop.f32.mrf.mxu0
  %v1399 = vadd.f32 0.0, %v1398
  %1400 = vmatmul.f32.gmra.mxu0 %v793
  %v1401 = vpop.f32.mrf.mxu0
  %v1402 = vadd.f32 0.0, %v1401
  %1403 = vmatmul.f32.gmra.mxu0 %v796
  %v1404 = vpop.f32.mrf.mxu0
  %v1405 = vadd.f32 0.0, %v1404
  %1406 = vmatmul.f32.gmra.mxu0 %v799
  %v1407 = vpop.f32.mrf.mxu0
  %v1408 = vadd.f32 0.0, %v1407
  %1409 = vdwg.mxu0
  %v1410 = vmax.f32 %v823, %v970
  %v1411 = vmax.f32 %v826, %v973
  %v1412 = vmax.f32 %v829, %v976
  %v1413 = vmax.f32 %v832, %v979
  %v1414 = vmax.f32 %v835, %v982
  %v1415 = vmax.f32 %v838, %v985
  %v1416 = vmax.f32 %v841, %v988
  %v1417 = vmax.f32 %v844, %v991
  %v1418 = vmax.f32 %v847, %v994
  %v1419 = vmax.f32 %v850, %v997
  %v1420 = vmax.f32 %v853, %v1000
  %v1421 = vmax.f32 %v856, %v1003
  %v1422 = vmax.f32 %v859, %v1006
  %v1423 = vmax.f32 %v862, %v1009
  %v1424 = vmax.f32 %v865, %v1012
  %v1425 = vmax.f32 %v868, %v1015
  %v1426 = vmax.f32 %v871, %v1018
  %v1427 = vmax.f32 %v874, %v1021
  %v1428 = vmax.f32 %v877, %v1024
  %v1429 = vmax.f32 %v880, %v1027
  %v1430 = vmax.f32 %v883, %v1030
  %v1431 = vmax.f32 %v886, %v1033
  %v1432 = vmax.f32 %v889, %v1036
  %v1433 = vmax.f32 %v892, %v1039
  %v1434 = vmax.f32 %v895, %v1042
  %v1435 = vmax.f32 %v898, %v1045
  %v1436 = vmax.f32 %v901, %v1048
  %v1437 = vmax.f32 %v904, %v1051
  %v1438 = vmax.f32 %v907, %v1054
  %v1439 = vmax.f32 %v910, %v1057
  %v1440 = vmax.f32 %v913, %v1060
  %v1441 = vmax.f32 %v916, %v1063
  %v1442 = vmax.f32 %v919, %v1066
  %v1443 = vmax.f32 %v922, %v1069
  %v1444 = vmax.f32 %v925, %v1072
  %v1445 = vmax.f32 %v928, %v1075
  %v1446 = vmax.f32 %v931, %v1078
  %v1447 = vmax.f32 %v934, %v1081
  %v1448 = vmax.f32 %v937, %v1084
  %v1449 = vmax.f32 %v940, %v1087
  %v1450 = vmax.f32 %v943, %v1090
  %v1451 = vmax.f32 %v946, %v1093
  %v1452 = vmax.f32 %v949, %v1096
  %v1453 = vmax.f32 %v952, %v1099
  %v1454 = vmax.f32 %v955, %v1102
  %v1455 = vmax.f32 %v958, %v1105
  %v1456 = vmax.f32 %v961, %v1108
  %v1457 = vmax.f32 %v964, %v1111
  %v1458 = vmax.f32 %v967, %v1114
  %v1459 = vmax.f32 %v1117, %v1264
  %v1460 = vmax.f32 %v1120, %v1267
  %v1461 = vmax.f32 %v1123, %v1270
  %v1462 = vmax.f32 %v1126, %v1273
  %v1463 = vmax.f32 %v1129, %v1276
  %v1464 = vmax.f32 %v1132, %v1279
  %v1465 = vmax.f32 %v1135, %v1282
  %v1466 = vmax.f32 %v1138, %v1285
  %v1467 = vmax.f32 %v1141, %v1288
  %v1468 = vmax.f32 %v1144, %v1291
  %v1469 = vmax.f32 %v1147, %v1294
  %v1470 = vmax.f32 %v1150, %v1297
  %v1471 = vmax.f32 %v1153, %v1300
  %v1472 = vmax.f32 %v1156, %v1303
  %v1473 = vmax.f32 %v1159, %v1306
  %v1474 = vmax.f32 %v1162, %v1309
  %v1475 = vmax.f32 %v1165, %v1312
  %v1476 = vmax.f32 %v1168, %v1315
  %v1477 = vmax.f32 %v1171, %v1318
  %v1478 = vmax.f32 %v1174, %v1321
  %v1479 = vmax.f32 %v1177, %v1324
  %v1480 = vmax.f32 %v1180, %v1327
  %v1481 = vmax.f32 %v1183, %v1330
  %v1482 = vmax.f32 %v1186, %v1333
  %v1483 = vmax.f32 %v1189, %v1336
  %v1484 = vmax.f32 %v1192, %v1339
  %v1485 = vmax.f32 %v1195, %v1342
  %v1486 = vmax.f32 %v1198, %v1345
  %v1487 = vmax.f32 %v1201, %v1348
  %v1488 = vmax.f32 %v1204, %v1351
  %v1489 = vmax.f32 %v1207, %v1354
  %v1490 = vmax.f32 %v1210, %v1357
  %v1491 = vmax.f32 %v1213, %v1360
  %v1492 = vmax.f32 %v1216, %v1363
  %v1493 = vmax.f32 %v1219, %v1366
  %v1494 = vmax.f32 %v1222, %v1369
  %v1495 = vmax.f32 %v1225, %v1372
  %v1496 = vmax.f32 %v1228, %v1375
  %v1497 = vmax.f32 %v1231, %v1378
  %v1498 = vmax.f32 %v1234, %v1381
  %v1499 = vmax.f32 %v1237, %v1384
  %v1500 = vmax.f32 %v1240, %v1387
  %v1501 = vmax.f32 %v1243, %v1390
  %v1502 = vmax.f32 %v1246, %v1393
  %v1503 = vmax.f32 %v1249, %v1396
  %v1504 = vmax.f32 %v1252, %v1399
  %v1505 = vmax.f32 %v1255, %v1402
  %v1506 = vmax.f32 %v1258, %v1405
  %v1507 = vmax.f32 %v1261, %v1408
  %v1508 = vmax.f32 %v1410, %v1459
  %v1509 = vmax.f32 %v1411, %v1460
  %v1510 = vmax.f32 %v1412, %v1461
  %v1511 = vmax.f32 %v1413, %v1462
  %v1512 = vmax.f32 %v1414, %v1463
  %v1513 = vmax.f32 %v1415, %v1464
  %v1514 = vmax.f32 %v1416, %v1465
  %v1515 = vmax.f32 %v1417, %v1466
  %v1516 = vmax.f32 %v1418, %v1467
  %v1517 = vmax.f32 %v1419, %v1468
  %v1518 = vmax.f32 %v1420, %v1469
  %v1519 = vmax.f32 %v1421, %v1470
  %v1520 = vmax.f32 %v1422, %v1471
  %v1521 = vmax.f32 %v1423, %v1472
  %v1522 = vmax.f32 %v1424, %v1473
  %v1523 = vmax.f32 %v1425, %v1474
  %v1524 = vmax.f32 %v1426, %v1475
  %v1525 = vmax.f32 %v1427, %v1476
  %v1526 = vmax.f32 %v1428, %v1477
  %v1527 = vmax.f32 %v1429, %v1478
  %v1528 = vmax.f32 %v1430, %v1479
  %v1529 = vmax.f32 %v1431, %v1480
  %v1530 = vmax.f32 %v1432, %v1481
  %v1531 = vmax.f32 %v1433, %v1482
  %v1532 = vmax.f32 %v1434, %v1483
  %v1533 = vmax.f32 %v1435, %v1484
  %v1534 = vmax.f32 %v1436, %v1485
  %v1535 = vmax.f32 %v1437, %v1486
  %v1536 = vmax.f32 %v1438, %v1487
  %v1537 = vmax.f32 %v1439, %v1488
  %v1538 = vmax.f32 %v1440, %v1489
  %v1539 = vmax.f32 %v1441, %v1490
  %v1540 = vmax.f32 %v1442, %v1491
  %v1541 = vmax.f32 %v1443, %v1492
  %v1542 = vmax.f32 %v1444, %v1493
  %v1543 = vmax.f32 %v1445, %v1494
  %v1544 = vmax.f32 %v1446, %v1495
  %v1545 = vmax.f32 %v1447, %v1496
  %v1546 = vmax.f32 %v1448, %v1497
  %v1547 = vmax.f32 %v1449, %v1498
  %v1548 = vmax.f32 %v1450, %v1499
  %v1549 = vmax.f32 %v1451, %v1500
  %v1550 = vmax.f32 %v1452, %v1501
  %v1551 = vmax.f32 %v1453, %v1502
  %v1552 = vmax.f32 %v1454, %v1503
  %v1553 = vmax.f32 %v1455, %v1504
  %v1554 = vmax.f32 %v1456, %v1505
  %v1555 = vmax.f32 %v1457, %v1506
  %v1556 = vmax.f32 %v1458, %v1507
  %v1557 = vld [vmem:[%s2] sm:$0x1]
  %v1559 = vperm.slane %v1557, 0
  %v1561 = vadd.f32 %v1508, %v1559
  %v1562 = vadd.f32 %v1509, %v1559
  %v1563 = vadd.f32 %v1510, %v1559
  %v1564 = vadd.f32 %v1511, %v1559
  %v1565 = vadd.f32 %v1512, %v1559
  %v1566 = vadd.f32 %v1513, %v1559
  %v1567 = vadd.f32 %v1514, %v1559
  %v1568 = vadd.f32 %v1515, %v1559
  %v1569 = vadd.f32 %v1516, %v1559
  %v1570 = vadd.f32 %v1517, %v1559
  %v1571 = vadd.f32 %v1518, %v1559
  %v1572 = vadd.f32 %v1519, %v1559
  %v1573 = vadd.f32 %v1520, %v1559
  %v1574 = vadd.f32 %v1521, %v1559
  %v1575 = vadd.f32 %v1522, %v1559
  %v1576 = vadd.f32 %v1523, %v1559
  %v1577 = vadd.f32 %v1524, %v1559
  %v1578 = vadd.f32 %v1525, %v1559
  %v1579 = vadd.f32 %v1526, %v1559
  %v1580 = vadd.f32 %v1527, %v1559
  %v1581 = vadd.f32 %v1528, %v1559
  %v1582 = vadd.f32 %v1529, %v1559
  %v1583 = vadd.f32 %v1530, %v1559
  %v1584 = vadd.f32 %v1531, %v1559
  %v1585 = vadd.f32 %v1532, %v1559
  %v1586 = vadd.f32 %v1533, %v1559
  %v1587 = vadd.f32 %v1534, %v1559
  %v1588 = vadd.f32 %v1535, %v1559
  %v1589 = vadd.f32 %v1536, %v1559
  %v1590 = vadd.f32 %v1537, %v1559
  %v1591 = vadd.f32 %v1538, %v1559
  %v1592 = vadd.f32 %v1539, %v1559
  %v1593 = vadd.f32 %v1540, %v1559
  %v1594 = vadd.f32 %v1541, %v1559
  %v1595 = vadd.f32 %v1542, %v1559
  %v1596 = vadd.f32 %v1543, %v1559
  %v1597 = vadd.f32 %v1544, %v1559
  %v1598 = vadd.f32 %v1545, %v1559
  %v1599 = vadd.f32 %v1546, %v1559
  %v1600 = vadd.f32 %v1547, %v1559
  %v1601 = vadd.f32 %v1548, %v1559
  %v1602 = vadd.f32 %v1549, %v1559
  %v1603 = vadd.f32 %v1550, %v1559
  %v1604 = vadd.f32 %v1551, %v1559
  %v1605 = vadd.f32 %v1552, %v1559
  %v1606 = vadd.f32 %v1553, %v1559
  %v1607 = vadd.f32 %v1554, %v1559
  %v1608 = vadd.f32 %v1555, %v1559
  %v1609 = vadd.f32 %v1556, %v1559
  %v1610 = vmax.f32 %v1561, 0.0
  %v1611 = vmax.f32 %v1562, 0.0
  %v1612 = vmax.f32 %v1563, 0.0
  %v1613 = vmax.f32 %v1564, 0.0
  %v1614 = vmax.f32 %v1565, 0.0
  %v1615 = vmax.f32 %v1566, 0.0
  %v1616 = vmax.f32 %v1567, 0.0
  %v1617 = vmax.f32 %v1568, 0.0
  %v1618 = vmax.f32 %v1569, 0.0
  %v1619 = vmax.f32 %v1570, 0.0
  %v1620 = vmax.f32 %v1571, 0.0
  %v1621 = vmax.f32 %v1572, 0.0
  %v1622 = vmax.f32 %v1573, 0.0
  %v1623 = vmax.f32 %v1574, 0.0
  %v1624 = vmax.f32 %v1575, 0.0
  %v1625 = vmax.f32 %v1576, 0.0
  %v1626 = vmax.f32 %v1577, 0.0
  %v1627 = vmax.f32 %v1578, 0.0
  %v1628 = vmax.f32 %v1579, 0.0
  %v1629 = vmax.f32 %v1580, 0.0
  %v1630 = vmax.f32 %v1581, 0.0
  %v1631 = vmax.f32 %v1582, 0.0
  %v1632 = vmax.f32 %v1583, 0.0
  %v1633 = vmax.f32 %v1584, 0.0
  %v1634 = vmax.f32 %v1585, 0.0
  %v1635 = vmax.f32 %v1586, 0.0
  %v1636 = vmax.f32 %v1587, 0.0
  %v1637 = vmax.f32 %v1588, 0.0
  %v1638 = vmax.f32 %v1589, 0.0
  %v1639 = vmax.f32 %v1590, 0.0
  %v1640 = vmax.f32 %v1591, 0.0
  %v1641 = vmax.f32 %v1592, 0.0
  %v1642 = vmax.f32 %v1593, 0.0
  %v1643 = vmax.f32 %v1594, 0.0
  %v1644 = vmax.f32 %v1595, 0.0
  %v1645 = vmax.f32 %v1596, 0.0
  %v1646 = vmax.f32 %v1597, 0.0
  %v1647 = vmax.f32 %v1598, 0.0
  %v1648 = vmax.f32 %v1599, 0.0
  %v1649 = vmax.f32 %v1600, 0.0
  %v1650 = vmax.f32 %v1601, 0.0
  %v1651 = vmax.f32 %v1602, 0.0
  %v1652 = vmax.f32 %v1603, 0.0
  %v1653 = vmax.f32 %v1604, 0.0
  %v1654 = vmax.f32 %v1605, 0.0
  %v1655 = vmax.f32 %v1606, 0.0
  %v1656 = vmax.f32 %v1607, 0.0
  %v1657 = vmax.f32 %v1608, 0.0
  %v1658 = vmax.f32 %v1609, 0.0
  %1659 = vst [vmem:[%s3] sm:$0xff] %v1610
  %1660 = vst [vmem:[%s3 + $0x8] sm:$0xff] %v1611
  %1661 = vst [vmem:[%s3 + $0x10] sm:$0xff] %v1612
  %1662 = vst [vmem:[%s3 + $0x18] sm:$0xff] %v1613
  %1663 = vst [vmem:[%s3 + $0x20] sm:$0xff] %v1614
  %1664 = vst [vmem:[%s3 + $0x28] sm:$0xff] %v1615
  %1665 = vst [vmem:[%s3 + $0x30] sm:$0xff] %v1616
  %1666 = vst [vmem:[%s3 + $0x38] sm:$0xff] %v1617
  %1667 = vst [vmem:[%s3 + $0x40] sm:$0xff] %v1618
  %1668 = vst [vmem:[%s3 + $0x48] sm:$0xff] %v1619
  %1669 = vst [vmem:[%s3 + $0x50] sm:$0xff] %v1620
  %1670 = vst [vmem:[%s3 + $0x58] sm:$0xff] %v1621
  %1671 = vst [vmem:[%s3 + $0x60] sm:$0xff] %v1622
  %1672 = vst [vmem:[%s3 + $0x68] sm:$0xff] %v1623
  %1673 = vst [vmem:[%s3 + $0x70] sm:$0xff] %v1624
  %1674 = vst [vmem:[%s3 + $0x78] sm:$0xff] %v1625
  %1675 = vst [vmem:[%s3 + $0x80] sm:$0xff] %v1626
  %1676 = vst [vmem:[%s3 + $0x88] sm:$0xff] %v1627
  %1677 = vst [vmem:[%s3 + $0x90] sm:$0xff] %v1628
  %1678 = vst [vmem:[%s3 + $0x98] sm:$0xff] %v1629
  %1679 = vst [vmem:[%s3 + $0xa0] sm:$0xff] %v1630
  %1680 = vst [vmem:[%s3 + $0xa8] sm:$0xff] %v1631
  %1681 = vst [vmem:[%s3 + $0xb0] sm:$0xff] %v1632
  %1682 = vst [vmem:[%s3 + $0xb8] sm:$0xff] %v1633
  %1683 = vst [vmem:[%s3 + $0xc0] sm:$0xff] %v1634
  %1684 = vst [vmem:[%s3 + $0xc8] sm:$0xff] %v1635
  %1685 = vst [vmem:[%s3 + $0xd0] sm:$0xff] %v1636
  %1686 = vst [vmem:[%s3 + $0xd8] sm:$0xff] %v1637
  %1687 = vst [vmem:[%s3 + $0xe0] sm:$0xff] %v1638
  %1688 = vst [vmem:[%s3 + $0xe8] sm:$0xff] %v1639
  %1689 = vst [vmem:[%s3 + $0xf0] sm:$0xff] %v1640
  %1690 = vst [vmem:[%s3 + $0xf8] sm:$0xff] %v1641
  %1691 = vst [vmem:[%s3 + $0x100] sm:$0xff] %v1642
  %1692 = vst [vmem:[%s3 + $0x108] sm:$0xff] %v1643
  %1693 = vst [vmem:[%s3 + $0x110] sm:$0xff] %v1644
  %1694 = vst [vmem:[%s3 + $0x118] sm:$0xff] %v1645
  %1695 = vst [vmem:[%s3 + $0x120] sm:$0xff] %v1646
  %1696 = vst [vmem:[%s3 + $0x128] sm:$0xff] %v1647
  %1697 = vst [vmem:[%s3 + $0x130] sm:$0xff] %v1648
  %1698 = vst [vmem:[%s3 + $0x138] sm:$0xff] %v1649
  %1699 = vst [vmem:[%s3 + $0x140] sm:$0xff] %v1650
  %1700 = vst [vmem:[%s3 + $0x148] sm:$0xff] %v1651
  %1701 = vst [vmem:[%s3 + $0x150] sm:$0xff] %v1652
  %1702 = vst [vmem:[%s3 + $0x158] sm:$0xff] %v1653
  %1703 = vst [vmem:[%s3 + $0x160] sm:$0xff] %v1654
  %1704 = vst [vmem:[%s3 + $0x168] sm:$0xff] %v1655
  %1705 = vst [vmem:[%s3 + $0x170] sm:$0xff] %v1656
  %1706 = vst [vmem:[%s3 + $0x178] sm:$0xff] %v1657
  %1707 = vst [vmem:[%s3 + $0x180] sm:$0xff] %v1658
  // Predicated region
  $region14: #{mnist_network_forward.4} parent=0 // pred_check
    _
  $region15: #{mnist_network_forward.4} parent=0 // pred_check_branch
    %1709 = sbr.rel (0) target = $region17
  $region16: #{mnist_network_forward.4} parent=0 // pred_region
    _
  $region17: #{mnist_network_forward.4} parent=0 // pred_fallthru
    _
  // Predicated region
  $region18: #{mnist_network_forward.4} parent=0 // pred_check
    _
  $region19: #{mnist_network_forward.4} parent=0 // pred_check_branch
    %1711 = sbr.rel (0) target = $region21
  $region20: #{mnist_network_forward.4} parent=0 // pred_region
    _
  $region21: #{mnist_network_forward.4} parent=0 // pred_fallthru
    _

// kernel: mnist_network_forward.5
$region0: #{mnist_network_forward.5}
  #allocation0 [shape = 'u32[]', space=smem, size = 0x4, offset = 0x4, fixed_abs, tag = 'smem constant byte address 0x4 - core index']
  #allocation1 [shape = 'u32[72,128]{1,0:T(1,128)}', space=vmem, size = 0x9000, scoped, tag = 'internal scratch']
  %s0 = inlined_call_operand.vmem [shape: f32[392,288], index: 0, kind: input, shape index: {}]
  %s1 = inlined_call_operand.vmem [shape: f32[288,128], index: 1, kind: input, shape index: {}]
  %s2 = inlined_call_operand.vmem [shape: f32[1,128], index: 2, kind: input, shape index: {}]
  %s3 = inlined_call_operand.vmem [shape: f32[392,128], index: 3, kind: output, shape index: {}]
  %s4 = sld [smem:[#allocation0]]
  $region22: #{mnist_network_forward.5} parent=0
    _
  %s6 = ssub.s32 1, %s4
  %s7 = scalar_select 0, %s6, %s4
  // Predicated region
  $region2: #{mnist_network_forward.5} parent=0 // pred_check
    _
  $region3: #{mnist_network_forward.5} parent=0 // pred_check_branch
    %9 = sbr.rel (0) target = $region5
  $region4: #{mnist_network_forward.5} parent=0 // pred_region
    _
  $region5: #{mnist_network_forward.5} parent=0 // pred_fallthru
    _
  // Predicated region
  $region6: #{mnist_network_forward.5} parent=0 // pred_check
    _
  $region7: #{mnist_network_forward.5} parent=0 // pred_check_branch
    %11 = sbr.rel (0) target = $region9
  $region8: #{mnist_network_forward.5} parent=0 // pred_region
    _
  $region9: #{mnist_network_forward.5} parent=0 // pred_fallthru
    _
  // Predicated region
  $region10: #{mnist_network_forward.5} parent=0 // pred_check
    _
  $region11: #{mnist_network_forward.5} parent=0 // pred_check_branch
    %13 = sbr.rel (0) target = $region13
  $region12: #{mnist_network_forward.5} parent=0 // pred_region
    _
  $region13: #{mnist_network_forward.5} parent=0 // pred_fallthru
    _
  %v14 = vld [vmem:[%s0] sm:$0xff]
  %v15 = vld [vmem:[%s0 + $0x8] sm:$0xff]
  %v16 = vld [vmem:[%s0 + $0x10] sm:$0xff]
  %v17 = vld [vmem:[%s0 + $0x18] sm:$0xff]
  %v18 = vld [vmem:[%s0 + $0x20] sm:$0xff]
  %v19 = vld [vmem:[%s0 + $0x28] sm:$0xff]
  %v20 = vld [vmem:[%s0 + $0x30] sm:$0xff]
  %v21 = vld [vmem:[%s0 + $0x38] sm:$0xff]
  %v22 = vld [vmem:[%s0 + $0x40] sm:$0xff]
  %v23 = vld [vmem:[%s0 + $0x48] sm:$0xff]
  %v24 = vld [vmem:[%s0 + $0x50] sm:$0xff]
  %v25 = vld [vmem:[%s0 + $0x58] sm:$0xff]
  %v26 = vld [vmem:[%s0 + $0x60] sm:$0xff]
  %v27 = vld [vmem:[%s0 + $0x68] sm:$0xff]
  %v28 = vld [vmem:[%s0 + $0x70] sm:$0xff]
  %v29 = vld [vmem:[%s0 + $0x78] sm:$0xff]
  %v30 = vld [vmem:[%s0 + $0x80] sm:$0xff]
  %v31 = vld [vmem:[%s0 + $0x88] sm:$0xff]
  %v32 = vld [vmem:[%s0 + $0x90] sm:$0xff]
  %v33 = vld [vmem:[%s0 + $0x98] sm:$0xff]
  %v34 = vld [vmem:[%s0 + $0xa0] sm:$0xff]
  %v35 = vld [vmem:[%s0 + $0xa8] sm:$0xff]
  %v36 = vld [vmem:[%s0 + $0xb0] sm:$0xff]
  %v37 = vld [vmem:[%s0 + $0xb8] sm:$0xff]
  %v38 = vld [vmem:[%s0 + $0xc0] sm:$0xff]
  %v39 = vld [vmem:[%s0 + $0xc8] sm:$0xff]
  %v40 = vld [vmem:[%s0 + $0xd0] sm:$0xff]
  %v41 = vld [vmem:[%s0 + $0xd8] sm:$0xff]
  %v42 = vld [vmem:[%s0 + $0xe0] sm:$0xff]
  %v43 = vld [vmem:[%s0 + $0xe8] sm:$0xff]
  %v44 = vld [vmem:[%s0 + $0xf0] sm:$0xff]
  %v45 = vld [vmem:[%s0 + $0xf8] sm:$0xff]
  %v46 = vld [vmem:[%s0 + $0x100] sm:$0xff]
  %v47 = vld [vmem:[%s0 + $0x108] sm:$0xff]
  %v48 = vld [vmem:[%s0 + $0x110] sm:$0xff]
  %v49 = vld [vmem:[%s0 + $0x118] sm:$0xff]
  %v50 = vld [vmem:[%s0 + $0x120] sm:$0xff]
  %v51 = vld [vmem:[%s0 + $0x128] sm:$0xff]
  %v52 = vld [vmem:[%s0 + $0x130] sm:$0xff]
  %v53 = vld [vmem:[%s0 + $0x138] sm:$0xff]
  %v54 = vld [vmem:[%s0 + $0x140] sm:$0xff]
  %v55 = vld [vmem:[%s0 + $0x148] sm:$0xff]
  %v56 = vld [vmem:[%s0 + $0x150] sm:$0xff]
  %v57 = vld [vmem:[%s0 + $0x158] sm:$0xff]
  %v58 = vld [vmem:[%s0 + $0x160] sm:$0xff]
  %v59 = vld [vmem:[%s0 + $0x168] sm:$0xff]
  %v60 = vld [vmem:[%s0 + $0x170] sm:$0xff]
  %v61 = vld [vmem:[%s0 + $0x178] sm:$0xff]
  %v62 = vld [vmem:[%s0 + $0x180] sm:$0xff]
  %v63 = vld [vmem:[%s0 + $0x188] sm:$0xff]
  %v64 = vld [vmem:[%s0 + $0x190] sm:$0xff]
  %v65 = vld [vmem:[%s0 + $0x198] sm:$0xff]
  %v66 = vld [vmem:[%s0 + $0x1a0] sm:$0xff]
  %v67 = vld [vmem:[%s0 + $0x1a8] sm:$0xff]
  %v68 = vld [vmem:[%s0 + $0x1b0] sm:$0xff]
  %v69 = vld [vmem:[%s0 + $0x1b8] sm:$0xff]
  %v70 = vld [vmem:[%s0 + $0x1c0] sm:$0xff]
  %v71 = vld [vmem:[%s0 + $0x1c8] sm:$0xff]
  %v72 = vld [vmem:[%s0 + $0x1d0] sm:$0xff]
  %v73 = vld [vmem:[%s0 + $0x1d8] sm:$0xff]
  %v74 = vld [vmem:[%s0 + $0x1e0] sm:$0xff]
  %v75 = vld [vmem:[%s0 + $0x1e8] sm:$0xff]
  %v76 = vld [vmem:[%s0 + $0x1f0] sm:$0xff]
  %v77 = vld [vmem:[%s0 + $0x1f8] sm:$0xff]
  %v78 = vld [vmem:[%s0 + $0x200] sm:$0xff]
  %v79 = vld [vmem:[%s0 + $0x208] sm:$0xff]
  %v80 = vld [vmem:[%s0 + $0x210] sm:$0xff]
  %v81 = vld [vmem:[%s0 + $0x218] sm:$0xff]
  %v82 = vld [vmem:[%s0 + $0x220] sm:$0xff]
  %v83 = vld [vmem:[%s0 + $0x228] sm:$0xff]
  %v84 = vld [vmem:[%s0 + $0x230] sm:$0xff]
  %v85 = vld [vmem:[%s0 + $0x238] sm:$0xff]
  %v86 = vld [vmem:[%s0 + $0x240] sm:$0xff]
  %v87 = vld [vmem:[%s0 + $0x248] sm:$0xff]
  %v88 = vld [vmem:[%s0 + $0x250] sm:$0xff]
  %v89 = vld [vmem:[%s0 + $0x258] sm:$0xff]
  %v90 = vld [vmem:[%s0 + $0x260] sm:$0xff]
  %v91 = vld [vmem:[%s0 + $0x268] sm:$0xff]
  %v92 = vld [vmem:[%s0 + $0x270] sm:$0xff]
  %v93 = vld [vmem:[%s0 + $0x278] sm:$0xff]
  %v94 = vld [vmem:[%s0 + $0x280] sm:$0xff]
  %v95 = vld [vmem:[%s0 + $0x288] sm:$0xff]
  %v96 = vld [vmem:[%s0 + $0x290] sm:$0xff]
  %v97 = vld [vmem:[%s0 + $0x298] sm:$0xff]
  %v98 = vld [vmem:[%s0 + $0x2a0] sm:$0xff]
  %v99 = vld [vmem:[%s0 + $0x2a8] sm:$0xff]
  %v100 = vld [vmem:[%s0 + $0x2b0] sm:$0xff]
  %v101 = vld [vmem:[%s0 + $0x2b8] sm:$0xff]
  %v102 = vld [vmem:[%s0 + $0x2c0] sm:$0xff]
  %v103 = vld [vmem:[%s0 + $0x2c8] sm:$0xff]
  %v104 = vld [vmem:[%s0 + $0x2d0] sm:$0xff]
  %v105 = vld [vmem:[%s0 + $0x2d8] sm:$0xff]
  %v106 = vld [vmem:[%s0 + $0x2e0] sm:$0xff]
  %v107 = vld [vmem:[%s0 + $0x2e8] sm:$0xff]
  %v108 = vld [vmem:[%s0 + $0x2f0] sm:$0xff]
  %v109 = vld [vmem:[%s0 + $0x2f8] sm:$0xff]
  %v110 = vld [vmem:[%s0 + $0x300] sm:$0xff]
  %v111 = vld [vmem:[%s0 + $0x308] sm:$0xff]
  %v112 = vld [vmem:[%s0 + $0x310] sm:$0xff]
  %v113 = vld [vmem:[%s0 + $0x318] sm:$0xff]
  %v114 = vld [vmem:[%s0 + $0x320] sm:$0xff]
  %v115 = vld [vmem:[%s0 + $0x328] sm:$0xff]
  %v116 = vld [vmem:[%s0 + $0x330] sm:$0xff]
  %v117 = vld [vmem:[%s0 + $0x338] sm:$0xff]
  %v118 = vld [vmem:[%s0 + $0x340] sm:$0xff]
  %v119 = vld [vmem:[%s0 + $0x348] sm:$0xff]
  %v120 = vld [vmem:[%s0 + $0x350] sm:$0xff]
  %v121 = vld [vmem:[%s0 + $0x358] sm:$0xff]
  %v122 = vld [vmem:[%s0 + $0x360] sm:$0xff]
  %v123 = vld [vmem:[%s0 + $0x368] sm:$0xff]
  %v124 = vld [vmem:[%s0 + $0x370] sm:$0xff]
  %v125 = vld [vmem:[%s0 + $0x378] sm:$0xff]
  %v126 = vld [vmem:[%s0 + $0x380] sm:$0xff]
  %v127 = vld [vmem:[%s0 + $0x388] sm:$0xff]
  %v128 = vld [vmem:[%s0 + $0x390] sm:$0xff]
  %v129 = vld [vmem:[%s0 + $0x398] sm:$0xff]
  %v130 = vld [vmem:[%s0 + $0x3a0] sm:$0xff]
  %v131 = vld [vmem:[%s0 + $0x3a8] sm:$0xff]
  %v132 = vld [vmem:[%s0 + $0x3b0] sm:$0xff]
  %v133 = vld [vmem:[%s0 + $0x3b8] sm:$0xff]
  %v134 = vld [vmem:[%s0 + $0x3c0] sm:$0xff]
  %v135 = vld [vmem:[%s0 + $0x3c8] sm:$0xff]
  %v136 = vld [vmem:[%s0 + $0x3d0] sm:$0xff]
  %v137 = vld [vmem:[%s0 + $0x3d8] sm:$0xff]
  %v138 = vld [vmem:[%s0 + $0x3e0] sm:$0xff]
  %v139 = vld [vmem:[%s0 + $0x3e8] sm:$0xff]
  %v140 = vld [vmem:[%s0 + $0x3f0] sm:$0xff]
  %v141 = vld [vmem:[%s0 + $0x3f8] sm:$0xff]
  %v142 = vld [vmem:[%s0 + $0x400] sm:$0xff]
  %v143 = vld [vmem:[%s0 + $0x408] sm:$0xff]
  %v144 = vld [vmem:[%s0 + $0x410] sm:$0xff]
  %v145 = vld [vmem:[%s0 + $0x418] sm:$0xff]
  %v146 = vld [vmem:[%s0 + $0x420] sm:$0xff]
  %v147 = vld [vmem:[%s0 + $0x428] sm:$0xff]
  %v148 = vld [vmem:[%s0 + $0x430] sm:$0xff]
  %v149 = vld [vmem:[%s0 + $0x438] sm:$0xff]
  %v150 = vld [vmem:[%s0 + $0x440] sm:$0xff]
  %v151 = vld [vmem:[%s0 + $0x448] sm:$0xff]
  %v152 = vld [vmem:[%s0 + $0x450] sm:$0xff]
  %v153 = vld [vmem:[%s0 + $0x458] sm:$0xff]
  %v154 = vld [vmem:[%s0 + $0x460] sm:$0xff]
  %v155 = vld [vmem:[%s0 + $0x468] sm:$0xff]
  %v156 = vld [vmem:[%s0 + $0x470] sm:$0xff]
  %v157 = vld [vmem:[%s0 + $0x478] sm:$0xff]
  %v158 = vld [vmem:[%s0 + $0x480] sm:$0xff]
  %v159 = vld [vmem:[%s0 + $0x488] sm:$0xff]
  %v160 = vld [vmem:[%s0 + $0x490] sm:$0xff]
  %v161 = vld [vmem:[%s1] sm:$0xff]
  %v162 = vld [vmem:[%s1 + $0x8] sm:$0xff]
  %v163 = vld [vmem:[%s1 + $0x10] sm:$0xff]
  %v164 = vld [vmem:[%s1 + $0x18] sm:$0xff]
  %v165 = vld [vmem:[%s1 + $0x20] sm:$0xff]
  %v166 = vld [vmem:[%s1 + $0x28] sm:$0xff]
  %v167 = vld [vmem:[%s1 + $0x30] sm:$0xff]
  %v168 = vld [vmem:[%s1 + $0x38] sm:$0xff]
  %v169 = vld [vmem:[%s1 + $0x40] sm:$0xff]
  %v170 = vld [vmem:[%s1 + $0x48] sm:$0xff]
  %v171 = vld [vmem:[%s1 + $0x50] sm:$0xff]
  %v172 = vld [vmem:[%s1 + $0x58] sm:$0xff]
  %v173 = vld [vmem:[%s1 + $0x60] sm:$0xff]
  %v174 = vld [vmem:[%s1 + $0x68] sm:$0xff]
  %v175 = vld [vmem:[%s1 + $0x70] sm:$0xff]
  %v176 = vld [vmem:[%s1 + $0x78] sm:$0xff]
  %v177 = vld [vmem:[%s1 + $0x80] sm:$0xff]
  %v178 = vld [vmem:[%s1 + $0x88] sm:$0xff]
  %v179 = vld [vmem:[%s1 + $0x90] sm:$0xff]
  %v180 = vld [vmem:[%s1 + $0x98] sm:$0xff]
  %v181 = vld [vmem:[%s1 + $0xa0] sm:$0xff]
  %v182 = vld [vmem:[%s1 + $0xa8] sm:$0xff]
  %v183 = vld [vmem:[%s1 + $0xb0] sm:$0xff]
  %v184 = vld [vmem:[%s1 + $0xb8] sm:$0xff]
  %v185 = vld [vmem:[%s1 + $0xc0] sm:$0xff]
  %v186 = vld [vmem:[%s1 + $0xc8] sm:$0xff]
  %v187 = vld [vmem:[%s1 + $0xd0] sm:$0xff]
  %v188 = vld [vmem:[%s1 + $0xd8] sm:$0xff]
  %v189 = vld [vmem:[%s1 + $0xe0] sm:$0xff]
  %v190 = vld [vmem:[%s1 + $0xe8] sm:$0xff]
  %v191 = vld [vmem:[%s1 + $0xf0] sm:$0xff]
  %v192 = vld [vmem:[%s1 + $0xf8] sm:$0xff]
  %v193 = vld [vmem:[%s1 + $0x100] sm:$0xff]
  %v194 = vld [vmem:[%s1 + $0x108] sm:$0xff]
  %v195 = vld [vmem:[%s1 + $0x110] sm:$0xff]
  %v196 = vld [vmem:[%s1 + $0x118] sm:$0xff]
  %v197 = vld [vmem:[%s2] sm:$0x1]
  %v199 = vperm.slane %v197, 0
  %vm201 = vcmask 261120
  %v203 = vsel %vm201, %v16, 0
  %v206 = vsel %vm201, %v19, 0
  %v209 = vsel %vm201, %v22, 0
  %v212 = vsel %vm201, %v25, 0
  %v215 = vsel %vm201, %v28, 0
  %v218 = vsel %vm201, %v31, 0
  %v221 = vsel %vm201, %v34, 0
  %v224 = vsel %vm201, %v37, 0
  %v227 = vsel %vm201, %v40, 0
  %v230 = vsel %vm201, %v43, 0
  %v233 = vsel %vm201, %v46, 0
  %v236 = vsel %vm201, %v49, 0
  %v239 = vsel %vm201, %v52, 0
  %v242 = vsel %vm201, %v55, 0
  %v245 = vsel %vm201, %v58, 0
  %v248 = vsel %vm201, %v61, 0
  %v251 = vsel %vm201, %v64, 0
  %v254 = vsel %vm201, %v67, 0
  %v257 = vsel %vm201, %v70, 0
  %v260 = vsel %vm201, %v73, 0
  %v263 = vsel %vm201, %v76, 0
  %v266 = vsel %vm201, %v79, 0
  %v269 = vsel %vm201, %v82, 0
  %v272 = vsel %vm201, %v85, 0
  %v275 = vsel %vm201, %v88, 0
  %v278 = vsel %vm201, %v91, 0
  %v281 = vsel %vm201, %v94, 0
  %v284 = vsel %vm201, %v97, 0
  %v287 = vsel %vm201, %v100, 0
  %v290 = vsel %vm201, %v103, 0
  %v293 = vsel %vm201, %v106, 0
  %v296 = vsel %vm201, %v109, 0
  %v299 = vsel %vm201, %v112, 0
  %v302 = vsel %vm201, %v115, 0
  %v305 = vsel %vm201, %v118, 0
  %v308 = vsel %vm201, %v121, 0
  %v311 = vsel %vm201, %v124, 0
  %v314 = vsel %vm201, %v127, 0
  %v317 = vsel %vm201, %v130, 0
  %v320 = vsel %vm201, %v133, 0
  %v323 = vsel %vm201, %v136, 0
  %v326 = vsel %vm201, %v139, 0
  %v329 = vsel %vm201, %v142, 0
  %v332 = vsel %vm201, %v145, 0
  %v335 = vsel %vm201, %v148, 0
  %v338 = vsel %vm201, %v151, 0
  %v341 = vsel %vm201, %v154, 0
  %v344 = vsel %vm201, %v157, 0
  %v347 = vsel %vm201, %v160, 0
  %349 = vmatpush.msra.mxu0 %v176
  %350 = vmatpush.msra.mxu0 %v175
  %351 = vmatpush.msra.mxu0 %v174
  %352 = vmatpush.msra.mxu0 %v173
  %353 = vmatpush.msra.mxu0 %v172
  %354 = vmatpush.msra.mxu0 %v171
  %355 = vmatpush.msra.mxu0 %v170
  %356 = vmatpush.msra.mxu0 %v169
  %357 = vmatpush.msra.mxu0 %v168
  %358 = vmatpush.msra.mxu0 %v167
  %359 = vmatpush.msra.mxu0 %v166
  %360 = vmatpush.msra.mxu0 %v165
  %361 = vmatpush.msra.mxu0 %v164
  %362 = vmatpush.msra.mxu0 %v163
  %363 = vmatpush.msra.mxu0 %v162
  %364 = vmatpush.msra.mxu0 %v161
  %365 = vmatmul.f32.gmra.mxu0 %v14
  %v366 = vpop.f32.mrf.mxu0
  %v367 = vadd.f32 %v199, %v366
  %368 = vmatmul.f32.gmra.mxu0 %v17
  %v369 = vpop.f32.mrf.mxu0
  %v370 = vadd.f32 %v199, %v369
  %371 = vmatmul.f32.gmra.mxu0 %v20
  %v372 = vpop.f32.mrf.mxu0
  %v373 = vadd.f32 %v199, %v372
  %374 = vmatmul.f32.gmra.mxu0 %v23
  %v375 = vpop.f32.mrf.mxu0
  %v376 = vadd.f32 %v199, %v375
  %377 = vmatmul.f32.gmra.mxu0 %v26
  %v378 = vpop.f32.mrf.mxu0
  %v379 = vadd.f32 %v199, %v378
  %380 = vmatmul.f32.gmra.mxu0 %v29
  %v381 = vpop.f32.mrf.mxu0
  %v382 = vadd.f32 %v199, %v381
  %383 = vmatmul.f32.gmra.mxu0 %v32
  %v384 = vpop.f32.mrf.mxu0
  %v385 = vadd.f32 %v199, %v384
  %386 = vmatmul.f32.gmra.mxu0 %v35
  %v387 = vpop.f32.mrf.mxu0
  %v388 = vadd.f32 %v199, %v387
  %389 = vmatmul.f32.gmra.mxu0 %v38
  %v390 = vpop.f32.mrf.mxu0
  %v391 = vadd.f32 %v199, %v390
  %392 = vmatmul.f32.gmra.mxu0 %v41
  %v393 = vpop.f32.mrf.mxu0
  %v394 = vadd.f32 %v199, %v393
  %395 = vmatmul.f32.gmra.mxu0 %v44
  %v396 = vpop.f32.mrf.mxu0
  %v397 = vadd.f32 %v199, %v396
  %398 = vmatmul.f32.gmra.mxu0 %v47
  %v399 = vpop.f32.mrf.mxu0
  %v400 = vadd.f32 %v199, %v399
  %401 = vmatmul.f32.gmra.mxu0 %v50
  %v402 = vpop.f32.mrf.mxu0
  %v403 = vadd.f32 %v199, %v402
  %404 = vmatmul.f32.gmra.mxu0 %v53
  %v405 = vpop.f32.mrf.mxu0
  %v406 = vadd.f32 %v199, %v405
  %407 = vmatmul.f32.gmra.mxu0 %v56
  %v408 = vpop.f32.mrf.mxu0
  %v409 = vadd.f32 %v199, %v408
  %410 = vmatmul.f32.gmra.mxu0 %v59
  %v411 = vpop.f32.mrf.mxu0
  %v412 = vadd.f32 %v199, %v411
  %413 = vmatmul.f32.gmra.mxu0 %v62
  %v414 = vpop.f32.mrf.mxu0
  %v415 = vadd.f32 %v199, %v414
  %416 = vmatmul.f32.gmra.mxu0 %v65
  %v417 = vpop.f32.mrf.mxu0
  %v418 = vadd.f32 %v199, %v417
  %419 = vmatmul.f32.gmra.mxu0 %v68
  %v420 = vpop.f32.mrf.mxu0
  %v421 = vadd.f32 %v199, %v420
  %422 = vmatmul.f32.gmra.mxu0 %v71
  %v423 = vpop.f32.mrf.mxu0
  %v424 = vadd.f32 %v199, %v423
  %425 = vmatmul.f32.gmra.mxu0 %v74
  %v426 = vpop.f32.mrf.mxu0
  %v427 = vadd.f32 %v199, %v426
  %428 = vmatmul.f32.gmra.mxu0 %v77
  %v429 = vpop.f32.mrf.mxu0
  %v430 = vadd.f32 %v199, %v429
  %431 = vmatmul.f32.gmra.mxu0 %v80
  %v432 = vpop.f32.mrf.mxu0
  %v433 = vadd.f32 %v199, %v432
  %434 = vmatmul.f32.gmra.mxu0 %v83
  %v435 = vpop.f32.mrf.mxu0
  %v436 = vadd.f32 %v199, %v435
  %437 = vmatmul.f32.gmra.mxu0 %v86
  %v438 = vpop.f32.mrf.mxu0
  %v439 = vadd.f32 %v199, %v438
  %440 = vmatmul.f32.gmra.mxu0 %v89
  %v441 = vpop.f32.mrf.mxu0
  %v442 = vadd.f32 %v199, %v441
  %443 = vmatmul.f32.gmra.mxu0 %v92
  %v444 = vpop.f32.mrf.mxu0
  %v445 = vadd.f32 %v199, %v444
  %446 = vmatmul.f32.gmra.mxu0 %v95
  %v447 = vpop.f32.mrf.mxu0
  %v448 = vadd.f32 %v199, %v447
  %449 = vmatmul.f32.gmra.mxu0 %v98
  %v450 = vpop.f32.mrf.mxu0
  %v451 = vadd.f32 %v199, %v450
  %452 = vmatmul.f32.gmra.mxu0 %v101
  %v453 = vpop.f32.mrf.mxu0
  %v454 = vadd.f32 %v199, %v453
  %455 = vmatmul.f32.gmra.mxu0 %v104
  %v456 = vpop.f32.mrf.mxu0
  %v457 = vadd.f32 %v199, %v456
  %458 = vmatmul.f32.gmra.mxu0 %v107
  %v459 = vpop.f32.mrf.mxu0
  %v460 = vadd.f32 %v199, %v459
  %461 = vmatmul.f32.gmra.mxu0 %v110
  %v462 = vpop.f32.mrf.mxu0
  %v463 = vadd.f32 %v199, %v462
  %464 = vmatmul.f32.gmra.mxu0 %v113
  %v465 = vpop.f32.mrf.mxu0
  %v466 = vadd.f32 %v199, %v465
  %467 = vmatmul.f32.gmra.mxu0 %v116
  %v468 = vpop.f32.mrf.mxu0
  %v469 = vadd.f32 %v199, %v468
  %470 = vmatmul.f32.gmra.mxu0 %v119
  %v471 = vpop.f32.mrf.mxu0
  %v472 = vadd.f32 %v199, %v471
  %473 = vmatmul.f32.gmra.mxu0 %v122
  %v474 = vpop.f32.mrf.mxu0
  %v475 = vadd.f32 %v199, %v474
  %476 = vmatmul.f32.gmra.mxu0 %v125
  %v477 = vpop.f32.mrf.mxu0
  %v478 = vadd.f32 %v199, %v477
  %479 = vmatmul.f32.gmra.mxu0 %v128
  %v480 = vpop.f32.mrf.mxu0
  %v481 = vadd.f32 %v199, %v480
  %482 = vmatmul.f32.gmra.mxu0 %v131
  %v483 = vpop.f32.mrf.mxu0
  %v484 = vadd.f32 %v199, %v483
  %485 = vmatmul.f32.gmra.mxu0 %v134
  %v486 = vpop.f32.mrf.mxu0
  %v487 = vadd.f32 %v199, %v486
  %488 = vmatmul.f32.gmra.mxu0 %v137
  %v489 = vpop.f32.mrf.mxu0
  %v490 = vadd.f32 %v199, %v489
  %491 = vmatmul.f32.gmra.mxu0 %v140
  %v492 = vpop.f32.mrf.mxu0
  %v493 = vadd.f32 %v199, %v492
  %494 = vmatmul.f32.gmra.mxu0 %v143
  %v495 = vpop.f32.mrf.mxu0
  %v496 = vadd.f32 %v199, %v495
  %497 = vmatmul.f32.gmra.mxu0 %v146
  %v498 = vpop.f32.mrf.mxu0
  %v499 = vadd.f32 %v199, %v498
  %500 = vmatmul.f32.gmra.mxu0 %v149
  %v501 = vpop.f32.mrf.mxu0
  %v502 = vadd.f32 %v199, %v501
  %503 = vmatmul.f32.gmra.mxu0 %v152
  %v504 = vpop.f32.mrf.mxu0
  %v505 = vadd.f32 %v199, %v504
  %506 = vmatmul.f32.gmra.mxu0 %v155
  %v507 = vpop.f32.mrf.mxu0
  %v508 = vadd.f32 %v199, %v507
  %509 = vmatmul.f32.gmra.mxu0 %v158
  %v510 = vpop.f32.mrf.mxu0
  %v511 = vadd.f32 %v199, %v510
  %512 = vdwg.mxu0
  %513 = vmatpush.msra.mxu0 %v192
  %514 = vmatpush.msra.mxu0 %v191
  %515 = vmatpush.msra.mxu0 %v190
  %516 = vmatpush.msra.mxu0 %v189
  %517 = vmatpush.msra.mxu0 %v188
  %518 = vmatpush.msra.mxu0 %v187
  %519 = vmatpush.msra.mxu0 %v186
  %520 = vmatpush.msra.mxu0 %v185
  %521 = vmatpush.msra.mxu0 %v184
  %522 = vmatpush.msra.mxu0 %v183
  %523 = vmatpush.msra.mxu0 %v182
  %524 = vmatpush.msra.mxu0 %v181
  %525 = vmatpush.msra.mxu0 %v180
  %526 = vmatpush.msra.mxu0 %v179
  %527 = vmatpush.msra.mxu0 %v178
  %528 = vmatpush.msra.mxu0 %v177
  %529 = vmatmul.f32.gmra.mxu0 %v15
  %v530 = vpop.f32.mrf.mxu0
  %v531 = vadd.f32 %v367, %v530
  %532 = vmatmul.f32.gmra.mxu0 %v18
  %v533 = vpop.f32.mrf.mxu0
  %v534 = vadd.f32 %v370, %v533
  %535 = vmatmul.f32.gmra.mxu0 %v21
  %v536 = vpop.f32.mrf.mxu0
  %v537 = vadd.f32 %v373, %v536
  %538 = vmatmul.f32.gmra.mxu0 %v24
  %v539 = vpop.f32.mrf.mxu0
  %v540 = vadd.f32 %v376, %v539
  %541 = vmatmul.f32.gmra.mxu0 %v27
  %v542 = vpop.f32.mrf.mxu0
  %v543 = vadd.f32 %v379, %v542
  %544 = vmatmul.f32.gmra.mxu0 %v30
  %v545 = vpop.f32.mrf.mxu0
  %v546 = vadd.f32 %v382, %v545
  %547 = vmatmul.f32.gmra.mxu0 %v33
  %v548 = vpop.f32.mrf.mxu0
  %v549 = vadd.f32 %v385, %v548
  %550 = vmatmul.f32.gmra.mxu0 %v36
  %v551 = vpop.f32.mrf.mxu0
  %v552 = vadd.f32 %v388, %v551
  %553 = vmatmul.f32.gmra.mxu0 %v39
  %v554 = vpop.f32.mrf.mxu0
  %v555 = vadd.f32 %v391, %v554
  %556 = vmatmul.f32.gmra.mxu0 %v42
  %v557 = vpop.f32.mrf.mxu0
  %v558 = vadd.f32 %v394, %v557
  %559 = vmatmul.f32.gmra.mxu0 %v45
  %v560 = vpop.f32.mrf.mxu0
  %v561 = vadd.f32 %v397, %v560
  %562 = vmatmul.f32.gmra.mxu0 %v48
  %v563 = vpop.f32.mrf.mxu0
  %v564 = vadd.f32 %v400, %v563
  %565 = vmatmul.f32.gmra.mxu0 %v51
  %v566 = vpop.f32.mrf.mxu0
  %v567 = vadd.f32 %v403, %v566
  %568 = vmatmul.f32.gmra.mxu0 %v54
  %v569 = vpop.f32.mrf.mxu0
  %v570 = vadd.f32 %v406, %v569
  %571 = vmatmul.f32.gmra.mxu0 %v57
  %v572 = vpop.f32.mrf.mxu0
  %v573 = vadd.f32 %v409, %v572
  %574 = vmatmul.f32.gmra.mxu0 %v60
  %v575 = vpop.f32.mrf.mxu0
  %v576 = vadd.f32 %v412, %v575
  %577 = vmatmul.f32.gmra.mxu0 %v63
  %v578 = vpop.f32.mrf.mxu0
  %v579 = vadd.f32 %v415, %v578
  %580 = vmatmul.f32.gmra.mxu0 %v66
  %v581 = vpop.f32.mrf.mxu0
  %v582 = vadd.f32 %v418, %v581
  %583 = vmatmul.f32.gmra.mxu0 %v69
  %v584 = vpop.f32.mrf.mxu0
  %v585 = vadd.f32 %v421, %v584
  %586 = vmatmul.f32.gmra.mxu0 %v72
  %v587 = vpop.f32.mrf.mxu0
  %v588 = vadd.f32 %v424, %v587
  %589 = vmatmul.f32.gmra.mxu0 %v75
  %v590 = vpop.f32.mrf.mxu0
  %v591 = vadd.f32 %v427, %v590
  %592 = vmatmul.f32.gmra.mxu0 %v78
  %v593 = vpop.f32.mrf.mxu0
  %v594 = vadd.f32 %v430, %v593
  %595 = vmatmul.f32.gmra.mxu0 %v81
  %v596 = vpop.f32.mrf.mxu0
  %v597 = vadd.f32 %v433, %v596
  %598 = vmatmul.f32.gmra.mxu0 %v84
  %v599 = vpop.f32.mrf.mxu0
  %v600 = vadd.f32 %v436, %v599
  %601 = vmatmul.f32.gmra.mxu0 %v87
  %v602 = vpop.f32.mrf.mxu0
  %v603 = vadd.f32 %v439, %v602
  %604 = vmatmul.f32.gmra.mxu0 %v90
  %v605 = vpop.f32.mrf.mxu0
  %v606 = vadd.f32 %v442, %v605
  %607 = vmatmul.f32.gmra.mxu0 %v93
  %v608 = vpop.f32.mrf.mxu0
  %v609 = vadd.f32 %v445, %v608
  %610 = vmatmul.f32.gmra.mxu0 %v96
  %v611 = vpop.f32.mrf.mxu0
  %v612 = vadd.f32 %v448, %v611
  %613 = vmatmul.f32.gmra.mxu0 %v99
  %v614 = vpop.f32.mrf.mxu0
  %v615 = vadd.f32 %v451, %v614
  %616 = vmatmul.f32.gmra.mxu0 %v102
  %v617 = vpop.f32.mrf.mxu0
  %v618 = vadd.f32 %v454, %v617
  %619 = vmatmul.f32.gmra.mxu0 %v105
  %v620 = vpop.f32.mrf.mxu0
  %v621 = vadd.f32 %v457, %v620
  %622 = vmatmul.f32.gmra.mxu0 %v108
  %v623 = vpop.f32.mrf.mxu0
  %v624 = vadd.f32 %v460, %v623
  %625 = vmatmul.f32.gmra.mxu0 %v111
  %v626 = vpop.f32.mrf.mxu0
  %v627 = vadd.f32 %v463, %v626
  %628 = vmatmul.f32.gmra.mxu0 %v114
  %v629 = vpop.f32.mrf.mxu0
  %v630 = vadd.f32 %v466, %v629
  %631 = vmatmul.f32.gmra.mxu0 %v117
  %v632 = vpop.f32.mrf.mxu0
  %v633 = vadd.f32 %v469, %v632
  %634 = vmatmul.f32.gmra.mxu0 %v120
  %v635 = vpop.f32.mrf.mxu0
  %v636 = vadd.f32 %v472, %v635
  %637 = vmatmul.f32.gmra.mxu0 %v123
  %v638 = vpop.f32.mrf.mxu0
  %v639 = vadd.f32 %v475, %v638
  %640 = vmatmul.f32.gmra.mxu0 %v126
  %v641 = vpop.f32.mrf.mxu0
  %v642 = vadd.f32 %v478, %v641
  %643 = vmatmul.f32.gmra.mxu0 %v129
  %v644 = vpop.f32.mrf.mxu0
  %v645 = vadd.f32 %v481, %v644
  %646 = vmatmul.f32.gmra.mxu0 %v132
  %v647 = vpop.f32.mrf.mxu0
  %v648 = vadd.f32 %v484, %v647
  %649 = vmatmul.f32.gmra.mxu0 %v135
  %v650 = vpop.f32.mrf.mxu0
  %v651 = vadd.f32 %v487, %v650
  %652 = vmatmul.f32.gmra.mxu0 %v138
  %v653 = vpop.f32.mrf.mxu0
  %v654 = vadd.f32 %v490, %v653
  %655 = vmatmul.f32.gmra.mxu0 %v141
  %v656 = vpop.f32.mrf.mxu0
  %v657 = vadd.f32 %v493, %v656
  %658 = vmatmul.f32.gmra.mxu0 %v144
  %v659 = vpop.f32.mrf.mxu0
  %v660 = vadd.f32 %v496, %v659
  %661 = vmatmul.f32.gmra.mxu0 %v147
  %v662 = vpop.f32.mrf.mxu0
  %v663 = vadd.f32 %v499, %v662
  %664 = vmatmul.f32.gmra.mxu0 %v150
  %v665 = vpop.f32.mrf.mxu0
  %v666 = vadd.f32 %v502, %v665
  %667 = vmatmul.f32.gmra.mxu0 %v153
  %v668 = vpop.f32.mrf.mxu0
  %v669 = vadd.f32 %v505, %v668
  %670 = vmatmul.f32.gmra.mxu0 %v156
  %v671 = vpop.f32.mrf.mxu0
  %v672 = vadd.f32 %v508, %v671
  %673 = vmatmul.f32.gmra.mxu0 %v159
  %v674 = vpop.f32.mrf.mxu0
  %v675 = vadd.f32 %v511, %v674
  %676 = vdwg.mxu0
  %677 = vmatpush.msra.mxu0 0.0
  %678 = vmatpush.msra.mxu0 0.0
  %679 = vmatpush.msra.mxu0 0.0
  %680 = vmatpush.msra.mxu0 0.0
  %681 = vmatpush.msra.mxu0 0.0
  %682 = vmatpush.msra.mxu0 0.0
  %683 = vmatpush.msra.mxu0 0.0
  %684 = vmatpush.msra.mxu0 0.0
  %685 = vmatpush.msra.mxu0 0.0
  %686 = vmatpush.msra.mxu0 0.0
  %687 = vmatpush.msra.mxu0 0.0
  %688 = vmatpush.msra.mxu0 0.0
  %689 = vmatpush.msra.mxu0 %v196
  %690 = vmatpush.msra.mxu0 %v195
  %691 = vmatpush.msra.mxu0 %v194
  %692 = vmatpush.msra.mxu0 %v193
  %693 = vmatmul.f32.gmra.mxu0 %v203
  %v694 = vpop.f32.mrf.mxu0
  %v695 = vadd.f32 %v531, %v694
  %696 = vmatmul.f32.gmra.mxu0 %v206
  %v697 = vpop.f32.mrf.mxu0
  %v698 = vadd.f32 %v534, %v697
  %699 = vmatmul.f32.gmra.mxu0 %v209
  %v700 = vpop.f32.mrf.mxu0
  %v701 = vadd.f32 %v537, %v700
  %702 = vmatmul.f32.gmra.mxu0 %v212
  %v703 = vpop.f32.mrf.mxu0
  %v704 = vadd.f32 %v540, %v703
  %705 = vmatmul.f32.gmra.mxu0 %v215
  %v706 = vpop.f32.mrf.mxu0
  %v707 = vadd.f32 %v543, %v706
  %708 = vmatmul.f32.gmra.mxu0 %v218
  %v709 = vpop.f32.mrf.mxu0
  %v710 = vadd.f32 %v546, %v709
  %711 = vmatmul.f32.gmra.mxu0 %v221
  %v712 = vpop.f32.mrf.mxu0
  %v713 = vadd.f32 %v549, %v712
  %714 = vmatmul.f32.gmra.mxu0 %v224
  %v715 = vpop.f32.mrf.mxu0
  %v716 = vadd.f32 %v552, %v715
  %717 = vmatmul.f32.gmra.mxu0 %v227
  %v718 = vpop.f32.mrf.mxu0
  %v719 = vadd.f32 %v555, %v718
  %720 = vmatmul.f32.gmra.mxu0 %v230
  %v721 = vpop.f32.mrf.mxu0
  %v722 = vadd.f32 %v558, %v721
  %723 = vmatmul.f32.gmra.mxu0 %v233
  %v724 = vpop.f32.mrf.mxu0
  %v725 = vadd.f32 %v561, %v724
  %726 = vmatmul.f32.gmra.mxu0 %v236
  %v727 = vpop.f32.mrf.mxu0
  %v728 = vadd.f32 %v564, %v727
  %729 = vmatmul.f32.gmra.mxu0 %v239
  %v730 = vpop.f32.mrf.mxu0
  %v731 = vadd.f32 %v567, %v730
  %732 = vmatmul.f32.gmra.mxu0 %v242
  %v733 = vpop.f32.mrf.mxu0
  %v734 = vadd.f32 %v570, %v733
  %735 = vmatmul.f32.gmra.mxu0 %v245
  %v736 = vpop.f32.mrf.mxu0
  %v737 = vadd.f32 %v573, %v736
  %738 = vmatmul.f32.gmra.mxu0 %v248
  %v739 = vpop.f32.mrf.mxu0
  %v740 = vadd.f32 %v576, %v739
  %741 = vmatmul.f32.gmra.mxu0 %v251
  %v742 = vpop.f32.mrf.mxu0
  %v743 = vadd.f32 %v579, %v742
  %744 = vmatmul.f32.gmra.mxu0 %v254
  %v745 = vpop.f32.mrf.mxu0
  %v746 = vadd.f32 %v582, %v745
  %747 = vmatmul.f32.gmra.mxu0 %v257
  %v748 = vpop.f32.mrf.mxu0
  %v749 = vadd.f32 %v585, %v748
  %750 = vmatmul.f32.gmra.mxu0 %v260
  %v751 = vpop.f32.mrf.mxu0
  %v752 = vadd.f32 %v588, %v751
  %753 = vmatmul.f32.gmra.mxu0 %v263
  %v754 = vpop.f32.mrf.mxu0
  %v755 = vadd.f32 %v591, %v754
  %756 = vmatmul.f32.gmra.mxu0 %v266
  %v757 = vpop.f32.mrf.mxu0
  %v758 = vadd.f32 %v594, %v757
  %759 = vmatmul.f32.gmra.mxu0 %v269
  %v760 = vpop.f32.mrf.mxu0
  %v761 = vadd.f32 %v597, %v760
  %762 = vmatmul.f32.gmra.mxu0 %v272
  %v763 = vpop.f32.mrf.mxu0
  %v764 = vadd.f32 %v600, %v763
  %765 = vmatmul.f32.gmra.mxu0 %v275
  %v766 = vpop.f32.mrf.mxu0
  %v767 = vadd.f32 %v603, %v766
  %768 = vmatmul.f32.gmra.mxu0 %v278
  %v769 = vpop.f32.mrf.mxu0
  %v770 = vadd.f32 %v606, %v769
  %771 = vmatmul.f32.gmra.mxu0 %v281
  %v772 = vpop.f32.mrf.mxu0
  %v773 = vadd.f32 %v609, %v772
  %774 = vmatmul.f32.gmra.mxu0 %v284
  %v775 = vpop.f32.mrf.mxu0
  %v776 = vadd.f32 %v612, %v775
  %777 = vmatmul.f32.gmra.mxu0 %v287
  %v778 = vpop.f32.mrf.mxu0
  %v779 = vadd.f32 %v615, %v778
  %780 = vmatmul.f32.gmra.mxu0 %v290
  %v781 = vpop.f32.mrf.mxu0
  %v782 = vadd.f32 %v618, %v781
  %783 = vmatmul.f32.gmra.mxu0 %v293
  %v784 = vpop.f32.mrf.mxu0
  %v785 = vadd.f32 %v621, %v784
  %786 = vmatmul.f32.gmra.mxu0 %v296
  %v787 = vpop.f32.mrf.mxu0
  %v788 = vadd.f32 %v624, %v787
  %789 = vmatmul.f32.gmra.mxu0 %v299
  %v790 = vpop.f32.mrf.mxu0
  %v791 = vadd.f32 %v627, %v790
  %792 = vmatmul.f32.gmra.mxu0 %v302
  %v793 = vpop.f32.mrf.mxu0
  %v794 = vadd.f32 %v630, %v793
  %795 = vmatmul.f32.gmra.mxu0 %v305
  %v796 = vpop.f32.mrf.mxu0
  %v797 = vadd.f32 %v633, %v796
  %798 = vmatmul.f32.gmra.mxu0 %v308
  %v799 = vpop.f32.mrf.mxu0
  %v800 = vadd.f32 %v636, %v799
  %801 = vmatmul.f32.gmra.mxu0 %v311
  %v802 = vpop.f32.mrf.mxu0
  %v803 = vadd.f32 %v639, %v802
  %804 = vmatmul.f32.gmra.mxu0 %v314
  %v805 = vpop.f32.mrf.mxu0
  %v806 = vadd.f32 %v642, %v805
  %807 = vmatmul.f32.gmra.mxu0 %v317
  %v808 = vpop.f32.mrf.mxu0
  %v809 = vadd.f32 %v645, %v808
  %810 = vmatmul.f32.gmra.mxu0 %v320
  %v811 = vpop.f32.mrf.mxu0
  %v812 = vadd.f32 %v648, %v811
  %813 = vmatmul.f32.gmra.mxu0 %v323
  %v814 = vpop.f32.mrf.mxu0
  %v815 = vadd.f32 %v651, %v814
  %816 = vmatmul.f32.gmra.mxu0 %v326
  %v817 = vpop.f32.mrf.mxu0
  %v818 = vadd.f32 %v654, %v817
  %819 = vmatmul.f32.gmra.mxu0 %v329
  %v820 = vpop.f32.mrf.mxu0
  %v821 = vadd.f32 %v657, %v820
  %822 = vmatmul.f32.gmra.mxu0 %v332
  %v823 = vpop.f32.mrf.mxu0
  %v824 = vadd.f32 %v660, %v823
  %825 = vmatmul.f32.gmra.mxu0 %v335
  %v826 = vpop.f32.mrf.mxu0
  %v827 = vadd.f32 %v663, %v826
  %828 = vmatmul.f32.gmra.mxu0 %v338
  %v829 = vpop.f32.mrf.mxu0
  %v830 = vadd.f32 %v666, %v829
  %831 = vmatmul.f32.gmra.mxu0 %v341
  %v832 = vpop.f32.mrf.mxu0
  %v833 = vadd.f32 %v669, %v832
  %834 = vmatmul.f32.gmra.mxu0 %v344
  %v835 = vpop.f32.mrf.mxu0
  %v836 = vadd.f32 %v672, %v835
  %837 = vmatmul.f32.gmra.mxu0 %v347
  %v838 = vpop.f32.mrf.mxu0
  %v839 = vadd.f32 %v675, %v838
  %840 = vdwg.mxu0
  %v841 = vmax.f32 %v695, 0.0
  %v842 = vmax.f32 %v698, 0.0
  %v843 = vmax.f32 %v701, 0.0
  %v844 = vmax.f32 %v704, 0.0
  %v845 = vmax.f32 %v707, 0.0
  %v846 = vmax.f32 %v710, 0.0
  %v847 = vmax.f32 %v713, 0.0
  %v848 = vmax.f32 %v716, 0.0
  %v849 = vmax.f32 %v719, 0.0
  %v850 = vmax.f32 %v722, 0.0
  %v851 = vmax.f32 %v725, 0.0
  %v852 = vmax.f32 %v728, 0.0
  %v853 = vmax.f32 %v731, 0.0
  %v854 = vmax.f32 %v734, 0.0
  %v855 = vmax.f32 %v737, 0.0
  %v856 = vmax.f32 %v740, 0.0
  %v857 = vmax.f32 %v743, 0.0
  %v858 = vmax.f32 %v746, 0.0
  %v859 = vmax.f32 %v749, 0.0
  %v860 = vmax.f32 %v752, 0.0
  %v861 = vmax.f32 %v755, 0.0
  %v862 = vmax.f32 %v758, 0.0
  %v863 = vmax.f32 %v761, 0.0
  %v864 = vmax.f32 %v764, 0.0
  %v865 = vmax.f32 %v767, 0.0
  %v866 = vmax.f32 %v770, 0.0
  %v867 = vmax.f32 %v773, 0.0
  %v868 = vmax.f32 %v776, 0.0
  %v869 = vmax.f32 %v779, 0.0
  %v870 = vmax.f32 %v782, 0.0
  %v871 = vmax.f32 %v785, 0.0
  %v872 = vmax.f32 %v788, 0.0
  %v873 = vmax.f32 %v791, 0.0
  %v874 = vmax.f32 %v794, 0.0
  %v875 = vmax.f32 %v797, 0.0
  %v876 = vmax.f32 %v800, 0.0
  %v877 = vmax.f32 %v803, 0.0
  %v878 = vmax.f32 %v806, 0.0
  %v879 = vmax.f32 %v809, 0.0
  %v880 = vmax.f32 %v812, 0.0
  %v881 = vmax.f32 %v815, 0.0
  %v882 = vmax.f32 %v818, 0.0
  %v883 = vmax.f32 %v821, 0.0
  %v884 = vmax.f32 %v824, 0.0
  %v885 = vmax.f32 %v827, 0.0
  %v886 = vmax.f32 %v830, 0.0
  %v887 = vmax.f32 %v833, 0.0
  %v888 = vmax.f32 %v836, 0.0
  %v889 = vmax.f32 %v839, 0.0
  %890 = vst [vmem:[%s3] sm:$0xff] %v841
  %891 = vst [vmem:[%s3 + $0x8] sm:$0xff] %v842
  %892 = vst [vmem:[%s3 + $0x10] sm:$0xff] %v843
  %893 = vst [vmem:[%s3 + $0x18] sm:$0xff] %v844
  %894 = vst [vmem:[%s3 + $0x20] sm:$0xff] %v845
  %895 = vst [vmem:[%s3 + $0x28] sm:$0xff] %v846
  %896 = vst [vmem:[%s3 + $0x30] sm:$0xff] %v847
  %897 = vst [vmem:[%s3 + $0x38] sm:$0xff] %v848
  %898 = vst [vmem:[%s3 + $0x40] sm:$0xff] %v849
  %899 = vst [vmem:[%s3 + $0x48] sm:$0xff] %v850
  %900 = vst [vmem:[%s3 + $0x50] sm:$0xff] %v851
  %901 = vst [vmem:[%s3 + $0x58] sm:$0xff] %v852
  %902 = vst [vmem:[%s3 + $0x60] sm:$0xff] %v853
  %903 = vst [vmem:[%s3 + $0x68] sm:$0xff] %v854
  %904 = vst [vmem:[%s3 + $0x70] sm:$0xff] %v855
  %905 = vst [vmem:[%s3 + $0x78] sm:$0xff] %v856
  %906 = vst [vmem:[%s3 + $0x80] sm:$0xff] %v857
  %907 = vst [vmem:[%s3 + $0x88] sm:$0xff] %v858
  %908 = vst [vmem:[%s3 + $0x90] sm:$0xff] %v859
  %909 = vst [vmem:[%s3 + $0x98] sm:$0xff] %v860
  %910 = vst [vmem:[%s3 + $0xa0] sm:$0xff] %v861
  %911 = vst [vmem:[%s3 + $0xa8] sm:$0xff] %v862
  %912 = vst [vmem:[%s3 + $0xb0] sm:$0xff] %v863
  %913 = vst [vmem:[%s3 + $0xb8] sm:$0xff] %v864
  %914 = vst [vmem:[%s3 + $0xc0] sm:$0xff] %v865
  %915 = vst [vmem:[%s3 + $0xc8] sm:$0xff] %v866
  %916 = vst [vmem:[%s3 + $0xd0] sm:$0xff] %v867
  %917 = vst [vmem:[%s3 + $0xd8] sm:$0xff] %v868
  %918 = vst [vmem:[%s3 + $0xe0] sm:$0xff] %v869
  %919 = vst [vmem:[%s3 + $0xe8] sm:$0xff] %v870
  %920 = vst [vmem:[%s3 + $0xf0] sm:$0xff] %v871
  %921 = vst [vmem:[%s3 + $0xf8] sm:$0xff] %v872
  %922 = vst [vmem:[%s3 + $0x100] sm:$0xff] %v873
  %923 = vst [vmem:[%s3 + $0x108] sm:$0xff] %v874
  %924 = vst [vmem:[%s3 + $0x110] sm:$0xff] %v875
  %925 = vst [vmem:[%s3 + $0x118] sm:$0xff] %v876
  %926 = vst [vmem:[%s3 + $0x120] sm:$0xff] %v877
  %927 = vst [vmem:[%s3 + $0x128] sm:$0xff] %v878
  %928 = vst [vmem:[%s3 + $0x130] sm:$0xff] %v879
  %929 = vst [vmem:[%s3 + $0x138] sm:$0xff] %v880
  %930 = vst [vmem:[%s3 + $0x140] sm:$0xff] %v881
  %931 = vst [vmem:[%s3 + $0x148] sm:$0xff] %v882
  %932 = vst [vmem:[%s3 + $0x150] sm:$0xff] %v883
  %933 = vst [vmem:[%s3 + $0x158] sm:$0xff] %v884
  %934 = vst [vmem:[%s3 + $0x160] sm:$0xff] %v885
  %935 = vst [vmem:[%s3 + $0x168] sm:$0xff] %v886
  %936 = vst [vmem:[%s3 + $0x170] sm:$0xff] %v887
  %937 = vst [vmem:[%s3 + $0x178] sm:$0xff] %v888
  %938 = vst [vmem:[%s3 + $0x180] sm:$0xff] %v889
  // Predicated region
  $region14: #{mnist_network_forward.5} parent=0 // pred_check
    _
  $region15: #{mnist_network_forward.5} parent=0 // pred_check_branch
    %940 = sbr.rel (0) target = $region17
  $region16: #{mnist_network_forward.5} parent=0 // pred_region
    _
  $region17: #{mnist_network_forward.5} parent=0 // pred_fallthru
    _
  // Predicated region
  $region18: #{mnist_network_forward.5} parent=0 // pred_check
    _
  $region19: #{mnist_network_forward.5} parent=0 // pred_check_branch
    %942 = sbr.rel (0) target = $region21
  $region20: #{mnist_network_forward.5} parent=0 // pred_region
    _
  $region21: #{mnist_network_forward.5} parent=0 // pred_fallthru
    _

// kernel: mnist_network_forward.6
$region0: #{mnist_network_forward.6}
  #allocation0 [shape = 'u32[]', space=smem, size = 0x4, offset = 0x4, fixed_abs, tag = 'smem constant byte address 0x4 - core index']
  #allocation1 [shape = 'u32[72,128]{1,0:T(1,128)}', space=vmem, size = 0x9000, scoped, tag = 'internal scratch']
  %s0 = inlined_call_operand.vmem [shape: f32[416,576], index: 0, kind: input, shape index: {}]
  %s1 = inlined_call_operand.vmem [shape: f32[576,128], index: 1, kind: input, shape index: {}]
  %s2 = inlined_call_operand.vmem [shape: f32[1,128], index: 2, kind: input, shape index: {}]
  %s3 = inlined_call_operand.vmem [shape: f32[104,128], index: 3, kind: output, shape index: {}]
  %s4 = sld [smem:[#allocation0]]
  $region22: #{mnist_network_forward.6} parent=0
    _
  %s6 = ssub.s32 1, %s4
  %s7 = scalar_select 0, %s6, %s4
  // Predicated region
  $region2: #{mnist_network_forward.6} parent=0 // pred_check
    _
  $region3: #{mnist_network_forward.6} parent=0 // pred_check_branch
    %9 = sbr.rel (0) target = $region5
  $region4: #{mnist_network_forward.6} parent=0 // pred_region
    _
  $region5: #{mnist_network_forward.6} parent=0 // pred_fallthru
    _
  // Predicated region
  $region6: #{mnist_network_forward.6} parent=0 // pred_check
    _
  $region7: #{mnist_network_forward.6} parent=0 // pred_check_branch
    %11 = sbr.rel (0) target = $region9
  $region8: #{mnist_network_forward.6} parent=0 // pred_region
    _
  $region9: #{mnist_network_forward.6} parent=0 // pred_fallthru
    _
  // Predicated region
  $region10: #{mnist_network_forward.6} parent=0 // pred_check
    _
  $region11: #{mnist_network_forward.6} parent=0 // pred_check_branch
    %13 = sbr.rel (0) target = $region13
  $region12: #{mnist_network_forward.6} parent=0 // pred_region
    _
  $region13: #{mnist_network_forward.6} parent=0 // pred_fallthru
    _
  %v14 = vld [vmem:[%s0] sm:$0xff]
  %v15 = vld [vmem:[%s0 + $0x8] sm:$0xff]
  %v16 = vld [vmem:[%s0 + $0x10] sm:$0xff]
  %v17 = vld [vmem:[%s0 + $0x18] sm:$0xff]
  %v18 = vld [vmem:[%s0 + $0x20] sm:$0xff]
  %v19 = vld [vmem:[%s0 + $0x28] sm:$0xff]
  %v20 = vld [vmem:[%s0 + $0x30] sm:$0xff]
  %v21 = vld [vmem:[%s0 + $0x38] sm:$0xff]
  %v22 = vld [vmem:[%s0 + $0x40] sm:$0xff]
  %v23 = vld [vmem:[%s0 + $0x48] sm:$0xff]
  %v24 = vld [vmem:[%s0 + $0x50] sm:$0xff]
  %v25 = vld [vmem:[%s0 + $0x58] sm:$0xff]
  %v26 = vld [vmem:[%s0 + $0x60] sm:$0xff]
  %v27 = vld [vmem:[%s0 + $0x68] sm:$0xff]
  %v28 = vld [vmem:[%s0 + $0x70] sm:$0xff]
  %v29 = vld [vmem:[%s0 + $0x78] sm:$0xff]
  %v30 = vld [vmem:[%s0 + $0x80] sm:$0xff]
  %v31 = vld [vmem:[%s0 + $0x88] sm:$0xff]
  %v32 = vld [vmem:[%s0 + $0x90] sm:$0xff]
  %v33 = vld [vmem:[%s0 + $0x98] sm:$0xff]
  %v34 = vld [vmem:[%s0 + $0xa0] sm:$0xff]
  %v35 = vld [vmem:[%s0 + $0xa8] sm:$0xff]
  %v36 = vld [vmem:[%s0 + $0xb0] sm:$0xff]
  %v37 = vld [vmem:[%s0 + $0xb8] sm:$0xff]
  %v38 = vld [vmem:[%s0 + $0xc0] sm:$0xff]
  %v39 = vld [vmem:[%s0 + $0xc8] sm:$0xff]
  %v40 = vld [vmem:[%s0 + $0xd0] sm:$0xff]
  %v41 = vld [vmem:[%s0 + $0xd8] sm:$0xff]
  %v42 = vld [vmem:[%s0 + $0xe0] sm:$0xff]
  %v43 = vld [vmem:[%s0 + $0xe8] sm:$0xff]
  %v44 = vld [vmem:[%s0 + $0xf0] sm:$0xff]
  %v45 = vld [vmem:[%s0 + $0xf8] sm:$0xff]
  %v46 = vld [vmem:[%s0 + $0x100] sm:$0xff]
  %v47 = vld [vmem:[%s0 + $0x108] sm:$0xff]
  %v48 = vld [vmem:[%s0 + $0x110] sm:$0xff]
  %v49 = vld [vmem:[%s0 + $0x118] sm:$0xff]
  %v50 = vld [vmem:[%s0 + $0x120] sm:$0xff]
  %v51 = vld [vmem:[%s0 + $0x128] sm:$0xff]
  %v52 = vld [vmem:[%s0 + $0x130] sm:$0xff]
  %v53 = vld [vmem:[%s0 + $0x138] sm:$0xff]
  %v54 = vld [vmem:[%s0 + $0x140] sm:$0xff]
  %v55 = vld [vmem:[%s0 + $0x148] sm:$0xff]
  %v56 = vld [vmem:[%s0 + $0x150] sm:$0xff]
  %v57 = vld [vmem:[%s0 + $0x158] sm:$0xff]
  %v58 = vld [vmem:[%s0 + $0x160] sm:$0xff]
  %v59 = vld [vmem:[%s0 + $0x168] sm:$0xff]
  %v60 = vld [vmem:[%s0 + $0x170] sm:$0xff]
  %v61 = vld [vmem:[%s0 + $0x178] sm:$0xff]
  %v62 = vld [vmem:[%s0 + $0x180] sm:$0xff]
  %v63 = vld [vmem:[%s0 + $0x188] sm:$0xff]
  %v64 = vld [vmem:[%s0 + $0x190] sm:$0xff]
  %v65 = vld [vmem:[%s0 + $0x198] sm:$0xff]
  %v66 = vld [vmem:[%s0 + $0x1a0] sm:$0xff]
  %v67 = vld [vmem:[%s0 + $0x1a8] sm:$0xff]
  %v68 = vld [vmem:[%s0 + $0x1b0] sm:$0xff]
  %v69 = vld [vmem:[%s0 + $0x1b8] sm:$0xff]
  %v70 = vld [vmem:[%s0 + $0x1c0] sm:$0xff]
  %v71 = vld [vmem:[%s0 + $0x1c8] sm:$0xff]
  %v72 = vld [vmem:[%s0 + $0x1d0] sm:$0xff]
  %v73 = vld [vmem:[%s0 + $0x1d8] sm:$0xff]
  %v74 = vld [vmem:[%s0 + $0x1e0] sm:$0xff]
  %v75 = vld [vmem:[%s0 + $0x1e8] sm:$0xff]
  %v76 = vld [vmem:[%s0 + $0x1f0] sm:$0xff]
  %v77 = vld [vmem:[%s0 + $0x1f8] sm:$0xff]
  %v78 = vld [vmem:[%s0 + $0x200] sm:$0xff]
  %v79 = vld [vmem:[%s0 + $0x208] sm:$0xff]
  %v80 = vld [vmem:[%s0 + $0x210] sm:$0xff]
  %v81 = vld [vmem:[%s0 + $0x218] sm:$0xff]
  %v82 = vld [vmem:[%s0 + $0x220] sm:$0xff]
  %v83 = vld [vmem:[%s0 + $0x228] sm:$0xff]
  %v84 = vld [vmem:[%s0 + $0x230] sm:$0xff]
  %v85 = vld [vmem:[%s0 + $0x238] sm:$0xff]
  %v86 = vld [vmem:[%s0 + $0x240] sm:$0xff]
  %v87 = vld [vmem:[%s0 + $0x248] sm:$0xff]
  %v88 = vld [vmem:[%s0 + $0x250] sm:$0xff]
  %v89 = vld [vmem:[%s0 + $0x258] sm:$0xff]
  %v90 = vld [vmem:[%s0 + $0x260] sm:$0xff]
  %v91 = vld [vmem:[%s0 + $0x268] sm:$0xff]
  %v92 = vld [vmem:[%s0 + $0x270] sm:$0xff]
  %v93 = vld [vmem:[%s0 + $0x278] sm:$0xff]
  %v94 = vld [vmem:[%s0 + $0x280] sm:$0xff]
  %v95 = vld [vmem:[%s0 + $0x288] sm:$0xff]
  %v96 = vld [vmem:[%s0 + $0x290] sm:$0xff]
  %v97 = vld [vmem:[%s0 + $0x298] sm:$0xff]
  %v98 = vld [vmem:[%s0 + $0x2a0] sm:$0xff]
  %v99 = vld [vmem:[%s0 + $0x2a8] sm:$0xff]
  %v100 = vld [vmem:[%s0 + $0x2b0] sm:$0xff]
  %v101 = vld [vmem:[%s0 + $0x2b8] sm:$0xff]
  %v102 = vld [vmem:[%s0 + $0x2c0] sm:$0xff]
  %v103 = vld [vmem:[%s0 + $0x2c8] sm:$0xff]
  %v104 = vld [vmem:[%s0 + $0x2d0] sm:$0xff]
  %v105 = vld [vmem:[%s0 + $0x2d8] sm:$0xff]
  %v106 = vld [vmem:[%s0 + $0x2e0] sm:$0xff]
  %v107 = vld [vmem:[%s0 + $0x2e8] sm:$0xff]
  %v108 = vld [vmem:[%s0 + $0x2f0] sm:$0xff]
  %v109 = vld [vmem:[%s0 + $0x2f8] sm:$0xff]
  %v110 = vld [vmem:[%s0 + $0x300] sm:$0xff]
  %v111 = vld [vmem:[%s0 + $0x308] sm:$0xff]
  %v112 = vld [vmem:[%s0 + $0x310] sm:$0xff]
  %v113 = vld [vmem:[%s0 + $0x318] sm:$0xff]
  %v114 = vld [vmem:[%s0 + $0x320] sm:$0xff]
  %v115 = vld [vmem:[%s0 + $0x328] sm:$0xff]
  %v116 = vld [vmem:[%s0 + $0x330] sm:$0xff]
  %v117 = vld [vmem:[%s0 + $0x338] sm:$0xff]
  %v118 = vld [vmem:[%s0 + $0x340] sm:$0xff]
  %v119 = vld [vmem:[%s0 + $0x348] sm:$0xff]
  %v120 = vld [vmem:[%s0 + $0x350] sm:$0xff]
  %v121 = vld [vmem:[%s0 + $0x358] sm:$0xff]
  %v122 = vld [vmem:[%s0 + $0x360] sm:$0xff]
  %v123 = vld [vmem:[%s0 + $0x368] sm:$0xff]
  %v124 = vld [vmem:[%s0 + $0x370] sm:$0xff]
  %v125 = vld [vmem:[%s0 + $0x378] sm:$0xff]
  %v126 = vld [vmem:[%s0 + $0x380] sm:$0xff]
  %v127 = vld [vmem:[%s0 + $0x388] sm:$0xff]
  %v128 = vld [vmem:[%s0 + $0x390] sm:$0xff]
  %v129 = vld [vmem:[%s0 + $0x398] sm:$0xff]
  %v130 = vld [vmem:[%s0 + $0x3a0] sm:$0xff]
  %v131 = vld [vmem:[%s0 + $0x3a8] sm:$0xff]
  %v132 = vld [vmem:[%s0 + $0x3b0] sm:$0xff]
  %v133 = vld [vmem:[%s0 + $0x3b8] sm:$0xff]
  %v134 = vld [vmem:[%s0 + $0x3c0] sm:$0xff]
  %v135 = vld [vmem:[%s0 + $0x3c8] sm:$0xff]
  %v136 = vld [vmem:[%s0 + $0x3d0] sm:$0xff]
  %v137 = vld [vmem:[%s0 + $0x3d8] sm:$0xff]
  %v138 = vld [vmem:[%s0 + $0x3e0] sm:$0xff]
  %v139 = vld [vmem:[%s0 + $0x3e8] sm:$0xff]
  %v140 = vld [vmem:[%s0 + $0x3f0] sm:$0xff]
  %v141 = vld [vmem:[%s0 + $0x3f8] sm:$0xff]
  %v142 = vld [vmem:[%s0 + $0x400] sm:$0xff]
  %v143 = vld [vmem:[%s0 + $0x408] sm:$0xff]
  %v144 = vld [vmem:[%s0 + $0x410] sm:$0xff]
  %v145 = vld [vmem:[%s0 + $0x418] sm:$0xff]
  %v146 = vld [vmem:[%s0 + $0x420] sm:$0xff]
  %v147 = vld [vmem:[%s0 + $0x428] sm:$0xff]
  %v148 = vld [vmem:[%s0 + $0x430] sm:$0xff]
  %v149 = vld [vmem:[%s0 + $0x438] sm:$0xff]
  %v150 = vld [vmem:[%s0 + $0x440] sm:$0xff]
  %v151 = vld [vmem:[%s0 + $0x448] sm:$0xff]
  %v152 = vld [vmem:[%s0 + $0x450] sm:$0xff]
  %v153 = vld [vmem:[%s0 + $0x458] sm:$0xff]
  %v154 = vld [vmem:[%s0 + $0x460] sm:$0xff]
  %v155 = vld [vmem:[%s0 + $0x468] sm:$0xff]
  %v156 = vld [vmem:[%s0 + $0x470] sm:$0xff]
  %v157 = vld [vmem:[%s0 + $0x478] sm:$0xff]
  %v158 = vld [vmem:[%s0 + $0x480] sm:$0xff]
  %v159 = vld [vmem:[%s0 + $0x488] sm:$0xff]
  %v160 = vld [vmem:[%s0 + $0x490] sm:$0xff]
  %v161 = vld [vmem:[%s0 + $0x498] sm:$0xff]
  %v162 = vld [vmem:[%s0 + $0x4a0] sm:$0xff]
  %v163 = vld [vmem:[%s0 + $0x4a8] sm:$0xff]
  %v164 = vld [vmem:[%s0 + $0x4b0] sm:$0xff]
  %v165 = vld [vmem:[%s0 + $0x4b8] sm:$0xff]
  %v166 = vld [vmem:[%s0 + $0x4c0] sm:$0xff]
  %v167 = vld [vmem:[%s0 + $0x4c8] sm:$0xff]
  %v168 = vld [vmem:[%s0 + $0x4d0] sm:$0xff]
  %v169 = vld [vmem:[%s0 + $0x4d8] sm:$0xff]
  %v170 = vld [vmem:[%s0 + $0x4e0] sm:$0xff]
  %v171 = vld [vmem:[%s0 + $0x4e8] sm:$0xff]
  %v172 = vld [vmem:[%s0 + $0x4f0] sm:$0xff]
  %v173 = vld [vmem:[%s0 + $0x4f8] sm:$0xff]
  %v174 = vld [vmem:[%s0 + $0x500] sm:$0xff]
  %v175 = vld [vmem:[%s0 + $0x508] sm:$0xff]
  %v176 = vld [vmem:[%s0 + $0x510] sm:$0xff]
  %v177 = vld [vmem:[%s0 + $0x518] sm:$0xff]
  %v178 = vld [vmem:[%s0 + $0x520] sm:$0xff]
  %v179 = vld [vmem:[%s0 + $0x528] sm:$0xff]
  %v180 = vld [vmem:[%s0 + $0x530] sm:$0xff]
  %v181 = vld [vmem:[%s0 + $0x538] sm:$0xff]
  %v182 = vld [vmem:[%s0 + $0x540] sm:$0xff]
  %v183 = vld [vmem:[%s0 + $0x548] sm:$0xff]
  %v184 = vld [vmem:[%s0 + $0x550] sm:$0xff]
  %v185 = vld [vmem:[%s0 + $0x558] sm:$0xff]
  %v186 = vld [vmem:[%s0 + $0x560] sm:$0xff]
  %v187 = vld [vmem:[%s0 + $0x568] sm:$0xff]
  %v188 = vld [vmem:[%s0 + $0x570] sm:$0xff]
  %v189 = vld [vmem:[%s0 + $0x578] sm:$0xff]
  %v190 = vld [vmem:[%s0 + $0x580] sm:$0xff]
  %v191 = vld [vmem:[%s0 + $0x588] sm:$0xff]
  %v192 = vld [vmem:[%s0 + $0x590] sm:$0xff]
  %v193 = vld [vmem:[%s0 + $0x598] sm:$0xff]
  %v194 = vld [vmem:[%s0 + $0x5a0] sm:$0xff]
  %v195 = vld [vmem:[%s0 + $0x5a8] sm:$0xff]
  %v196 = vld [vmem:[%s0 + $0x5b0] sm:$0xff]
  %v197 = vld [vmem:[%s0 + $0x5b8] sm:$0xff]
  %v198 = vld [vmem:[%s0 + $0x5c0] sm:$0xff]
  %v199 = vld [vmem:[%s0 + $0x5c8] sm:$0xff]
  %v200 = vld [vmem:[%s0 + $0x5d0] sm:$0xff]
  %v201 = vld [vmem:[%s0 + $0x5d8] sm:$0xff]
  %v202 = vld [vmem:[%s0 + $0x5e0] sm:$0xff]
  %v203 = vld [vmem:[%s0 + $0x5e8] sm:$0xff]
  %v204 = vld [vmem:[%s0 + $0x5f0] sm:$0xff]
  %v205 = vld [vmem:[%s0 + $0x5f8] sm:$0xff]
  %v206 = vld [vmem:[%s0 + $0x600] sm:$0xff]
  %v207 = vld [vmem:[%s0 + $0x608] sm:$0xff]
  %v208 = vld [vmem:[%s0 + $0x610] sm:$0xff]
  %v209 = vld [vmem:[%s0 + $0x618] sm:$0xff]
  %v210 = vld [vmem:[%s0 + $0x620] sm:$0xff]
  %v211 = vld [vmem:[%s0 + $0x628] sm:$0xff]
  %v212 = vld [vmem:[%s0 + $0x630] sm:$0xff]
  %v213 = vld [vmem:[%s0 + $0x638] sm:$0xff]
  %v214 = vld [vmem:[%s0 + $0x640] sm:$0xff]
  %v215 = vld [vmem:[%s0 + $0x648] sm:$0xff]
  %v216 = vld [vmem:[%s0 + $0x650] sm:$0xff]
  %v217 = vld [vmem:[%s0 + $0x658] sm:$0xff]
  %v218 = vld [vmem:[%s0 + $0x660] sm:$0xff]
  %v219 = vld [vmem:[%s0 + $0x668] sm:$0xff]
  %v220 = vld [vmem:[%s0 + $0x670] sm:$0xff]
  %v221 = vld [vmem:[%s0 + $0x678] sm:$0xff]
  %v222 = vld [vmem:[%s0 + $0x680] sm:$0xff]
  %v223 = vld [vmem:[%s0 + $0x688] sm:$0xff]
  %v224 = vld [vmem:[%s0 + $0x690] sm:$0xff]
  %v225 = vld [vmem:[%s0 + $0x698] sm:$0xff]
  %v226 = vld [vmem:[%s0 + $0x6a0] sm:$0xff]
  %v227 = vld [vmem:[%s0 + $0x6a8] sm:$0xff]
  %v228 = vld [vmem:[%s0 + $0x6b0] sm:$0xff]
  %v229 = vld [vmem:[%s0 + $0x6b8] sm:$0xff]
  %v230 = vld [vmem:[%s0 + $0x6c0] sm:$0xff]
  %v231 = vld [vmem:[%s0 + $0x6c8] sm:$0xff]
  %v232 = vld [vmem:[%s0 + $0x6d0] sm:$0xff]
  %v233 = vld [vmem:[%s0 + $0x6d8] sm:$0xff]
  %v234 = vld [vmem:[%s0 + $0x6e0] sm:$0xff]
  %v235 = vld [vmem:[%s0 + $0x6e8] sm:$0xff]
  %v236 = vld [vmem:[%s0 + $0x6f0] sm:$0xff]
  %v237 = vld [vmem:[%s0 + $0x6f8] sm:$0xff]
  %v238 = vld [vmem:[%s0 + $0x700] sm:$0xff]
  %v239 = vld [vmem:[%s0 + $0x708] sm:$0xff]
  %v240 = vld [vmem:[%s0 + $0x710] sm:$0xff]
  %v241 = vld [vmem:[%s0 + $0x718] sm:$0xff]
  %v242 = vld [vmem:[%s0 + $0x720] sm:$0xff]
  %v243 = vld [vmem:[%s0 + $0x728] sm:$0xff]
  %v244 = vld [vmem:[%s0 + $0x730] sm:$0xff]
  %v245 = vld [vmem:[%s0 + $0x738] sm:$0xff]
  %v246 = vld [vmem:[%s0 + $0x740] sm:$0xff]
  %v247 = vld [vmem:[%s0 + $0x748] sm:$0xff]
  %v248 = vld [vmem:[%s0 + $0x750] sm:$0xff]
  %v249 = vld [vmem:[%s0 + $0x758] sm:$0xff]
  %v250 = vld [vmem:[%s0 + $0x760] sm:$0xff]
  %v251 = vld [vmem:[%s0 + $0x768] sm:$0xff]
  %v252 = vld [vmem:[%s0 + $0x770] sm:$0xff]
  %v253 = vld [vmem:[%s0 + $0x778] sm:$0xff]
  %v254 = vld [vmem:[%s0 + $0x780] sm:$0xff]
  %v255 = vld [vmem:[%s0 + $0x788] sm:$0xff]
  %v256 = vld [vmem:[%s0 + $0x790] sm:$0xff]
  %v257 = vld [vmem:[%s0 + $0x798] sm:$0xff]
  %v258 = vld [vmem:[%s0 + $0x7a0] sm:$0xff]
  %v259 = vld [vmem:[%s0 + $0x7a8] sm:$0xff]
  %v260 = vld [vmem:[%s0 + $0x7b0] sm:$0xff]
  %v261 = vld [vmem:[%s0 + $0x7b8] sm:$0xff]
  %v262 = vld [vmem:[%s0 + $0x7c0] sm:$0xff]
  %v263 = vld [vmem:[%s0 + $0x7c8] sm:$0xff]
  %v264 = vld [vmem:[%s0 + $0x7d0] sm:$0xff]
  %v265 = vld [vmem:[%s0 + $0x7d8] sm:$0xff]
  %v266 = vld [vmem:[%s0 + $0x7e0] sm:$0xff]
  %v267 = vld [vmem:[%s0 + $0x7e8] sm:$0xff]
  %v268 = vld [vmem:[%s0 + $0x7f0] sm:$0xff]
  %v269 = vld [vmem:[%s0 + $0x7f8] sm:$0xff]
  %v270 = vld [vmem:[%s0 + $0x800] sm:$0xff]
  %v271 = vld [vmem:[%s0 + $0x808] sm:$0xff]
  %v272 = vld [vmem:[%s0 + $0x810] sm:$0xff]
  %v273 = vld [vmem:[%s0 + $0x818] sm:$0xff]
  %v274 = vld [vmem:[%s1] sm:$0xff]
  %v275 = vld [vmem:[%s1 + $0x8] sm:$0xff]
  %v276 = vld [vmem:[%s1 + $0x10] sm:$0xff]
  %v277 = vld [vmem:[%s1 + $0x18] sm:$0xff]
  %v278 = vld [vmem:[%s1 + $0x20] sm:$0xff]
  %v279 = vld [vmem:[%s1 + $0x28] sm:$0xff]
  %v280 = vld [vmem:[%s1 + $0x30] sm:$0xff]
  %v281 = vld [vmem:[%s1 + $0x38] sm:$0xff]
  %v282 = vld [vmem:[%s1 + $0x40] sm:$0xff]
  %v283 = vld [vmem:[%s1 + $0x48] sm:$0xff]
  %v284 = vld [vmem:[%s1 + $0x50] sm:$0xff]
  %v285 = vld [vmem:[%s1 + $0x58] sm:$0xff]
  %v286 = vld [vmem:[%s1 + $0x60] sm:$0xff]
  %v287 = vld [vmem:[%s1 + $0x68] sm:$0xff]
  %v288 = vld [vmem:[%s1 + $0x70] sm:$0xff]
  %v289 = vld [vmem:[%s1 + $0x78] sm:$0xff]
  %v290 = vld [vmem:[%s1 + $0x80] sm:$0xff]
  %v291 = vld [vmem:[%s1 + $0x88] sm:$0xff]
  %v292 = vld [vmem:[%s1 + $0x90] sm:$0xff]
  %v293 = vld [vmem:[%s1 + $0x98] sm:$0xff]
  %v294 = vld [vmem:[%s1 + $0xa0] sm:$0xff]
  %v295 = vld [vmem:[%s1 + $0xa8] sm:$0xff]
  %v296 = vld [vmem:[%s1 + $0xb0] sm:$0xff]
  %v297 = vld [vmem:[%s1 + $0xb8] sm:$0xff]
  %v298 = vld [vmem:[%s1 + $0xc0] sm:$0xff]
  %v299 = vld [vmem:[%s1 + $0xc8] sm:$0xff]
  %v300 = vld [vmem:[%s1 + $0xd0] sm:$0xff]
  %v301 = vld [vmem:[%s1 + $0xd8] sm:$0xff]
  %v302 = vld [vmem:[%s1 + $0xe0] sm:$0xff]
  %v303 = vld [vmem:[%s1 + $0xe8] sm:$0xff]
  %v304 = vld [vmem:[%s1 + $0xf0] sm:$0xff]
  %v305 = vld [vmem:[%s1 + $0xf8] sm:$0xff]
  %v306 = vld [vmem:[%s1 + $0x100] sm:$0xff]
  %v307 = vld [vmem:[%s1 + $0x108] sm:$0xff]
  %v308 = vld [vmem:[%s1 + $0x110] sm:$0xff]
  %v309 = vld [vmem:[%s1 + $0x118] sm:$0xff]
  %v310 = vld [vmem:[%s1 + $0x120] sm:$0xff]
  %v311 = vld [vmem:[%s1 + $0x128] sm:$0xff]
  %v312 = vld [vmem:[%s1 + $0x130] sm:$0xff]
  %v313 = vld [vmem:[%s1 + $0x138] sm:$0xff]
  %v314 = vld [vmem:[%s1 + $0x140] sm:$0xff]
  %v315 = vld [vmem:[%s1 + $0x148] sm:$0xff]
  %v316 = vld [vmem:[%s1 + $0x150] sm:$0xff]
  %v317 = vld [vmem:[%s1 + $0x158] sm:$0xff]
  %v318 = vld [vmem:[%s1 + $0x160] sm:$0xff]
  %v319 = vld [vmem:[%s1 + $0x168] sm:$0xff]
  %v320 = vld [vmem:[%s1 + $0x170] sm:$0xff]
  %v321 = vld [vmem:[%s1 + $0x178] sm:$0xff]
  %v322 = vld [vmem:[%s1 + $0x180] sm:$0xff]
  %v323 = vld [vmem:[%s1 + $0x188] sm:$0xff]
  %v324 = vld [vmem:[%s1 + $0x190] sm:$0xff]
  %v325 = vld [vmem:[%s1 + $0x198] sm:$0xff]
  %v326 = vld [vmem:[%s1 + $0x1a0] sm:$0xff]
  %v327 = vld [vmem:[%s1 + $0x1a8] sm:$0xff]
  %v328 = vld [vmem:[%s1 + $0x1b0] sm:$0xff]
  %v329 = vld [vmem:[%s1 + $0x1b8] sm:$0xff]
  %v330 = vld [vmem:[%s1 + $0x1c0] sm:$0xff]
  %v331 = vld [vmem:[%s1 + $0x1c8] sm:$0xff]
  %v332 = vld [vmem:[%s1 + $0x1d0] sm:$0xff]
  %v333 = vld [vmem:[%s1 + $0x1d8] sm:$0xff]
  %v334 = vld [vmem:[%s1 + $0x1e0] sm:$0xff]
  %v335 = vld [vmem:[%s1 + $0x1e8] sm:$0xff]
  %v336 = vld [vmem:[%s1 + $0x1f0] sm:$0xff]
  %v337 = vld [vmem:[%s1 + $0x1f8] sm:$0xff]
  %v338 = vld [vmem:[%s1 + $0x200] sm:$0xff]
  %v339 = vld [vmem:[%s1 + $0x208] sm:$0xff]
  %v340 = vld [vmem:[%s1 + $0x210] sm:$0xff]
  %v341 = vld [vmem:[%s1 + $0x218] sm:$0xff]
  %v342 = vld [vmem:[%s1 + $0x220] sm:$0xff]
  %v343 = vld [vmem:[%s1 + $0x228] sm:$0xff]
  %v344 = vld [vmem:[%s1 + $0x230] sm:$0xff]
  %v345 = vld [vmem:[%s1 + $0x238] sm:$0xff]
  %vm346 = vcmask 523264
  %v348 = vsel %vm346, %v18, 0
  %v351 = vsel %vm346, %v23, 0
  %v354 = vsel %vm346, %v28, 0
  %v357 = vsel %vm346, %v33, 0
  %v360 = vsel %vm346, %v38, 0
  %v363 = vsel %vm346, %v43, 0
  %v366 = vsel %vm346, %v48, 0
  %v369 = vsel %vm346, %v53, 0
  %v372 = vsel %vm346, %v58, 0
  %v375 = vsel %vm346, %v63, 0
  %v378 = vsel %vm346, %v68, 0
  %v381 = vsel %vm346, %v73, 0
  %v384 = vsel %vm346, %v78, 0
  %v387 = vsel %vm346, %v83, 0
  %v390 = vsel %vm346, %v88, 0
  %v393 = vsel %vm346, %v93, 0
  %v396 = vsel %vm346, %v98, 0
  %v399 = vsel %vm346, %v103, 0
  %v402 = vsel %vm346, %v108, 0
  %v405 = vsel %vm346, %v113, 0
  %v408 = vsel %vm346, %v118, 0
  %v411 = vsel %vm346, %v123, 0
  %v414 = vsel %vm346, %v128, 0
  %v417 = vsel %vm346, %v133, 0
  %v420 = vsel %vm346, %v138, 0
  %v423 = vsel %vm346, %v143, 0
  %v426 = vsel %vm346, %v148, 0
  %v429 = vsel %vm346, %v153, 0
  %v432 = vsel %vm346, %v158, 0
  %v435 = vsel %vm346, %v163, 0
  %v438 = vsel %vm346, %v168, 0
  %v441 = vsel %vm346, %v173, 0
  %v444 = vsel %vm346, %v178, 0
  %v447 = vsel %vm346, %v183, 0
  %v450 = vsel %vm346, %v188, 0
  %v453 = vsel %vm346, %v193, 0
  %v456 = vsel %vm346, %v198, 0
  %v459 = vsel %vm346, %v203, 0
  %v462 = vsel %vm346, %v208, 0
  %v465 = vsel %vm346, %v213, 0
  %v468 = vsel %vm346, %v218, 0
  %v471 = vsel %vm346, %v223, 0
  %v474 = vsel %vm346, %v228, 0
  %v477 = vsel %vm346, %v233, 0
  %v480 = vsel %vm346, %v238, 0
  %v483 = vsel %vm346, %v243, 0
  %v486 = vsel %vm346, %v248, 0
  %v489 = vsel %vm346, %v253, 0
  %v492 = vsel %vm346, %v258, 0
  %v495 = vsel %vm346, %v263, 0
  %v498 = vsel %vm346, %v268, 0
  %v501 = vsel %vm346, %v273, 0
  %503 = vmatpush.msra.mxu0 %v289
  %504 = vmatpush.msra.mxu0 %v288
  %505 = vmatpush.msra.mxu0 %v287
  %506 = vmatpush.msra.mxu0 %v286
  %507 = vmatpush.msra.mxu0 %v285
  %508 = vmatpush.msra.mxu0 %v284
  %509 = vmatpush.msra.mxu0 %v283
  %510 = vmatpush.msra.mxu0 %v282
  %511 = vmatpush.msra.mxu0 %v281
  %512 = vmatpush.msra.mxu0 %v280
  %513 = vmatpush.msra.mxu0 %v279
  %514 = vmatpush.msra.mxu0 %v278
  %515 = vmatpush.msra.mxu0 %v277
  %516 = vmatpush.msra.mxu0 %v276
  %517 = vmatpush.msra.mxu0 %v275
  %518 = vmatpush.msra.mxu0 %v274
  %519 = vmatmul.f32.gmra.mxu0 %v14
  %v520 = vpop.f32.mrf.mxu0
  %v521 = vadd.f32 0.0, %v520
  %522 = vmatmul.f32.gmra.mxu0 %v19
  %v523 = vpop.f32.mrf.mxu0
  %v524 = vadd.f32 0.0, %v523
  %525 = vmatmul.f32.gmra.mxu0 %v24
  %v526 = vpop.f32.mrf.mxu0
  %v527 = vadd.f32 0.0, %v526
  %528 = vmatmul.f32.gmra.mxu0 %v29
  %v529 = vpop.f32.mrf.mxu0
  %v530 = vadd.f32 0.0, %v529
  %531 = vmatmul.f32.gmra.mxu0 %v34
  %v532 = vpop.f32.mrf.mxu0
  %v533 = vadd.f32 0.0, %v532
  %534 = vmatmul.f32.gmra.mxu0 %v39
  %v535 = vpop.f32.mrf.mxu0
  %v536 = vadd.f32 0.0, %v535
  %537 = vmatmul.f32.gmra.mxu0 %v44
  %v538 = vpop.f32.mrf.mxu0
  %v539 = vadd.f32 0.0, %v538
  %540 = vmatmul.f32.gmra.mxu0 %v49
  %v541 = vpop.f32.mrf.mxu0
  %v542 = vadd.f32 0.0, %v541
  %543 = vmatmul.f32.gmra.mxu0 %v54
  %v544 = vpop.f32.mrf.mxu0
  %v545 = vadd.f32 0.0, %v544
  %546 = vmatmul.f32.gmra.mxu0 %v59
  %v547 = vpop.f32.mrf.mxu0
  %v548 = vadd.f32 0.0, %v547
  %549 = vmatmul.f32.gmra.mxu0 %v64
  %v550 = vpop.f32.mrf.mxu0
  %v551 = vadd.f32 0.0, %v550
  %552 = vmatmul.f32.gmra.mxu0 %v69
  %v553 = vpop.f32.mrf.mxu0
  %v554 = vadd.f32 0.0, %v553
  %555 = vmatmul.f32.gmra.mxu0 %v74
  %v556 = vpop.f32.mrf.mxu0
  %v557 = vadd.f32 0.0, %v556
  %558 = vmatmul.f32.gmra.mxu0 %v79
  %v559 = vpop.f32.mrf.mxu0
  %v560 = vadd.f32 0.0, %v559
  %561 = vmatmul.f32.gmra.mxu0 %v84
  %v562 = vpop.f32.mrf.mxu0
  %v563 = vadd.f32 0.0, %v562
  %564 = vmatmul.f32.gmra.mxu0 %v89
  %v565 = vpop.f32.mrf.mxu0
  %v566 = vadd.f32 0.0, %v565
  %567 = vmatmul.f32.gmra.mxu0 %v94
  %v568 = vpop.f32.mrf.mxu0
  %v569 = vadd.f32 0.0, %v568
  %570 = vmatmul.f32.gmra.mxu0 %v99
  %v571 = vpop.f32.mrf.mxu0
  %v572 = vadd.f32 0.0, %v571
  %573 = vmatmul.f32.gmra.mxu0 %v104
  %v574 = vpop.f32.mrf.mxu0
  %v575 = vadd.f32 0.0, %v574
  %576 = vmatmul.f32.gmra.mxu0 %v109
  %v577 = vpop.f32.mrf.mxu0
  %v578 = vadd.f32 0.0, %v577
  %579 = vmatmul.f32.gmra.mxu0 %v114
  %v580 = vpop.f32.mrf.mxu0
  %v581 = vadd.f32 0.0, %v580
  %582 = vmatmul.f32.gmra.mxu0 %v119
  %v583 = vpop.f32.mrf.mxu0
  %v584 = vadd.f32 0.0, %v583
  %585 = vmatmul.f32.gmra.mxu0 %v124
  %v586 = vpop.f32.mrf.mxu0
  %v587 = vadd.f32 0.0, %v586
  %588 = vmatmul.f32.gmra.mxu0 %v129
  %v589 = vpop.f32.mrf.mxu0
  %v590 = vadd.f32 0.0, %v589
  %591 = vmatmul.f32.gmra.mxu0 %v134
  %v592 = vpop.f32.mrf.mxu0
  %v593 = vadd.f32 0.0, %v592
  %594 = vmatmul.f32.gmra.mxu0 %v139
  %v595 = vpop.f32.mrf.mxu0
  %v596 = vadd.f32 0.0, %v595
  %597 = vmatmul.f32.gmra.mxu0 %v144
  %v598 = vpop.f32.mrf.mxu0
  %v599 = vadd.f32 0.0, %v598
  %600 = vmatmul.f32.gmra.mxu0 %v149
  %v601 = vpop.f32.mrf.mxu0
  %v602 = vadd.f32 0.0, %v601
  %603 = vmatmul.f32.gmra.mxu0 %v154
  %v604 = vpop.f32.mrf.mxu0
  %v605 = vadd.f32 0.0, %v604
  %606 = vmatmul.f32.gmra.mxu0 %v159
  %v607 = vpop.f32.mrf.mxu0
  %v608 = vadd.f32 0.0, %v607
  %609 = vmatmul.f32.gmra.mxu0 %v164
  %v610 = vpop.f32.mrf.mxu0
  %v611 = vadd.f32 0.0, %v610
  %612 = vmatmul.f32.gmra.mxu0 %v169
  %v613 = vpop.f32.mrf.mxu0
  %v614 = vadd.f32 0.0, %v613
  %615 = vmatmul.f32.gmra.mxu0 %v174
  %v616 = vpop.f32.mrf.mxu0
  %v617 = vadd.f32 0.0, %v616
  %618 = vmatmul.f32.gmra.mxu0 %v179
  %v619 = vpop.f32.mrf.mxu0
  %v620 = vadd.f32 0.0, %v619
  %621 = vmatmul.f32.gmra.mxu0 %v184
  %v622 = vpop.f32.mrf.mxu0
  %v623 = vadd.f32 0.0, %v622
  %624 = vmatmul.f32.gmra.mxu0 %v189
  %v625 = vpop.f32.mrf.mxu0
  %v626 = vadd.f32 0.0, %v625
  %627 = vmatmul.f32.gmra.mxu0 %v194
  %v628 = vpop.f32.mrf.mxu0
  %v629 = vadd.f32 0.0, %v628
  %630 = vmatmul.f32.gmra.mxu0 %v199
  %v631 = vpop.f32.mrf.mxu0
  %v632 = vadd.f32 0.0, %v631
  %633 = vmatmul.f32.gmra.mxu0 %v204
  %v634 = vpop.f32.mrf.mxu0
  %v635 = vadd.f32 0.0, %v634
  %636 = vmatmul.f32.gmra.mxu0 %v209
  %v637 = vpop.f32.mrf.mxu0
  %v638 = vadd.f32 0.0, %v637
  %639 = vmatmul.f32.gmra.mxu0 %v214
  %v640 = vpop.f32.mrf.mxu0
  %v641 = vadd.f32 0.0, %v640
  %642 = vmatmul.f32.gmra.mxu0 %v219
  %v643 = vpop.f32.mrf.mxu0
  %v644 = vadd.f32 0.0, %v643
  %645 = vmatmul.f32.gmra.mxu0 %v224
  %v646 = vpop.f32.mrf.mxu0
  %v647 = vadd.f32 0.0, %v646
  %648 = vmatmul.f32.gmra.mxu0 %v229
  %v649 = vpop.f32.mrf.mxu0
  %v650 = vadd.f32 0.0, %v649
  %651 = vmatmul.f32.gmra.mxu0 %v234
  %v652 = vpop.f32.mrf.mxu0
  %v653 = vadd.f32 0.0, %v652
  %654 = vmatmul.f32.gmra.mxu0 %v239
  %v655 = vpop.f32.mrf.mxu0
  %v656 = vadd.f32 0.0, %v655
  %657 = vmatmul.f32.gmra.mxu0 %v244
  %v658 = vpop.f32.mrf.mxu0
  %v659 = vadd.f32 0.0, %v658
  %660 = vmatmul.f32.gmra.mxu0 %v249
  %v661 = vpop.f32.mrf.mxu0
  %v662 = vadd.f32 0.0, %v661
  %663 = vmatmul.f32.gmra.mxu0 %v254
  %v664 = vpop.f32.mrf.mxu0
  %v665 = vadd.f32 0.0, %v664
  %666 = vmatmul.f32.gmra.mxu0 %v259
  %v667 = vpop.f32.mrf.mxu0
  %v668 = vadd.f32 0.0, %v667
  %669 = vmatmul.f32.gmra.mxu0 %v264
  %v670 = vpop.f32.mrf.mxu0
  %v671 = vadd.f32 0.0, %v670
  %672 = vmatmul.f32.gmra.mxu0 %v269
  %v673 = vpop.f32.mrf.mxu0
  %v674 = vadd.f32 0.0, %v673
  %675 = vdwg.mxu0
  %676 = vmatpush.msra.mxu0 %v305
  %677 = vmatpush.msra.mxu0 %v304
  %678 = vmatpush.msra.mxu0 %v303
  %679 = vmatpush.msra.mxu0 %v302
  %680 = vmatpush.msra.mxu0 %v301
  %681 = vmatpush.msra.mxu0 %v300
  %682 = vmatpush.msra.mxu0 %v299
  %683 = vmatpush.msra.mxu0 %v298
  %684 = vmatpush.msra.mxu0 %v297
  %685 = vmatpush.msra.mxu0 %v296
  %686 = vmatpush.msra.mxu0 %v295
  %687 = vmatpush.msra.mxu0 %v294
  %688 = vmatpush.msra.mxu0 %v293
  %689 = vmatpush.msra.mxu0 %v292
  %690 = vmatpush.msra.mxu0 %v291
  %691 = vmatpush.msra.mxu0 %v290
  %692 = vmatmul.f32.gmra.mxu0 %v15
  %v693 = vpop.f32.mrf.mxu0
  %v694 = vadd.f32 %v521, %v693
  %695 = vmatmul.f32.gmra.mxu0 %v20
  %v696 = vpop.f32.mrf.mxu0
  %v697 = vadd.f32 %v524, %v696
  %698 = vmatmul.f32.gmra.mxu0 %v25
  %v699 = vpop.f32.mrf.mxu0
  %v700 = vadd.f32 %v527, %v699
  %701 = vmatmul.f32.gmra.mxu0 %v30
  %v702 = vpop.f32.mrf.mxu0
  %v703 = vadd.f32 %v530, %v702
  %704 = vmatmul.f32.gmra.mxu0 %v35
  %v705 = vpop.f32.mrf.mxu0
  %v706 = vadd.f32 %v533, %v705
  %707 = vmatmul.f32.gmra.mxu0 %v40
  %v708 = vpop.f32.mrf.mxu0
  %v709 = vadd.f32 %v536, %v708
  %710 = vmatmul.f32.gmra.mxu0 %v45
  %v711 = vpop.f32.mrf.mxu0
  %v712 = vadd.f32 %v539, %v711
  %713 = vmatmul.f32.gmra.mxu0 %v50
  %v714 = vpop.f32.mrf.mxu0
  %v715 = vadd.f32 %v542, %v714
  %716 = vmatmul.f32.gmra.mxu0 %v55
  %v717 = vpop.f32.mrf.mxu0
  %v718 = vadd.f32 %v545, %v717
  %719 = vmatmul.f32.gmra.mxu0 %v60
  %v720 = vpop.f32.mrf.mxu0
  %v721 = vadd.f32 %v548, %v720
  %722 = vmatmul.f32.gmra.mxu0 %v65
  %v723 = vpop.f32.mrf.mxu0
  %v724 = vadd.f32 %v551, %v723
  %725 = vmatmul.f32.gmra.mxu0 %v70
  %v726 = vpop.f32.mrf.mxu0
  %v727 = vadd.f32 %v554, %v726
  %728 = vmatmul.f32.gmra.mxu0 %v75
  %v729 = vpop.f32.mrf.mxu0
  %v730 = vadd.f32 %v557, %v729
  %731 = vmatmul.f32.gmra.mxu0 %v80
  %v732 = vpop.f32.mrf.mxu0
  %v733 = vadd.f32 %v560, %v732
  %734 = vmatmul.f32.gmra.mxu0 %v85
  %v735 = vpop.f32.mrf.mxu0
  %v736 = vadd.f32 %v563, %v735
  %737 = vmatmul.f32.gmra.mxu0 %v90
  %v738 = vpop.f32.mrf.mxu0
  %v739 = vadd.f32 %v566, %v738
  %740 = vmatmul.f32.gmra.mxu0 %v95
  %v741 = vpop.f32.mrf.mxu0
  %v742 = vadd.f32 %v569, %v741
  %743 = vmatmul.f32.gmra.mxu0 %v100
  %v744 = vpop.f32.mrf.mxu0
  %v745 = vadd.f32 %v572, %v744
  %746 = vmatmul.f32.gmra.mxu0 %v105
  %v747 = vpop.f32.mrf.mxu0
  %v748 = vadd.f32 %v575, %v747
  %749 = vmatmul.f32.gmra.mxu0 %v110
  %v750 = vpop.f32.mrf.mxu0
  %v751 = vadd.f32 %v578, %v750
  %752 = vmatmul.f32.gmra.mxu0 %v115
  %v753 = vpop.f32.mrf.mxu0
  %v754 = vadd.f32 %v581, %v753
  %755 = vmatmul.f32.gmra.mxu0 %v120
  %v756 = vpop.f32.mrf.mxu0
  %v757 = vadd.f32 %v584, %v756
  %758 = vmatmul.f32.gmra.mxu0 %v125
  %v759 = vpop.f32.mrf.mxu0
  %v760 = vadd.f32 %v587, %v759
  %761 = vmatmul.f32.gmra.mxu0 %v130
  %v762 = vpop.f32.mrf.mxu0
  %v763 = vadd.f32 %v590, %v762
  %764 = vmatmul.f32.gmra.mxu0 %v135
  %v765 = vpop.f32.mrf.mxu0
  %v766 = vadd.f32 %v593, %v765
  %767 = vmatmul.f32.gmra.mxu0 %v140
  %v768 = vpop.f32.mrf.mxu0
  %v769 = vadd.f32 %v596, %v768
  %770 = vmatmul.f32.gmra.mxu0 %v145
  %v771 = vpop.f32.mrf.mxu0
  %v772 = vadd.f32 %v599, %v771
  %773 = vmatmul.f32.gmra.mxu0 %v150
  %v774 = vpop.f32.mrf.mxu0
  %v775 = vadd.f32 %v602, %v774
  %776 = vmatmul.f32.gmra.mxu0 %v155
  %v777 = vpop.f32.mrf.mxu0
  %v778 = vadd.f32 %v605, %v777
  %779 = vmatmul.f32.gmra.mxu0 %v160
  %v780 = vpop.f32.mrf.mxu0
  %v781 = vadd.f32 %v608, %v780
  %782 = vmatmul.f32.gmra.mxu0 %v165
  %v783 = vpop.f32.mrf.mxu0
  %v784 = vadd.f32 %v611, %v783
  %785 = vmatmul.f32.gmra.mxu0 %v170
  %v786 = vpop.f32.mrf.mxu0
  %v787 = vadd.f32 %v614, %v786
  %788 = vmatmul.f32.gmra.mxu0 %v175
  %v789 = vpop.f32.mrf.mxu0
  %v790 = vadd.f32 %v617, %v789
  %791 = vmatmul.f32.gmra.mxu0 %v180
  %v792 = vpop.f32.mrf.mxu0
  %v793 = vadd.f32 %v620, %v792
  %794 = vmatmul.f32.gmra.mxu0 %v185
  %v795 = vpop.f32.mrf.mxu0
  %v796 = vadd.f32 %v623, %v795
  %797 = vmatmul.f32.gmra.mxu0 %v190
  %v798 = vpop.f32.mrf.mxu0
  %v799 = vadd.f32 %v626, %v798
  %800 = vmatmul.f32.gmra.mxu0 %v195
  %v801 = vpop.f32.mrf.mxu0
  %v802 = vadd.f32 %v629, %v801
  %803 = vmatmul.f32.gmra.mxu0 %v200
  %v804 = vpop.f32.mrf.mxu0
  %v805 = vadd.f32 %v632, %v804
  %806 = vmatmul.f32.gmra.mxu0 %v205
  %v807 = vpop.f32.mrf.mxu0
  %v808 = vadd.f32 %v635, %v807
  %809 = vmatmul.f32.gmra.mxu0 %v210
  %v810 = vpop.f32.mrf.mxu0
  %v811 = vadd.f32 %v638, %v810
  %812 = vmatmul.f32.gmra.mxu0 %v215
  %v813 = vpop.f32.mrf.mxu0
  %v814 = vadd.f32 %v641, %v813
  %815 = vmatmul.f32.gmra.mxu0 %v220
  %v816 = vpop.f32.mrf.mxu0
  %v817 = vadd.f32 %v644, %v816
  %818 = vmatmul.f32.gmra.mxu0 %v225
  %v819 = vpop.f32.mrf.mxu0
  %v820 = vadd.f32 %v647, %v819
  %821 = vmatmul.f32.gmra.mxu0 %v230
  %v822 = vpop.f32.mrf.mxu0
  %v823 = vadd.f32 %v650, %v822
  %824 = vmatmul.f32.gmra.mxu0 %v235
  %v825 = vpop.f32.mrf.mxu0
  %v826 = vadd.f32 %v653, %v825
  %827 = vmatmul.f32.gmra.mxu0 %v240
  %v828 = vpop.f32.mrf.mxu0
  %v829 = vadd.f32 %v656, %v828
  %830 = vmatmul.f32.gmra.mxu0 %v245
  %v831 = vpop.f32.mrf.mxu0
  %v832 = vadd.f32 %v659, %v831
  %833 = vmatmul.f32.gmra.mxu0 %v250
  %v834 = vpop.f32.mrf.mxu0
  %v835 = vadd.f32 %v662, %v834
  %836 = vmatmul.f32.gmra.mxu0 %v255
  %v837 = vpop.f32.mrf.mxu0
  %v838 = vadd.f32 %v665, %v837
  %839 = vmatmul.f32.gmra.mxu0 %v260
  %v840 = vpop.f32.mrf.mxu0
  %v841 = vadd.f32 %v668, %v840
  %842 = vmatmul.f32.gmra.mxu0 %v265
  %v843 = vpop.f32.mrf.mxu0
  %v844 = vadd.f32 %v671, %v843
  %845 = vmatmul.f32.gmra.mxu0 %v270
  %v846 = vpop.f32.mrf.mxu0
  %v847 = vadd.f32 %v674, %v846
  %848 = vdwg.mxu0
  %849 = vmatpush.msra.mxu0 %v321
  %850 = vmatpush.msra.mxu0 %v320
  %851 = vmatpush.msra.mxu0 %v319
  %852 = vmatpush.msra.mxu0 %v318
  %853 = vmatpush.msra.mxu0 %v317
  %854 = vmatpush.msra.mxu0 %v316
  %855 = vmatpush.msra.mxu0 %v315
  %856 = vmatpush.msra.mxu0 %v314
  %857 = vmatpush.msra.mxu0 %v313
  %858 = vmatpush.msra.mxu0 %v312
  %859 = vmatpush.msra.mxu0 %v311
  %860 = vmatpush.msra.mxu0 %v310
  %861 = vmatpush.msra.mxu0 %v309
  %862 = vmatpush.msra.mxu0 %v308
  %863 = vmatpush.msra.mxu0 %v307
  %864 = vmatpush.msra.mxu0 %v306
  %865 = vmatmul.f32.gmra.mxu0 %v16
  %v866 = vpop.f32.mrf.mxu0
  %v867 = vadd.f32 %v694, %v866
  %868 = vmatmul.f32.gmra.mxu0 %v21
  %v869 = vpop.f32.mrf.mxu0
  %v870 = vadd.f32 %v697, %v869
  %871 = vmatmul.f32.gmra.mxu0 %v26
  %v872 = vpop.f32.mrf.mxu0
  %v873 = vadd.f32 %v700, %v872
  %874 = vmatmul.f32.gmra.mxu0 %v31
  %v875 = vpop.f32.mrf.mxu0
  %v876 = vadd.f32 %v703, %v875
  %877 = vmatmul.f32.gmra.mxu0 %v36
  %v878 = vpop.f32.mrf.mxu0
  %v879 = vadd.f32 %v706, %v878
  %880 = vmatmul.f32.gmra.mxu0 %v41
  %v881 = vpop.f32.mrf.mxu0
  %v882 = vadd.f32 %v709, %v881
  %883 = vmatmul.f32.gmra.mxu0 %v46
  %v884 = vpop.f32.mrf.mxu0
  %v885 = vadd.f32 %v712, %v884
  %886 = vmatmul.f32.gmra.mxu0 %v51
  %v887 = vpop.f32.mrf.mxu0
  %v888 = vadd.f32 %v715, %v887
  %889 = vmatmul.f32.gmra.mxu0 %v56
  %v890 = vpop.f32.mrf.mxu0
  %v891 = vadd.f32 %v718, %v890
  %892 = vmatmul.f32.gmra.mxu0 %v61
  %v893 = vpop.f32.mrf.mxu0
  %v894 = vadd.f32 %v721, %v893
  %895 = vmatmul.f32.gmra.mxu0 %v66
  %v896 = vpop.f32.mrf.mxu0
  %v897 = vadd.f32 %v724, %v896
  %898 = vmatmul.f32.gmra.mxu0 %v71
  %v899 = vpop.f32.mrf.mxu0
  %v900 = vadd.f32 %v727, %v899
  %901 = vmatmul.f32.gmra.mxu0 %v76
  %v902 = vpop.f32.mrf.mxu0
  %v903 = vadd.f32 %v730, %v902
  %904 = vmatmul.f32.gmra.mxu0 %v81
  %v905 = vpop.f32.mrf.mxu0
  %v906 = vadd.f32 %v733, %v905
  %907 = vmatmul.f32.gmra.mxu0 %v86
  %v908 = vpop.f32.mrf.mxu0
  %v909 = vadd.f32 %v736, %v908
  %910 = vmatmul.f32.gmra.mxu0 %v91
  %v911 = vpop.f32.mrf.mxu0
  %v912 = vadd.f32 %v739, %v911
  %913 = vmatmul.f32.gmra.mxu0 %v96
  %v914 = vpop.f32.mrf.mxu0
  %v915 = vadd.f32 %v742, %v914
  %916 = vmatmul.f32.gmra.mxu0 %v101
  %v917 = vpop.f32.mrf.mxu0
  %v918 = vadd.f32 %v745, %v917
  %919 = vmatmul.f32.gmra.mxu0 %v106
  %v920 = vpop.f32.mrf.mxu0
  %v921 = vadd.f32 %v748, %v920
  %922 = vmatmul.f32.gmra.mxu0 %v111
  %v923 = vpop.f32.mrf.mxu0
  %v924 = vadd.f32 %v751, %v923
  %925 = vmatmul.f32.gmra.mxu0 %v116
  %v926 = vpop.f32.mrf.mxu0
  %v927 = vadd.f32 %v754, %v926
  %928 = vmatmul.f32.gmra.mxu0 %v121
  %v929 = vpop.f32.mrf.mxu0
  %v930 = vadd.f32 %v757, %v929
  %931 = vmatmul.f32.gmra.mxu0 %v126
  %v932 = vpop.f32.mrf.mxu0
  %v933 = vadd.f32 %v760, %v932
  %934 = vmatmul.f32.gmra.mxu0 %v131
  %v935 = vpop.f32.mrf.mxu0
  %v936 = vadd.f32 %v763, %v935
  %937 = vmatmul.f32.gmra.mxu0 %v136
  %v938 = vpop.f32.mrf.mxu0
  %v939 = vadd.f32 %v766, %v938
  %940 = vmatmul.f32.gmra.mxu0 %v141
  %v941 = vpop.f32.mrf.mxu0
  %v942 = vadd.f32 %v769, %v941
  %943 = vmatmul.f32.gmra.mxu0 %v146
  %v944 = vpop.f32.mrf.mxu0
  %v945 = vadd.f32 %v772, %v944
  %946 = vmatmul.f32.gmra.mxu0 %v151
  %v947 = vpop.f32.mrf.mxu0
  %v948 = vadd.f32 %v775, %v947
  %949 = vmatmul.f32.gmra.mxu0 %v156
  %v950 = vpop.f32.mrf.mxu0
  %v951 = vadd.f32 %v778, %v950
  %952 = vmatmul.f32.gmra.mxu0 %v161
  %v953 = vpop.f32.mrf.mxu0
  %v954 = vadd.f32 %v781, %v953
  %955 = vmatmul.f32.gmra.mxu0 %v166
  %v956 = vpop.f32.mrf.mxu0
  %v957 = vadd.f32 %v784, %v956
  %958 = vmatmul.f32.gmra.mxu0 %v171
  %v959 = vpop.f32.mrf.mxu0
  %v960 = vadd.f32 %v787, %v959
  %961 = vmatmul.f32.gmra.mxu0 %v176
  %v962 = vpop.f32.mrf.mxu0
  %v963 = vadd.f32 %v790, %v962
  %964 = vmatmul.f32.gmra.mxu0 %v181
  %v965 = vpop.f32.mrf.mxu0
  %v966 = vadd.f32 %v793, %v965
  %967 = vmatmul.f32.gmra.mxu0 %v186
  %v968 = vpop.f32.mrf.mxu0
  %v969 = vadd.f32 %v796, %v968
  %970 = vmatmul.f32.gmra.mxu0 %v191
  %v971 = vpop.f32.mrf.mxu0
  %v972 = vadd.f32 %v799, %v971
  %973 = vmatmul.f32.gmra.mxu0 %v196
  %v974 = vpop.f32.mrf.mxu0
  %v975 = vadd.f32 %v802, %v974
  %976 = vmatmul.f32.gmra.mxu0 %v201
  %v977 = vpop.f32.mrf.mxu0
  %v978 = vadd.f32 %v805, %v977
  %979 = vmatmul.f32.gmra.mxu0 %v206
  %v980 = vpop.f32.mrf.mxu0
  %v981 = vadd.f32 %v808, %v980
  %982 = vmatmul.f32.gmra.mxu0 %v211
  %v983 = vpop.f32.mrf.mxu0
  %v984 = vadd.f32 %v811, %v983
  %985 = vmatmul.f32.gmra.mxu0 %v216
  %v986 = vpop.f32.mrf.mxu0
  %v987 = vadd.f32 %v814, %v986
  %988 = vmatmul.f32.gmra.mxu0 %v221
  %v989 = vpop.f32.mrf.mxu0
  %v990 = vadd.f32 %v817, %v989
  %991 = vmatmul.f32.gmra.mxu0 %v226
  %v992 = vpop.f32.mrf.mxu0
  %v993 = vadd.f32 %v820, %v992
  %994 = vmatmul.f32.gmra.mxu0 %v231
  %v995 = vpop.f32.mrf.mxu0
  %v996 = vadd.f32 %v823, %v995
  %997 = vmatmul.f32.gmra.mxu0 %v236
  %v998 = vpop.f32.mrf.mxu0
  %v999 = vadd.f32 %v826, %v998
  %1000 = vmatmul.f32.gmra.mxu0 %v241
  %v1001 = vpop.f32.mrf.mxu0
  %v1002 = vadd.f32 %v829, %v1001
  %1003 = vmatmul.f32.gmra.mxu0 %v246
  %v1004 = vpop.f32.mrf.mxu0
  %v1005 = vadd.f32 %v832, %v1004
  %1006 = vmatmul.f32.gmra.mxu0 %v251
  %v1007 = vpop.f32.mrf.mxu0
  %v1008 = vadd.f32 %v835, %v1007
  %1009 = vmatmul.f32.gmra.mxu0 %v256
  %v1010 = vpop.f32.mrf.mxu0
  %v1011 = vadd.f32 %v838, %v1010
  %1012 = vmatmul.f32.gmra.mxu0 %v261
  %v1013 = vpop.f32.mrf.mxu0
  %v1014 = vadd.f32 %v841, %v1013
  %1015 = vmatmul.f32.gmra.mxu0 %v266
  %v1016 = vpop.f32.mrf.mxu0
  %v1017 = vadd.f32 %v844, %v1016
  %1018 = vmatmul.f32.gmra.mxu0 %v271
  %v1019 = vpop.f32.mrf.mxu0
  %v1020 = vadd.f32 %v847, %v1019
  %1021 = vdwg.mxu0
  %1022 = vmatpush.msra.mxu0 %v337
  %1023 = vmatpush.msra.mxu0 %v336
  %1024 = vmatpush.msra.mxu0 %v335
  %1025 = vmatpush.msra.mxu0 %v334
  %1026 = vmatpush.msra.mxu0 %v333
  %1027 = vmatpush.msra.mxu0 %v332
  %1028 = vmatpush.msra.mxu0 %v331
  %1029 = vmatpush.msra.mxu0 %v330
  %1030 = vmatpush.msra.mxu0 %v329
  %1031 = vmatpush.msra.mxu0 %v328
  %1032 = vmatpush.msra.mxu0 %v327
  %1033 = vmatpush.msra.mxu0 %v326
  %1034 = vmatpush.msra.mxu0 %v325
  %1035 = vmatpush.msra.mxu0 %v324
  %1036 = vmatpush.msra.mxu0 %v323
  %1037 = vmatpush.msra.mxu0 %v322
  %1038 = vmatmul.f32.gmra.mxu0 %v17
  %v1039 = vpop.f32.mrf.mxu0
  %v1040 = vadd.f32 %v867, %v1039
  %1041 = vmatmul.f32.gmra.mxu0 %v22
  %v1042 = vpop.f32.mrf.mxu0
  %v1043 = vadd.f32 %v870, %v1042
  %1044 = vmatmul.f32.gmra.mxu0 %v27
  %v1045 = vpop.f32.mrf.mxu0
  %v1046 = vadd.f32 %v873, %v1045
  %1047 = vmatmul.f32.gmra.mxu0 %v32
  %v1048 = vpop.f32.mrf.mxu0
  %v1049 = vadd.f32 %v876, %v1048
  %1050 = vmatmul.f32.gmra.mxu0 %v37
  %v1051 = vpop.f32.mrf.mxu0
  %v1052 = vadd.f32 %v879, %v1051
  %1053 = vmatmul.f32.gmra.mxu0 %v42
  %v1054 = vpop.f32.mrf.mxu0
  %v1055 = vadd.f32 %v882, %v1054
  %1056 = vmatmul.f32.gmra.mxu0 %v47
  %v1057 = vpop.f32.mrf.mxu0
  %v1058 = vadd.f32 %v885, %v1057
  %1059 = vmatmul.f32.gmra.mxu0 %v52
  %v1060 = vpop.f32.mrf.mxu0
  %v1061 = vadd.f32 %v888, %v1060
  %1062 = vmatmul.f32.gmra.mxu0 %v57
  %v1063 = vpop.f32.mrf.mxu0
  %v1064 = vadd.f32 %v891, %v1063
  %1065 = vmatmul.f32.gmra.mxu0 %v62
  %v1066 = vpop.f32.mrf.mxu0
  %v1067 = vadd.f32 %v894, %v1066
  %1068 = vmatmul.f32.gmra.mxu0 %v67
  %v1069 = vpop.f32.mrf.mxu0
  %v1070 = vadd.f32 %v897, %v1069
  %1071 = vmatmul.f32.gmra.mxu0 %v72
  %v1072 = vpop.f32.mrf.mxu0
  %v1073 = vadd.f32 %v900, %v1072
  %1074 = vmatmul.f32.gmra.mxu0 %v77
  %v1075 = vpop.f32.mrf.mxu0
  %v1076 = vadd.f32 %v903, %v1075
  %1077 = vmatmul.f32.gmra.mxu0 %v82
  %v1078 = vpop.f32.mrf.mxu0
  %v1079 = vadd.f32 %v906, %v1078
  %1080 = vmatmul.f32.gmra.mxu0 %v87
  %v1081 = vpop.f32.mrf.mxu0
  %v1082 = vadd.f32 %v909, %v1081
  %1083 = vmatmul.f32.gmra.mxu0 %v92
  %v1084 = vpop.f32.mrf.mxu0
  %v1085 = vadd.f32 %v912, %v1084
  %1086 = vmatmul.f32.gmra.mxu0 %v97
  %v1087 = vpop.f32.mrf.mxu0
  %v1088 = vadd.f32 %v915, %v1087
  %1089 = vmatmul.f32.gmra.mxu0 %v102
  %v1090 = vpop.f32.mrf.mxu0
  %v1091 = vadd.f32 %v918, %v1090
  %1092 = vmatmul.f32.gmra.mxu0 %v107
  %v1093 = vpop.f32.mrf.mxu0
  %v1094 = vadd.f32 %v921, %v1093
  %1095 = vmatmul.f32.gmra.mxu0 %v112
  %v1096 = vpop.f32.mrf.mxu0
  %v1097 = vadd.f32 %v924, %v1096
  %1098 = vmatmul.f32.gmra.mxu0 %v117
  %v1099 = vpop.f32.mrf.mxu0
  %v1100 = vadd.f32 %v927, %v1099
  %1101 = vmatmul.f32.gmra.mxu0 %v122
  %v1102 = vpop.f32.mrf.mxu0
  %v1103 = vadd.f32 %v930, %v1102
  %1104 = vmatmul.f32.gmra.mxu0 %v127
  %v1105 = vpop.f32.mrf.mxu0
  %v1106 = vadd.f32 %v933, %v1105
  %1107 = vmatmul.f32.gmra.mxu0 %v132
  %v1108 = vpop.f32.mrf.mxu0
  %v1109 = vadd.f32 %v936, %v1108
  %1110 = vmatmul.f32.gmra.mxu0 %v137
  %v1111 = vpop.f32.mrf.mxu0
  %v1112 = vadd.f32 %v939, %v1111
  %1113 = vmatmul.f32.gmra.mxu0 %v142
  %v1114 = vpop.f32.mrf.mxu0
  %v1115 = vadd.f32 %v942, %v1114
  %1116 = vmatmul.f32.gmra.mxu0 %v147
  %v1117 = vpop.f32.mrf.mxu0
  %v1118 = vadd.f32 %v945, %v1117
  %1119 = vmatmul.f32.gmra.mxu0 %v152
  %v1120 = vpop.f32.mrf.mxu0
  %v1121 = vadd.f32 %v948, %v1120
  %1122 = vmatmul.f32.gmra.mxu0 %v157
  %v1123 = vpop.f32.mrf.mxu0
  %v1124 = vadd.f32 %v951, %v1123
  %1125 = vmatmul.f32.gmra.mxu0 %v162
  %v1126 = vpop.f32.mrf.mxu0
  %v1127 = vadd.f32 %v954, %v1126
  %1128 = vmatmul.f32.gmra.mxu0 %v167
  %v1129 = vpop.f32.mrf.mxu0
  %v1130 = vadd.f32 %v957, %v1129
  %1131 = vmatmul.f32.gmra.mxu0 %v172
  %v1132 = vpop.f32.mrf.mxu0
  %v1133 = vadd.f32 %v960, %v1132
  %1134 = vmatmul.f32.gmra.mxu0 %v177
  %v1135 = vpop.f32.mrf.mxu0
  %v1136 = vadd.f32 %v963, %v1135
  %1137 = vmatmul.f32.gmra.mxu0 %v182
  %v1138 = vpop.f32.mrf.mxu0
  %v1139 = vadd.f32 %v966, %v1138
  %1140 = vmatmul.f32.gmra.mxu0 %v187
  %v1141 = vpop.f32.mrf.mxu0
  %v1142 = vadd.f32 %v969, %v1141
  %1143 = vmatmul.f32.gmra.mxu0 %v192
  %v1144 = vpop.f32.mrf.mxu0
  %v1145 = vadd.f32 %v972, %v1144
  %1146 = vmatmul.f32.gmra.mxu0 %v197
  %v1147 = vpop.f32.mrf.mxu0
  %v1148 = vadd.f32 %v975, %v1147
  %1149 = vmatmul.f32.gmra.mxu0 %v202
  %v1150 = vpop.f32.mrf.mxu0
  %v1151 = vadd.f32 %v978, %v1150
  %1152 = vmatmul.f32.gmra.mxu0 %v207
  %v1153 = vpop.f32.mrf.mxu0
  %v1154 = vadd.f32 %v981, %v1153
  %1155 = vmatmul.f32.gmra.mxu0 %v212
  %v1156 = vpop.f32.mrf.mxu0
  %v1157 = vadd.f32 %v984, %v1156
  %1158 = vmatmul.f32.gmra.mxu0 %v217
  %v1159 = vpop.f32.mrf.mxu0
  %v1160 = vadd.f32 %v987, %v1159
  %1161 = vmatmul.f32.gmra.mxu0 %v222
  %v1162 = vpop.f32.mrf.mxu0
  %v1163 = vadd.f32 %v990, %v1162
  %1164 = vmatmul.f32.gmra.mxu0 %v227
  %v1165 = vpop.f32.mrf.mxu0
  %v1166 = vadd.f32 %v993, %v1165
  %1167 = vmatmul.f32.gmra.mxu0 %v232
  %v1168 = vpop.f32.mrf.mxu0
  %v1169 = vadd.f32 %v996, %v1168
  %1170 = vmatmul.f32.gmra.mxu0 %v237
  %v1171 = vpop.f32.mrf.mxu0
  %v1172 = vadd.f32 %v999, %v1171
  %1173 = vmatmul.f32.gmra.mxu0 %v242
  %v1174 = vpop.f32.mrf.mxu0
  %v1175 = vadd.f32 %v1002, %v1174
  %1176 = vmatmul.f32.gmra.mxu0 %v247
  %v1177 = vpop.f32.mrf.mxu0
  %v1178 = vadd.f32 %v1005, %v1177
  %1179 = vmatmul.f32.gmra.mxu0 %v252
  %v1180 = vpop.f32.mrf.mxu0
  %v1181 = vadd.f32 %v1008, %v1180
  %1182 = vmatmul.f32.gmra.mxu0 %v257
  %v1183 = vpop.f32.mrf.mxu0
  %v1184 = vadd.f32 %v1011, %v1183
  %1185 = vmatmul.f32.gmra.mxu0 %v262
  %v1186 = vpop.f32.mrf.mxu0
  %v1187 = vadd.f32 %v1014, %v1186
  %1188 = vmatmul.f32.gmra.mxu0 %v267
  %v1189 = vpop.f32.mrf.mxu0
  %v1190 = vadd.f32 %v1017, %v1189
  %1191 = vmatmul.f32.gmra.mxu0 %v272
  %v1192 = vpop.f32.mrf.mxu0
  %v1193 = vadd.f32 %v1020, %v1192
  %1194 = vdwg.mxu0
  %1195 = vmatpush.msra.mxu0 0.0
  %1196 = vmatpush.msra.mxu0 0.0
  %1197 = vmatpush.msra.mxu0 0.0
  %1198 = vmatpush.msra.mxu0 0.0
  %1199 = vmatpush.msra.mxu0 0.0
  %1200 = vmatpush.msra.mxu0 0.0
  %1201 = vmatpush.msra.mxu0 0.0
  %1202 = vmatpush.msra.mxu0 0.0
  %1203 = vmatpush.msra.mxu0 %v345
  %1204 = vmatpush.msra.mxu0 %v344
  %1205 = vmatpush.msra.mxu0 %v343
  %1206 = vmatpush.msra.mxu0 %v342
  %1207 = vmatpush.msra.mxu0 %v341
  %1208 = vmatpush.msra.mxu0 %v340
  %1209 = vmatpush.msra.mxu0 %v339
  %1210 = vmatpush.msra.mxu0 %v338
  %1211 = vmatmul.f32.gmra.mxu0 %v348
  %v1212 = vpop.f32.mrf.mxu0
  %v1213 = vadd.f32 %v1040, %v1212
  %1214 = vmatmul.f32.gmra.mxu0 %v351
  %v1215 = vpop.f32.mrf.mxu0
  %v1216 = vadd.f32 %v1043, %v1215
  %1217 = vmatmul.f32.gmra.mxu0 %v354
  %v1218 = vpop.f32.mrf.mxu0
  %v1219 = vadd.f32 %v1046, %v1218
  %1220 = vmatmul.f32.gmra.mxu0 %v357
  %v1221 = vpop.f32.mrf.mxu0
  %v1222 = vadd.f32 %v1049, %v1221
  %1223 = vmatmul.f32.gmra.mxu0 %v360
  %v1224 = vpop.f32.mrf.mxu0
  %v1225 = vadd.f32 %v1052, %v1224
  %1226 = vmatmul.f32.gmra.mxu0 %v363
  %v1227 = vpop.f32.mrf.mxu0
  %v1228 = vadd.f32 %v1055, %v1227
  %1229 = vmatmul.f32.gmra.mxu0 %v366
  %v1230 = vpop.f32.mrf.mxu0
  %v1231 = vadd.f32 %v1058, %v1230
  %1232 = vmatmul.f32.gmra.mxu0 %v369
  %v1233 = vpop.f32.mrf.mxu0
  %v1234 = vadd.f32 %v1061, %v1233
  %1235 = vmatmul.f32.gmra.mxu0 %v372
  %v1236 = vpop.f32.mrf.mxu0
  %v1237 = vadd.f32 %v1064, %v1236
  %1238 = vmatmul.f32.gmra.mxu0 %v375
  %v1239 = vpop.f32.mrf.mxu0
  %v1240 = vadd.f32 %v1067, %v1239
  %1241 = vmatmul.f32.gmra.mxu0 %v378
  %v1242 = vpop.f32.mrf.mxu0
  %v1243 = vadd.f32 %v1070, %v1242
  %1244 = vmatmul.f32.gmra.mxu0 %v381
  %v1245 = vpop.f32.mrf.mxu0
  %v1246 = vadd.f32 %v1073, %v1245
  %1247 = vmatmul.f32.gmra.mxu0 %v384
  %v1248 = vpop.f32.mrf.mxu0
  %v1249 = vadd.f32 %v1076, %v1248
  %1250 = vmatmul.f32.gmra.mxu0 %v387
  %v1251 = vpop.f32.mrf.mxu0
  %v1252 = vadd.f32 %v1079, %v1251
  %1253 = vmatmul.f32.gmra.mxu0 %v390
  %v1254 = vpop.f32.mrf.mxu0
  %v1255 = vadd.f32 %v1082, %v1254
  %1256 = vmatmul.f32.gmra.mxu0 %v393
  %v1257 = vpop.f32.mrf.mxu0
  %v1258 = vadd.f32 %v1085, %v1257
  %1259 = vmatmul.f32.gmra.mxu0 %v396
  %v1260 = vpop.f32.mrf.mxu0
  %v1261 = vadd.f32 %v1088, %v1260
  %1262 = vmatmul.f32.gmra.mxu0 %v399
  %v1263 = vpop.f32.mrf.mxu0
  %v1264 = vadd.f32 %v1091, %v1263
  %1265 = vmatmul.f32.gmra.mxu0 %v402
  %v1266 = vpop.f32.mrf.mxu0
  %v1267 = vadd.f32 %v1094, %v1266
  %1268 = vmatmul.f32.gmra.mxu0 %v405
  %v1269 = vpop.f32.mrf.mxu0
  %v1270 = vadd.f32 %v1097, %v1269
  %1271 = vmatmul.f32.gmra.mxu0 %v408
  %v1272 = vpop.f32.mrf.mxu0
  %v1273 = vadd.f32 %v1100, %v1272
  %1274 = vmatmul.f32.gmra.mxu0 %v411
  %v1275 = vpop.f32.mrf.mxu0
  %v1276 = vadd.f32 %v1103, %v1275
  %1277 = vmatmul.f32.gmra.mxu0 %v414
  %v1278 = vpop.f32.mrf.mxu0
  %v1279 = vadd.f32 %v1106, %v1278
  %1280 = vmatmul.f32.gmra.mxu0 %v417
  %v1281 = vpop.f32.mrf.mxu0
  %v1282 = vadd.f32 %v1109, %v1281
  %1283 = vmatmul.f32.gmra.mxu0 %v420
  %v1284 = vpop.f32.mrf.mxu0
  %v1285 = vadd.f32 %v1112, %v1284
  %1286 = vmatmul.f32.gmra.mxu0 %v423
  %v1287 = vpop.f32.mrf.mxu0
  %v1288 = vadd.f32 %v1115, %v1287
  %1289 = vmatmul.f32.gmra.mxu0 %v426
  %v1290 = vpop.f32.mrf.mxu0
  %v1291 = vadd.f32 %v1118, %v1290
  %1292 = vmatmul.f32.gmra.mxu0 %v429
  %v1293 = vpop.f32.mrf.mxu0
  %v1294 = vadd.f32 %v1121, %v1293
  %1295 = vmatmul.f32.gmra.mxu0 %v432
  %v1296 = vpop.f32.mrf.mxu0
  %v1297 = vadd.f32 %v1124, %v1296
  %1298 = vmatmul.f32.gmra.mxu0 %v435
  %v1299 = vpop.f32.mrf.mxu0
  %v1300 = vadd.f32 %v1127, %v1299
  %1301 = vmatmul.f32.gmra.mxu0 %v438
  %v1302 = vpop.f32.mrf.mxu0
  %v1303 = vadd.f32 %v1130, %v1302
  %1304 = vmatmul.f32.gmra.mxu0 %v441
  %v1305 = vpop.f32.mrf.mxu0
  %v1306 = vadd.f32 %v1133, %v1305
  %1307 = vmatmul.f32.gmra.mxu0 %v444
  %v1308 = vpop.f32.mrf.mxu0
  %v1309 = vadd.f32 %v1136, %v1308
  %1310 = vmatmul.f32.gmra.mxu0 %v447
  %v1311 = vpop.f32.mrf.mxu0
  %v1312 = vadd.f32 %v1139, %v1311
  %1313 = vmatmul.f32.gmra.mxu0 %v450
  %v1314 = vpop.f32.mrf.mxu0
  %v1315 = vadd.f32 %v1142, %v1314
  %1316 = vmatmul.f32.gmra.mxu0 %v453
  %v1317 = vpop.f32.mrf.mxu0
  %v1318 = vadd.f32 %v1145, %v1317
  %1319 = vmatmul.f32.gmra.mxu0 %v456
  %v1320 = vpop.f32.mrf.mxu0
  %v1321 = vadd.f32 %v1148, %v1320
  %1322 = vmatmul.f32.gmra.mxu0 %v459
  %v1323 = vpop.f32.mrf.mxu0
  %v1324 = vadd.f32 %v1151, %v1323
  %1325 = vmatmul.f32.gmra.mxu0 %v462
  %v1326 = vpop.f32.mrf.mxu0
  %v1327 = vadd.f32 %v1154, %v1326
  %1328 = vmatmul.f32.gmra.mxu0 %v465
  %v1329 = vpop.f32.mrf.mxu0
  %v1330 = vadd.f32 %v1157, %v1329
  %1331 = vmatmul.f32.gmra.mxu0 %v468
  %v1332 = vpop.f32.mrf.mxu0
  %v1333 = vadd.f32 %v1160, %v1332
  %1334 = vmatmul.f32.gmra.mxu0 %v471
  %v1335 = vpop.f32.mrf.mxu0
  %v1336 = vadd.f32 %v1163, %v1335
  %1337 = vmatmul.f32.gmra.mxu0 %v474
  %v1338 = vpop.f32.mrf.mxu0
  %v1339 = vadd.f32 %v1166, %v1338
  %1340 = vmatmul.f32.gmra.mxu0 %v477
  %v1341 = vpop.f32.mrf.mxu0
  %v1342 = vadd.f32 %v1169, %v1341
  %1343 = vmatmul.f32.gmra.mxu0 %v480
  %v1344 = vpop.f32.mrf.mxu0
  %v1345 = vadd.f32 %v1172, %v1344
  %1346 = vmatmul.f32.gmra.mxu0 %v483
  %v1347 = vpop.f32.mrf.mxu0
  %v1348 = vadd.f32 %v1175, %v1347
  %1349 = vmatmul.f32.gmra.mxu0 %v486
  %v1350 = vpop.f32.mrf.mxu0
  %v1351 = vadd.f32 %v1178, %v1350
  %1352 = vmatmul.f32.gmra.mxu0 %v489
  %v1353 = vpop.f32.mrf.mxu0
  %v1354 = vadd.f32 %v1181, %v1353
  %1355 = vmatmul.f32.gmra.mxu0 %v492
  %v1356 = vpop.f32.mrf.mxu0
  %v1357 = vadd.f32 %v1184, %v1356
  %1358 = vmatmul.f32.gmra.mxu0 %v495
  %v1359 = vpop.f32.mrf.mxu0
  %v1360 = vadd.f32 %v1187, %v1359
  %1361 = vmatmul.f32.gmra.mxu0 %v498
  %v1362 = vpop.f32.mrf.mxu0
  %v1363 = vadd.f32 %v1190, %v1362
  %1364 = vmatmul.f32.gmra.mxu0 %v501
  %v1365 = vpop.f32.mrf.mxu0
  %v1366 = vadd.f32 %v1193, %v1365
  %1367 = vdwg.mxu0
  %v1368 = vmax.f32 %v1213, %v1252
  %v1369 = vmax.f32 %v1216, %v1255
  %v1370 = vmax.f32 %v1219, %v1258
  %v1371 = vmax.f32 %v1222, %v1261
  %v1372 = vmax.f32 %v1225, %v1264
  %v1373 = vmax.f32 %v1228, %v1267
  %v1374 = vmax.f32 %v1231, %v1270
  %v1375 = vmax.f32 %v1234, %v1273
  %v1376 = vmax.f32 %v1237, %v1276
  %v1377 = vmax.f32 %v1240, %v1279
  %v1378 = vmax.f32 %v1243, %v1282
  %v1379 = vmax.f32 %v1246, %v1285
  %v1380 = vmax.f32 %v1249, %v1288
  %v1381 = vmax.f32 %v1291, %v1330
  %v1382 = vmax.f32 %v1294, %v1333
  %v1383 = vmax.f32 %v1297, %v1336
  %v1384 = vmax.f32 %v1300, %v1339
  %v1385 = vmax.f32 %v1303, %v1342
  %v1386 = vmax.f32 %v1306, %v1345
  %v1387 = vmax.f32 %v1309, %v1348
  %v1388 = vmax.f32 %v1312, %v1351
  %v1389 = vmax.f32 %v1315, %v1354
  %v1390 = vmax.f32 %v1318, %v1357
  %v1391 = vmax.f32 %v1321, %v1360
  %v1392 = vmax.f32 %v1324, %v1363
  %v1393 = vmax.f32 %v1327, %v1366
  %v1394 = vmax.f32 %v1368, %v1381
  %v1395 = vmax.f32 %v1369, %v1382
  %v1396 = vmax.f32 %v1370, %v1383
  %v1397 = vmax.f32 %v1371, %v1384
  %v1398 = vmax.f32 %v1372, %v1385
  %v1399 = vmax.f32 %v1373, %v1386
  %v1400 = vmax.f32 %v1374, %v1387
  %v1401 = vmax.f32 %v1375, %v1388
  %v1402 = vmax.f32 %v1376, %v1389
  %v1403 = vmax.f32 %v1377, %v1390
  %v1404 = vmax.f32 %v1378, %v1391
  %v1405 = vmax.f32 %v1379, %v1392
  %v1406 = vmax.f32 %v1380, %v1393
  %v1407 = vld [vmem:[%s2] sm:$0x1]
  %v1409 = vperm.slane %v1407, 0
  %v1411 = vadd.f32 %v1394, %v1409
  %v1412 = vadd.f32 %v1395, %v1409
  %v1413 = vadd.f32 %v1396, %v1409
  %v1414 = vadd.f32 %v1397, %v1409
  %v1415 = vadd.f32 %v1398, %v1409
  %v1416 = vadd.f32 %v1399, %v1409
  %v1417 = vadd.f32 %v1400, %v1409
  %v1418 = vadd.f32 %v1401, %v1409
  %v1419 = vadd.f32 %v1402, %v1409
  %v1420 = vadd.f32 %v1403, %v1409
  %v1421 = vadd.f32 %v1404, %v1409
  %v1422 = vadd.f32 %v1405, %v1409
  %v1423 = vadd.f32 %v1406, %v1409
  %v1424 = vmax.f32 %v1411, 0.0
  %v1425 = vmax.f32 %v1412, 0.0
  %v1426 = vmax.f32 %v1413, 0.0
  %v1427 = vmax.f32 %v1414, 0.0
  %v1428 = vmax.f32 %v1415, 0.0
  %v1429 = vmax.f32 %v1416, 0.0
  %v1430 = vmax.f32 %v1417, 0.0
  %v1431 = vmax.f32 %v1418, 0.0
  %v1432 = vmax.f32 %v1419, 0.0
  %v1433 = vmax.f32 %v1420, 0.0
  %v1434 = vmax.f32 %v1421, 0.0
  %v1435 = vmax.f32 %v1422, 0.0
  %v1436 = vmax.f32 %v1423, 0.0
  %1437 = vst [vmem:[%s3] sm:$0xff] %v1424
  %1438 = vst [vmem:[%s3 + $0x8] sm:$0xff] %v1425
  %1439 = vst [vmem:[%s3 + $0x10] sm:$0xff] %v1426
  %1440 = vst [vmem:[%s3 + $0x18] sm:$0xff] %v1427
  %1441 = vst [vmem:[%s3 + $0x20] sm:$0xff] %v1428
  %1442 = vst [vmem:[%s3 + $0x28] sm:$0xff] %v1429
  %1443 = vst [vmem:[%s3 + $0x30] sm:$0xff] %v1430
  %1444 = vst [vmem:[%s3 + $0x38] sm:$0xff] %v1431
  %1445 = vst [vmem:[%s3 + $0x40] sm:$0xff] %v1432
  %1446 = vst [vmem:[%s3 + $0x48] sm:$0xff] %v1433
  %1447 = vst [vmem:[%s3 + $0x50] sm:$0xff] %v1434
  %1448 = vst [vmem:[%s3 + $0x58] sm:$0xff] %v1435
  %1449 = vst [vmem:[%s3 + $0x60] sm:$0xff] %v1436
  // Predicated region
  $region14: #{mnist_network_forward.6} parent=0 // pred_check
    _
  $region15: #{mnist_network_forward.6} parent=0 // pred_check_branch
    %1451 = sbr.rel (0) target = $region17
  $region16: #{mnist_network_forward.6} parent=0 // pred_region
    _
  $region17: #{mnist_network_forward.6} parent=0 // pred_fallthru
    _
  // Predicated region
  $region18: #{mnist_network_forward.6} parent=0 // pred_check
    _
  $region19: #{mnist_network_forward.6} parent=0 // pred_check_branch
    %1453 = sbr.rel (0) target = $region21
  $region20: #{mnist_network_forward.6} parent=0 // pred_region
    _
  $region21: #{mnist_network_forward.6} parent=0 // pred_fallthru
    _

// kernel: mnist_network_forward.7
$region0: #{mnist_network_forward.7}
  #allocation0 [shape = 'u32[]', space=smem, size = 0x4, offset = 0x4, fixed_abs, tag = 'smem constant byte address 0x4 - core index']
  #allocation1 [shape = 'u32[72,128]{1,0:T(1,128)}', space=vmem, size = 0x9000, scoped, tag = 'internal scratch']
  %s0 = inlined_call_operand.vmem [shape: f32[288,1152], index: 0, kind: input, shape index: {}]
  %s1 = inlined_call_operand.vmem [shape: f32[1152,256], index: 1, kind: input, shape index: {}]
  %s2 = inlined_call_operand.vmem [shape: f32[1,256], index: 2, kind: input, shape index: {}]
  %s3 = inlined_call_operand.vmem [shape: f32[72,256], index: 3, kind: output, shape index: {}]
  %s4 = sld [smem:[#allocation0]]
  $region22: #{mnist_network_forward.7} parent=0
    _
  %s6 = ssub.s32 1, %s4
  %s7 = scalar_select 0, %s6, %s4
  // Predicated region
  $region2: #{mnist_network_forward.7} parent=0 // pred_check
    _
  $region3: #{mnist_network_forward.7} parent=0 // pred_check_branch
    %9 = sbr.rel (0) target = $region5
  $region4: #{mnist_network_forward.7} parent=0 // pred_region
    _
  $region5: #{mnist_network_forward.7} parent=0 // pred_fallthru
    _
  // Predicated region
  $region6: #{mnist_network_forward.7} parent=0 // pred_check
    _
  $region7: #{mnist_network_forward.7} parent=0 // pred_check_branch
    %11 = sbr.rel (0) target = $region9
  $region8: #{mnist_network_forward.7} parent=0 // pred_region
    _
  $region9: #{mnist_network_forward.7} parent=0 // pred_fallthru
    _
  // Predicated region
  $region10: #{mnist_network_forward.7} parent=0 // pred_check
    _
  $region11: #{mnist_network_forward.7} parent=0 // pred_check_branch
    %13 = sbr.rel (0) target = $region13
  $region12: #{mnist_network_forward.7} parent=0 // pred_region
    _
  $region13: #{mnist_network_forward.7} parent=0 // pred_fallthru
    _
  %v14 = vld [vmem:[%s0] sm:$0xff]
  %v15 = vld [vmem:[%s0 + $0x8] sm:$0xff]
  %v16 = vld [vmem:[%s0 + $0x10] sm:$0xff]
  %v17 = vld [vmem:[%s0 + $0x18] sm:$0xff]
  %v18 = vld [vmem:[%s0 + $0x20] sm:$0xff]
  %v19 = vld [vmem:[%s0 + $0x28] sm:$0xff]
  %v20 = vld [vmem:[%s0 + $0x30] sm:$0xff]
  %v21 = vld [vmem:[%s0 + $0x38] sm:$0xff]
  %v22 = vld [vmem:[%s0 + $0x40] sm:$0xff]
  %v23 = vld [vmem:[%s0 + $0x48] sm:$0xff]
  %v24 = vld [vmem:[%s0 + $0x50] sm:$0xff]
  %v25 = vld [vmem:[%s0 + $0x58] sm:$0xff]
  %v26 = vld [vmem:[%s0 + $0x60] sm:$0xff]
  %v27 = vld [vmem:[%s0 + $0x68] sm:$0xff]
  %v28 = vld [vmem:[%s0 + $0x70] sm:$0xff]
  %v29 = vld [vmem:[%s0 + $0x78] sm:$0xff]
  %v30 = vld [vmem:[%s0 + $0x80] sm:$0xff]
  %v31 = vld [vmem:[%s0 + $0x88] sm:$0xff]
  %v32 = vld [vmem:[%s0 + $0x90] sm:$0xff]
  %v33 = vld [vmem:[%s0 + $0x98] sm:$0xff]
  %v34 = vld [vmem:[%s0 + $0xa0] sm:$0xff]
  %v35 = vld [vmem:[%s0 + $0xa8] sm:$0xff]
  %v36 = vld [vmem:[%s0 + $0xb0] sm:$0xff]
  %v37 = vld [vmem:[%s0 + $0xb8] sm:$0xff]
  %v38 = vld [vmem:[%s0 + $0xc0] sm:$0xff]
  %v39 = vld [vmem:[%s0 + $0xc8] sm:$0xff]
  %v40 = vld [vmem:[%s0 + $0xd0] sm:$0xff]
  %v41 = vld [vmem:[%s0 + $0xd8] sm:$0xff]
  %v42 = vld [vmem:[%s0 + $0xe0] sm:$0xff]
  %v43 = vld [vmem:[%s0 + $0xe8] sm:$0xff]
  %v44 = vld [vmem:[%s0 + $0xf0] sm:$0xff]
  %v45 = vld [vmem:[%s0 + $0xf8] sm:$0xff]
  %v46 = vld [vmem:[%s0 + $0x100] sm:$0xff]
  %v47 = vld [vmem:[%s0 + $0x108] sm:$0xff]
  %v48 = vld [vmem:[%s0 + $0x110] sm:$0xff]
  %v49 = vld [vmem:[%s0 + $0x118] sm:$0xff]
  %v50 = vld [vmem:[%s0 + $0x120] sm:$0xff]
  %v51 = vld [vmem:[%s0 + $0x128] sm:$0xff]
  %v52 = vld [vmem:[%s0 + $0x130] sm:$0xff]
  %v53 = vld [vmem:[%s0 + $0x138] sm:$0xff]
  %v54 = vld [vmem:[%s0 + $0x140] sm:$0xff]
  %v55 = vld [vmem:[%s0 + $0x148] sm:$0xff]
  %v56 = vld [vmem:[%s0 + $0x150] sm:$0xff]
  %v57 = vld [vmem:[%s0 + $0x158] sm:$0xff]
  %v58 = vld [vmem:[%s0 + $0x160] sm:$0xff]
  %v59 = vld [vmem:[%s0 + $0x168] sm:$0xff]
  %v60 = vld [vmem:[%s0 + $0x170] sm:$0xff]
  %v61 = vld [vmem:[%s0 + $0x178] sm:$0xff]
  %v62 = vld [vmem:[%s0 + $0x180] sm:$0xff]
  %v63 = vld [vmem:[%s0 + $0x188] sm:$0xff]
  %v64 = vld [vmem:[%s0 + $0x190] sm:$0xff]
  %v65 = vld [vmem:[%s0 + $0x198] sm:$0xff]
  %v66 = vld [vmem:[%s0 + $0x1a0] sm:$0xff]
  %v67 = vld [vmem:[%s0 + $0x1a8] sm:$0xff]
  %v68 = vld [vmem:[%s0 + $0x1b0] sm:$0xff]
  %v69 = vld [vmem:[%s0 + $0x1b8] sm:$0xff]
  %v70 = vld [vmem:[%s0 + $0x1c0] sm:$0xff]
  %v71 = vld [vmem:[%s0 + $0x1c8] sm:$0xff]
  %v72 = vld [vmem:[%s0 + $0x1d0] sm:$0xff]
  %v73 = vld [vmem:[%s0 + $0x1d8] sm:$0xff]
  %v74 = vld [vmem:[%s0 + $0x1e0] sm:$0xff]
  %v75 = vld [vmem:[%s0 + $0x1e8] sm:$0xff]
  %v76 = vld [vmem:[%s0 + $0x1f0] sm:$0xff]
  %v77 = vld [vmem:[%s0 + $0x1f8] sm:$0xff]
  %v78 = vld [vmem:[%s0 + $0x200] sm:$0xff]
  %v79 = vld [vmem:[%s0 + $0x208] sm:$0xff]
  %v80 = vld [vmem:[%s0 + $0x210] sm:$0xff]
  %v81 = vld [vmem:[%s0 + $0x218] sm:$0xff]
  %v82 = vld [vmem:[%s0 + $0x220] sm:$0xff]
  %v83 = vld [vmem:[%s0 + $0x228] sm:$0xff]
  %v84 = vld [vmem:[%s0 + $0x230] sm:$0xff]
  %v85 = vld [vmem:[%s0 + $0x238] sm:$0xff]
  %v86 = vld [vmem:[%s0 + $0x240] sm:$0xff]
  %v87 = vld [vmem:[%s0 + $0x248] sm:$0xff]
  %v88 = vld [vmem:[%s0 + $0x250] sm:$0xff]
  %v89 = vld [vmem:[%s0 + $0x258] sm:$0xff]
  %v90 = vld [vmem:[%s0 + $0x260] sm:$0xff]
  %v91 = vld [vmem:[%s0 + $0x268] sm:$0xff]
  %v92 = vld [vmem:[%s0 + $0x270] sm:$0xff]
  %v93 = vld [vmem:[%s0 + $0x278] sm:$0xff]
  %v94 = vld [vmem:[%s0 + $0x280] sm:$0xff]
  %v95 = vld [vmem:[%s0 + $0x288] sm:$0xff]
  %v96 = vld [vmem:[%s0 + $0x290] sm:$0xff]
  %v97 = vld [vmem:[%s0 + $0x298] sm:$0xff]
  %v98 = vld [vmem:[%s0 + $0x2a0] sm:$0xff]
  %v99 = vld [vmem:[%s0 + $0x2a8] sm:$0xff]
  %v100 = vld [vmem:[%s0 + $0x2b0] sm:$0xff]
  %v101 = vld [vmem:[%s0 + $0x2b8] sm:$0xff]
  %v102 = vld [vmem:[%s0 + $0x2c0] sm:$0xff]
  %v103 = vld [vmem:[%s0 + $0x2c8] sm:$0xff]
  %v104 = vld [vmem:[%s0 + $0x2d0] sm:$0xff]
  %v105 = vld [vmem:[%s0 + $0x2d8] sm:$0xff]
  %v106 = vld [vmem:[%s0 + $0x2e0] sm:$0xff]
  %v107 = vld [vmem:[%s0 + $0x2e8] sm:$0xff]
  %v108 = vld [vmem:[%s0 + $0x2f0] sm:$0xff]
  %v109 = vld [vmem:[%s0 + $0x2f8] sm:$0xff]
  %v110 = vld [vmem:[%s0 + $0x300] sm:$0xff]
  %v111 = vld [vmem:[%s0 + $0x308] sm:$0xff]
  %v112 = vld [vmem:[%s0 + $0x310] sm:$0xff]
  %v113 = vld [vmem:[%s0 + $0x318] sm:$0xff]
  %v114 = vld [vmem:[%s0 + $0x320] sm:$0xff]
  %v115 = vld [vmem:[%s0 + $0x328] sm:$0xff]
  %v116 = vld [vmem:[%s0 + $0x330] sm:$0xff]
  %v117 = vld [vmem:[%s0 + $0x338] sm:$0xff]
  %v118 = vld [vmem:[%s0 + $0x340] sm:$0xff]
  %v119 = vld [vmem:[%s0 + $0x348] sm:$0xff]
  %v120 = vld [vmem:[%s0 + $0x350] sm:$0xff]
  %v121 = vld [vmem:[%s0 + $0x358] sm:$0xff]
  %v122 = vld [vmem:[%s0 + $0x360] sm:$0xff]
  %v123 = vld [vmem:[%s0 + $0x368] sm:$0xff]
  %v124 = vld [vmem:[%s0 + $0x370] sm:$0xff]
  %v125 = vld [vmem:[%s0 + $0x378] sm:$0xff]
  %v126 = vld [vmem:[%s0 + $0x380] sm:$0xff]
  %v127 = vld [vmem:[%s0 + $0x388] sm:$0xff]
  %v128 = vld [vmem:[%s0 + $0x390] sm:$0xff]
  %v129 = vld [vmem:[%s0 + $0x398] sm:$0xff]
  %v130 = vld [vmem:[%s0 + $0x3a0] sm:$0xff]
  %v131 = vld [vmem:[%s0 + $0x3a8] sm:$0xff]
  %v132 = vld [vmem:[%s0 + $0x3b0] sm:$0xff]
  %v133 = vld [vmem:[%s0 + $0x3b8] sm:$0xff]
  %v134 = vld [vmem:[%s0 + $0x3c0] sm:$0xff]
  %v135 = vld [vmem:[%s0 + $0x3c8] sm:$0xff]
  %v136 = vld [vmem:[%s0 + $0x3d0] sm:$0xff]
  %v137 = vld [vmem:[%s0 + $0x3d8] sm:$0xff]
  %v138 = vld [vmem:[%s0 + $0x3e0] sm:$0xff]
  %v139 = vld [vmem:[%s0 + $0x3e8] sm:$0xff]
  %v140 = vld [vmem:[%s0 + $0x3f0] sm:$0xff]
  %v141 = vld [vmem:[%s0 + $0x3f8] sm:$0xff]
  %v142 = vld [vmem:[%s0 + $0x400] sm:$0xff]
  %v143 = vld [vmem:[%s0 + $0x408] sm:$0xff]
  %v144 = vld [vmem:[%s0 + $0x410] sm:$0xff]
  %v145 = vld [vmem:[%s0 + $0x418] sm:$0xff]
  %v146 = vld [vmem:[%s0 + $0x420] sm:$0xff]
  %v147 = vld [vmem:[%s0 + $0x428] sm:$0xff]
  %v148 = vld [vmem:[%s0 + $0x430] sm:$0xff]
  %v149 = vld [vmem:[%s0 + $0x438] sm:$0xff]
  %v150 = vld [vmem:[%s0 + $0x440] sm:$0xff]
  %v151 = vld [vmem:[%s0 + $0x448] sm:$0xff]
  %v152 = vld [vmem:[%s0 + $0x450] sm:$0xff]
  %v153 = vld [vmem:[%s0 + $0x458] sm:$0xff]
  %v154 = vld [vmem:[%s0 + $0x460] sm:$0xff]
  %v155 = vld [vmem:[%s0 + $0x468] sm:$0xff]
  %v156 = vld [vmem:[%s0 + $0x470] sm:$0xff]
  %v157 = vld [vmem:[%s0 + $0x478] sm:$0xff]
  %v158 = vld [vmem:[%s0 + $0x480] sm:$0xff]
  %v159 = vld [vmem:[%s0 + $0x488] sm:$0xff]
  %v160 = vld [vmem:[%s0 + $0x490] sm:$0xff]
  %v161 = vld [vmem:[%s0 + $0x498] sm:$0xff]
  %v162 = vld [vmem:[%s0 + $0x4a0] sm:$0xff]
  %v163 = vld [vmem:[%s0 + $0x4a8] sm:$0xff]
  %v164 = vld [vmem:[%s0 + $0x4b0] sm:$0xff]
  %v165 = vld [vmem:[%s0 + $0x4b8] sm:$0xff]
  %v166 = vld [vmem:[%s0 + $0x4c0] sm:$0xff]
  %v167 = vld [vmem:[%s0 + $0x4c8] sm:$0xff]
  %v168 = vld [vmem:[%s0 + $0x4d0] sm:$0xff]
  %v169 = vld [vmem:[%s0 + $0x4d8] sm:$0xff]
  %v170 = vld [vmem:[%s0 + $0x4e0] sm:$0xff]
  %v171 = vld [vmem:[%s0 + $0x4e8] sm:$0xff]
  %v172 = vld [vmem:[%s0 + $0x4f0] sm:$0xff]
  %v173 = vld [vmem:[%s0 + $0x4f8] sm:$0xff]
  %v174 = vld [vmem:[%s0 + $0x500] sm:$0xff]
  %v175 = vld [vmem:[%s0 + $0x508] sm:$0xff]
  %v176 = vld [vmem:[%s0 + $0x510] sm:$0xff]
  %v177 = vld [vmem:[%s0 + $0x518] sm:$0xff]
  %v178 = vld [vmem:[%s0 + $0x520] sm:$0xff]
  %v179 = vld [vmem:[%s0 + $0x528] sm:$0xff]
  %v180 = vld [vmem:[%s0 + $0x530] sm:$0xff]
  %v181 = vld [vmem:[%s0 + $0x538] sm:$0xff]
  %v182 = vld [vmem:[%s0 + $0x540] sm:$0xff]
  %v183 = vld [vmem:[%s0 + $0x548] sm:$0xff]
  %v184 = vld [vmem:[%s0 + $0x550] sm:$0xff]
  %v185 = vld [vmem:[%s0 + $0x558] sm:$0xff]
  %v186 = vld [vmem:[%s0 + $0x560] sm:$0xff]
  %v187 = vld [vmem:[%s0 + $0x568] sm:$0xff]
  %v188 = vld [vmem:[%s0 + $0x570] sm:$0xff]
  %v189 = vld [vmem:[%s0 + $0x578] sm:$0xff]
  %v190 = vld [vmem:[%s0 + $0x580] sm:$0xff]
  %v191 = vld [vmem:[%s0 + $0x588] sm:$0xff]
  %v192 = vld [vmem:[%s0 + $0x590] sm:$0xff]
  %v193 = vld [vmem:[%s0 + $0x598] sm:$0xff]
  %v194 = vld [vmem:[%s0 + $0x5a0] sm:$0xff]
  %v195 = vld [vmem:[%s0 + $0x5a8] sm:$0xff]
  %v196 = vld [vmem:[%s0 + $0x5b0] sm:$0xff]
  %v197 = vld [vmem:[%s0 + $0x5b8] sm:$0xff]
  %v198 = vld [vmem:[%s0 + $0x5c0] sm:$0xff]
  %v199 = vld [vmem:[%s0 + $0x5c8] sm:$0xff]
  %v200 = vld [vmem:[%s0 + $0x5d0] sm:$0xff]
  %v201 = vld [vmem:[%s0 + $0x5d8] sm:$0xff]
  %v202 = vld [vmem:[%s0 + $0x5e0] sm:$0xff]
  %v203 = vld [vmem:[%s0 + $0x5e8] sm:$0xff]
  %v204 = vld [vmem:[%s0 + $0x5f0] sm:$0xff]
  %v205 = vld [vmem:[%s0 + $0x5f8] sm:$0xff]
  %v206 = vld [vmem:[%s0 + $0x600] sm:$0xff]
  %v207 = vld [vmem:[%s0 + $0x608] sm:$0xff]
  %v208 = vld [vmem:[%s0 + $0x610] sm:$0xff]
  %v209 = vld [vmem:[%s0 + $0x618] sm:$0xff]
  %v210 = vld [vmem:[%s0 + $0x620] sm:$0xff]
  %v211 = vld [vmem:[%s0 + $0x628] sm:$0xff]
  %v212 = vld [vmem:[%s0 + $0x630] sm:$0xff]
  %v213 = vld [vmem:[%s0 + $0x638] sm:$0xff]
  %v214 = vld [vmem:[%s0 + $0x640] sm:$0xff]
  %v215 = vld [vmem:[%s0 + $0x648] sm:$0xff]
  %v216 = vld [vmem:[%s0 + $0x650] sm:$0xff]
  %v217 = vld [vmem:[%s0 + $0x658] sm:$0xff]
  %v218 = vld [vmem:[%s0 + $0x660] sm:$0xff]
  %v219 = vld [vmem:[%s0 + $0x668] sm:$0xff]
  %v220 = vld [vmem:[%s0 + $0x670] sm:$0xff]
  %v221 = vld [vmem:[%s0 + $0x678] sm:$0xff]
  %v222 = vld [vmem:[%s0 + $0x680] sm:$0xff]
  %v223 = vld [vmem:[%s0 + $0x688] sm:$0xff]
  %v224 = vld [vmem:[%s0 + $0x690] sm:$0xff]
  %v225 = vld [vmem:[%s0 + $0x698] sm:$0xff]
  %v226 = vld [vmem:[%s0 + $0x6a0] sm:$0xff]
  %v227 = vld [vmem:[%s0 + $0x6a8] sm:$0xff]
  %v228 = vld [vmem:[%s0 + $0x6b0] sm:$0xff]
  %v229 = vld [vmem:[%s0 + $0x6b8] sm:$0xff]
  %v230 = vld [vmem:[%s0 + $0x6c0] sm:$0xff]
  %v231 = vld [vmem:[%s0 + $0x6c8] sm:$0xff]
  %v232 = vld [vmem:[%s0 + $0x6d0] sm:$0xff]
  %v233 = vld [vmem:[%s0 + $0x6d8] sm:$0xff]
  %v234 = vld [vmem:[%s0 + $0x6e0] sm:$0xff]
  %v235 = vld [vmem:[%s0 + $0x6e8] sm:$0xff]
  %v236 = vld [vmem:[%s0 + $0x6f0] sm:$0xff]
  %v237 = vld [vmem:[%s0 + $0x6f8] sm:$0xff]
  %v238 = vld [vmem:[%s0 + $0x700] sm:$0xff]
  %v239 = vld [vmem:[%s0 + $0x708] sm:$0xff]
  %v240 = vld [vmem:[%s0 + $0x710] sm:$0xff]
  %v241 = vld [vmem:[%s0 + $0x718] sm:$0xff]
  %v242 = vld [vmem:[%s0 + $0x720] sm:$0xff]
  %v243 = vld [vmem:[%s0 + $0x728] sm:$0xff]
  %v244 = vld [vmem:[%s0 + $0x730] sm:$0xff]
  %v245 = vld [vmem:[%s0 + $0x738] sm:$0xff]
  %v246 = vld [vmem:[%s0 + $0x740] sm:$0xff]
  %v247 = vld [vmem:[%s0 + $0x748] sm:$0xff]
  %v248 = vld [vmem:[%s0 + $0x750] sm:$0xff]
  %v249 = vld [vmem:[%s0 + $0x758] sm:$0xff]
  %v250 = vld [vmem:[%s0 + $0x760] sm:$0xff]
  %v251 = vld [vmem:[%s0 + $0x768] sm:$0xff]
  %v252 = vld [vmem:[%s0 + $0x770] sm:$0xff]
  %v253 = vld [vmem:[%s0 + $0x778] sm:$0xff]
  %v254 = vld [vmem:[%s0 + $0x780] sm:$0xff]
  %v255 = vld [vmem:[%s0 + $0x788] sm:$0xff]
  %v256 = vld [vmem:[%s0 + $0x790] sm:$0xff]
  %v257 = vld [vmem:[%s0 + $0x798] sm:$0xff]
  %v258 = vld [vmem:[%s0 + $0x7a0] sm:$0xff]
  %v259 = vld [vmem:[%s0 + $0x7a8] sm:$0xff]
  %v260 = vld [vmem:[%s0 + $0x7b0] sm:$0xff]
  %v261 = vld [vmem:[%s0 + $0x7b8] sm:$0xff]
  %v262 = vld [vmem:[%s0 + $0x7c0] sm:$0xff]
  %v263 = vld [vmem:[%s0 + $0x7c8] sm:$0xff]
  %v264 = vld [vmem:[%s0 + $0x7d0] sm:$0xff]
  %v265 = vld [vmem:[%s0 + $0x7d8] sm:$0xff]
  %v266 = vld [vmem:[%s0 + $0x7e0] sm:$0xff]
  %v267 = vld [vmem:[%s0 + $0x7e8] sm:$0xff]
  %v268 = vld [vmem:[%s0 + $0x7f0] sm:$0xff]
  %v269 = vld [vmem:[%s0 + $0x7f8] sm:$0xff]
  %v270 = vld [vmem:[%s0 + $0x800] sm:$0xff]
  %v271 = vld [vmem:[%s0 + $0x808] sm:$0xff]
  %v272 = vld [vmem:[%s0 + $0x810] sm:$0xff]
  %v273 = vld [vmem:[%s0 + $0x818] sm:$0xff]
  %v274 = vld [vmem:[%s0 + $0x820] sm:$0xff]
  %v275 = vld [vmem:[%s0 + $0x828] sm:$0xff]
  %v276 = vld [vmem:[%s0 + $0x830] sm:$0xff]
  %v277 = vld [vmem:[%s0 + $0x838] sm:$0xff]
  %v278 = vld [vmem:[%s0 + $0x840] sm:$0xff]
  %v279 = vld [vmem:[%s0 + $0x848] sm:$0xff]
  %v280 = vld [vmem:[%s0 + $0x850] sm:$0xff]
  %v281 = vld [vmem:[%s0 + $0x858] sm:$0xff]
  %v282 = vld [vmem:[%s0 + $0x860] sm:$0xff]
  %v283 = vld [vmem:[%s0 + $0x868] sm:$0xff]
  %v284 = vld [vmem:[%s0 + $0x870] sm:$0xff]
  %v285 = vld [vmem:[%s0 + $0x878] sm:$0xff]
  %v286 = vld [vmem:[%s0 + $0x880] sm:$0xff]
  %v287 = vld [vmem:[%s0 + $0x888] sm:$0xff]
  %v288 = vld [vmem:[%s0 + $0x890] sm:$0xff]
  %v289 = vld [vmem:[%s0 + $0x898] sm:$0xff]
  %v290 = vld [vmem:[%s0 + $0x8a0] sm:$0xff]
  %v291 = vld [vmem:[%s0 + $0x8a8] sm:$0xff]
  %v292 = vld [vmem:[%s0 + $0x8b0] sm:$0xff]
  %v293 = vld [vmem:[%s0 + $0x8b8] sm:$0xff]
  %v294 = vld [vmem:[%s0 + $0x8c0] sm:$0xff]
  %v295 = vld [vmem:[%s0 + $0x8c8] sm:$0xff]
  %v296 = vld [vmem:[%s0 + $0x8d0] sm:$0xff]
  %v297 = vld [vmem:[%s0 + $0x8d8] sm:$0xff]
  %v298 = vld [vmem:[%s0 + $0x8e0] sm:$0xff]
  %v299 = vld [vmem:[%s0 + $0x8e8] sm:$0xff]
  %v300 = vld [vmem:[%s0 + $0x8f0] sm:$0xff]
  %v301 = vld [vmem:[%s0 + $0x8f8] sm:$0xff]
  %v302 = vld [vmem:[%s0 + $0x900] sm:$0xff]
  %v303 = vld [vmem:[%s0 + $0x908] sm:$0xff]
  %v304 = vld [vmem:[%s0 + $0x910] sm:$0xff]
  %v305 = vld [vmem:[%s0 + $0x918] sm:$0xff]
  %v306 = vld [vmem:[%s0 + $0x920] sm:$0xff]
  %v307 = vld [vmem:[%s0 + $0x928] sm:$0xff]
  %v308 = vld [vmem:[%s0 + $0x930] sm:$0xff]
  %v309 = vld [vmem:[%s0 + $0x938] sm:$0xff]
  %v310 = vld [vmem:[%s0 + $0x940] sm:$0xff]
  %v311 = vld [vmem:[%s0 + $0x948] sm:$0xff]
  %v312 = vld [vmem:[%s0 + $0x950] sm:$0xff]
  %v313 = vld [vmem:[%s0 + $0x958] sm:$0xff]
  %v314 = vld [vmem:[%s0 + $0x960] sm:$0xff]
  %v315 = vld [vmem:[%s0 + $0x968] sm:$0xff]
  %v316 = vld [vmem:[%s0 + $0x970] sm:$0xff]
  %v317 = vld [vmem:[%s0 + $0x978] sm:$0xff]
  %v318 = vld [vmem:[%s0 + $0x980] sm:$0xff]
  %v319 = vld [vmem:[%s0 + $0x988] sm:$0xff]
  %v320 = vld [vmem:[%s0 + $0x990] sm:$0xff]
  %v321 = vld [vmem:[%s0 + $0x998] sm:$0xff]
  %v322 = vld [vmem:[%s0 + $0x9a0] sm:$0xff]
  %v323 = vld [vmem:[%s0 + $0x9a8] sm:$0xff]
  %v324 = vld [vmem:[%s0 + $0x9b0] sm:$0xff]
  %v325 = vld [vmem:[%s0 + $0x9b8] sm:$0xff]
  %v326 = vld [vmem:[%s0 + $0x9c0] sm:$0xff]
  %v327 = vld [vmem:[%s0 + $0x9c8] sm:$0xff]
  %v328 = vld [vmem:[%s0 + $0x9d0] sm:$0xff]
  %v329 = vld [vmem:[%s0 + $0x9d8] sm:$0xff]
  %v330 = vld [vmem:[%s0 + $0x9e0] sm:$0xff]
  %v331 = vld [vmem:[%s0 + $0x9e8] sm:$0xff]
  %v332 = vld [vmem:[%s0 + $0x9f0] sm:$0xff]
  %v333 = vld [vmem:[%s0 + $0x9f8] sm:$0xff]
  %v334 = vld [vmem:[%s0 + $0xa00] sm:$0xff]
  %v335 = vld [vmem:[%s0 + $0xa08] sm:$0xff]
  %v336 = vld [vmem:[%s0 + $0xa10] sm:$0xff]
  %v337 = vld [vmem:[%s0 + $0xa18] sm:$0xff]
  %v338 = vld [vmem:[%s1] sm:$0xff]
  %v339 = vld [vmem:[%s1 + $0x8] sm:$0xff]
  %v340 = vld [vmem:[%s1 + $0x10] sm:$0xff]
  %v341 = vld [vmem:[%s1 + $0x18] sm:$0xff]
  %v342 = vld [vmem:[%s1 + $0x20] sm:$0xff]
  %v343 = vld [vmem:[%s1 + $0x28] sm:$0xff]
  %v344 = vld [vmem:[%s1 + $0x30] sm:$0xff]
  %v345 = vld [vmem:[%s1 + $0x38] sm:$0xff]
  %v346 = vld [vmem:[%s1 + $0x40] sm:$0xff]
  %v347 = vld [vmem:[%s1 + $0x48] sm:$0xff]
  %v348 = vld [vmem:[%s1 + $0x50] sm:$0xff]
  %v349 = vld [vmem:[%s1 + $0x58] sm:$0xff]
  %v350 = vld [vmem:[%s1 + $0x60] sm:$0xff]
  %v351 = vld [vmem:[%s1 + $0x68] sm:$0xff]
  %v352 = vld [vmem:[%s1 + $0x70] sm:$0xff]
  %v353 = vld [vmem:[%s1 + $0x78] sm:$0xff]
  %v354 = vld [vmem:[%s1 + $0x80] sm:$0xff]
  %v355 = vld [vmem:[%s1 + $0x88] sm:$0xff]
  %v356 = vld [vmem:[%s1 + $0x90] sm:$0xff]
  %v357 = vld [vmem:[%s1 + $0x98] sm:$0xff]
  %v358 = vld [vmem:[%s1 + $0xa0] sm:$0xff]
  %v359 = vld [vmem:[%s1 + $0xa8] sm:$0xff]
  %v360 = vld [vmem:[%s1 + $0xb0] sm:$0xff]
  %v361 = vld [vmem:[%s1 + $0xb8] sm:$0xff]
  %v362 = vld [vmem:[%s1 + $0xc0] sm:$0xff]
  %v363 = vld [vmem:[%s1 + $0xc8] sm:$0xff]
  %v364 = vld [vmem:[%s1 + $0xd0] sm:$0xff]
  %v365 = vld [vmem:[%s1 + $0xd8] sm:$0xff]
  %v366 = vld [vmem:[%s1 + $0xe0] sm:$0xff]
  %v367 = vld [vmem:[%s1 + $0xe8] sm:$0xff]
  %v368 = vld [vmem:[%s1 + $0xf0] sm:$0xff]
  %v369 = vld [vmem:[%s1 + $0xf8] sm:$0xff]
  %v370 = vld [vmem:[%s1 + $0x100] sm:$0xff]
  %v371 = vld [vmem:[%s1 + $0x108] sm:$0xff]
  %v372 = vld [vmem:[%s1 + $0x110] sm:$0xff]
  %v373 = vld [vmem:[%s1 + $0x118] sm:$0xff]
  %v374 = vld [vmem:[%s1 + $0x120] sm:$0xff]
  %v375 = vld [vmem:[%s1 + $0x128] sm:$0xff]
  %v376 = vld [vmem:[%s1 + $0x130] sm:$0xff]
  %v377 = vld [vmem:[%s1 + $0x138] sm:$0xff]
  %v378 = vld [vmem:[%s1 + $0x140] sm:$0xff]
  %v379 = vld [vmem:[%s1 + $0x148] sm:$0xff]
  %v380 = vld [vmem:[%s1 + $0x150] sm:$0xff]
  %v381 = vld [vmem:[%s1 + $0x158] sm:$0xff]
  %v382 = vld [vmem:[%s1 + $0x160] sm:$0xff]
  %v383 = vld [vmem:[%s1 + $0x168] sm:$0xff]
  %v384 = vld [vmem:[%s1 + $0x170] sm:$0xff]
  %v385 = vld [vmem:[%s1 + $0x178] sm:$0xff]
  %v386 = vld [vmem:[%s1 + $0x180] sm:$0xff]
  %v387 = vld [vmem:[%s1 + $0x188] sm:$0xff]
  %v388 = vld [vmem:[%s1 + $0x190] sm:$0xff]
  %v389 = vld [vmem:[%s1 + $0x198] sm:$0xff]
  %v390 = vld [vmem:[%s1 + $0x1a0] sm:$0xff]
  %v391 = vld [vmem:[%s1 + $0x1a8] sm:$0xff]
  %v392 = vld [vmem:[%s1 + $0x1b0] sm:$0xff]
  %v393 = vld [vmem:[%s1 + $0x1b8] sm:$0xff]
  %v394 = vld [vmem:[%s1 + $0x1c0] sm:$0xff]
  %v395 = vld [vmem:[%s1 + $0x1c8] sm:$0xff]
  %v396 = vld [vmem:[%s1 + $0x1d0] sm:$0xff]
  %v397 = vld [vmem:[%s1 + $0x1d8] sm:$0xff]
  %v398 = vld [vmem:[%s1 + $0x1e0] sm:$0xff]
  %v399 = vld [vmem:[%s1 + $0x1e8] sm:$0xff]
  %v400 = vld [vmem:[%s1 + $0x1f0] sm:$0xff]
  %v401 = vld [vmem:[%s1 + $0x1f8] sm:$0xff]
  %v402 = vld [vmem:[%s1 + $0x200] sm:$0xff]
  %v403 = vld [vmem:[%s1 + $0x208] sm:$0xff]
  %v404 = vld [vmem:[%s1 + $0x210] sm:$0xff]
  %v405 = vld [vmem:[%s1 + $0x218] sm:$0xff]
  %v406 = vld [vmem:[%s1 + $0x220] sm:$0xff]
  %v407 = vld [vmem:[%s1 + $0x228] sm:$0xff]
  %v408 = vld [vmem:[%s1 + $0x230] sm:$0xff]
  %v409 = vld [vmem:[%s1 + $0x238] sm:$0xff]
  %v410 = vld [vmem:[%s1 + $0x240] sm:$0xff]
  %v411 = vld [vmem:[%s1 + $0x248] sm:$0xff]
  %v412 = vld [vmem:[%s1 + $0x250] sm:$0xff]
  %v413 = vld [vmem:[%s1 + $0x258] sm:$0xff]
  %v414 = vld [vmem:[%s1 + $0x260] sm:$0xff]
  %v415 = vld [vmem:[%s1 + $0x268] sm:$0xff]
  %v416 = vld [vmem:[%s1 + $0x270] sm:$0xff]
  %v417 = vld [vmem:[%s1 + $0x278] sm:$0xff]
  %v418 = vld [vmem:[%s1 + $0x280] sm:$0xff]
  %v419 = vld [vmem:[%s1 + $0x288] sm:$0xff]
  %v420 = vld [vmem:[%s1 + $0x290] sm:$0xff]
  %v421 = vld [vmem:[%s1 + $0x298] sm:$0xff]
  %v422 = vld [vmem:[%s1 + $0x2a0] sm:$0xff]
  %v423 = vld [vmem:[%s1 + $0x2a8] sm:$0xff]
  %v424 = vld [vmem:[%s1 + $0x2b0] sm:$0xff]
  %v425 = vld [vmem:[%s1 + $0x2b8] sm:$0xff]
  %v426 = vld [vmem:[%s1 + $0x2c0] sm:$0xff]
  %v427 = vld [vmem:[%s1 + $0x2c8] sm:$0xff]
  %v428 = vld [vmem:[%s1 + $0x2d0] sm:$0xff]
  %v429 = vld [vmem:[%s1 + $0x2d8] sm:$0xff]
  %v430 = vld [vmem:[%s1 + $0x2e0] sm:$0xff]
  %v431 = vld [vmem:[%s1 + $0x2e8] sm:$0xff]
  %v432 = vld [vmem:[%s1 + $0x2f0] sm:$0xff]
  %v433 = vld [vmem:[%s1 + $0x2f8] sm:$0xff]
  %v434 = vld [vmem:[%s1 + $0x300] sm:$0xff]
  %v435 = vld [vmem:[%s1 + $0x308] sm:$0xff]
  %v436 = vld [vmem:[%s1 + $0x310] sm:$0xff]
  %v437 = vld [vmem:[%s1 + $0x318] sm:$0xff]
  %v438 = vld [vmem:[%s1 + $0x320] sm:$0xff]
  %v439 = vld [vmem:[%s1 + $0x328] sm:$0xff]
  %v440 = vld [vmem:[%s1 + $0x330] sm:$0xff]
  %v441 = vld [vmem:[%s1 + $0x338] sm:$0xff]
  %v442 = vld [vmem:[%s1 + $0x340] sm:$0xff]
  %v443 = vld [vmem:[%s1 + $0x348] sm:$0xff]
  %v444 = vld [vmem:[%s1 + $0x350] sm:$0xff]
  %v445 = vld [vmem:[%s1 + $0x358] sm:$0xff]
  %v446 = vld [vmem:[%s1 + $0x360] sm:$0xff]
  %v447 = vld [vmem:[%s1 + $0x368] sm:$0xff]
  %v448 = vld [vmem:[%s1 + $0x370] sm:$0xff]
  %v449 = vld [vmem:[%s1 + $0x378] sm:$0xff]
  %v450 = vld [vmem:[%s1 + $0x380] sm:$0xff]
  %v451 = vld [vmem:[%s1 + $0x388] sm:$0xff]
  %v452 = vld [vmem:[%s1 + $0x390] sm:$0xff]
  %v453 = vld [vmem:[%s1 + $0x398] sm:$0xff]
  %v454 = vld [vmem:[%s1 + $0x3a0] sm:$0xff]
  %v455 = vld [vmem:[%s1 + $0x3a8] sm:$0xff]
  %v456 = vld [vmem:[%s1 + $0x3b0] sm:$0xff]
  %v457 = vld [vmem:[%s1 + $0x3b8] sm:$0xff]
  %v458 = vld [vmem:[%s1 + $0x3c0] sm:$0xff]
  %v459 = vld [vmem:[%s1 + $0x3c8] sm:$0xff]
  %v460 = vld [vmem:[%s1 + $0x3d0] sm:$0xff]
  %v461 = vld [vmem:[%s1 + $0x3d8] sm:$0xff]
  %v462 = vld [vmem:[%s1 + $0x3e0] sm:$0xff]
  %v463 = vld [vmem:[%s1 + $0x3e8] sm:$0xff]
  %v464 = vld [vmem:[%s1 + $0x3f0] sm:$0xff]
  %v465 = vld [vmem:[%s1 + $0x3f8] sm:$0xff]
  %v466 = vld [vmem:[%s1 + $0x400] sm:$0xff]
  %v467 = vld [vmem:[%s1 + $0x408] sm:$0xff]
  %v468 = vld [vmem:[%s1 + $0x410] sm:$0xff]
  %v469 = vld [vmem:[%s1 + $0x418] sm:$0xff]
  %v470 = vld [vmem:[%s1 + $0x420] sm:$0xff]
  %v471 = vld [vmem:[%s1 + $0x428] sm:$0xff]
  %v472 = vld [vmem:[%s1 + $0x430] sm:$0xff]
  %v473 = vld [vmem:[%s1 + $0x438] sm:$0xff]
  %v474 = vld [vmem:[%s1 + $0x440] sm:$0xff]
  %v475 = vld [vmem:[%s1 + $0x448] sm:$0xff]
  %v476 = vld [vmem:[%s1 + $0x450] sm:$0xff]
  %v477 = vld [vmem:[%s1 + $0x458] sm:$0xff]
  %v478 = vld [vmem:[%s1 + $0x460] sm:$0xff]
  %v479 = vld [vmem:[%s1 + $0x468] sm:$0xff]
  %v480 = vld [vmem:[%s1 + $0x470] sm:$0xff]
  %v481 = vld [vmem:[%s1 + $0x478] sm:$0xff]
  %v482 = vld [vmem:[%s1 + $0x480] sm:$0xff]
  %v483 = vld [vmem:[%s1 + $0x488] sm:$0xff]
  %v484 = vld [vmem:[%s1 + $0x490] sm:$0xff]
  %v485 = vld [vmem:[%s1 + $0x498] sm:$0xff]
  %v486 = vld [vmem:[%s1 + $0x4a0] sm:$0xff]
  %v487 = vld [vmem:[%s1 + $0x4a8] sm:$0xff]
  %v488 = vld [vmem:[%s1 + $0x4b0] sm:$0xff]
  %v489 = vld [vmem:[%s1 + $0x4b8] sm:$0xff]
  %v490 = vld [vmem:[%s1 + $0x4c0] sm:$0xff]
  %v491 = vld [vmem:[%s1 + $0x4c8] sm:$0xff]
  %v492 = vld [vmem:[%s1 + $0x4d0] sm:$0xff]
  %v493 = vld [vmem:[%s1 + $0x4d8] sm:$0xff]
  %v494 = vld [vmem:[%s1 + $0x4e0] sm:$0xff]
  %v495 = vld [vmem:[%s1 + $0x4e8] sm:$0xff]
  %v496 = vld [vmem:[%s1 + $0x4f0] sm:$0xff]
  %v497 = vld [vmem:[%s1 + $0x4f8] sm:$0xff]
  %v498 = vld [vmem:[%s1 + $0x500] sm:$0xff]
  %v499 = vld [vmem:[%s1 + $0x508] sm:$0xff]
  %v500 = vld [vmem:[%s1 + $0x510] sm:$0xff]
  %v501 = vld [vmem:[%s1 + $0x518] sm:$0xff]
  %v502 = vld [vmem:[%s1 + $0x520] sm:$0xff]
  %v503 = vld [vmem:[%s1 + $0x528] sm:$0xff]
  %v504 = vld [vmem:[%s1 + $0x530] sm:$0xff]
  %v505 = vld [vmem:[%s1 + $0x538] sm:$0xff]
  %v506 = vld [vmem:[%s1 + $0x540] sm:$0xff]
  %v507 = vld [vmem:[%s1 + $0x548] sm:$0xff]
  %v508 = vld [vmem:[%s1 + $0x550] sm:$0xff]
  %v509 = vld [vmem:[%s1 + $0x558] sm:$0xff]
  %v510 = vld [vmem:[%s1 + $0x560] sm:$0xff]
  %v511 = vld [vmem:[%s1 + $0x568] sm:$0xff]
  %v512 = vld [vmem:[%s1 + $0x570] sm:$0xff]
  %v513 = vld [vmem:[%s1 + $0x578] sm:$0xff]
  %v514 = vld [vmem:[%s1 + $0x580] sm:$0xff]
  %v515 = vld [vmem:[%s1 + $0x588] sm:$0xff]
  %v516 = vld [vmem:[%s1 + $0x590] sm:$0xff]
  %v517 = vld [vmem:[%s1 + $0x598] sm:$0xff]
  %v518 = vld [vmem:[%s1 + $0x5a0] sm:$0xff]
  %v519 = vld [vmem:[%s1 + $0x5a8] sm:$0xff]
  %v520 = vld [vmem:[%s1 + $0x5b0] sm:$0xff]
  %v521 = vld [vmem:[%s1 + $0x5b8] sm:$0xff]
  %v522 = vld [vmem:[%s1 + $0x5c0] sm:$0xff]
  %v523 = vld [vmem:[%s1 + $0x5c8] sm:$0xff]
  %v524 = vld [vmem:[%s1 + $0x5d0] sm:$0xff]
  %v525 = vld [vmem:[%s1 + $0x5d8] sm:$0xff]
  %v526 = vld [vmem:[%s1 + $0x5e0] sm:$0xff]
  %v527 = vld [vmem:[%s1 + $0x5e8] sm:$0xff]
  %v528 = vld [vmem:[%s1 + $0x5f0] sm:$0xff]
  %v529 = vld [vmem:[%s1 + $0x5f8] sm:$0xff]
  %v530 = vld [vmem:[%s1 + $0x600] sm:$0xff]
  %v531 = vld [vmem:[%s1 + $0x608] sm:$0xff]
  %v532 = vld [vmem:[%s1 + $0x610] sm:$0xff]
  %v533 = vld [vmem:[%s1 + $0x618] sm:$0xff]
  %v534 = vld [vmem:[%s1 + $0x620] sm:$0xff]
  %v535 = vld [vmem:[%s1 + $0x628] sm:$0xff]
  %v536 = vld [vmem:[%s1 + $0x630] sm:$0xff]
  %v537 = vld [vmem:[%s1 + $0x638] sm:$0xff]
  %v538 = vld [vmem:[%s1 + $0x640] sm:$0xff]
  %v539 = vld [vmem:[%s1 + $0x648] sm:$0xff]
  %v540 = vld [vmem:[%s1 + $0x650] sm:$0xff]
  %v541 = vld [vmem:[%s1 + $0x658] sm:$0xff]
  %v542 = vld [vmem:[%s1 + $0x660] sm:$0xff]
  %v543 = vld [vmem:[%s1 + $0x668] sm:$0xff]
  %v544 = vld [vmem:[%s1 + $0x670] sm:$0xff]
  %v545 = vld [vmem:[%s1 + $0x678] sm:$0xff]
  %v546 = vld [vmem:[%s1 + $0x680] sm:$0xff]
  %v547 = vld [vmem:[%s1 + $0x688] sm:$0xff]
  %v548 = vld [vmem:[%s1 + $0x690] sm:$0xff]
  %v549 = vld [vmem:[%s1 + $0x698] sm:$0xff]
  %v550 = vld [vmem:[%s1 + $0x6a0] sm:$0xff]
  %v551 = vld [vmem:[%s1 + $0x6a8] sm:$0xff]
  %v552 = vld [vmem:[%s1 + $0x6b0] sm:$0xff]
  %v553 = vld [vmem:[%s1 + $0x6b8] sm:$0xff]
  %v554 = vld [vmem:[%s1 + $0x6c0] sm:$0xff]
  %v555 = vld [vmem:[%s1 + $0x6c8] sm:$0xff]
  %v556 = vld [vmem:[%s1 + $0x6d0] sm:$0xff]
  %v557 = vld [vmem:[%s1 + $0x6d8] sm:$0xff]
  %v558 = vld [vmem:[%s1 + $0x6e0] sm:$0xff]
  %v559 = vld [vmem:[%s1 + $0x6e8] sm:$0xff]
  %v560 = vld [vmem:[%s1 + $0x6f0] sm:$0xff]
  %v561 = vld [vmem:[%s1 + $0x6f8] sm:$0xff]
  %v562 = vld [vmem:[%s1 + $0x700] sm:$0xff]
  %v563 = vld [vmem:[%s1 + $0x708] sm:$0xff]
  %v564 = vld [vmem:[%s1 + $0x710] sm:$0xff]
  %v565 = vld [vmem:[%s1 + $0x718] sm:$0xff]
  %v566 = vld [vmem:[%s1 + $0x720] sm:$0xff]
  %v567 = vld [vmem:[%s1 + $0x728] sm:$0xff]
  %v568 = vld [vmem:[%s1 + $0x730] sm:$0xff]
  %v569 = vld [vmem:[%s1 + $0x738] sm:$0xff]
  %v570 = vld [vmem:[%s1 + $0x740] sm:$0xff]
  %v571 = vld [vmem:[%s1 + $0x748] sm:$0xff]
  %v572 = vld [vmem:[%s1 + $0x750] sm:$0xff]
  %v573 = vld [vmem:[%s1 + $0x758] sm:$0xff]
  %v574 = vld [vmem:[%s1 + $0x760] sm:$0xff]
  %v575 = vld [vmem:[%s1 + $0x768] sm:$0xff]
  %v576 = vld [vmem:[%s1 + $0x770] sm:$0xff]
  %v577 = vld [vmem:[%s1 + $0x778] sm:$0xff]
  %v578 = vld [vmem:[%s1 + $0x780] sm:$0xff]
  %v579 = vld [vmem:[%s1 + $0x788] sm:$0xff]
  %v580 = vld [vmem:[%s1 + $0x790] sm:$0xff]
  %v581 = vld [vmem:[%s1 + $0x798] sm:$0xff]
  %v582 = vld [vmem:[%s1 + $0x7a0] sm:$0xff]
  %v583 = vld [vmem:[%s1 + $0x7a8] sm:$0xff]
  %v584 = vld [vmem:[%s1 + $0x7b0] sm:$0xff]
  %v585 = vld [vmem:[%s1 + $0x7b8] sm:$0xff]
  %v586 = vld [vmem:[%s1 + $0x7c0] sm:$0xff]
  %v587 = vld [vmem:[%s1 + $0x7c8] sm:$0xff]
  %v588 = vld [vmem:[%s1 + $0x7d0] sm:$0xff]
  %v589 = vld [vmem:[%s1 + $0x7d8] sm:$0xff]
  %v590 = vld [vmem:[%s1 + $0x7e0] sm:$0xff]
  %v591 = vld [vmem:[%s1 + $0x7e8] sm:$0xff]
  %v592 = vld [vmem:[%s1 + $0x7f0] sm:$0xff]
  %v593 = vld [vmem:[%s1 + $0x7f8] sm:$0xff]
  %v594 = vld [vmem:[%s1 + $0x800] sm:$0xff]
  %v595 = vld [vmem:[%s1 + $0x808] sm:$0xff]
  %v596 = vld [vmem:[%s1 + $0x810] sm:$0xff]
  %v597 = vld [vmem:[%s1 + $0x818] sm:$0xff]
  %v598 = vld [vmem:[%s1 + $0x820] sm:$0xff]
  %v599 = vld [vmem:[%s1 + $0x828] sm:$0xff]
  %v600 = vld [vmem:[%s1 + $0x830] sm:$0xff]
  %v601 = vld [vmem:[%s1 + $0x838] sm:$0xff]
  %v602 = vld [vmem:[%s1 + $0x840] sm:$0xff]
  %v603 = vld [vmem:[%s1 + $0x848] sm:$0xff]
  %v604 = vld [vmem:[%s1 + $0x850] sm:$0xff]
  %v605 = vld [vmem:[%s1 + $0x858] sm:$0xff]
  %v606 = vld [vmem:[%s1 + $0x860] sm:$0xff]
  %v607 = vld [vmem:[%s1 + $0x868] sm:$0xff]
  %v608 = vld [vmem:[%s1 + $0x870] sm:$0xff]
  %v609 = vld [vmem:[%s1 + $0x878] sm:$0xff]
  %v610 = vld [vmem:[%s1 + $0x880] sm:$0xff]
  %v611 = vld [vmem:[%s1 + $0x888] sm:$0xff]
  %v612 = vld [vmem:[%s1 + $0x890] sm:$0xff]
  %v613 = vld [vmem:[%s1 + $0x898] sm:$0xff]
  %v614 = vld [vmem:[%s1 + $0x8a0] sm:$0xff]
  %v615 = vld [vmem:[%s1 + $0x8a8] sm:$0xff]
  %v616 = vld [vmem:[%s1 + $0x8b0] sm:$0xff]
  %v617 = vld [vmem:[%s1 + $0x8b8] sm:$0xff]
  %v618 = vld [vmem:[%s1 + $0x8c0] sm:$0xff]
  %v619 = vld [vmem:[%s1 + $0x8c8] sm:$0xff]
  %v620 = vld [vmem:[%s1 + $0x8d0] sm:$0xff]
  %v621 = vld [vmem:[%s1 + $0x8d8] sm:$0xff]
  %v622 = vld [vmem:[%s1 + $0x8e0] sm:$0xff]
  %v623 = vld [vmem:[%s1 + $0x8e8] sm:$0xff]
  %v624 = vld [vmem:[%s1 + $0x8f0] sm:$0xff]
  %v625 = vld [vmem:[%s1 + $0x8f8] sm:$0xff]
  %626 = vmatpush.msra.mxu0 %v368
  %627 = vmatpush.msra.mxu0 %v366
  %628 = vmatpush.msra.mxu0 %v364
  %629 = vmatpush.msra.mxu0 %v362
  %630 = vmatpush.msra.mxu0 %v360
  %631 = vmatpush.msra.mxu0 %v358
  %632 = vmatpush.msra.mxu0 %v356
  %633 = vmatpush.msra.mxu0 %v354
  %634 = vmatpush.msra.mxu0 %v352
  %635 = vmatpush.msra.mxu0 %v350
  %636 = vmatpush.msra.mxu0 %v348
  %637 = vmatpush.msra.mxu0 %v346
  %638 = vmatpush.msra.mxu0 %v344
  %639 = vmatpush.msra.mxu0 %v342
  %640 = vmatpush.msra.mxu0 %v340
  %641 = vmatpush.msra.mxu0 %v338
  %642 = vmatmul.f32.gmra.mxu0 %v14
  %v643 = vpop.f32.mrf.mxu0
  %v644 = vadd.f32 0.0, %v643
  %645 = vmatmul.f32.gmra.mxu0 %v23
  %v646 = vpop.f32.mrf.mxu0
  %v647 = vadd.f32 0.0, %v646
  %648 = vmatmul.f32.gmra.mxu0 %v32
  %v649 = vpop.f32.mrf.mxu0
  %v650 = vadd.f32 0.0, %v649
  %651 = vmatmul.f32.gmra.mxu0 %v41
  %v652 = vpop.f32.mrf.mxu0
  %v653 = vadd.f32 0.0, %v652
  %654 = vmatmul.f32.gmra.mxu0 %v50
  %v655 = vpop.f32.mrf.mxu0
  %v656 = vadd.f32 0.0, %v655
  %657 = vmatmul.f32.gmra.mxu0 %v59
  %v658 = vpop.f32.mrf.mxu0
  %v659 = vadd.f32 0.0, %v658
  %660 = vmatmul.f32.gmra.mxu0 %v68
  %v661 = vpop.f32.mrf.mxu0
  %v662 = vadd.f32 0.0, %v661
  %663 = vmatmul.f32.gmra.mxu0 %v77
  %v664 = vpop.f32.mrf.mxu0
  %v665 = vadd.f32 0.0, %v664
  %666 = vmatmul.f32.gmra.mxu0 %v86
  %v667 = vpop.f32.mrf.mxu0
  %v668 = vadd.f32 0.0, %v667
  %669 = vmatmul.f32.gmra.mxu0 %v95
  %v670 = vpop.f32.mrf.mxu0
  %v671 = vadd.f32 0.0, %v670
  %672 = vmatmul.f32.gmra.mxu0 %v104
  %v673 = vpop.f32.mrf.mxu0
  %v674 = vadd.f32 0.0, %v673
  %675 = vmatmul.f32.gmra.mxu0 %v113
  %v676 = vpop.f32.mrf.mxu0
  %v677 = vadd.f32 0.0, %v676
  %678 = vmatmul.f32.gmra.mxu0 %v122
  %v679 = vpop.f32.mrf.mxu0
  %v680 = vadd.f32 0.0, %v679
  %681 = vmatmul.f32.gmra.mxu0 %v131
  %v682 = vpop.f32.mrf.mxu0
  %v683 = vadd.f32 0.0, %v682
  %684 = vmatmul.f32.gmra.mxu0 %v140
  %v685 = vpop.f32.mrf.mxu0
  %v686 = vadd.f32 0.0, %v685
  %687 = vmatmul.f32.gmra.mxu0 %v149
  %v688 = vpop.f32.mrf.mxu0
  %v689 = vadd.f32 0.0, %v688
  %690 = vmatmul.f32.gmra.mxu0 %v158
  %v691 = vpop.f32.mrf.mxu0
  %v692 = vadd.f32 0.0, %v691
  %693 = vmatmul.f32.gmra.mxu0 %v167
  %v694 = vpop.f32.mrf.mxu0
  %v695 = vadd.f32 0.0, %v694
  %696 = vmatmul.f32.gmra.mxu0 %v176
  %v697 = vpop.f32.mrf.mxu0
  %v698 = vadd.f32 0.0, %v697
  %699 = vmatmul.f32.gmra.mxu0 %v185
  %v700 = vpop.f32.mrf.mxu0
  %v701 = vadd.f32 0.0, %v700
  %702 = vmatmul.f32.gmra.mxu0 %v194
  %v703 = vpop.f32.mrf.mxu0
  %v704 = vadd.f32 0.0, %v703
  %705 = vmatmul.f32.gmra.mxu0 %v203
  %v706 = vpop.f32.mrf.mxu0
  %v707 = vadd.f32 0.0, %v706
  %708 = vmatmul.f32.gmra.mxu0 %v212
  %v709 = vpop.f32.mrf.mxu0
  %v710 = vadd.f32 0.0, %v709
  %711 = vmatmul.f32.gmra.mxu0 %v221
  %v712 = vpop.f32.mrf.mxu0
  %v713 = vadd.f32 0.0, %v712
  %714 = vmatmul.f32.gmra.mxu0 %v230
  %v715 = vpop.f32.mrf.mxu0
  %v716 = vadd.f32 0.0, %v715
  %717 = vmatmul.f32.gmra.mxu0 %v239
  %v718 = vpop.f32.mrf.mxu0
  %v719 = vadd.f32 0.0, %v718
  %720 = vmatmul.f32.gmra.mxu0 %v248
  %v721 = vpop.f32.mrf.mxu0
  %v722 = vadd.f32 0.0, %v721
  %723 = vmatmul.f32.gmra.mxu0 %v257
  %v724 = vpop.f32.mrf.mxu0
  %v725 = vadd.f32 0.0, %v724
  %726 = vmatmul.f32.gmra.mxu0 %v266
  %v727 = vpop.f32.mrf.mxu0
  %v728 = vadd.f32 0.0, %v727
  %729 = vmatmul.f32.gmra.mxu0 %v275
  %v730 = vpop.f32.mrf.mxu0
  %v731 = vadd.f32 0.0, %v730
  %732 = vmatmul.f32.gmra.mxu0 %v284
  %v733 = vpop.f32.mrf.mxu0
  %v734 = vadd.f32 0.0, %v733
  %735 = vmatmul.f32.gmra.mxu0 %v293
  %v736 = vpop.f32.mrf.mxu0
  %v737 = vadd.f32 0.0, %v736
  %738 = vmatmul.f32.gmra.mxu0 %v302
  %v739 = vpop.f32.mrf.mxu0
  %v740 = vadd.f32 0.0, %v739
  %741 = vmatmul.f32.gmra.mxu0 %v311
  %v742 = vpop.f32.mrf.mxu0
  %v743 = vadd.f32 0.0, %v742
  %744 = vmatmul.f32.gmra.mxu0 %v320
  %v745 = vpop.f32.mrf.mxu0
  %v746 = vadd.f32 0.0, %v745
  %747 = vmatmul.f32.gmra.mxu0 %v329
  %v748 = vpop.f32.mrf.mxu0
  %v749 = vadd.f32 0.0, %v748
  %750 = vdwg.mxu0
  %751 = vmatpush.msra.mxu0 %v400
  %752 = vmatpush.msra.mxu0 %v398
  %753 = vmatpush.msra.mxu0 %v396
  %754 = vmatpush.msra.mxu0 %v394
  %755 = vmatpush.msra.mxu0 %v392
  %756 = vmatpush.msra.mxu0 %v390
  %757 = vmatpush.msra.mxu0 %v388
  %758 = vmatpush.msra.mxu0 %v386
  %759 = vmatpush.msra.mxu0 %v384
  %760 = vmatpush.msra.mxu0 %v382
  %761 = vmatpush.msra.mxu0 %v380
  %762 = vmatpush.msra.mxu0 %v378
  %763 = vmatpush.msra.mxu0 %v376
  %764 = vmatpush.msra.mxu0 %v374
  %765 = vmatpush.msra.mxu0 %v372
  %766 = vmatpush.msra.mxu0 %v370
  %767 = vmatmul.f32.gmra.mxu0 %v15
  %v768 = vpop.f32.mrf.mxu0
  %v769 = vadd.f32 %v644, %v768
  %770 = vmatmul.f32.gmra.mxu0 %v24
  %v771 = vpop.f32.mrf.mxu0
  %v772 = vadd.f32 %v647, %v771
  %773 = vmatmul.f32.gmra.mxu0 %v33
  %v774 = vpop.f32.mrf.mxu0
  %v775 = vadd.f32 %v650, %v774
  %776 = vmatmul.f32.gmra.mxu0 %v42
  %v777 = vpop.f32.mrf.mxu0
  %v778 = vadd.f32 %v653, %v777
  %779 = vmatmul.f32.gmra.mxu0 %v51
  %v780 = vpop.f32.mrf.mxu0
  %v781 = vadd.f32 %v656, %v780
  %782 = vmatmul.f32.gmra.mxu0 %v60
  %v783 = vpop.f32.mrf.mxu0
  %v784 = vadd.f32 %v659, %v783
  %785 = vmatmul.f32.gmra.mxu0 %v69
  %v786 = vpop.f32.mrf.mxu0
  %v787 = vadd.f32 %v662, %v786
  %788 = vmatmul.f32.gmra.mxu0 %v78
  %v789 = vpop.f32.mrf.mxu0
  %v790 = vadd.f32 %v665, %v789
  %791 = vmatmul.f32.gmra.mxu0 %v87
  %v792 = vpop.f32.mrf.mxu0
  %v793 = vadd.f32 %v668, %v792
  %794 = vmatmul.f32.gmra.mxu0 %v96
  %v795 = vpop.f32.mrf.mxu0
  %v796 = vadd.f32 %v671, %v795
  %797 = vmatmul.f32.gmra.mxu0 %v105
  %v798 = vpop.f32.mrf.mxu0
  %v799 = vadd.f32 %v674, %v798
  %800 = vmatmul.f32.gmra.mxu0 %v114
  %v801 = vpop.f32.mrf.mxu0
  %v802 = vadd.f32 %v677, %v801
  %803 = vmatmul.f32.gmra.mxu0 %v123
  %v804 = vpop.f32.mrf.mxu0
  %v805 = vadd.f32 %v680, %v804
  %806 = vmatmul.f32.gmra.mxu0 %v132
  %v807 = vpop.f32.mrf.mxu0
  %v808 = vadd.f32 %v683, %v807
  %809 = vmatmul.f32.gmra.mxu0 %v141
  %v810 = vpop.f32.mrf.mxu0
  %v811 = vadd.f32 %v686, %v810
  %812 = vmatmul.f32.gmra.mxu0 %v150
  %v813 = vpop.f32.mrf.mxu0
  %v814 = vadd.f32 %v689, %v813
  %815 = vmatmul.f32.gmra.mxu0 %v159
  %v816 = vpop.f32.mrf.mxu0
  %v817 = vadd.f32 %v692, %v816
  %818 = vmatmul.f32.gmra.mxu0 %v168
  %v819 = vpop.f32.mrf.mxu0
  %v820 = vadd.f32 %v695, %v819
  %821 = vmatmul.f32.gmra.mxu0 %v177
  %v822 = vpop.f32.mrf.mxu0
  %v823 = vadd.f32 %v698, %v822
  %824 = vmatmul.f32.gmra.mxu0 %v186
  %v825 = vpop.f32.mrf.mxu0
  %v826 = vadd.f32 %v701, %v825
  %827 = vmatmul.f32.gmra.mxu0 %v195
  %v828 = vpop.f32.mrf.mxu0
  %v829 = vadd.f32 %v704, %v828
  %830 = vmatmul.f32.gmra.mxu0 %v204
  %v831 = vpop.f32.mrf.mxu0
  %v832 = vadd.f32 %v707, %v831
  %833 = vmatmul.f32.gmra.mxu0 %v213
  %v834 = vpop.f32.mrf.mxu0
  %v835 = vadd.f32 %v710, %v834
  %836 = vmatmul.f32.gmra.mxu0 %v222
  %v837 = vpop.f32.mrf.mxu0
  %v838 = vadd.f32 %v713, %v837
  %839 = vmatmul.f32.gmra.mxu0 %v231
  %v840 = vpop.f32.mrf.mxu0
  %v841 = vadd.f32 %v716, %v840
  %842 = vmatmul.f32.gmra.mxu0 %v240
  %v843 = vpop.f32.mrf.mxu0
  %v844 = vadd.f32 %v719, %v843
  %845 = vmatmul.f32.gmra.mxu0 %v249
  %v846 = vpop.f32.mrf.mxu0
  %v847 = vadd.f32 %v722, %v846
  %848 = vmatmul.f32.gmra.mxu0 %v258
  %v849 = vpop.f32.mrf.mxu0
  %v850 = vadd.f32 %v725, %v849
  %851 = vmatmul.f32.gmra.mxu0 %v267
  %v852 = vpop.f32.mrf.mxu0
  %v853 = vadd.f32 %v728, %v852
  %854 = vmatmul.f32.gmra.mxu0 %v276
  %v855 = vpop.f32.mrf.mxu0
  %v856 = vadd.f32 %v731, %v855
  %857 = vmatmul.f32.gmra.mxu0 %v285
  %v858 = vpop.f32.mrf.mxu0
  %v859 = vadd.f32 %v734, %v858
  %860 = vmatmul.f32.gmra.mxu0 %v294
  %v861 = vpop.f32.mrf.mxu0
  %v862 = vadd.f32 %v737, %v861
  %863 = vmatmul.f32.gmra.mxu0 %v303
  %v864 = vpop.f32.mrf.mxu0
  %v865 = vadd.f32 %v740, %v864
  %866 = vmatmul.f32.gmra.mxu0 %v312
  %v867 = vpop.f32.mrf.mxu0
  %v868 = vadd.f32 %v743, %v867
  %869 = vmatmul.f32.gmra.mxu0 %v321
  %v870 = vpop.f32.mrf.mxu0
  %v871 = vadd.f32 %v746, %v870
  %872 = vmatmul.f32.gmra.mxu0 %v330
  %v873 = vpop.f32.mrf.mxu0
  %v874 = vadd.f32 %v749, %v873
  %875 = vdwg.mxu0
  %876 = vmatpush.msra.mxu0 %v432
  %877 = vmatpush.msra.mxu0 %v430
  %878 = vmatpush.msra.mxu0 %v428
  %879 = vmatpush.msra.mxu0 %v426
  %880 = vmatpush.msra.mxu0 %v424
  %881 = vmatpush.msra.mxu0 %v422
  %882 = vmatpush.msra.mxu0 %v420
  %883 = vmatpush.msra.mxu0 %v418
  %884 = vmatpush.msra.mxu0 %v416
  %885 = vmatpush.msra.mxu0 %v414
  %886 = vmatpush.msra.mxu0 %v412
  %887 = vmatpush.msra.mxu0 %v410
  %888 = vmatpush.msra.mxu0 %v408
  %889 = vmatpush.msra.mxu0 %v406
  %890 = vmatpush.msra.mxu0 %v404
  %891 = vmatpush.msra.mxu0 %v402
  %892 = vmatmul.f32.gmra.mxu0 %v16
  %v893 = vpop.f32.mrf.mxu0
  %v894 = vadd.f32 %v769, %v893
  %895 = vmatmul.f32.gmra.mxu0 %v25
  %v896 = vpop.f32.mrf.mxu0
  %v897 = vadd.f32 %v772, %v896
  %898 = vmatmul.f32.gmra.mxu0 %v34
  %v899 = vpop.f32.mrf.mxu0
  %v900 = vadd.f32 %v775, %v899
  %901 = vmatmul.f32.gmra.mxu0 %v43
  %v902 = vpop.f32.mrf.mxu0
  %v903 = vadd.f32 %v778, %v902
  %904 = vmatmul.f32.gmra.mxu0 %v52
  %v905 = vpop.f32.mrf.mxu0
  %v906 = vadd.f32 %v781, %v905
  %907 = vmatmul.f32.gmra.mxu0 %v61
  %v908 = vpop.f32.mrf.mxu0
  %v909 = vadd.f32 %v784, %v908
  %910 = vmatmul.f32.gmra.mxu0 %v70
  %v911 = vpop.f32.mrf.mxu0
  %v912 = vadd.f32 %v787, %v911
  %913 = vmatmul.f32.gmra.mxu0 %v79
  %v914 = vpop.f32.mrf.mxu0
  %v915 = vadd.f32 %v790, %v914
  %916 = vmatmul.f32.gmra.mxu0 %v88
  %v917 = vpop.f32.mrf.mxu0
  %v918 = vadd.f32 %v793, %v917
  %919 = vmatmul.f32.gmra.mxu0 %v97
  %v920 = vpop.f32.mrf.mxu0
  %v921 = vadd.f32 %v796, %v920
  %922 = vmatmul.f32.gmra.mxu0 %v106
  %v923 = vpop.f32.mrf.mxu0
  %v924 = vadd.f32 %v799, %v923
  %925 = vmatmul.f32.gmra.mxu0 %v115
  %v926 = vpop.f32.mrf.mxu0
  %v927 = vadd.f32 %v802, %v926
  %928 = vmatmul.f32.gmra.mxu0 %v124
  %v929 = vpop.f32.mrf.mxu0
  %v930 = vadd.f32 %v805, %v929
  %931 = vmatmul.f32.gmra.mxu0 %v133
  %v932 = vpop.f32.mrf.mxu0
  %v933 = vadd.f32 %v808, %v932
  %934 = vmatmul.f32.gmra.mxu0 %v142
  %v935 = vpop.f32.mrf.mxu0
  %v936 = vadd.f32 %v811, %v935
  %937 = vmatmul.f32.gmra.mxu0 %v151
  %v938 = vpop.f32.mrf.mxu0
  %v939 = vadd.f32 %v814, %v938
  %940 = vmatmul.f32.gmra.mxu0 %v160
  %v941 = vpop.f32.mrf.mxu0
  %v942 = vadd.f32 %v817, %v941
  %943 = vmatmul.f32.gmra.mxu0 %v169
  %v944 = vpop.f32.mrf.mxu0
  %v945 = vadd.f32 %v820, %v944
  %946 = vmatmul.f32.gmra.mxu0 %v178
  %v947 = vpop.f32.mrf.mxu0
  %v948 = vadd.f32 %v823, %v947
  %949 = vmatmul.f32.gmra.mxu0 %v187
  %v950 = vpop.f32.mrf.mxu0
  %v951 = vadd.f32 %v826, %v950
  %952 = vmatmul.f32.gmra.mxu0 %v196
  %v953 = vpop.f32.mrf.mxu0
  %v954 = vadd.f32 %v829, %v953
  %955 = vmatmul.f32.gmra.mxu0 %v205
  %v956 = vpop.f32.mrf.mxu0
  %v957 = vadd.f32 %v832, %v956
  %958 = vmatmul.f32.gmra.mxu0 %v214
  %v959 = vpop.f32.mrf.mxu0
  %v960 = vadd.f32 %v835, %v959
  %961 = vmatmul.f32.gmra.mxu0 %v223
  %v962 = vpop.f32.mrf.mxu0
  %v963 = vadd.f32 %v838, %v962
  %964 = vmatmul.f32.gmra.mxu0 %v232
  %v965 = vpop.f32.mrf.mxu0
  %v966 = vadd.f32 %v841, %v965
  %967 = vmatmul.f32.gmra.mxu0 %v241
  %v968 = vpop.f32.mrf.mxu0
  %v969 = vadd.f32 %v844, %v968
  %970 = vmatmul.f32.gmra.mxu0 %v250
  %v971 = vpop.f32.mrf.mxu0
  %v972 = vadd.f32 %v847, %v971
  %973 = vmatmul.f32.gmra.mxu0 %v259
  %v974 = vpop.f32.mrf.mxu0
  %v975 = vadd.f32 %v850, %v974
  %976 = vmatmul.f32.gmra.mxu0 %v268
  %v977 = vpop.f32.mrf.mxu0
  %v978 = vadd.f32 %v853, %v977
  %979 = vmatmul.f32.gmra.mxu0 %v277
  %v980 = vpop.f32.mrf.mxu0
  %v981 = vadd.f32 %v856, %v980
  %982 = vmatmul.f32.gmra.mxu0 %v286
  %v983 = vpop.f32.mrf.mxu0
  %v984 = vadd.f32 %v859, %v983
  %985 = vmatmul.f32.gmra.mxu0 %v295
  %v986 = vpop.f32.mrf.mxu0
  %v987 = vadd.f32 %v862, %v986
  %988 = vmatmul.f32.gmra.mxu0 %v304
  %v989 = vpop.f32.mrf.mxu0
  %v990 = vadd.f32 %v865, %v989
  %991 = vmatmul.f32.gmra.mxu0 %v313
  %v992 = vpop.f32.mrf.mxu0
  %v993 = vadd.f32 %v868, %v992
  %994 = vmatmul.f32.gmra.mxu0 %v322
  %v995 = vpop.f32.mrf.mxu0
  %v996 = vadd.f32 %v871, %v995
  %997 = vmatmul.f32.gmra.mxu0 %v331
  %v998 = vpop.f32.mrf.mxu0
  %v999 = vadd.f32 %v874, %v998
  %1000 = vdwg.mxu0
  %1001 = vmatpush.msra.mxu0 %v464
  %1002 = vmatpush.msra.mxu0 %v462
  %1003 = vmatpush.msra.mxu0 %v460
  %1004 = vmatpush.msra.mxu0 %v458
  %1005 = vmatpush.msra.mxu0 %v456
  %1006 = vmatpush.msra.mxu0 %v454
  %1007 = vmatpush.msra.mxu0 %v452
  %1008 = vmatpush.msra.mxu0 %v450
  %1009 = vmatpush.msra.mxu0 %v448
  %1010 = vmatpush.msra.mxu0 %v446
  %1011 = vmatpush.msra.mxu0 %v444
  %1012 = vmatpush.msra.mxu0 %v442
  %1013 = vmatpush.msra.mxu0 %v440
  %1014 = vmatpush.msra.mxu0 %v438
  %1015 = vmatpush.msra.mxu0 %v436
  %1016 = vmatpush.msra.mxu0 %v434
  %1017 = vmatmul.f32.gmra.mxu0 %v17
  %v1018 = vpop.f32.mrf.mxu0
  %v1019 = vadd.f32 %v894, %v1018
  %1020 = vmatmul.f32.gmra.mxu0 %v26
  %v1021 = vpop.f32.mrf.mxu0
  %v1022 = vadd.f32 %v897, %v1021
  %1023 = vmatmul.f32.gmra.mxu0 %v35
  %v1024 = vpop.f32.mrf.mxu0
  %v1025 = vadd.f32 %v900, %v1024
  %1026 = vmatmul.f32.gmra.mxu0 %v44
  %v1027 = vpop.f32.mrf.mxu0
  %v1028 = vadd.f32 %v903, %v1027
  %1029 = vmatmul.f32.gmra.mxu0 %v53
  %v1030 = vpop.f32.mrf.mxu0
  %v1031 = vadd.f32 %v906, %v1030
  %1032 = vmatmul.f32.gmra.mxu0 %v62
  %v1033 = vpop.f32.mrf.mxu0
  %v1034 = vadd.f32 %v909, %v1033
  %1035 = vmatmul.f32.gmra.mxu0 %v71
  %v1036 = vpop.f32.mrf.mxu0
  %v1037 = vadd.f32 %v912, %v1036
  %1038 = vmatmul.f32.gmra.mxu0 %v80
  %v1039 = vpop.f32.mrf.mxu0
  %v1040 = vadd.f32 %v915, %v1039
  %1041 = vmatmul.f32.gmra.mxu0 %v89
  %v1042 = vpop.f32.mrf.mxu0
  %v1043 = vadd.f32 %v918, %v1042
  %1044 = vmatmul.f32.gmra.mxu0 %v98
  %v1045 = vpop.f32.mrf.mxu0
  %v1046 = vadd.f32 %v921, %v1045
  %1047 = vmatmul.f32.gmra.mxu0 %v107
  %v1048 = vpop.f32.mrf.mxu0
  %v1049 = vadd.f32 %v924, %v1048
  %1050 = vmatmul.f32.gmra.mxu0 %v116
  %v1051 = vpop.f32.mrf.mxu0
  %v1052 = vadd.f32 %v927, %v1051
  %1053 = vmatmul.f32.gmra.mxu0 %v125
  %v1054 = vpop.f32.mrf.mxu0
  %v1055 = vadd.f32 %v930, %v1054
  %1056 = vmatmul.f32.gmra.mxu0 %v134
  %v1057 = vpop.f32.mrf.mxu0
  %v1058 = vadd.f32 %v933, %v1057
  %1059 = vmatmul.f32.gmra.mxu0 %v143
  %v1060 = vpop.f32.mrf.mxu0
  %v1061 = vadd.f32 %v936, %v1060
  %1062 = vmatmul.f32.gmra.mxu0 %v152
  %v1063 = vpop.f32.mrf.mxu0
  %v1064 = vadd.f32 %v939, %v1063
  %1065 = vmatmul.f32.gmra.mxu0 %v161
  %v1066 = vpop.f32.mrf.mxu0
  %v1067 = vadd.f32 %v942, %v1066
  %1068 = vmatmul.f32.gmra.mxu0 %v170
  %v1069 = vpop.f32.mrf.mxu0
  %v1070 = vadd.f32 %v945, %v1069
  %1071 = vmatmul.f32.gmra.mxu0 %v179
  %v1072 = vpop.f32.mrf.mxu0
  %v1073 = vadd.f32 %v948, %v1072
  %1074 = vmatmul.f32.gmra.mxu0 %v188
  %v1075 = vpop.f32.mrf.mxu0
  %v1076 = vadd.f32 %v951, %v1075
  %1077 = vmatmul.f32.gmra.mxu0 %v197
  %v1078 = vpop.f32.mrf.mxu0
  %v1079 = vadd.f32 %v954, %v1078
  %1080 = vmatmul.f32.gmra.mxu0 %v206
  %v1081 = vpop.f32.mrf.mxu0
  %v1082 = vadd.f32 %v957, %v1081
  %1083 = vmatmul.f32.gmra.mxu0 %v215
  %v1084 = vpop.f32.mrf.mxu0
  %v1085 = vadd.f32 %v960, %v1084
  %1086 = vmatmul.f32.gmra.mxu0 %v224
  %v1087 = vpop.f32.mrf.mxu0
  %v1088 = vadd.f32 %v963, %v1087
  %1089 = vmatmul.f32.gmra.mxu0 %v233
  %v1090 = vpop.f32.mrf.mxu0
  %v1091 = vadd.f32 %v966, %v1090
  %1092 = vmatmul.f32.gmra.mxu0 %v242
  %v1093 = vpop.f32.mrf.mxu0
  %v1094 = vadd.f32 %v969, %v1093
  %1095 = vmatmul.f32.gmra.mxu0 %v251
  %v1096 = vpop.f32.mrf.mxu0
  %v1097 = vadd.f32 %v972, %v1096
  %1098 = vmatmul.f32.gmra.mxu0 %v260
  %v1099 = vpop.f32.mrf.mxu0
  %v1100 = vadd.f32 %v975, %v1099
  %1101 = vmatmul.f32.gmra.mxu0 %v269
  %v1102 = vpop.f32.mrf.mxu0
  %v1103 = vadd.f32 %v978, %v1102
  %1104 = vmatmul.f32.gmra.mxu0 %v278
  %v1105 = vpop.f32.mrf.mxu0
  %v1106 = vadd.f32 %v981, %v1105
  %1107 = vmatmul.f32.gmra.mxu0 %v287
  %v1108 = vpop.f32.mrf.mxu0
  %v1109 = vadd.f32 %v984, %v1108
  %1110 = vmatmul.f32.gmra.mxu0 %v296
  %v1111 = vpop.f32.mrf.mxu0
  %v1112 = vadd.f32 %v987, %v1111
  %1113 = vmatmul.f32.gmra.mxu0 %v305
  %v1114 = vpop.f32.mrf.mxu0
  %v1115 = vadd.f32 %v990, %v1114
  %1116 = vmatmul.f32.gmra.mxu0 %v314
  %v1117 = vpop.f32.mrf.mxu0
  %v1118 = vadd.f32 %v993, %v1117
  %1119 = vmatmul.f32.gmra.mxu0 %v323
  %v1120 = vpop.f32.mrf.mxu0
  %v1121 = vadd.f32 %v996, %v1120
  %1122 = vmatmul.f32.gmra.mxu0 %v332
  %v1123 = vpop.f32.mrf.mxu0
  %v1124 = vadd.f32 %v999, %v1123
  %1125 = vdwg.mxu0
  %1126 = vmatpush.msra.mxu0 %v496
  %1127 = vmatpush.msra.mxu0 %v494
  %1128 = vmatpush.msra.mxu0 %v492
  %1129 = vmatpush.msra.mxu0 %v490
  %1130 = vmatpush.msra.mxu0 %v488
  %1131 = vmatpush.msra.mxu0 %v486
  %1132 = vmatpush.msra.mxu0 %v484
  %1133 = vmatpush.msra.mxu0 %v482
  %1134 = vmatpush.msra.mxu0 %v480
  %1135 = vmatpush.msra.mxu0 %v478
  %1136 = vmatpush.msra.mxu0 %v476
  %1137 = vmatpush.msra.mxu0 %v474
  %1138 = vmatpush.msra.mxu0 %v472
  %1139 = vmatpush.msra.mxu0 %v470
  %1140 = vmatpush.msra.mxu0 %v468
  %1141 = vmatpush.msra.mxu0 %v466
  %1142 = vmatmul.f32.gmra.mxu0 %v18
  %v1143 = vpop.f32.mrf.mxu0
  %v1144 = vadd.f32 %v1019, %v1143
  %1145 = vmatmul.f32.gmra.mxu0 %v27
  %v1146 = vpop.f32.mrf.mxu0
  %v1147 = vadd.f32 %v1022, %v1146
  %1148 = vmatmul.f32.gmra.mxu0 %v36
  %v1149 = vpop.f32.mrf.mxu0
  %v1150 = vadd.f32 %v1025, %v1149
  %1151 = vmatmul.f32.gmra.mxu0 %v45
  %v1152 = vpop.f32.mrf.mxu0
  %v1153 = vadd.f32 %v1028, %v1152
  %1154 = vmatmul.f32.gmra.mxu0 %v54
  %v1155 = vpop.f32.mrf.mxu0
  %v1156 = vadd.f32 %v1031, %v1155
  %1157 = vmatmul.f32.gmra.mxu0 %v63
  %v1158 = vpop.f32.mrf.mxu0
  %v1159 = vadd.f32 %v1034, %v1158
  %1160 = vmatmul.f32.gmra.mxu0 %v72
  %v1161 = vpop.f32.mrf.mxu0
  %v1162 = vadd.f32 %v1037, %v1161
  %1163 = vmatmul.f32.gmra.mxu0 %v81
  %v1164 = vpop.f32.mrf.mxu0
  %v1165 = vadd.f32 %v1040, %v1164
  %1166 = vmatmul.f32.gmra.mxu0 %v90
  %v1167 = vpop.f32.mrf.mxu0
  %v1168 = vadd.f32 %v1043, %v1167
  %1169 = vmatmul.f32.gmra.mxu0 %v99
  %v1170 = vpop.f32.mrf.mxu0
  %v1171 = vadd.f32 %v1046, %v1170
  %1172 = vmatmul.f32.gmra.mxu0 %v108
  %v1173 = vpop.f32.mrf.mxu0
  %v1174 = vadd.f32 %v1049, %v1173
  %1175 = vmatmul.f32.gmra.mxu0 %v117
  %v1176 = vpop.f32.mrf.mxu0
  %v1177 = vadd.f32 %v1052, %v1176
  %1178 = vmatmul.f32.gmra.mxu0 %v126
  %v1179 = vpop.f32.mrf.mxu0
  %v1180 = vadd.f32 %v1055, %v1179
  %1181 = vmatmul.f32.gmra.mxu0 %v135
  %v1182 = vpop.f32.mrf.mxu0
  %v1183 = vadd.f32 %v1058, %v1182
  %1184 = vmatmul.f32.gmra.mxu0 %v144
  %v1185 = vpop.f32.mrf.mxu0
  %v1186 = vadd.f32 %v1061, %v1185
  %1187 = vmatmul.f32.gmra.mxu0 %v153
  %v1188 = vpop.f32.mrf.mxu0
  %v1189 = vadd.f32 %v1064, %v1188
  %1190 = vmatmul.f32.gmra.mxu0 %v162
  %v1191 = vpop.f32.mrf.mxu0
  %v1192 = vadd.f32 %v1067, %v1191
  %1193 = vmatmul.f32.gmra.mxu0 %v171
  %v1194 = vpop.f32.mrf.mxu0
  %v1195 = vadd.f32 %v1070, %v1194
  %1196 = vmatmul.f32.gmra.mxu0 %v180
  %v1197 = vpop.f32.mrf.mxu0
  %v1198 = vadd.f32 %v1073, %v1197
  %1199 = vmatmul.f32.gmra.mxu0 %v189
  %v1200 = vpop.f32.mrf.mxu0
  %v1201 = vadd.f32 %v1076, %v1200
  %1202 = vmatmul.f32.gmra.mxu0 %v198
  %v1203 = vpop.f32.mrf.mxu0
  %v1204 = vadd.f32 %v1079, %v1203
  %1205 = vmatmul.f32.gmra.mxu0 %v207
  %v1206 = vpop.f32.mrf.mxu0
  %v1207 = vadd.f32 %v1082, %v1206
  %1208 = vmatmul.f32.gmra.mxu0 %v216
  %v1209 = vpop.f32.mrf.mxu0
  %v1210 = vadd.f32 %v1085, %v1209
  %1211 = vmatmul.f32.gmra.mxu0 %v225
  %v1212 = vpop.f32.mrf.mxu0
  %v1213 = vadd.f32 %v1088, %v1212
  %1214 = vmatmul.f32.gmra.mxu0 %v234
  %v1215 = vpop.f32.mrf.mxu0
  %v1216 = vadd.f32 %v1091, %v1215
  %1217 = vmatmul.f32.gmra.mxu0 %v243
  %v1218 = vpop.f32.mrf.mxu0
  %v1219 = vadd.f32 %v1094, %v1218
  %1220 = vmatmul.f32.gmra.mxu0 %v252
  %v1221 = vpop.f32.mrf.mxu0
  %v1222 = vadd.f32 %v1097, %v1221
  %1223 = vmatmul.f32.gmra.mxu0 %v261
  %v1224 = vpop.f32.mrf.mxu0
  %v1225 = vadd.f32 %v1100, %v1224
  %1226 = vmatmul.f32.gmra.mxu0 %v270
  %v1227 = vpop.f32.mrf.mxu0
  %v1228 = vadd.f32 %v1103, %v1227
  %1229 = vmatmul.f32.gmra.mxu0 %v279
  %v1230 = vpop.f32.mrf.mxu0
  %v1231 = vadd.f32 %v1106, %v1230
  %1232 = vmatmul.f32.gmra.mxu0 %v288
  %v1233 = vpop.f32.mrf.mxu0
  %v1234 = vadd.f32 %v1109, %v1233
  %1235 = vmatmul.f32.gmra.mxu0 %v297
  %v1236 = vpop.f32.mrf.mxu0
  %v1237 = vadd.f32 %v1112, %v1236
  %1238 = vmatmul.f32.gmra.mxu0 %v306
  %v1239 = vpop.f32.mrf.mxu0
  %v1240 = vadd.f32 %v1115, %v1239
  %1241 = vmatmul.f32.gmra.mxu0 %v315
  %v1242 = vpop.f32.mrf.mxu0
  %v1243 = vadd.f32 %v1118, %v1242
  %1244 = vmatmul.f32.gmra.mxu0 %v324
  %v1245 = vpop.f32.mrf.mxu0
  %v1246 = vadd.f32 %v1121, %v1245
  %1247 = vmatmul.f32.gmra.mxu0 %v333
  %v1248 = vpop.f32.mrf.mxu0
  %v1249 = vadd.f32 %v1124, %v1248
  %1250 = vdwg.mxu0
  %1251 = vmatpush.msra.mxu0 %v528
  %1252 = vmatpush.msra.mxu0 %v526
  %1253 = vmatpush.msra.mxu0 %v524
  %1254 = vmatpush.msra.mxu0 %v522
  %1255 = vmatpush.msra.mxu0 %v520
  %1256 = vmatpush.msra.mxu0 %v518
  %1257 = vmatpush.msra.mxu0 %v516
  %1258 = vmatpush.msra.mxu0 %v514
  %1259 = vmatpush.msra.mxu0 %v512
  %1260 = vmatpush.msra.mxu0 %v510
  %1261 = vmatpush.msra.mxu0 %v508
  %1262 = vmatpush.msra.mxu0 %v506
  %1263 = vmatpush.msra.mxu0 %v504
  %1264 = vmatpush.msra.mxu0 %v502
  %1265 = vmatpush.msra.mxu0 %v500
  %1266 = vmatpush.msra.mxu0 %v498
  %1267 = vmatmul.f32.gmra.mxu0 %v19
  %v1268 = vpop.f32.mrf.mxu0
  %v1269 = vadd.f32 %v1144, %v1268
  %1270 = vmatmul.f32.gmra.mxu0 %v28
  %v1271 = vpop.f32.mrf.mxu0
  %v1272 = vadd.f32 %v1147, %v1271
  %1273 = vmatmul.f32.gmra.mxu0 %v37
  %v1274 = vpop.f32.mrf.mxu0
  %v1275 = vadd.f32 %v1150, %v1274
  %1276 = vmatmul.f32.gmra.mxu0 %v46
  %v1277 = vpop.f32.mrf.mxu0
  %v1278 = vadd.f32 %v1153, %v1277
  %1279 = vmatmul.f32.gmra.mxu0 %v55
  %v1280 = vpop.f32.mrf.mxu0
  %v1281 = vadd.f32 %v1156, %v1280
  %1282 = vmatmul.f32.gmra.mxu0 %v64
  %v1283 = vpop.f32.mrf.mxu0
  %v1284 = vadd.f32 %v1159, %v1283
  %1285 = vmatmul.f32.gmra.mxu0 %v73
  %v1286 = vpop.f32.mrf.mxu0
  %v1287 = vadd.f32 %v1162, %v1286
  %1288 = vmatmul.f32.gmra.mxu0 %v82
  %v1289 = vpop.f32.mrf.mxu0
  %v1290 = vadd.f32 %v1165, %v1289
  %1291 = vmatmul.f32.gmra.mxu0 %v91
  %v1292 = vpop.f32.mrf.mxu0
  %v1293 = vadd.f32 %v1168, %v1292
  %1294 = vmatmul.f32.gmra.mxu0 %v100
  %v1295 = vpop.f32.mrf.mxu0
  %v1296 = vadd.f32 %v1171, %v1295
  %1297 = vmatmul.f32.gmra.mxu0 %v109
  %v1298 = vpop.f32.mrf.mxu0
  %v1299 = vadd.f32 %v1174, %v1298
  %1300 = vmatmul.f32.gmra.mxu0 %v118
  %v1301 = vpop.f32.mrf.mxu0
  %v1302 = vadd.f32 %v1177, %v1301
  %1303 = vmatmul.f32.gmra.mxu0 %v127
  %v1304 = vpop.f32.mrf.mxu0
  %v1305 = vadd.f32 %v1180, %v1304
  %1306 = vmatmul.f32.gmra.mxu0 %v136
  %v1307 = vpop.f32.mrf.mxu0
  %v1308 = vadd.f32 %v1183, %v1307
  %1309 = vmatmul.f32.gmra.mxu0 %v145
  %v1310 = vpop.f32.mrf.mxu0
  %v1311 = vadd.f32 %v1186, %v1310
  %1312 = vmatmul.f32.gmra.mxu0 %v154
  %v1313 = vpop.f32.mrf.mxu0
  %v1314 = vadd.f32 %v1189, %v1313
  %1315 = vmatmul.f32.gmra.mxu0 %v163
  %v1316 = vpop.f32.mrf.mxu0
  %v1317 = vadd.f32 %v1192, %v1316
  %1318 = vmatmul.f32.gmra.mxu0 %v172
  %v1319 = vpop.f32.mrf.mxu0
  %v1320 = vadd.f32 %v1195, %v1319
  %1321 = vmatmul.f32.gmra.mxu0 %v181
  %v1322 = vpop.f32.mrf.mxu0
  %v1323 = vadd.f32 %v1198, %v1322
  %1324 = vmatmul.f32.gmra.mxu0 %v190
  %v1325 = vpop.f32.mrf.mxu0
  %v1326 = vadd.f32 %v1201, %v1325
  %1327 = vmatmul.f32.gmra.mxu0 %v199
  %v1328 = vpop.f32.mrf.mxu0
  %v1329 = vadd.f32 %v1204, %v1328
  %1330 = vmatmul.f32.gmra.mxu0 %v208
  %v1331 = vpop.f32.mrf.mxu0
  %v1332 = vadd.f32 %v1207, %v1331
  %1333 = vmatmul.f32.gmra.mxu0 %v217
  %v1334 = vpop.f32.mrf.mxu0
  %v1335 = vadd.f32 %v1210, %v1334
  %1336 = vmatmul.f32.gmra.mxu0 %v226
  %v1337 = vpop.f32.mrf.mxu0
  %v1338 = vadd.f32 %v1213, %v1337
  %1339 = vmatmul.f32.gmra.mxu0 %v235
  %v1340 = vpop.f32.mrf.mxu0
  %v1341 = vadd.f32 %v1216, %v1340
  %1342 = vmatmul.f32.gmra.mxu0 %v244
  %v1343 = vpop.f32.mrf.mxu0
  %v1344 = vadd.f32 %v1219, %v1343
  %1345 = vmatmul.f32.gmra.mxu0 %v253
  %v1346 = vpop.f32.mrf.mxu0
  %v1347 = vadd.f32 %v1222, %v1346
  %1348 = vmatmul.f32.gmra.mxu0 %v262
  %v1349 = vpop.f32.mrf.mxu0
  %v1350 = vadd.f32 %v1225, %v1349
  %1351 = vmatmul.f32.gmra.mxu0 %v271
  %v1352 = vpop.f32.mrf.mxu0
  %v1353 = vadd.f32 %v1228, %v1352
  %1354 = vmatmul.f32.gmra.mxu0 %v280
  %v1355 = vpop.f32.mrf.mxu0
  %v1356 = vadd.f32 %v1231, %v1355
  %1357 = vmatmul.f32.gmra.mxu0 %v289
  %v1358 = vpop.f32.mrf.mxu0
  %v1359 = vadd.f32 %v1234, %v1358
  %1360 = vmatmul.f32.gmra.mxu0 %v298
  %v1361 = vpop.f32.mrf.mxu0
  %v1362 = vadd.f32 %v1237, %v1361
  %1363 = vmatmul.f32.gmra.mxu0 %v307
  %v1364 = vpop.f32.mrf.mxu0
  %v1365 = vadd.f32 %v1240, %v1364
  %1366 = vmatmul.f32.gmra.mxu0 %v316
  %v1367 = vpop.f32.mrf.mxu0
  %v1368 = vadd.f32 %v1243, %v1367
  %1369 = vmatmul.f32.gmra.mxu0 %v325
  %v1370 = vpop.f32.mrf.mxu0
  %v1371 = vadd.f32 %v1246, %v1370
  %1372 = vmatmul.f32.gmra.mxu0 %v334
  %v1373 = vpop.f32.mrf.mxu0
  %v1374 = vadd.f32 %v1249, %v1373
  %1375 = vdwg.mxu0
  %1376 = vmatpush.msra.mxu0 %v560
  %1377 = vmatpush.msra.mxu0 %v558
  %1378 = vmatpush.msra.mxu0 %v556
  %1379 = vmatpush.msra.mxu0 %v554
  %1380 = vmatpush.msra.mxu0 %v552
  %1381 = vmatpush.msra.mxu0 %v550
  %1382 = vmatpush.msra.mxu0 %v548
  %1383 = vmatpush.msra.mxu0 %v546
  %1384 = vmatpush.msra.mxu0 %v544
  %1385 = vmatpush.msra.mxu0 %v542
  %1386 = vmatpush.msra.mxu0 %v540
  %1387 = vmatpush.msra.mxu0 %v538
  %1388 = vmatpush.msra.mxu0 %v536
  %1389 = vmatpush.msra.mxu0 %v534
  %1390 = vmatpush.msra.mxu0 %v532
  %1391 = vmatpush.msra.mxu0 %v530
  %1392 = vmatmul.f32.gmra.mxu0 %v20
  %v1393 = vpop.f32.mrf.mxu0
  %v1394 = vadd.f32 %v1269, %v1393
  %1395 = vmatmul.f32.gmra.mxu0 %v29
  %v1396 = vpop.f32.mrf.mxu0
  %v1397 = vadd.f32 %v1272, %v1396
  %1398 = vmatmul.f32.gmra.mxu0 %v38
  %v1399 = vpop.f32.mrf.mxu0
  %v1400 = vadd.f32 %v1275, %v1399
  %1401 = vmatmul.f32.gmra.mxu0 %v47
  %v1402 = vpop.f32.mrf.mxu0
  %v1403 = vadd.f32 %v1278, %v1402
  %1404 = vmatmul.f32.gmra.mxu0 %v56
  %v1405 = vpop.f32.mrf.mxu0
  %v1406 = vadd.f32 %v1281, %v1405
  %1407 = vmatmul.f32.gmra.mxu0 %v65
  %v1408 = vpop.f32.mrf.mxu0
  %v1409 = vadd.f32 %v1284, %v1408
  %1410 = vmatmul.f32.gmra.mxu0 %v74
  %v1411 = vpop.f32.mrf.mxu0
  %v1412 = vadd.f32 %v1287, %v1411
  %1413 = vmatmul.f32.gmra.mxu0 %v83
  %v1414 = vpop.f32.mrf.mxu0
  %v1415 = vadd.f32 %v1290, %v1414
  %1416 = vmatmul.f32.gmra.mxu0 %v92
  %v1417 = vpop.f32.mrf.mxu0
  %v1418 = vadd.f32 %v1293, %v1417
  %1419 = vmatmul.f32.gmra.mxu0 %v101
  %v1420 = vpop.f32.mrf.mxu0
  %v1421 = vadd.f32 %v1296, %v1420
  %1422 = vmatmul.f32.gmra.mxu0 %v110
  %v1423 = vpop.f32.mrf.mxu0
  %v1424 = vadd.f32 %v1299, %v1423
  %1425 = vmatmul.f32.gmra.mxu0 %v119
  %v1426 = vpop.f32.mrf.mxu0
  %v1427 = vadd.f32 %v1302, %v1426
  %1428 = vmatmul.f32.gmra.mxu0 %v128
  %v1429 = vpop.f32.mrf.mxu0
  %v1430 = vadd.f32 %v1305, %v1429
  %1431 = vmatmul.f32.gmra.mxu0 %v137
  %v1432 = vpop.f32.mrf.mxu0
  %v1433 = vadd.f32 %v1308, %v1432
  %1434 = vmatmul.f32.gmra.mxu0 %v146
  %v1435 = vpop.f32.mrf.mxu0
  %v1436 = vadd.f32 %v1311, %v1435
  %1437 = vmatmul.f32.gmra.mxu0 %v155
  %v1438 = vpop.f32.mrf.mxu0
  %v1439 = vadd.f32 %v1314, %v1438
  %1440 = vmatmul.f32.gmra.mxu0 %v164
  %v1441 = vpop.f32.mrf.mxu0
  %v1442 = vadd.f32 %v1317, %v1441
  %1443 = vmatmul.f32.gmra.mxu0 %v173
  %v1444 = vpop.f32.mrf.mxu0
  %v1445 = vadd.f32 %v1320, %v1444
  %1446 = vmatmul.f32.gmra.mxu0 %v182
  %v1447 = vpop.f32.mrf.mxu0
  %v1448 = vadd.f32 %v1323, %v1447
  %1449 = vmatmul.f32.gmra.mxu0 %v191
  %v1450 = vpop.f32.mrf.mxu0
  %v1451 = vadd.f32 %v1326, %v1450
  %1452 = vmatmul.f32.gmra.mxu0 %v200
  %v1453 = vpop.f32.mrf.mxu0
  %v1454 = vadd.f32 %v1329, %v1453
  %1455 = vmatmul.f32.gmra.mxu0 %v209
  %v1456 = vpop.f32.mrf.mxu0
  %v1457 = vadd.f32 %v1332, %v1456
  %1458 = vmatmul.f32.gmra.mxu0 %v218
  %v1459 = vpop.f32.mrf.mxu0
  %v1460 = vadd.f32 %v1335, %v1459
  %1461 = vmatmul.f32.gmra.mxu0 %v227
  %v1462 = vpop.f32.mrf.mxu0
  %v1463 = vadd.f32 %v1338, %v1462
  %1464 = vmatmul.f32.gmra.mxu0 %v236
  %v1465 = vpop.f32.mrf.mxu0
  %v1466 = vadd.f32 %v1341, %v1465
  %1467 = vmatmul.f32.gmra.mxu0 %v245
  %v1468 = vpop.f32.mrf.mxu0
  %v1469 = vadd.f32 %v1344, %v1468
  %1470 = vmatmul.f32.gmra.mxu0 %v254
  %v1471 = vpop.f32.mrf.mxu0
  %v1472 = vadd.f32 %v1347, %v1471
  %1473 = vmatmul.f32.gmra.mxu0 %v263
  %v1474 = vpop.f32.mrf.mxu0
  %v1475 = vadd.f32 %v1350, %v1474
  %1476 = vmatmul.f32.gmra.mxu0 %v272
  %v1477 = vpop.f32.mrf.mxu0
  %v1478 = vadd.f32 %v1353, %v1477
  %1479 = vmatmul.f32.gmra.mxu0 %v281
  %v1480 = vpop.f32.mrf.mxu0
  %v1481 = vadd.f32 %v1356, %v1480
  %1482 = vmatmul.f32.gmra.mxu0 %v290
  %v1483 = vpop.f32.mrf.mxu0
  %v1484 = vadd.f32 %v1359, %v1483
  %1485 = vmatmul.f32.gmra.mxu0 %v299
  %v1486 = vpop.f32.mrf.mxu0
  %v1487 = vadd.f32 %v1362, %v1486
  %1488 = vmatmul.f32.gmra.mxu0 %v308
  %v1489 = vpop.f32.mrf.mxu0
  %v1490 = vadd.f32 %v1365, %v1489
  %1491 = vmatmul.f32.gmra.mxu0 %v317
  %v1492 = vpop.f32.mrf.mxu0
  %v1493 = vadd.f32 %v1368, %v1492
  %1494 = vmatmul.f32.gmra.mxu0 %v326
  %v1495 = vpop.f32.mrf.mxu0
  %v1496 = vadd.f32 %v1371, %v1495
  %1497 = vmatmul.f32.gmra.mxu0 %v335
  %v1498 = vpop.f32.mrf.mxu0
  %v1499 = vadd.f32 %v1374, %v1498
  %1500 = vdwg.mxu0
  %1501 = vmatpush.msra.mxu0 %v592
  %1502 = vmatpush.msra.mxu0 %v590
  %1503 = vmatpush.msra.mxu0 %v588
  %1504 = vmatpush.msra.mxu0 %v586
  %1505 = vmatpush.msra.mxu0 %v584
  %1506 = vmatpush.msra.mxu0 %v582
  %1507 = vmatpush.msra.mxu0 %v580
  %1508 = vmatpush.msra.mxu0 %v578
  %1509 = vmatpush.msra.mxu0 %v576
  %1510 = vmatpush.msra.mxu0 %v574
  %1511 = vmatpush.msra.mxu0 %v572
  %1512 = vmatpush.msra.mxu0 %v570
  %1513 = vmatpush.msra.mxu0 %v568
  %1514 = vmatpush.msra.mxu0 %v566
  %1515 = vmatpush.msra.mxu0 %v564
  %1516 = vmatpush.msra.mxu0 %v562
  %1517 = vmatmul.f32.gmra.mxu0 %v21
  %v1518 = vpop.f32.mrf.mxu0
  %v1519 = vadd.f32 %v1394, %v1518
  %1520 = vmatmul.f32.gmra.mxu0 %v30
  %v1521 = vpop.f32.mrf.mxu0
  %v1522 = vadd.f32 %v1397, %v1521
  %1523 = vmatmul.f32.gmra.mxu0 %v39
  %v1524 = vpop.f32.mrf.mxu0
  %v1525 = vadd.f32 %v1400, %v1524
  %1526 = vmatmul.f32.gmra.mxu0 %v48
  %v1527 = vpop.f32.mrf.mxu0
  %v1528 = vadd.f32 %v1403, %v1527
  %1529 = vmatmul.f32.gmra.mxu0 %v57
  %v1530 = vpop.f32.mrf.mxu0
  %v1531 = vadd.f32 %v1406, %v1530
  %1532 = vmatmul.f32.gmra.mxu0 %v66
  %v1533 = vpop.f32.mrf.mxu0
  %v1534 = vadd.f32 %v1409, %v1533
  %1535 = vmatmul.f32.gmra.mxu0 %v75
  %v1536 = vpop.f32.mrf.mxu0
  %v1537 = vadd.f32 %v1412, %v1536
  %1538 = vmatmul.f32.gmra.mxu0 %v84
  %v1539 = vpop.f32.mrf.mxu0
  %v1540 = vadd.f32 %v1415, %v1539
  %1541 = vmatmul.f32.gmra.mxu0 %v93
  %v1542 = vpop.f32.mrf.mxu0
  %v1543 = vadd.f32 %v1418, %v1542
  %1544 = vmatmul.f32.gmra.mxu0 %v102
  %v1545 = vpop.f32.mrf.mxu0
  %v1546 = vadd.f32 %v1421, %v1545
  %1547 = vmatmul.f32.gmra.mxu0 %v111
  %v1548 = vpop.f32.mrf.mxu0
  %v1549 = vadd.f32 %v1424, %v1548
  %1550 = vmatmul.f32.gmra.mxu0 %v120
  %v1551 = vpop.f32.mrf.mxu0
  %v1552 = vadd.f32 %v1427, %v1551
  %1553 = vmatmul.f32.gmra.mxu0 %v129
  %v1554 = vpop.f32.mrf.mxu0
  %v1555 = vadd.f32 %v1430, %v1554
  %1556 = vmatmul.f32.gmra.mxu0 %v138
  %v1557 = vpop.f32.mrf.mxu0
  %v1558 = vadd.f32 %v1433, %v1557
  %1559 = vmatmul.f32.gmra.mxu0 %v147
  %v1560 = vpop.f32.mrf.mxu0
  %v1561 = vadd.f32 %v1436, %v1560
  %1562 = vmatmul.f32.gmra.mxu0 %v156
  %v1563 = vpop.f32.mrf.mxu0
  %v1564 = vadd.f32 %v1439, %v1563
  %1565 = vmatmul.f32.gmra.mxu0 %v165
  %v1566 = vpop.f32.mrf.mxu0
  %v1567 = vadd.f32 %v1442, %v1566
  %1568 = vmatmul.f32.gmra.mxu0 %v174
  %v1569 = vpop.f32.mrf.mxu0
  %v1570 = vadd.f32 %v1445, %v1569
  %1571 = vmatmul.f32.gmra.mxu0 %v183
  %v1572 = vpop.f32.mrf.mxu0
  %v1573 = vadd.f32 %v1448, %v1572
  %1574 = vmatmul.f32.gmra.mxu0 %v192
  %v1575 = vpop.f32.mrf.mxu0
  %v1576 = vadd.f32 %v1451, %v1575
  %1577 = vmatmul.f32.gmra.mxu0 %v201
  %v1578 = vpop.f32.mrf.mxu0
  %v1579 = vadd.f32 %v1454, %v1578
  %1580 = vmatmul.f32.gmra.mxu0 %v210
  %v1581 = vpop.f32.mrf.mxu0
  %v1582 = vadd.f32 %v1457, %v1581
  %1583 = vmatmul.f32.gmra.mxu0 %v219
  %v1584 = vpop.f32.mrf.mxu0
  %v1585 = vadd.f32 %v1460, %v1584
  %1586 = vmatmul.f32.gmra.mxu0 %v228
  %v1587 = vpop.f32.mrf.mxu0
  %v1588 = vadd.f32 %v1463, %v1587
  %1589 = vmatmul.f32.gmra.mxu0 %v237
  %v1590 = vpop.f32.mrf.mxu0
  %v1591 = vadd.f32 %v1466, %v1590
  %1592 = vmatmul.f32.gmra.mxu0 %v246
  %v1593 = vpop.f32.mrf.mxu0
  %v1594 = vadd.f32 %v1469, %v1593
  %1595 = vmatmul.f32.gmra.mxu0 %v255
  %v1596 = vpop.f32.mrf.mxu0
  %v1597 = vadd.f32 %v1472, %v1596
  %1598 = vmatmul.f32.gmra.mxu0 %v264
  %v1599 = vpop.f32.mrf.mxu0
  %v1600 = vadd.f32 %v1475, %v1599
  %1601 = vmatmul.f32.gmra.mxu0 %v273
  %v1602 = vpop.f32.mrf.mxu0
  %v1603 = vadd.f32 %v1478, %v1602
  %1604 = vmatmul.f32.gmra.mxu0 %v282
  %v1605 = vpop.f32.mrf.mxu0
  %v1606 = vadd.f32 %v1481, %v1605
  %1607 = vmatmul.f32.gmra.mxu0 %v291
  %v1608 = vpop.f32.mrf.mxu0
  %v1609 = vadd.f32 %v1484, %v1608
  %1610 = vmatmul.f32.gmra.mxu0 %v300
  %v1611 = vpop.f32.mrf.mxu0
  %v1612 = vadd.f32 %v1487, %v1611
  %1613 = vmatmul.f32.gmra.mxu0 %v309
  %v1614 = vpop.f32.mrf.mxu0
  %v1615 = vadd.f32 %v1490, %v1614
  %1616 = vmatmul.f32.gmra.mxu0 %v318
  %v1617 = vpop.f32.mrf.mxu0
  %v1618 = vadd.f32 %v1493, %v1617
  %1619 = vmatmul.f32.gmra.mxu0 %v327
  %v1620 = vpop.f32.mrf.mxu0
  %v1621 = vadd.f32 %v1496, %v1620
  %1622 = vmatmul.f32.gmra.mxu0 %v336
  %v1623 = vpop.f32.mrf.mxu0
  %v1624 = vadd.f32 %v1499, %v1623
  %1625 = vdwg.mxu0
  %1626 = vmatpush.msra.mxu0 %v624
  %1627 = vmatpush.msra.mxu0 %v622
  %1628 = vmatpush.msra.mxu0 %v620
  %1629 = vmatpush.msra.mxu0 %v618
  %1630 = vmatpush.msra.mxu0 %v616
  %1631 = vmatpush.msra.mxu0 %v614
  %1632 = vmatpush.msra.mxu0 %v612
  %1633 = vmatpush.msra.mxu0 %v610
  %1634 = vmatpush.msra.mxu0 %v608
  %1635 = vmatpush.msra.mxu0 %v606
  %1636 = vmatpush.msra.mxu0 %v604
  %1637 = vmatpush.msra.mxu0 %v602
  %1638 = vmatpush.msra.mxu0 %v600
  %1639 = vmatpush.msra.mxu0 %v598
  %1640 = vmatpush.msra.mxu0 %v596
  %1641 = vmatpush.msra.mxu0 %v594
  %1642 = vmatmul.f32.gmra.mxu0 %v22
  %v1643 = vpop.f32.mrf.mxu0
  %v1644 = vadd.f32 %v1519, %v1643
  %1645 = vmatmul.f32.gmra.mxu0 %v31
  %v1646 = vpop.f32.mrf.mxu0
  %v1647 = vadd.f32 %v1522, %v1646
  %1648 = vmatmul.f32.gmra.mxu0 %v40
  %v1649 = vpop.f32.mrf.mxu0
  %v1650 = vadd.f32 %v1525, %v1649
  %1651 = vmatmul.f32.gmra.mxu0 %v49
  %v1652 = vpop.f32.mrf.mxu0
  %v1653 = vadd.f32 %v1528, %v1652
  %1654 = vmatmul.f32.gmra.mxu0 %v58
  %v1655 = vpop.f32.mrf.mxu0
  %v1656 = vadd.f32 %v1531, %v1655
  %1657 = vmatmul.f32.gmra.mxu0 %v67
  %v1658 = vpop.f32.mrf.mxu0
  %v1659 = vadd.f32 %v1534, %v1658
  %1660 = vmatmul.f32.gmra.mxu0 %v76
  %v1661 = vpop.f32.mrf.mxu0
  %v1662 = vadd.f32 %v1537, %v1661
  %1663 = vmatmul.f32.gmra.mxu0 %v85
  %v1664 = vpop.f32.mrf.mxu0
  %v1665 = vadd.f32 %v1540, %v1664
  %1666 = vmatmul.f32.gmra.mxu0 %v94
  %v1667 = vpop.f32.mrf.mxu0
  %v1668 = vadd.f32 %v1543, %v1667
  %1669 = vmatmul.f32.gmra.mxu0 %v103
  %v1670 = vpop.f32.mrf.mxu0
  %v1671 = vadd.f32 %v1546, %v1670
  %1672 = vmatmul.f32.gmra.mxu0 %v112
  %v1673 = vpop.f32.mrf.mxu0
  %v1674 = vadd.f32 %v1549, %v1673
  %1675 = vmatmul.f32.gmra.mxu0 %v121
  %v1676 = vpop.f32.mrf.mxu0
  %v1677 = vadd.f32 %v1552, %v1676
  %1678 = vmatmul.f32.gmra.mxu0 %v130
  %v1679 = vpop.f32.mrf.mxu0
  %v1680 = vadd.f32 %v1555, %v1679
  %1681 = vmatmul.f32.gmra.mxu0 %v139
  %v1682 = vpop.f32.mrf.mxu0
  %v1683 = vadd.f32 %v1558, %v1682
  %1684 = vmatmul.f32.gmra.mxu0 %v148
  %v1685 = vpop.f32.mrf.mxu0
  %v1686 = vadd.f32 %v1561, %v1685
  %1687 = vmatmul.f32.gmra.mxu0 %v157
  %v1688 = vpop.f32.mrf.mxu0
  %v1689 = vadd.f32 %v1564, %v1688
  %1690 = vmatmul.f32.gmra.mxu0 %v166
  %v1691 = vpop.f32.mrf.mxu0
  %v1692 = vadd.f32 %v1567, %v1691
  %1693 = vmatmul.f32.gmra.mxu0 %v175
  %v1694 = vpop.f32.mrf.mxu0
  %v1695 = vadd.f32 %v1570, %v1694
  %1696 = vmatmul.f32.gmra.mxu0 %v184
  %v1697 = vpop.f32.mrf.mxu0
  %v1698 = vadd.f32 %v1573, %v1697
  %1699 = vmatmul.f32.gmra.mxu0 %v193
  %v1700 = vpop.f32.mrf.mxu0
  %v1701 = vadd.f32 %v1576, %v1700
  %1702 = vmatmul.f32.gmra.mxu0 %v202
  %v1703 = vpop.f32.mrf.mxu0
  %v1704 = vadd.f32 %v1579, %v1703
  %1705 = vmatmul.f32.gmra.mxu0 %v211
  %v1706 = vpop.f32.mrf.mxu0
  %v1707 = vadd.f32 %v1582, %v1706
  %1708 = vmatmul.f32.gmra.mxu0 %v220
  %v1709 = vpop.f32.mrf.mxu0
  %v1710 = vadd.f32 %v1585, %v1709
  %1711 = vmatmul.f32.gmra.mxu0 %v229
  %v1712 = vpop.f32.mrf.mxu0
  %v1713 = vadd.f32 %v1588, %v1712
  %1714 = vmatmul.f32.gmra.mxu0 %v238
  %v1715 = vpop.f32.mrf.mxu0
  %v1716 = vadd.f32 %v1591, %v1715
  %1717 = vmatmul.f32.gmra.mxu0 %v247
  %v1718 = vpop.f32.mrf.mxu0
  %v1719 = vadd.f32 %v1594, %v1718
  %1720 = vmatmul.f32.gmra.mxu0 %v256
  %v1721 = vpop.f32.mrf.mxu0
  %v1722 = vadd.f32 %v1597, %v1721
  %1723 = vmatmul.f32.gmra.mxu0 %v265
  %v1724 = vpop.f32.mrf.mxu0
  %v1725 = vadd.f32 %v1600, %v1724
  %1726 = vmatmul.f32.gmra.mxu0 %v274
  %v1727 = vpop.f32.mrf.mxu0
  %v1728 = vadd.f32 %v1603, %v1727
  %1729 = vmatmul.f32.gmra.mxu0 %v283
  %v1730 = vpop.f32.mrf.mxu0
  %v1731 = vadd.f32 %v1606, %v1730
  %1732 = vmatmul.f32.gmra.mxu0 %v292
  %v1733 = vpop.f32.mrf.mxu0
  %v1734 = vadd.f32 %v1609, %v1733
  %1735 = vmatmul.f32.gmra.mxu0 %v301
  %v1736 = vpop.f32.mrf.mxu0
  %v1737 = vadd.f32 %v1612, %v1736
  %1738 = vmatmul.f32.gmra.mxu0 %v310
  %v1739 = vpop.f32.mrf.mxu0
  %v1740 = vadd.f32 %v1615, %v1739
  %1741 = vmatmul.f32.gmra.mxu0 %v319
  %v1742 = vpop.f32.mrf.mxu0
  %v1743 = vadd.f32 %v1618, %v1742
  %1744 = vmatmul.f32.gmra.mxu0 %v328
  %v1745 = vpop.f32.mrf.mxu0
  %v1746 = vadd.f32 %v1621, %v1745
  %1747 = vmatmul.f32.gmra.mxu0 %v337
  %v1748 = vpop.f32.mrf.mxu0
  %v1749 = vadd.f32 %v1624, %v1748
  %1750 = vdwg.mxu0
  %1751 = vmatpush.msra.mxu0 %v369
  %1752 = vmatpush.msra.mxu0 %v367
  %1753 = vmatpush.msra.mxu0 %v365
  %1754 = vmatpush.msra.mxu0 %v363
  %1755 = vmatpush.msra.mxu0 %v361
  %1756 = vmatpush.msra.mxu0 %v359
  %1757 = vmatpush.msra.mxu0 %v357
  %1758 = vmatpush.msra.mxu0 %v355
  %1759 = vmatpush.msra.mxu0 %v353
  %1760 = vmatpush.msra.mxu0 %v351
  %1761 = vmatpush.msra.mxu0 %v349
  %1762 = vmatpush.msra.mxu0 %v347
  %1763 = vmatpush.msra.mxu0 %v345
  %1764 = vmatpush.msra.mxu0 %v343
  %1765 = vmatpush.msra.mxu0 %v341
  %1766 = vmatpush.msra.mxu0 %v339
  %1767 = vmatmul.f32.gmra.mxu0 %v14
  %v1768 = vpop.f32.mrf.mxu0
  %v1769 = vadd.f32 0.0, %v1768
  %1770 = vmatmul.f32.gmra.mxu0 %v23
  %v1771 = vpop.f32.mrf.mxu0
  %v1772 = vadd.f32 0.0, %v1771
  %1773 = vmatmul.f32.gmra.mxu0 %v32
  %v1774 = vpop.f32.mrf.mxu0
  %v1775 = vadd.f32 0.0, %v1774
  %1776 = vmatmul.f32.gmra.mxu0 %v41
  %v1777 = vpop.f32.mrf.mxu0
  %v1778 = vadd.f32 0.0, %v1777
  %1779 = vmatmul.f32.gmra.mxu0 %v50
  %v1780 = vpop.f32.mrf.mxu0
  %v1781 = vadd.f32 0.0, %v1780
  %1782 = vmatmul.f32.gmra.mxu0 %v59
  %v1783 = vpop.f32.mrf.mxu0
  %v1784 = vadd.f32 0.0, %v1783
  %1785 = vmatmul.f32.gmra.mxu0 %v68
  %v1786 = vpop.f32.mrf.mxu0
  %v1787 = vadd.f32 0.0, %v1786
  %1788 = vmatmul.f32.gmra.mxu0 %v77
  %v1789 = vpop.f32.mrf.mxu0
  %v1790 = vadd.f32 0.0, %v1789
  %1791 = vmatmul.f32.gmra.mxu0 %v86
  %v1792 = vpop.f32.mrf.mxu0
  %v1793 = vadd.f32 0.0, %v1792
  %1794 = vmatmul.f32.gmra.mxu0 %v95
  %v1795 = vpop.f32.mrf.mxu0
  %v1796 = vadd.f32 0.0, %v1795
  %1797 = vmatmul.f32.gmra.mxu0 %v104
  %v1798 = vpop.f32.mrf.mxu0
  %v1799 = vadd.f32 0.0, %v1798
  %1800 = vmatmul.f32.gmra.mxu0 %v113
  %v1801 = vpop.f32.mrf.mxu0
  %v1802 = vadd.f32 0.0, %v1801
  %1803 = vmatmul.f32.gmra.mxu0 %v122
  %v1804 = vpop.f32.mrf.mxu0
  %v1805 = vadd.f32 0.0, %v1804
  %1806 = vmatmul.f32.gmra.mxu0 %v131
  %v1807 = vpop.f32.mrf.mxu0
  %v1808 = vadd.f32 0.0, %v1807
  %1809 = vmatmul.f32.gmra.mxu0 %v140
  %v1810 = vpop.f32.mrf.mxu0
  %v1811 = vadd.f32 0.0, %v1810
  %1812 = vmatmul.f32.gmra.mxu0 %v149
  %v1813 = vpop.f32.mrf.mxu0
  %v1814 = vadd.f32 0.0, %v1813
  %1815 = vmatmul.f32.gmra.mxu0 %v158
  %v1816 = vpop.f32.mrf.mxu0
  %v1817 = vadd.f32 0.0, %v1816
  %1818 = vmatmul.f32.gmra.mxu0 %v167
  %v1819 = vpop.f32.mrf.mxu0
  %v1820 = vadd.f32 0.0, %v1819
  %1821 = vmatmul.f32.gmra.mxu0 %v176
  %v1822 = vpop.f32.mrf.mxu0
  %v1823 = vadd.f32 0.0, %v1822
  %1824 = vmatmul.f32.gmra.mxu0 %v185
  %v1825 = vpop.f32.mrf.mxu0
  %v1826 = vadd.f32 0.0, %v1825
  %1827 = vmatmul.f32.gmra.mxu0 %v194
  %v1828 = vpop.f32.mrf.mxu0
  %v1829 = vadd.f32 0.0, %v1828
  %1830 = vmatmul.f32.gmra.mxu0 %v203
  %v1831 = vpop.f32.mrf.mxu0
  %v1832 = vadd.f32 0.0, %v1831
  %1833 = vmatmul.f32.gmra.mxu0 %v212
  %v1834 = vpop.f32.mrf.mxu0
  %v1835 = vadd.f32 0.0, %v1834
  %1836 = vmatmul.f32.gmra.mxu0 %v221
  %v1837 = vpop.f32.mrf.mxu0
  %v1838 = vadd.f32 0.0, %v1837
  %1839 = vmatmul.f32.gmra.mxu0 %v230
  %v1840 = vpop.f32.mrf.mxu0
  %v1841 = vadd.f32 0.0, %v1840
  %1842 = vmatmul.f32.gmra.mxu0 %v239
  %v1843 = vpop.f32.mrf.mxu0
  %v1844 = vadd.f32 0.0, %v1843
  %1845 = vmatmul.f32.gmra.mxu0 %v248
  %v1846 = vpop.f32.mrf.mxu0
  %v1847 = vadd.f32 0.0, %v1846
  %1848 = vmatmul.f32.gmra.mxu0 %v257
  %v1849 = vpop.f32.mrf.mxu0
  %v1850 = vadd.f32 0.0, %v1849
  %1851 = vmatmul.f32.gmra.mxu0 %v266
  %v1852 = vpop.f32.mrf.mxu0
  %v1853 = vadd.f32 0.0, %v1852
  %1854 = vmatmul.f32.gmra.mxu0 %v275
  %v1855 = vpop.f32.mrf.mxu0
  %v1856 = vadd.f32 0.0, %v1855
  %1857 = vmatmul.f32.gmra.mxu0 %v284
  %v1858 = vpop.f32.mrf.mxu0
  %v1859 = vadd.f32 0.0, %v1858
  %1860 = vmatmul.f32.gmra.mxu0 %v293
  %v1861 = vpop.f32.mrf.mxu0
  %v1862 = vadd.f32 0.0, %v1861
  %1863 = vmatmul.f32.gmra.mxu0 %v302
  %v1864 = vpop.f32.mrf.mxu0
  %v1865 = vadd.f32 0.0, %v1864
  %1866 = vmatmul.f32.gmra.mxu0 %v311
  %v1867 = vpop.f32.mrf.mxu0
  %v1868 = vadd.f32 0.0, %v1867
  %1869 = vmatmul.f32.gmra.mxu0 %v320
  %v1870 = vpop.f32.mrf.mxu0
  %v1871 = vadd.f32 0.0, %v1870
  %1872 = vmatmul.f32.gmra.mxu0 %v329
  %v1873 = vpop.f32.mrf.mxu0
  %v1874 = vadd.f32 0.0, %v1873
  %1875 = vdwg.mxu0
  %1876 = vmatpush.msra.mxu0 %v401
  %1877 = vmatpush.msra.mxu0 %v399
  %1878 = vmatpush.msra.mxu0 %v397
  %1879 = vmatpush.msra.mxu0 %v395
  %1880 = vmatpush.msra.mxu0 %v393
  %1881 = vmatpush.msra.mxu0 %v391
  %1882 = vmatpush.msra.mxu0 %v389
  %1883 = vmatpush.msra.mxu0 %v387
  %1884 = vmatpush.msra.mxu0 %v385
  %1885 = vmatpush.msra.mxu0 %v383
  %1886 = vmatpush.msra.mxu0 %v381
  %1887 = vmatpush.msra.mxu0 %v379
  %1888 = vmatpush.msra.mxu0 %v377
  %1889 = vmatpush.msra.mxu0 %v375
  %1890 = vmatpush.msra.mxu0 %v373
  %1891 = vmatpush.msra.mxu0 %v371
  %1892 = vmatmul.f32.gmra.mxu0 %v15
  %v1893 = vpop.f32.mrf.mxu0
  %v1894 = vadd.f32 %v1769, %v1893
  %1895 = vmatmul.f32.gmra.mxu0 %v24
  %v1896 = vpop.f32.mrf.mxu0
  %v1897 = vadd.f32 %v1772, %v1896
  %1898 = vmatmul.f32.gmra.mxu0 %v33
  %v1899 = vpop.f32.mrf.mxu0
  %v1900 = vadd.f32 %v1775, %v1899
  %1901 = vmatmul.f32.gmra.mxu0 %v42
  %v1902 = vpop.f32.mrf.mxu0
  %v1903 = vadd.f32 %v1778, %v1902
  %1904 = vmatmul.f32.gmra.mxu0 %v51
  %v1905 = vpop.f32.mrf.mxu0
  %v1906 = vadd.f32 %v1781, %v1905
  %1907 = vmatmul.f32.gmra.mxu0 %v60
  %v1908 = vpop.f32.mrf.mxu0
  %v1909 = vadd.f32 %v1784, %v1908
  %1910 = vmatmul.f32.gmra.mxu0 %v69
  %v1911 = vpop.f32.mrf.mxu0
  %v1912 = vadd.f32 %v1787, %v1911
  %1913 = vmatmul.f32.gmra.mxu0 %v78
  %v1914 = vpop.f32.mrf.mxu0
  %v1915 = vadd.f32 %v1790, %v1914
  %1916 = vmatmul.f32.gmra.mxu0 %v87
  %v1917 = vpop.f32.mrf.mxu0
  %v1918 = vadd.f32 %v1793, %v1917
  %1919 = vmatmul.f32.gmra.mxu0 %v96
  %v1920 = vpop.f32.mrf.mxu0
  %v1921 = vadd.f32 %v1796, %v1920
  %1922 = vmatmul.f32.gmra.mxu0 %v105
  %v1923 = vpop.f32.mrf.mxu0
  %v1924 = vadd.f32 %v1799, %v1923
  %1925 = vmatmul.f32.gmra.mxu0 %v114
  %v1926 = vpop.f32.mrf.mxu0
  %v1927 = vadd.f32 %v1802, %v1926
  %1928 = vmatmul.f32.gmra.mxu0 %v123
  %v1929 = vpop.f32.mrf.mxu0
  %v1930 = vadd.f32 %v1805, %v1929
  %1931 = vmatmul.f32.gmra.mxu0 %v132
  %v1932 = vpop.f32.mrf.mxu0
  %v1933 = vadd.f32 %v1808, %v1932
  %1934 = vmatmul.f32.gmra.mxu0 %v141
  %v1935 = vpop.f32.mrf.mxu0
  %v1936 = vadd.f32 %v1811, %v1935
  %1937 = vmatmul.f32.gmra.mxu0 %v150
  %v1938 = vpop.f32.mrf.mxu0
  %v1939 = vadd.f32 %v1814, %v1938
  %1940 = vmatmul.f32.gmra.mxu0 %v159
  %v1941 = vpop.f32.mrf.mxu0
  %v1942 = vadd.f32 %v1817, %v1941
  %1943 = vmatmul.f32.gmra.mxu0 %v168
  %v1944 = vpop.f32.mrf.mxu0
  %v1945 = vadd.f32 %v1820, %v1944
  %1946 = vmatmul.f32.gmra.mxu0 %v177
  %v1947 = vpop.f32.mrf.mxu0
  %v1948 = vadd.f32 %v1823, %v1947
  %1949 = vmatmul.f32.gmra.mxu0 %v186
  %v1950 = vpop.f32.mrf.mxu0
  %v1951 = vadd.f32 %v1826, %v1950
  %1952 = vmatmul.f32.gmra.mxu0 %v195
  %v1953 = vpop.f32.mrf.mxu0
  %v1954 = vadd.f32 %v1829, %v1953
  %1955 = vmatmul.f32.gmra.mxu0 %v204
  %v1956 = vpop.f32.mrf.mxu0
  %v1957 = vadd.f32 %v1832, %v1956
  %1958 = vmatmul.f32.gmra.mxu0 %v213
  %v1959 = vpop.f32.mrf.mxu0
  %v1960 = vadd.f32 %v1835, %v1959
  %1961 = vmatmul.f32.gmra.mxu0 %v222
  %v1962 = vpop.f32.mrf.mxu0
  %v1963 = vadd.f32 %v1838, %v1962
  %1964 = vmatmul.f32.gmra.mxu0 %v231
  %v1965 = vpop.f32.mrf.mxu0
  %v1966 = vadd.f32 %v1841, %v1965
  %1967 = vmatmul.f32.gmra.mxu0 %v240
  %v1968 = vpop.f32.mrf.mxu0
  %v1969 = vadd.f32 %v1844, %v1968
  %1970 = vmatmul.f32.gmra.mxu0 %v249
  %v1971 = vpop.f32.mrf.mxu0
  %v1972 = vadd.f32 %v1847, %v1971
  %1973 = vmatmul.f32.gmra.mxu0 %v258
  %v1974 = vpop.f32.mrf.mxu0
  %v1975 = vadd.f32 %v1850, %v1974
  %1976 = vmatmul.f32.gmra.mxu0 %v267
  %v1977 = vpop.f32.mrf.mxu0
  %v1978 = vadd.f32 %v1853, %v1977
  %1979 = vmatmul.f32.gmra.mxu0 %v276
  %v1980 = vpop.f32.mrf.mxu0
  %v1981 = vadd.f32 %v1856, %v1980
  %1982 = vmatmul.f32.gmra.mxu0 %v285
  %v1983 = vpop.f32.mrf.mxu0
  %v1984 = vadd.f32 %v1859, %v1983
  %1985 = vmatmul.f32.gmra.mxu0 %v294
  %v1986 = vpop.f32.mrf.mxu0
  %v1987 = vadd.f32 %v1862, %v1986
  %1988 = vmatmul.f32.gmra.mxu0 %v303
  %v1989 = vpop.f32.mrf.mxu0
  %v1990 = vadd.f32 %v1865, %v1989
  %1991 = vmatmul.f32.gmra.mxu0 %v312
  %v1992 = vpop.f32.mrf.mxu0
  %v1993 = vadd.f32 %v1868, %v1992
  %1994 = vmatmul.f32.gmra.mxu0 %v321
  %v1995 = vpop.f32.mrf.mxu0
  %v1996 = vadd.f32 %v1871, %v1995
  %1997 = vmatmul.f32.gmra.mxu0 %v330
  %v1998 = vpop.f32.mrf.mxu0
  %v1999 = vadd.f32 %v1874, %v1998
  %2000 = vdwg.mxu0
  %2001 = vmatpush.msra.mxu0 %v433
  %2002 = vmatpush.msra.mxu0 %v431
  %2003 = vmatpush.msra.mxu0 %v429
  %2004 = vmatpush.msra.mxu0 %v427
  %2005 = vmatpush.msra.mxu0 %v425
  %2006 = vmatpush.msra.mxu0 %v423
  %2007 = vmatpush.msra.mxu0 %v421
  %2008 = vmatpush.msra.mxu0 %v419
  %2009 = vmatpush.msra.mxu0 %v417
  %2010 = vmatpush.msra.mxu0 %v415
  %2011 = vmatpush.msra.mxu0 %v413
  %2012 = vmatpush.msra.mxu0 %v411
  %2013 = vmatpush.msra.mxu0 %v409
  %2014 = vmatpush.msra.mxu0 %v407
  %2015 = vmatpush.msra.mxu0 %v405
  %2016 = vmatpush.msra.mxu0 %v403
  %2017 = vmatmul.f32.gmra.mxu0 %v16
  %v2018 = vpop.f32.mrf.mxu0
  %v2019 = vadd.f32 %v1894, %v2018
  %2020 = vmatmul.f32.gmra.mxu0 %v25
  %v2021 = vpop.f32.mrf.mxu0
  %v2022 = vadd.f32 %v1897, %v2021
  %2023 = vmatmul.f32.gmra.mxu0 %v34
  %v2024 = vpop.f32.mrf.mxu0
  %v2025 = vadd.f32 %v1900, %v2024
  %2026 = vmatmul.f32.gmra.mxu0 %v43
  %v2027 = vpop.f32.mrf.mxu0
  %v2028 = vadd.f32 %v1903, %v2027
  %2029 = vmatmul.f32.gmra.mxu0 %v52
  %v2030 = vpop.f32.mrf.mxu0
  %v2031 = vadd.f32 %v1906, %v2030
  %2032 = vmatmul.f32.gmra.mxu0 %v61
  %v2033 = vpop.f32.mrf.mxu0
  %v2034 = vadd.f32 %v1909, %v2033
  %2035 = vmatmul.f32.gmra.mxu0 %v70
  %v2036 = vpop.f32.mrf.mxu0
  %v2037 = vadd.f32 %v1912, %v2036
  %2038 = vmatmul.f32.gmra.mxu0 %v79
  %v2039 = vpop.f32.mrf.mxu0
  %v2040 = vadd.f32 %v1915, %v2039
  %2041 = vmatmul.f32.gmra.mxu0 %v88
  %v2042 = vpop.f32.mrf.mxu0
  %v2043 = vadd.f32 %v1918, %v2042
  %2044 = vmatmul.f32.gmra.mxu0 %v97
  %v2045 = vpop.f32.mrf.mxu0
  %v2046 = vadd.f32 %v1921, %v2045
  %2047 = vmatmul.f32.gmra.mxu0 %v106
  %v2048 = vpop.f32.mrf.mxu0
  %v2049 = vadd.f32 %v1924, %v2048
  %2050 = vmatmul.f32.gmra.mxu0 %v115
  %v2051 = vpop.f32.mrf.mxu0
  %v2052 = vadd.f32 %v1927, %v2051
  %2053 = vmatmul.f32.gmra.mxu0 %v124
  %v2054 = vpop.f32.mrf.mxu0
  %v2055 = vadd.f32 %v1930, %v2054
  %2056 = vmatmul.f32.gmra.mxu0 %v133
  %v2057 = vpop.f32.mrf.mxu0
  %v2058 = vadd.f32 %v1933, %v2057
  %2059 = vmatmul.f32.gmra.mxu0 %v142
  %v2060 = vpop.f32.mrf.mxu0
  %v2061 = vadd.f32 %v1936, %v2060
  %2062 = vmatmul.f32.gmra.mxu0 %v151
  %v2063 = vpop.f32.mrf.mxu0
  %v2064 = vadd.f32 %v1939, %v2063
  %2065 = vmatmul.f32.gmra.mxu0 %v160
  %v2066 = vpop.f32.mrf.mxu0
  %v2067 = vadd.f32 %v1942, %v2066
  %2068 = vmatmul.f32.gmra.mxu0 %v169
  %v2069 = vpop.f32.mrf.mxu0
  %v2070 = vadd.f32 %v1945, %v2069
  %2071 = vmatmul.f32.gmra.mxu0 %v178
  %v2072 = vpop.f32.mrf.mxu0
  %v2073 = vadd.f32 %v1948, %v2072
  %2074 = vmatmul.f32.gmra.mxu0 %v187
  %v2075 = vpop.f32.mrf.mxu0
  %v2076 = vadd.f32 %v1951, %v2075
  %2077 = vmatmul.f32.gmra.mxu0 %v196
  %v2078 = vpop.f32.mrf.mxu0
  %v2079 = vadd.f32 %v1954, %v2078
  %2080 = vmatmul.f32.gmra.mxu0 %v205
  %v2081 = vpop.f32.mrf.mxu0
  %v2082 = vadd.f32 %v1957, %v2081
  %2083 = vmatmul.f32.gmra.mxu0 %v214
  %v2084 = vpop.f32.mrf.mxu0
  %v2085 = vadd.f32 %v1960, %v2084
  %2086 = vmatmul.f32.gmra.mxu0 %v223
  %v2087 = vpop.f32.mrf.mxu0
  %v2088 = vadd.f32 %v1963, %v2087
  %2089 = vmatmul.f32.gmra.mxu0 %v232
  %v2090 = vpop.f32.mrf.mxu0
  %v2091 = vadd.f32 %v1966, %v2090
  %2092 = vmatmul.f32.gmra.mxu0 %v241
  %v2093 = vpop.f32.mrf.mxu0
  %v2094 = vadd.f32 %v1969, %v2093
  %2095 = vmatmul.f32.gmra.mxu0 %v250
  %v2096 = vpop.f32.mrf.mxu0
  %v2097 = vadd.f32 %v1972, %v2096
  %2098 = vmatmul.f32.gmra.mxu0 %v259
  %v2099 = vpop.f32.mrf.mxu0
  %v2100 = vadd.f32 %v1975, %v2099
  %2101 = vmatmul.f32.gmra.mxu0 %v268
  %v2102 = vpop.f32.mrf.mxu0
  %v2103 = vadd.f32 %v1978, %v2102
  %2104 = vmatmul.f32.gmra.mxu0 %v277
  %v2105 = vpop.f32.mrf.mxu0
  %v2106 = vadd.f32 %v1981, %v2105
  %2107 = vmatmul.f32.gmra.mxu0 %v286
  %v2108 = vpop.f32.mrf.mxu0
  %v2109 = vadd.f32 %v1984, %v2108
  %2110 = vmatmul.f32.gmra.mxu0 %v295
  %v2111 = vpop.f32.mrf.mxu0
  %v2112 = vadd.f32 %v1987, %v2111
  %2113 = vmatmul.f32.gmra.mxu0 %v304
  %v2114 = vpop.f32.mrf.mxu0
  %v2115 = vadd.f32 %v1990, %v2114
  %2116 = vmatmul.f32.gmra.mxu0 %v313
  %v2117 = vpop.f32.mrf.mxu0
  %v2118 = vadd.f32 %v1993, %v2117
  %2119 = vmatmul.f32.gmra.mxu0 %v322
  %v2120 = vpop.f32.mrf.mxu0
  %v2121 = vadd.f32 %v1996, %v2120
  %2122 = vmatmul.f32.gmra.mxu0 %v331
  %v2123 = vpop.f32.mrf.mxu0
  %v2124 = vadd.f32 %v1999, %v2123
  %2125 = vdwg.mxu0
  %2126 = vmatpush.msra.mxu0 %v465
  %2127 = vmatpush.msra.mxu0 %v463
  %2128 = vmatpush.msra.mxu0 %v461
  %2129 = vmatpush.msra.mxu0 %v459
  %2130 = vmatpush.msra.mxu0 %v457
  %2131 = vmatpush.msra.mxu0 %v455
  %2132 = vmatpush.msra.mxu0 %v453
  %2133 = vmatpush.msra.mxu0 %v451
  %2134 = vmatpush.msra.mxu0 %v449
  %2135 = vmatpush.msra.mxu0 %v447
  %2136 = vmatpush.msra.mxu0 %v445
  %2137 = vmatpush.msra.mxu0 %v443
  %2138 = vmatpush.msra.mxu0 %v441
  %2139 = vmatpush.msra.mxu0 %v439
  %2140 = vmatpush.msra.mxu0 %v437
  %2141 = vmatpush.msra.mxu0 %v435
  %2142 = vmatmul.f32.gmra.mxu0 %v17
  %v2143 = vpop.f32.mrf.mxu0
  %v2144 = vadd.f32 %v2019, %v2143
  %2145 = vmatmul.f32.gmra.mxu0 %v26
  %v2146 = vpop.f32.mrf.mxu0
  %v2147 = vadd.f32 %v2022, %v2146
  %2148 = vmatmul.f32.gmra.mxu0 %v35
  %v2149 = vpop.f32.mrf.mxu0
  %v2150 = vadd.f32 %v2025, %v2149
  %2151 = vmatmul.f32.gmra.mxu0 %v44
  %v2152 = vpop.f32.mrf.mxu0
  %v2153 = vadd.f32 %v2028, %v2152
  %2154 = vmatmul.f32.gmra.mxu0 %v53
  %v2155 = vpop.f32.mrf.mxu0
  %v2156 = vadd.f32 %v2031, %v2155
  %2157 = vmatmul.f32.gmra.mxu0 %v62
  %v2158 = vpop.f32.mrf.mxu0
  %v2159 = vadd.f32 %v2034, %v2158
  %2160 = vmatmul.f32.gmra.mxu0 %v71
  %v2161 = vpop.f32.mrf.mxu0
  %v2162 = vadd.f32 %v2037, %v2161
  %2163 = vmatmul.f32.gmra.mxu0 %v80
  %v2164 = vpop.f32.mrf.mxu0
  %v2165 = vadd.f32 %v2040, %v2164
  %2166 = vmatmul.f32.gmra.mxu0 %v89
  %v2167 = vpop.f32.mrf.mxu0
  %v2168 = vadd.f32 %v2043, %v2167
  %2169 = vmatmul.f32.gmra.mxu0 %v98
  %v2170 = vpop.f32.mrf.mxu0
  %v2171 = vadd.f32 %v2046, %v2170
  %2172 = vmatmul.f32.gmra.mxu0 %v107
  %v2173 = vpop.f32.mrf.mxu0
  %v2174 = vadd.f32 %v2049, %v2173
  %2175 = vmatmul.f32.gmra.mxu0 %v116
  %v2176 = vpop.f32.mrf.mxu0
  %v2177 = vadd.f32 %v2052, %v2176
  %2178 = vmatmul.f32.gmra.mxu0 %v125
  %v2179 = vpop.f32.mrf.mxu0
  %v2180 = vadd.f32 %v2055, %v2179
  %2181 = vmatmul.f32.gmra.mxu0 %v134
  %v2182 = vpop.f32.mrf.mxu0
  %v2183 = vadd.f32 %v2058, %v2182
  %2184 = vmatmul.f32.gmra.mxu0 %v143
  %v2185 = vpop.f32.mrf.mxu0
  %v2186 = vadd.f32 %v2061, %v2185
  %2187 = vmatmul.f32.gmra.mxu0 %v152
  %v2188 = vpop.f32.mrf.mxu0
  %v2189 = vadd.f32 %v2064, %v2188
  %2190 = vmatmul.f32.gmra.mxu0 %v161
  %v2191 = vpop.f32.mrf.mxu0
  %v2192 = vadd.f32 %v2067, %v2191
  %2193 = vmatmul.f32.gmra.mxu0 %v170
  %v2194 = vpop.f32.mrf.mxu0
  %v2195 = vadd.f32 %v2070, %v2194
  %2196 = vmatmul.f32.gmra.mxu0 %v179
  %v2197 = vpop.f32.mrf.mxu0
  %v2198 = vadd.f32 %v2073, %v2197
  %2199 = vmatmul.f32.gmra.mxu0 %v188
  %v2200 = vpop.f32.mrf.mxu0
  %v2201 = vadd.f32 %v2076, %v2200
  %2202 = vmatmul.f32.gmra.mxu0 %v197
  %v2203 = vpop.f32.mrf.mxu0
  %v2204 = vadd.f32 %v2079, %v2203
  %2205 = vmatmul.f32.gmra.mxu0 %v206
  %v2206 = vpop.f32.mrf.mxu0
  %v2207 = vadd.f32 %v2082, %v2206
  %2208 = vmatmul.f32.gmra.mxu0 %v215
  %v2209 = vpop.f32.mrf.mxu0
  %v2210 = vadd.f32 %v2085, %v2209
  %2211 = vmatmul.f32.gmra.mxu0 %v224
  %v2212 = vpop.f32.mrf.mxu0
  %v2213 = vadd.f32 %v2088, %v2212
  %2214 = vmatmul.f32.gmra.mxu0 %v233
  %v2215 = vpop.f32.mrf.mxu0
  %v2216 = vadd.f32 %v2091, %v2215
  %2217 = vmatmul.f32.gmra.mxu0 %v242
  %v2218 = vpop.f32.mrf.mxu0
  %v2219 = vadd.f32 %v2094, %v2218
  %2220 = vmatmul.f32.gmra.mxu0 %v251
  %v2221 = vpop.f32.mrf.mxu0
  %v2222 = vadd.f32 %v2097, %v2221
  %2223 = vmatmul.f32.gmra.mxu0 %v260
  %v2224 = vpop.f32.mrf.mxu0
  %v2225 = vadd.f32 %v2100, %v2224
  %2226 = vmatmul.f32.gmra.mxu0 %v269
  %v2227 = vpop.f32.mrf.mxu0
  %v2228 = vadd.f32 %v2103, %v2227
  %2229 = vmatmul.f32.gmra.mxu0 %v278
  %v2230 = vpop.f32.mrf.mxu0
  %v2231 = vadd.f32 %v2106, %v2230
  %2232 = vmatmul.f32.gmra.mxu0 %v287
  %v2233 = vpop.f32.mrf.mxu0
  %v2234 = vadd.f32 %v2109, %v2233
  %2235 = vmatmul.f32.gmra.mxu0 %v296
  %v2236 = vpop.f32.mrf.mxu0
  %v2237 = vadd.f32 %v2112, %v2236
  %2238 = vmatmul.f32.gmra.mxu0 %v305
  %v2239 = vpop.f32.mrf.mxu0
  %v2240 = vadd.f32 %v2115, %v2239
  %2241 = vmatmul.f32.gmra.mxu0 %v314
  %v2242 = vpop.f32.mrf.mxu0
  %v2243 = vadd.f32 %v2118, %v2242
  %2244 = vmatmul.f32.gmra.mxu0 %v323
  %v2245 = vpop.f32.mrf.mxu0
  %v2246 = vadd.f32 %v2121, %v2245
  %2247 = vmatmul.f32.gmra.mxu0 %v332
  %v2248 = vpop.f32.mrf.mxu0
  %v2249 = vadd.f32 %v2124, %v2248
  %2250 = vdwg.mxu0
  %2251 = vmatpush.msra.mxu0 %v497
  %2252 = vmatpush.msra.mxu0 %v495
  %2253 = vmatpush.msra.mxu0 %v493
  %2254 = vmatpush.msra.mxu0 %v491
  %2255 = vmatpush.msra.mxu0 %v489
  %2256 = vmatpush.msra.mxu0 %v487
  %2257 = vmatpush.msra.mxu0 %v485
  %2258 = vmatpush.msra.mxu0 %v483
  %2259 = vmatpush.msra.mxu0 %v481
  %2260 = vmatpush.msra.mxu0 %v479
  %2261 = vmatpush.msra.mxu0 %v477
  %2262 = vmatpush.msra.mxu0 %v475
  %2263 = vmatpush.msra.mxu0 %v473
  %2264 = vmatpush.msra.mxu0 %v471
  %2265 = vmatpush.msra.mxu0 %v469
  %2266 = vmatpush.msra.mxu0 %v467
  %2267 = vmatmul.f32.gmra.mxu0 %v18
  %v2268 = vpop.f32.mrf.mxu0
  %v2269 = vadd.f32 %v2144, %v2268
  %2270 = vmatmul.f32.gmra.mxu0 %v27
  %v2271 = vpop.f32.mrf.mxu0
  %v2272 = vadd.f32 %v2147, %v2271
  %2273 = vmatmul.f32.gmra.mxu0 %v36
  %v2274 = vpop.f32.mrf.mxu0
  %v2275 = vadd.f32 %v2150, %v2274
  %2276 = vmatmul.f32.gmra.mxu0 %v45
  %v2277 = vpop.f32.mrf.mxu0
  %v2278 = vadd.f32 %v2153, %v2277
  %2279 = vmatmul.f32.gmra.mxu0 %v54
  %v2280 = vpop.f32.mrf.mxu0
  %v2281 = vadd.f32 %v2156, %v2280
  %2282 = vmatmul.f32.gmra.mxu0 %v63
  %v2283 = vpop.f32.mrf.mxu0
  %v2284 = vadd.f32 %v2159, %v2283
  %2285 = vmatmul.f32.gmra.mxu0 %v72
  %v2286 = vpop.f32.mrf.mxu0
  %v2287 = vadd.f32 %v2162, %v2286
  %2288 = vmatmul.f32.gmra.mxu0 %v81
  %v2289 = vpop.f32.mrf.mxu0
  %v2290 = vadd.f32 %v2165, %v2289
  %2291 = vmatmul.f32.gmra.mxu0 %v90
  %v2292 = vpop.f32.mrf.mxu0
  %v2293 = vadd.f32 %v2168, %v2292
  %2294 = vmatmul.f32.gmra.mxu0 %v99
  %v2295 = vpop.f32.mrf.mxu0
  %v2296 = vadd.f32 %v2171, %v2295
  %2297 = vmatmul.f32.gmra.mxu0 %v108
  %v2298 = vpop.f32.mrf.mxu0
  %v2299 = vadd.f32 %v2174, %v2298
  %2300 = vmatmul.f32.gmra.mxu0 %v117
  %v2301 = vpop.f32.mrf.mxu0
  %v2302 = vadd.f32 %v2177, %v2301
  %2303 = vmatmul.f32.gmra.mxu0 %v126
  %v2304 = vpop.f32.mrf.mxu0
  %v2305 = vadd.f32 %v2180, %v2304
  %2306 = vmatmul.f32.gmra.mxu0 %v135
  %v2307 = vpop.f32.mrf.mxu0
  %v2308 = vadd.f32 %v2183, %v2307
  %2309 = vmatmul.f32.gmra.mxu0 %v144
  %v2310 = vpop.f32.mrf.mxu0
  %v2311 = vadd.f32 %v2186, %v2310
  %2312 = vmatmul.f32.gmra.mxu0 %v153
  %v2313 = vpop.f32.mrf.mxu0
  %v2314 = vadd.f32 %v2189, %v2313
  %2315 = vmatmul.f32.gmra.mxu0 %v162
  %v2316 = vpop.f32.mrf.mxu0
  %v2317 = vadd.f32 %v2192, %v2316
  %2318 = vmatmul.f32.gmra.mxu0 %v171
  %v2319 = vpop.f32.mrf.mxu0
  %v2320 = vadd.f32 %v2195, %v2319
  %2321 = vmatmul.f32.gmra.mxu0 %v180
  %v2322 = vpop.f32.mrf.mxu0
  %v2323 = vadd.f32 %v2198, %v2322
  %2324 = vmatmul.f32.gmra.mxu0 %v189
  %v2325 = vpop.f32.mrf.mxu0
  %v2326 = vadd.f32 %v2201, %v2325
  %2327 = vmatmul.f32.gmra.mxu0 %v198
  %v2328 = vpop.f32.mrf.mxu0
  %v2329 = vadd.f32 %v2204, %v2328
  %2330 = vmatmul.f32.gmra.mxu0 %v207
  %v2331 = vpop.f32.mrf.mxu0
  %v2332 = vadd.f32 %v2207, %v2331
  %2333 = vmatmul.f32.gmra.mxu0 %v216
  %v2334 = vpop.f32.mrf.mxu0
  %v2335 = vadd.f32 %v2210, %v2334
  %2336 = vmatmul.f32.gmra.mxu0 %v225
  %v2337 = vpop.f32.mrf.mxu0
  %v2338 = vadd.f32 %v2213, %v2337
  %2339 = vmatmul.f32.gmra.mxu0 %v234
  %v2340 = vpop.f32.mrf.mxu0
  %v2341 = vadd.f32 %v2216, %v2340
  %2342 = vmatmul.f32.gmra.mxu0 %v243
  %v2343 = vpop.f32.mrf.mxu0
  %v2344 = vadd.f32 %v2219, %v2343
  %2345 = vmatmul.f32.gmra.mxu0 %v252
  %v2346 = vpop.f32.mrf.mxu0
  %v2347 = vadd.f32 %v2222, %v2346
  %2348 = vmatmul.f32.gmra.mxu0 %v261
  %v2349 = vpop.f32.mrf.mxu0
  %v2350 = vadd.f32 %v2225, %v2349
  %2351 = vmatmul.f32.gmra.mxu0 %v270
  %v2352 = vpop.f32.mrf.mxu0
  %v2353 = vadd.f32 %v2228, %v2352
  %2354 = vmatmul.f32.gmra.mxu0 %v279
  %v2355 = vpop.f32.mrf.mxu0
  %v2356 = vadd.f32 %v2231, %v2355
  %2357 = vmatmul.f32.gmra.mxu0 %v288
  %v2358 = vpop.f32.mrf.mxu0
  %v2359 = vadd.f32 %v2234, %v2358
  %2360 = vmatmul.f32.gmra.mxu0 %v297
  %v2361 = vpop.f32.mrf.mxu0
  %v2362 = vadd.f32 %v2237, %v2361
  %2363 = vmatmul.f32.gmra.mxu0 %v306
  %v2364 = vpop.f32.mrf.mxu0
  %v2365 = vadd.f32 %v2240, %v2364
  %2366 = vmatmul.f32.gmra.mxu0 %v315
  %v2367 = vpop.f32.mrf.mxu0
  %v2368 = vadd.f32 %v2243, %v2367
  %2369 = vmatmul.f32.gmra.mxu0 %v324
  %v2370 = vpop.f32.mrf.mxu0
  %v2371 = vadd.f32 %v2246, %v2370
  %2372 = vmatmul.f32.gmra.mxu0 %v333
  %v2373 = vpop.f32.mrf.mxu0
  %v2374 = vadd.f32 %v2249, %v2373
  %2375 = vdwg.mxu0
  %2376 = vmatpush.msra.mxu0 %v529
  %2377 = vmatpush.msra.mxu0 %v527
  %2378 = vmatpush.msra.mxu0 %v525
  %2379 = vmatpush.msra.mxu0 %v523
  %2380 = vmatpush.msra.mxu0 %v521
  %2381 = vmatpush.msra.mxu0 %v519
  %2382 = vmatpush.msra.mxu0 %v517
  %2383 = vmatpush.msra.mxu0 %v515
  %2384 = vmatpush.msra.mxu0 %v513
  %2385 = vmatpush.msra.mxu0 %v511
  %2386 = vmatpush.msra.mxu0 %v509
  %2387 = vmatpush.msra.mxu0 %v507
  %2388 = vmatpush.msra.mxu0 %v505
  %2389 = vmatpush.msra.mxu0 %v503
  %2390 = vmatpush.msra.mxu0 %v501
  %2391 = vmatpush.msra.mxu0 %v499
  %2392 = vmatmul.f32.gmra.mxu0 %v19
  %v2393 = vpop.f32.mrf.mxu0
  %v2394 = vadd.f32 %v2269, %v2393
  %2395 = vmatmul.f32.gmra.mxu0 %v28
  %v2396 = vpop.f32.mrf.mxu0
  %v2397 = vadd.f32 %v2272, %v2396
  %2398 = vmatmul.f32.gmra.mxu0 %v37
  %v2399 = vpop.f32.mrf.mxu0
  %v2400 = vadd.f32 %v2275, %v2399
  %2401 = vmatmul.f32.gmra.mxu0 %v46
  %v2402 = vpop.f32.mrf.mxu0
  %v2403 = vadd.f32 %v2278, %v2402
  %2404 = vmatmul.f32.gmra.mxu0 %v55
  %v2405 = vpop.f32.mrf.mxu0
  %v2406 = vadd.f32 %v2281, %v2405
  %2407 = vmatmul.f32.gmra.mxu0 %v64
  %v2408 = vpop.f32.mrf.mxu0
  %v2409 = vadd.f32 %v2284, %v2408
  %2410 = vmatmul.f32.gmra.mxu0 %v73
  %v2411 = vpop.f32.mrf.mxu0
  %v2412 = vadd.f32 %v2287, %v2411
  %2413 = vmatmul.f32.gmra.mxu0 %v82
  %v2414 = vpop.f32.mrf.mxu0
  %v2415 = vadd.f32 %v2290, %v2414
  %2416 = vmatmul.f32.gmra.mxu0 %v91
  %v2417 = vpop.f32.mrf.mxu0
  %v2418 = vadd.f32 %v2293, %v2417
  %2419 = vmatmul.f32.gmra.mxu0 %v100
  %v2420 = vpop.f32.mrf.mxu0
  %v2421 = vadd.f32 %v2296, %v2420
  %2422 = vmatmul.f32.gmra.mxu0 %v109
  %v2423 = vpop.f32.mrf.mxu0
  %v2424 = vadd.f32 %v2299, %v2423
  %2425 = vmatmul.f32.gmra.mxu0 %v118
  %v2426 = vpop.f32.mrf.mxu0
  %v2427 = vadd.f32 %v2302, %v2426
  %2428 = vmatmul.f32.gmra.mxu0 %v127
  %v2429 = vpop.f32.mrf.mxu0
  %v2430 = vadd.f32 %v2305, %v2429
  %2431 = vmatmul.f32.gmra.mxu0 %v136
  %v2432 = vpop.f32.mrf.mxu0
  %v2433 = vadd.f32 %v2308, %v2432
  %2434 = vmatmul.f32.gmra.mxu0 %v145
  %v2435 = vpop.f32.mrf.mxu0
  %v2436 = vadd.f32 %v2311, %v2435
  %2437 = vmatmul.f32.gmra.mxu0 %v154
  %v2438 = vpop.f32.mrf.mxu0
  %v2439 = vadd.f32 %v2314, %v2438
  %2440 = vmatmul.f32.gmra.mxu0 %v163
  %v2441 = vpop.f32.mrf.mxu0
  %v2442 = vadd.f32 %v2317, %v2441
  %2443 = vmatmul.f32.gmra.mxu0 %v172
  %v2444 = vpop.f32.mrf.mxu0
  %v2445 = vadd.f32 %v2320, %v2444
  %2446 = vmatmul.f32.gmra.mxu0 %v181
  %v2447 = vpop.f32.mrf.mxu0
  %v2448 = vadd.f32 %v2323, %v2447
  %2449 = vmatmul.f32.gmra.mxu0 %v190
  %v2450 = vpop.f32.mrf.mxu0
  %v2451 = vadd.f32 %v2326, %v2450
  %2452 = vmatmul.f32.gmra.mxu0 %v199
  %v2453 = vpop.f32.mrf.mxu0
  %v2454 = vadd.f32 %v2329, %v2453
  %2455 = vmatmul.f32.gmra.mxu0 %v208
  %v2456 = vpop.f32.mrf.mxu0
  %v2457 = vadd.f32 %v2332, %v2456
  %2458 = vmatmul.f32.gmra.mxu0 %v217
  %v2459 = vpop.f32.mrf.mxu0
  %v2460 = vadd.f32 %v2335, %v2459
  %2461 = vmatmul.f32.gmra.mxu0 %v226
  %v2462 = vpop.f32.mrf.mxu0
  %v2463 = vadd.f32 %v2338, %v2462
  %2464 = vmatmul.f32.gmra.mxu0 %v235
  %v2465 = vpop.f32.mrf.mxu0
  %v2466 = vadd.f32 %v2341, %v2465
  %2467 = vmatmul.f32.gmra.mxu0 %v244
  %v2468 = vpop.f32.mrf.mxu0
  %v2469 = vadd.f32 %v2344, %v2468
  %2470 = vmatmul.f32.gmra.mxu0 %v253
  %v2471 = vpop.f32.mrf.mxu0
  %v2472 = vadd.f32 %v2347, %v2471
  %2473 = vmatmul.f32.gmra.mxu0 %v262
  %v2474 = vpop.f32.mrf.mxu0
  %v2475 = vadd.f32 %v2350, %v2474
  %2476 = vmatmul.f32.gmra.mxu0 %v271
  %v2477 = vpop.f32.mrf.mxu0
  %v2478 = vadd.f32 %v2353, %v2477
  %2479 = vmatmul.f32.gmra.mxu0 %v280
  %v2480 = vpop.f32.mrf.mxu0
  %v2481 = vadd.f32 %v2356, %v2480
  %2482 = vmatmul.f32.gmra.mxu0 %v289
  %v2483 = vpop.f32.mrf.mxu0
  %v2484 = vadd.f32 %v2359, %v2483
  %2485 = vmatmul.f32.gmra.mxu0 %v298
  %v2486 = vpop.f32.mrf.mxu0
  %v2487 = vadd.f32 %v2362, %v2486
  %2488 = vmatmul.f32.gmra.mxu0 %v307
  %v2489 = vpop.f32.mrf.mxu0
  %v2490 = vadd.f32 %v2365, %v2489
  %2491 = vmatmul.f32.gmra.mxu0 %v316
  %v2492 = vpop.f32.mrf.mxu0
  %v2493 = vadd.f32 %v2368, %v2492
  %2494 = vmatmul.f32.gmra.mxu0 %v325
  %v2495 = vpop.f32.mrf.mxu0
  %v2496 = vadd.f32 %v2371, %v2495
  %2497 = vmatmul.f32.gmra.mxu0 %v334
  %v2498 = vpop.f32.mrf.mxu0
  %v2499 = vadd.f32 %v2374, %v2498
  %2500 = vdwg.mxu0
  %2501 = vmatpush.msra.mxu0 %v561
  %2502 = vmatpush.msra.mxu0 %v559
  %2503 = vmatpush.msra.mxu0 %v557
  %2504 = vmatpush.msra.mxu0 %v555
  %2505 = vmatpush.msra.mxu0 %v553
  %2506 = vmatpush.msra.mxu0 %v551
  %2507 = vmatpush.msra.mxu0 %v549
  %2508 = vmatpush.msra.mxu0 %v547
  %2509 = vmatpush.msra.mxu0 %v545
  %2510 = vmatpush.msra.mxu0 %v543
  %2511 = vmatpush.msra.mxu0 %v541
  %2512 = vmatpush.msra.mxu0 %v539
  %2513 = vmatpush.msra.mxu0 %v537
  %2514 = vmatpush.msra.mxu0 %v535
  %2515 = vmatpush.msra.mxu0 %v533
  %2516 = vmatpush.msra.mxu0 %v531
  %2517 = vmatmul.f32.gmra.mxu0 %v20
  %v2518 = vpop.f32.mrf.mxu0
  %v2519 = vadd.f32 %v2394, %v2518
  %2520 = vmatmul.f32.gmra.mxu0 %v29
  %v2521 = vpop.f32.mrf.mxu0
  %v2522 = vadd.f32 %v2397, %v2521
  %2523 = vmatmul.f32.gmra.mxu0 %v38
  %v2524 = vpop.f32.mrf.mxu0
  %v2525 = vadd.f32 %v2400, %v2524
  %2526 = vmatmul.f32.gmra.mxu0 %v47
  %v2527 = vpop.f32.mrf.mxu0
  %v2528 = vadd.f32 %v2403, %v2527
  %2529 = vmatmul.f32.gmra.mxu0 %v56
  %v2530 = vpop.f32.mrf.mxu0
  %v2531 = vadd.f32 %v2406, %v2530
  %2532 = vmatmul.f32.gmra.mxu0 %v65
  %v2533 = vpop.f32.mrf.mxu0
  %v2534 = vadd.f32 %v2409, %v2533
  %2535 = vmatmul.f32.gmra.mxu0 %v74
  %v2536 = vpop.f32.mrf.mxu0
  %v2537 = vadd.f32 %v2412, %v2536
  %2538 = vmatmul.f32.gmra.mxu0 %v83
  %v2539 = vpop.f32.mrf.mxu0
  %v2540 = vadd.f32 %v2415, %v2539
  %2541 = vmatmul.f32.gmra.mxu0 %v92
  %v2542 = vpop.f32.mrf.mxu0
  %v2543 = vadd.f32 %v2418, %v2542
  %2544 = vmatmul.f32.gmra.mxu0 %v101
  %v2545 = vpop.f32.mrf.mxu0
  %v2546 = vadd.f32 %v2421, %v2545
  %2547 = vmatmul.f32.gmra.mxu0 %v110
  %v2548 = vpop.f32.mrf.mxu0
  %v2549 = vadd.f32 %v2424, %v2548
  %2550 = vmatmul.f32.gmra.mxu0 %v119
  %v2551 = vpop.f32.mrf.mxu0
  %v2552 = vadd.f32 %v2427, %v2551
  %2553 = vmatmul.f32.gmra.mxu0 %v128
  %v2554 = vpop.f32.mrf.mxu0
  %v2555 = vadd.f32 %v2430, %v2554
  %2556 = vmatmul.f32.gmra.mxu0 %v137
  %v2557 = vpop.f32.mrf.mxu0
  %v2558 = vadd.f32 %v2433, %v2557
  %2559 = vmatmul.f32.gmra.mxu0 %v146
  %v2560 = vpop.f32.mrf.mxu0
  %v2561 = vadd.f32 %v2436, %v2560
  %2562 = vmatmul.f32.gmra.mxu0 %v155
  %v2563 = vpop.f32.mrf.mxu0
  %v2564 = vadd.f32 %v2439, %v2563
  %2565 = vmatmul.f32.gmra.mxu0 %v164
  %v2566 = vpop.f32.mrf.mxu0
  %v2567 = vadd.f32 %v2442, %v2566
  %2568 = vmatmul.f32.gmra.mxu0 %v173
  %v2569 = vpop.f32.mrf.mxu0
  %v2570 = vadd.f32 %v2445, %v2569
  %2571 = vmatmul.f32.gmra.mxu0 %v182
  %v2572 = vpop.f32.mrf.mxu0
  %v2573 = vadd.f32 %v2448, %v2572
  %2574 = vmatmul.f32.gmra.mxu0 %v191
  %v2575 = vpop.f32.mrf.mxu0
  %v2576 = vadd.f32 %v2451, %v2575
  %2577 = vmatmul.f32.gmra.mxu0 %v200
  %v2578 = vpop.f32.mrf.mxu0
  %v2579 = vadd.f32 %v2454, %v2578
  %2580 = vmatmul.f32.gmra.mxu0 %v209
  %v2581 = vpop.f32.mrf.mxu0
  %v2582 = vadd.f32 %v2457, %v2581
  %2583 = vmatmul.f32.gmra.mxu0 %v218
  %v2584 = vpop.f32.mrf.mxu0
  %v2585 = vadd.f32 %v2460, %v2584
  %2586 = vmatmul.f32.gmra.mxu0 %v227
  %v2587 = vpop.f32.mrf.mxu0
  %v2588 = vadd.f32 %v2463, %v2587
  %2589 = vmatmul.f32.gmra.mxu0 %v236
  %v2590 = vpop.f32.mrf.mxu0
  %v2591 = vadd.f32 %v2466, %v2590
  %2592 = vmatmul.f32.gmra.mxu0 %v245
  %v2593 = vpop.f32.mrf.mxu0
  %v2594 = vadd.f32 %v2469, %v2593
  %2595 = vmatmul.f32.gmra.mxu0 %v254
  %v2596 = vpop.f32.mrf.mxu0
  %v2597 = vadd.f32 %v2472, %v2596
  %2598 = vmatmul.f32.gmra.mxu0 %v263
  %v2599 = vpop.f32.mrf.mxu0
  %v2600 = vadd.f32 %v2475, %v2599
  %2601 = vmatmul.f32.gmra.mxu0 %v272
  %v2602 = vpop.f32.mrf.mxu0
  %v2603 = vadd.f32 %v2478, %v2602
  %2604 = vmatmul.f32.gmra.mxu0 %v281
  %v2605 = vpop.f32.mrf.mxu0
  %v2606 = vadd.f32 %v2481, %v2605
  %2607 = vmatmul.f32.gmra.mxu0 %v290
  %v2608 = vpop.f32.mrf.mxu0
  %v2609 = vadd.f32 %v2484, %v2608
  %2610 = vmatmul.f32.gmra.mxu0 %v299
  %v2611 = vpop.f32.mrf.mxu0
  %v2612 = vadd.f32 %v2487, %v2611
  %2613 = vmatmul.f32.gmra.mxu0 %v308
  %v2614 = vpop.f32.mrf.mxu0
  %v2615 = vadd.f32 %v2490, %v2614
  %2616 = vmatmul.f32.gmra.mxu0 %v317
  %v2617 = vpop.f32.mrf.mxu0
  %v2618 = vadd.f32 %v2493, %v2617
  %2619 = vmatmul.f32.gmra.mxu0 %v326
  %v2620 = vpop.f32.mrf.mxu0
  %v2621 = vadd.f32 %v2496, %v2620
  %2622 = vmatmul.f32.gmra.mxu0 %v335
  %v2623 = vpop.f32.mrf.mxu0
  %v2624 = vadd.f32 %v2499, %v2623
  %2625 = vdwg.mxu0
  %2626 = vmatpush.msra.mxu0 %v593
  %2627 = vmatpush.msra.mxu0 %v591
  %2628 = vmatpush.msra.mxu0 %v589
  %2629 = vmatpush.msra.mxu0 %v587
  %2630 = vmatpush.msra.mxu0 %v585
  %2631 = vmatpush.msra.mxu0 %v583
  %2632 = vmatpush.msra.mxu0 %v581
  %2633 = vmatpush.msra.mxu0 %v579
  %2634 = vmatpush.msra.mxu0 %v577
  %2635 = vmatpush.msra.mxu0 %v575
  %2636 = vmatpush.msra.mxu0 %v573
  %2637 = vmatpush.msra.mxu0 %v571
  %2638 = vmatpush.msra.mxu0 %v569
  %2639 = vmatpush.msra.mxu0 %v567
  %2640 = vmatpush.msra.mxu0 %v565
  %2641 = vmatpush.msra.mxu0 %v563
  %2642 = vmatmul.f32.gmra.mxu0 %v21
  %v2643 = vpop.f32.mrf.mxu0
  %v2644 = vadd.f32 %v2519, %v2643
  %2645 = vmatmul.f32.gmra.mxu0 %v30
  %v2646 = vpop.f32.mrf.mxu0
  %v2647 = vadd.f32 %v2522, %v2646
  %2648 = vmatmul.f32.gmra.mxu0 %v39
  %v2649 = vpop.f32.mrf.mxu0
  %v2650 = vadd.f32 %v2525, %v2649
  %2651 = vmatmul.f32.gmra.mxu0 %v48
  %v2652 = vpop.f32.mrf.mxu0
  %v2653 = vadd.f32 %v2528, %v2652
  %2654 = vmatmul.f32.gmra.mxu0 %v57
  %v2655 = vpop.f32.mrf.mxu0
  %v2656 = vadd.f32 %v2531, %v2655
  %2657 = vmatmul.f32.gmra.mxu0 %v66
  %v2658 = vpop.f32.mrf.mxu0
  %v2659 = vadd.f32 %v2534, %v2658
  %2660 = vmatmul.f32.gmra.mxu0 %v75
  %v2661 = vpop.f32.mrf.mxu0
  %v2662 = vadd.f32 %v2537, %v2661
  %2663 = vmatmul.f32.gmra.mxu0 %v84
  %v2664 = vpop.f32.mrf.mxu0
  %v2665 = vadd.f32 %v2540, %v2664
  %2666 = vmatmul.f32.gmra.mxu0 %v93
  %v2667 = vpop.f32.mrf.mxu0
  %v2668 = vadd.f32 %v2543, %v2667
  %2669 = vmatmul.f32.gmra.mxu0 %v102
  %v2670 = vpop.f32.mrf.mxu0
  %v2671 = vadd.f32 %v2546, %v2670
  %2672 = vmatmul.f32.gmra.mxu0 %v111
  %v2673 = vpop.f32.mrf.mxu0
  %v2674 = vadd.f32 %v2549, %v2673
  %2675 = vmatmul.f32.gmra.mxu0 %v120
  %v2676 = vpop.f32.mrf.mxu0
  %v2677 = vadd.f32 %v2552, %v2676
  %2678 = vmatmul.f32.gmra.mxu0 %v129
  %v2679 = vpop.f32.mrf.mxu0
  %v2680 = vadd.f32 %v2555, %v2679
  %2681 = vmatmul.f32.gmra.mxu0 %v138
  %v2682 = vpop.f32.mrf.mxu0
  %v2683 = vadd.f32 %v2558, %v2682
  %2684 = vmatmul.f32.gmra.mxu0 %v147
  %v2685 = vpop.f32.mrf.mxu0
  %v2686 = vadd.f32 %v2561, %v2685
  %2687 = vmatmul.f32.gmra.mxu0 %v156
  %v2688 = vpop.f32.mrf.mxu0
  %v2689 = vadd.f32 %v2564, %v2688
  %2690 = vmatmul.f32.gmra.mxu0 %v165
  %v2691 = vpop.f32.mrf.mxu0
  %v2692 = vadd.f32 %v2567, %v2691
  %2693 = vmatmul.f32.gmra.mxu0 %v174
  %v2694 = vpop.f32.mrf.mxu0
  %v2695 = vadd.f32 %v2570, %v2694
  %2696 = vmatmul.f32.gmra.mxu0 %v183
  %v2697 = vpop.f32.mrf.mxu0
  %v2698 = vadd.f32 %v2573, %v2697
  %2699 = vmatmul.f32.gmra.mxu0 %v192
  %v2700 = vpop.f32.mrf.mxu0
  %v2701 = vadd.f32 %v2576, %v2700
  %2702 = vmatmul.f32.gmra.mxu0 %v201
  %v2703 = vpop.f32.mrf.mxu0
  %v2704 = vadd.f32 %v2579, %v2703
  %2705 = vmatmul.f32.gmra.mxu0 %v210
  %v2706 = vpop.f32.mrf.mxu0
  %v2707 = vadd.f32 %v2582, %v2706
  %2708 = vmatmul.f32.gmra.mxu0 %v219
  %v2709 = vpop.f32.mrf.mxu0
  %v2710 = vadd.f32 %v2585, %v2709
  %2711 = vmatmul.f32.gmra.mxu0 %v228
  %v2712 = vpop.f32.mrf.mxu0
  %v2713 = vadd.f32 %v2588, %v2712
  %2714 = vmatmul.f32.gmra.mxu0 %v237
  %v2715 = vpop.f32.mrf.mxu0
  %v2716 = vadd.f32 %v2591, %v2715
  %2717 = vmatmul.f32.gmra.mxu0 %v246
  %v2718 = vpop.f32.mrf.mxu0
  %v2719 = vadd.f32 %v2594, %v2718
  %2720 = vmatmul.f32.gmra.mxu0 %v255
  %v2721 = vpop.f32.mrf.mxu0
  %v2722 = vadd.f32 %v2597, %v2721
  %2723 = vmatmul.f32.gmra.mxu0 %v264
  %v2724 = vpop.f32.mrf.mxu0
  %v2725 = vadd.f32 %v2600, %v2724
  %2726 = vmatmul.f32.gmra.mxu0 %v273
  %v2727 = vpop.f32.mrf.mxu0
  %v2728 = vadd.f32 %v2603, %v2727
  %2729 = vmatmul.f32.gmra.mxu0 %v282
  %v2730 = vpop.f32.mrf.mxu0
  %v2731 = vadd.f32 %v2606, %v2730
  %2732 = vmatmul.f32.gmra.mxu0 %v291
  %v2733 = vpop.f32.mrf.mxu0
  %v2734 = vadd.f32 %v2609, %v2733
  %2735 = vmatmul.f32.gmra.mxu0 %v300
  %v2736 = vpop.f32.mrf.mxu0
  %v2737 = vadd.f32 %v2612, %v2736
  %2738 = vmatmul.f32.gmra.mxu0 %v309
  %v2739 = vpop.f32.mrf.mxu0
  %v2740 = vadd.f32 %v2615, %v2739
  %2741 = vmatmul.f32.gmra.mxu0 %v318
  %v2742 = vpop.f32.mrf.mxu0
  %v2743 = vadd.f32 %v2618, %v2742
  %2744 = vmatmul.f32.gmra.mxu0 %v327
  %v2745 = vpop.f32.mrf.mxu0
  %v2746 = vadd.f32 %v2621, %v2745
  %2747 = vmatmul.f32.gmra.mxu0 %v336
  %v2748 = vpop.f32.mrf.mxu0
  %v2749 = vadd.f32 %v2624, %v2748
  %2750 = vdwg.mxu0
  %2751 = vmatpush.msra.mxu0 %v625
  %2752 = vmatpush.msra.mxu0 %v623
  %2753 = vmatpush.msra.mxu0 %v621
  %2754 = vmatpush.msra.mxu0 %v619
  %2755 = vmatpush.msra.mxu0 %v617
  %2756 = vmatpush.msra.mxu0 %v615
  %2757 = vmatpush.msra.mxu0 %v613
  %2758 = vmatpush.msra.mxu0 %v611
  %2759 = vmatpush.msra.mxu0 %v609
  %2760 = vmatpush.msra.mxu0 %v607
  %2761 = vmatpush.msra.mxu0 %v605
  %2762 = vmatpush.msra.mxu0 %v603
  %2763 = vmatpush.msra.mxu0 %v601
  %2764 = vmatpush.msra.mxu0 %v599
  %2765 = vmatpush.msra.mxu0 %v597
  %2766 = vmatpush.msra.mxu0 %v595
  %2767 = vmatmul.f32.gmra.mxu0 %v22
  %v2768 = vpop.f32.mrf.mxu0
  %v2769 = vadd.f32 %v2644, %v2768
  %2770 = vmatmul.f32.gmra.mxu0 %v31
  %v2771 = vpop.f32.mrf.mxu0
  %v2772 = vadd.f32 %v2647, %v2771
  %2773 = vmatmul.f32.gmra.mxu0 %v40
  %v2774 = vpop.f32.mrf.mxu0
  %v2775 = vadd.f32 %v2650, %v2774
  %2776 = vmatmul.f32.gmra.mxu0 %v49
  %v2777 = vpop.f32.mrf.mxu0
  %v2778 = vadd.f32 %v2653, %v2777
  %2779 = vmatmul.f32.gmra.mxu0 %v58
  %v2780 = vpop.f32.mrf.mxu0
  %v2781 = vadd.f32 %v2656, %v2780
  %2782 = vmatmul.f32.gmra.mxu0 %v67
  %v2783 = vpop.f32.mrf.mxu0
  %v2784 = vadd.f32 %v2659, %v2783
  %2785 = vmatmul.f32.gmra.mxu0 %v76
  %v2786 = vpop.f32.mrf.mxu0
  %v2787 = vadd.f32 %v2662, %v2786
  %2788 = vmatmul.f32.gmra.mxu0 %v85
  %v2789 = vpop.f32.mrf.mxu0
  %v2790 = vadd.f32 %v2665, %v2789
  %2791 = vmatmul.f32.gmra.mxu0 %v94
  %v2792 = vpop.f32.mrf.mxu0
  %v2793 = vadd.f32 %v2668, %v2792
  %2794 = vmatmul.f32.gmra.mxu0 %v103
  %v2795 = vpop.f32.mrf.mxu0
  %v2796 = vadd.f32 %v2671, %v2795
  %2797 = vmatmul.f32.gmra.mxu0 %v112
  %v2798 = vpop.f32.mrf.mxu0
  %v2799 = vadd.f32 %v2674, %v2798
  %2800 = vmatmul.f32.gmra.mxu0 %v121
  %v2801 = vpop.f32.mrf.mxu0
  %v2802 = vadd.f32 %v2677, %v2801
  %2803 = vmatmul.f32.gmra.mxu0 %v130
  %v2804 = vpop.f32.mrf.mxu0
  %v2805 = vadd.f32 %v2680, %v2804
  %2806 = vmatmul.f32.gmra.mxu0 %v139
  %v2807 = vpop.f32.mrf.mxu0
  %v2808 = vadd.f32 %v2683, %v2807
  %2809 = vmatmul.f32.gmra.mxu0 %v148
  %v2810 = vpop.f32.mrf.mxu0
  %v2811 = vadd.f32 %v2686, %v2810
  %2812 = vmatmul.f32.gmra.mxu0 %v157
  %v2813 = vpop.f32.mrf.mxu0
  %v2814 = vadd.f32 %v2689, %v2813
  %2815 = vmatmul.f32.gmra.mxu0 %v166
  %v2816 = vpop.f32.mrf.mxu0
  %v2817 = vadd.f32 %v2692, %v2816
  %2818 = vmatmul.f32.gmra.mxu0 %v175
  %v2819 = vpop.f32.mrf.mxu0
  %v2820 = vadd.f32 %v2695, %v2819
  %2821 = vmatmul.f32.gmra.mxu0 %v184
  %v2822 = vpop.f32.mrf.mxu0
  %v2823 = vadd.f32 %v2698, %v2822
  %2824 = vmatmul.f32.gmra.mxu0 %v193
  %v2825 = vpop.f32.mrf.mxu0
  %v2826 = vadd.f32 %v2701, %v2825
  %2827 = vmatmul.f32.gmra.mxu0 %v202
  %v2828 = vpop.f32.mrf.mxu0
  %v2829 = vadd.f32 %v2704, %v2828
  %2830 = vmatmul.f32.gmra.mxu0 %v211
  %v2831 = vpop.f32.mrf.mxu0
  %v2832 = vadd.f32 %v2707, %v2831
  %2833 = vmatmul.f32.gmra.mxu0 %v220
  %v2834 = vpop.f32.mrf.mxu0
  %v2835 = vadd.f32 %v2710, %v2834
  %2836 = vmatmul.f32.gmra.mxu0 %v229
  %v2837 = vpop.f32.mrf.mxu0
  %v2838 = vadd.f32 %v2713, %v2837
  %2839 = vmatmul.f32.gmra.mxu0 %v238
  %v2840 = vpop.f32.mrf.mxu0
  %v2841 = vadd.f32 %v2716, %v2840
  %2842 = vmatmul.f32.gmra.mxu0 %v247
  %v2843 = vpop.f32.mrf.mxu0
  %v2844 = vadd.f32 %v2719, %v2843
  %2845 = vmatmul.f32.gmra.mxu0 %v256
  %v2846 = vpop.f32.mrf.mxu0
  %v2847 = vadd.f32 %v2722, %v2846
  %2848 = vmatmul.f32.gmra.mxu0 %v265
  %v2849 = vpop.f32.mrf.mxu0
  %v2850 = vadd.f32 %v2725, %v2849
  %2851 = vmatmul.f32.gmra.mxu0 %v274
  %v2852 = vpop.f32.mrf.mxu0
  %v2853 = vadd.f32 %v2728, %v2852
  %2854 = vmatmul.f32.gmra.mxu0 %v283
  %v2855 = vpop.f32.mrf.mxu0
  %v2856 = vadd.f32 %v2731, %v2855
  %2857 = vmatmul.f32.gmra.mxu0 %v292
  %v2858 = vpop.f32.mrf.mxu0
  %v2859 = vadd.f32 %v2734, %v2858
  %2860 = vmatmul.f32.gmra.mxu0 %v301
  %v2861 = vpop.f32.mrf.mxu0
  %v2862 = vadd.f32 %v2737, %v2861
  %2863 = vmatmul.f32.gmra.mxu0 %v310
  %v2864 = vpop.f32.mrf.mxu0
  %v2865 = vadd.f32 %v2740, %v2864
  %2866 = vmatmul.f32.gmra.mxu0 %v319
  %v2867 = vpop.f32.mrf.mxu0
  %v2868 = vadd.f32 %v2743, %v2867
  %2869 = vmatmul.f32.gmra.mxu0 %v328
  %v2870 = vpop.f32.mrf.mxu0
  %v2871 = vadd.f32 %v2746, %v2870
  %2872 = vmatmul.f32.gmra.mxu0 %v337
  %v2873 = vpop.f32.mrf.mxu0
  %v2874 = vadd.f32 %v2749, %v2873
  %2875 = vdwg.mxu0
  %v2876 = vmax.f32 %v1644, %v1671
  %v2877 = vmax.f32 %v2769, %v2796
  %v2878 = vmax.f32 %v1647, %v1674
  %v2879 = vmax.f32 %v2772, %v2799
  %v2880 = vmax.f32 %v1650, %v1677
  %v2881 = vmax.f32 %v2775, %v2802
  %v2882 = vmax.f32 %v1653, %v1680
  %v2883 = vmax.f32 %v2778, %v2805
  %v2884 = vmax.f32 %v1656, %v1683
  %v2885 = vmax.f32 %v2781, %v2808
  %v2886 = vmax.f32 %v1659, %v1686
  %v2887 = vmax.f32 %v2784, %v2811
  %v2888 = vmax.f32 %v1662, %v1689
  %v2889 = vmax.f32 %v2787, %v2814
  %v2890 = vmax.f32 %v1665, %v1692
  %v2891 = vmax.f32 %v2790, %v2817
  %v2892 = vmax.f32 %v1668, %v1695
  %v2893 = vmax.f32 %v2793, %v2820
  %v2894 = vmax.f32 %v1698, %v1725
  %v2895 = vmax.f32 %v2823, %v2850
  %v2896 = vmax.f32 %v1701, %v1728
  %v2897 = vmax.f32 %v2826, %v2853
  %v2898 = vmax.f32 %v1704, %v1731
  %v2899 = vmax.f32 %v2829, %v2856
  %v2900 = vmax.f32 %v1707, %v1734
  %v2901 = vmax.f32 %v2832, %v2859
  %v2902 = vmax.f32 %v1710, %v1737
  %v2903 = vmax.f32 %v2835, %v2862
  %v2904 = vmax.f32 %v1713, %v1740
  %v2905 = vmax.f32 %v2838, %v2865
  %v2906 = vmax.f32 %v1716, %v1743
  %v2907 = vmax.f32 %v2841, %v2868
  %v2908 = vmax.f32 %v1719, %v1746
  %v2909 = vmax.f32 %v2844, %v2871
  %v2910 = vmax.f32 %v1722, %v1749
  %v2911 = vmax.f32 %v2847, %v2874
  %v2912 = vmax.f32 %v2876, %v2894
  %v2913 = vmax.f32 %v2877, %v2895
  %v2914 = vmax.f32 %v2878, %v2896
  %v2915 = vmax.f32 %v2879, %v2897
  %v2916 = vmax.f32 %v2880, %v2898
  %v2917 = vmax.f32 %v2881, %v2899
  %v2918 = vmax.f32 %v2882, %v2900
  %v2919 = vmax.f32 %v2883, %v2901
  %v2920 = vmax.f32 %v2884, %v2902
  %v2921 = vmax.f32 %v2885, %v2903
  %v2922 = vmax.f32 %v2886, %v2904
  %v2923 = vmax.f32 %v2887, %v2905
  %v2924 = vmax.f32 %v2888, %v2906
  %v2925 = vmax.f32 %v2889, %v2907
  %v2926 = vmax.f32 %v2890, %v2908
  %v2927 = vmax.f32 %v2891, %v2909
  %v2928 = vmax.f32 %v2892, %v2910
  %v2929 = vmax.f32 %v2893, %v2911
  %v2930 = vld [vmem:[%s2] sm:$0x3]
  %v2932 = vperm.slane %v2930, 0
  %v2933 = vperm.slane %v2930, 1
  %v2936 = vadd.f32 %v2912, %v2932
  %v2937 = vadd.f32 %v2913, %v2933
  %v2938 = vadd.f32 %v2914, %v2932
  %v2939 = vadd.f32 %v2915, %v2933
  %v2940 = vadd.f32 %v2916, %v2932
  %v2941 = vadd.f32 %v2917, %v2933
  %v2942 = vadd.f32 %v2918, %v2932
  %v2943 = vadd.f32 %v2919, %v2933
  %v2944 = vadd.f32 %v2920, %v2932
  %v2945 = vadd.f32 %v2921, %v2933
  %v2946 = vadd.f32 %v2922, %v2932
  %v2947 = vadd.f32 %v2923, %v2933
  %v2948 = vadd.f32 %v2924, %v2932
  %v2949 = vadd.f32 %v2925, %v2933
  %v2950 = vadd.f32 %v2926, %v2932
  %v2951 = vadd.f32 %v2927, %v2933
  %v2952 = vadd.f32 %v2928, %v2932
  %v2953 = vadd.f32 %v2929, %v2933
  %v2954 = vmax.f32 %v2936, 0.0
  %v2955 = vmax.f32 %v2937, 0.0
  %v2956 = vmax.f32 %v2938, 0.0
  %v2957 = vmax.f32 %v2939, 0.0
  %v2958 = vmax.f32 %v2940, 0.0
  %v2959 = vmax.f32 %v2941, 0.0
  %v2960 = vmax.f32 %v2942, 0.0
  %v2961 = vmax.f32 %v2943, 0.0
  %v2962 = vmax.f32 %v2944, 0.0
  %v2963 = vmax.f32 %v2945, 0.0
  %v2964 = vmax.f32 %v2946, 0.0
  %v2965 = vmax.f32 %v2947, 0.0
  %v2966 = vmax.f32 %v2948, 0.0
  %v2967 = vmax.f32 %v2949, 0.0
  %v2968 = vmax.f32 %v2950, 0.0
  %v2969 = vmax.f32 %v2951, 0.0
  %v2970 = vmax.f32 %v2952, 0.0
  %v2971 = vmax.f32 %v2953, 0.0
  %2972 = vst [vmem:[%s3] sm:$0xff] %v2954
  %2973 = vst [vmem:[%s3 + $0x8] sm:$0xff] %v2955
  %2974 = vst [vmem:[%s3 + $0x10] sm:$0xff] %v2956
  %2975 = vst [vmem:[%s3 + $0x18] sm:$0xff] %v2957
  %2976 = vst [vmem:[%s3 + $0x20] sm:$0xff] %v2958
  %2977 = vst [vmem:[%s3 + $0x28] sm:$0xff] %v2959
  %2978 = vst [vmem:[%s3 + $0x30] sm:$0xff] %v2960
  %2979 = vst [vmem:[%s3 + $0x38] sm:$0xff] %v2961
  %2980 = vst [vmem:[%s3 + $0x40] sm:$0xff] %v2962
  %2981 = vst [vmem:[%s3 + $0x48] sm:$0xff] %v2963
  %2982 = vst [vmem:[%s3 + $0x50] sm:$0xff] %v2964
  %2983 = vst [vmem:[%s3 + $0x58] sm:$0xff] %v2965
  %2984 = vst [vmem:[%s3 + $0x60] sm:$0xff] %v2966
  %2985 = vst [vmem:[%s3 + $0x68] sm:$0xff] %v2967
  %2986 = vst [vmem:[%s3 + $0x70] sm:$0xff] %v2968
  %2987 = vst [vmem:[%s3 + $0x78] sm:$0xff] %v2969
  %2988 = vst [vmem:[%s3 + $0x80] sm:$0xff] %v2970
  %2989 = vst [vmem:[%s3 + $0x88] sm:$0xff] %v2971
  // Predicated region
  $region14: #{mnist_network_forward.7} parent=0 // pred_check
    _
  $region15: #{mnist_network_forward.7} parent=0 // pred_check_branch
    %2991 = sbr.rel (0) target = $region17
  $region16: #{mnist_network_forward.7} parent=0 // pred_region
    _
  $region17: #{mnist_network_forward.7} parent=0 // pred_fallthru
    _
  // Predicated region
  $region18: #{mnist_network_forward.7} parent=0 // pred_check
    _
  $region19: #{mnist_network_forward.7} parent=0 // pred_check_branch
    %2993 = sbr.rel (0) target = $region21
  $region20: #{mnist_network_forward.7} parent=0 // pred_region
    _
  $region21: #{mnist_network_forward.7} parent=0 // pred_fallthru
    _

</llo_original>
